<compile_context>
chip_gen: v6e
topology: v6e:2x2x1
jax: 0.10.0
libtpu: 0.0.40
codegen_flags: <defaults>
</compile_context>

<pallas_src>
import functools

import numpy as np
import jax
import jax.numpy as jnp
from jax import lax
from jax.experimental import pallas as pl
from jax.experimental.pallas import tpu as pltpu

EPS = 1e-5


# ----------------------------------------------------------------------------- kernel
def _axial_attention_kernel(
    x_ref,        # (C, TB*L)      VMEM  TB input rows, length folded into lanes
    w_ref,        # (2*Op, C)      VMEM  reordered [Q|K|V] qkv weight (bn scales folded)
    b_ref,        # (2*Op, 1)      VMEM  reordered folded bias
    qemb_ref,     # (G*gph, L, L)  VMEM  query rel. embedding, group-tiled
    kembT_ref,    # (G*gph, L, L)  VMEM  key rel. embedding, pre-transposed, group-tiled
    vembs_ref,    # (Op, L, L)     VMEM  value rel. embedding, group-tiled, sve-scale folded
    sscale_ref,   # (3, G, 1, 1)   VMEM  folded bn_similarity scales (qk, qr, kr)
    obias_ref,    # (Op, 1)        VMEM  folded bn_output bias (sv + sve channels summed)
    o_ref,        # (Op, TB*L)     VMEM  output block (lane dense)
    qkv_s,        # (TB, 2*Op, L)  VMEM  scratch: qkv unfolded to (row, channel, position)
    *, groups, group_planes, tb, length, precision,
):
    G = groups
    gp = group_planes
    gph = gp // 2
    GQ = G * gph
    Op = G * gp
    L = length
    TB = tb

    # fused 1x1 Conv1d + bn_qkv affine (+ bn_output sv-scale on V rows): one big MXU matmul
    qkv2d = jnp.dot(w_ref[...], x_ref[...],
                    precision=precision,
                    preferred_element_type=jnp.float32)           # (2*Op, TB*L)
    qkv2d = qkv2d + b_ref[...]

    # unfold the lane-folded (row, position) axis through a VMEM scratch (static unroll)
    for t in range(TB):
        qkv_s[t] = qkv2d[:, t * L:(t + 1) * L]
    qkv3 = qkv_s[...]                                             # (TB, 2*Op, L)

    q3 = qkv3[:, :GQ, :]                                          # (TB, G*gph, L)
    k3 = qkv3[:, GQ:2 * GQ, :]                                    # (TB, G*gph, L)
    v3 = qkv3[:, 2 * GQ:, :]                                      # (TB, Op, L)

    q_emb = qemb_ref[...]                                         # (G*gph, L, L)
    k_embT = kembT_ref[...]                                       # (G*gph, L, L)
    v_emb = vembs_ref[...]                                        # (Op, L, L)

    # similarity maps, vectorized over (rows, groups); channel contraction done as a
    # leading-dim split + sum so no tiled-dim reshapes are needed.
    # qk[t,g,i,j] = sum_c q[t,g,c,i] k[t,g,c,j]
    qk = (q3[:, :, :, None] * k3[:, :, None, :]).reshape(TB, G, gph, L, L).sum(axis=2)
    # qr[t,g,i,j] = sum_c q[t,g,c,i] q_emb[c,i,j]
    qr = (q3[:, :, :, None] * q_emb[None]).reshape(TB, G, gph, L, L).sum(axis=2)
    # kr[t,g,i,j] = sum_c k[t,g,c,j] k_emb[c,j,i]
    kr = (k3[:, :, None, :] * k_embT[None]).reshape(TB, G, gph, L, L).sum(axis=2)

    ss = sscale_ref[...]                                          # (3, G, 1, 1)
    # bn_similarity scales; its bias is constant along the softmax axis -> dropped (no-op)
    logits = qk * ss[0][None] + qr * ss[1][None] + kr * ss[2][None]   # (TB, G, L, L)

    # stable softmax over j, divide replaced by EUP reciprocal
    logits = logits - jnp.max(logits, axis=-1, keepdims=True)
    e = jnp.exp(logits)
    sim = e * pl.reciprocal(jnp.sum(e, axis=-1, keepdims=True), approx=True)

    # broadcast each group's map to its gp value channels -> (TB, Op, L, L)
    sim_x = jnp.broadcast_to(sim[:, :, None, :, :], (TB, G, gp, L, L)).reshape(TB, Op, L, L)

    # sv[t,gc,i]  = sum_j sim[t,g,i,j] * v[t,gc,j]     (sv scale already folded into V rows)
    sv = jnp.sum(sim_x * v3[:, :, None, :], axis=-1)              # (TB, Op, L)
    # sve[t,gc,i] = sum_j sim[t,g,i,j] * v_emb_scaled[gc,i,j]
    sve = jnp.sum(sim_x * v_emb[None], axis=-1)                   # (TB, Op, L)

    out = sv + sve + obias_ref[...][None]                         # (TB, Op, L)

    # fill the lane-dense (Op, TB*L) output block (static unroll)
    for t in range(TB):
        o_ref[:, t * L:(t + 1) * L] = out[t].astype(o_ref.dtype)


# ---------------------------------------------------------------------------- wrapper
def _fold_bn(gamma, beta, rmean, rvar, eps=EPS):
    scale = gamma / jnp.sqrt(rvar + eps)
    return scale, beta - rmean * scale


def _pick_row_block(batch, length, max_lanes=256):
    """Largest divisor of `batch` with batch_block*length <= max_lanes, preferring
    lane-dense (multiple of 128) folded widths."""
    divs = [t for t in range(1, batch + 1) if batch % t == 0]
    fit = [t for t in divs if t * length <= max_lanes] or [1]
    dense = [t for t in fit if (t * length) % 128 == 0]
    return max(dense) if dense else max(fit)


def axial_attention_pallas(x, params, *, groups, out_planes, kernel_size,
                           matmul_precision=lax.Precision.HIGHEST):
    # matmul_precision: HIGHEST = exact f32 (default, keeps the bundled test tight).
    # On v6e/v7x pass None (DEFAULT) / cast to bf16 for higher MXU throughput
    # (validate with a looser tolerance, per the perf review).
    N, C, H, W = x.shape
    assert H == kernel_size, "axial length must equal kernel_size (width=False)"
    G = groups
    gp = out_planes // groups
    gph = gp // 2
    GQ = G * gph
    Op = out_planes
    L = H
    B = N * W
    TB = _pick_row_block(B, L)
    ks = kernel_size

    # (N,C,H,W) -> (N,W,C,H) -> (B,C,L) -> (C,B,L) -> (C,B*L): rows folded into lanes
    xb = jnp.transpose(x, (0, 3, 1, 2)).reshape(B, C, L)
    xf = jnp.transpose(xb, (1, 0, 2)).reshape(C, B * L)

    # relative positional embedding gather (glue)
    q_idx = jnp.arange(ks)[None, :]
    k_idx = jnp.arange(ks)[:, None]
    rel_idx = (k_idx - q_idx + ks - 1).reshape(-1)
    all_emb = params["relative"][:, rel_idx].reshape(2 * gp, ks, ks)
    q_emb = all_emb[:gph]                                   # (gph, L, L)
    k_emb = all_emb[gph:2 * gph]                            # (gph, L, L)
    v_emb = all_emb[2 * gph:]                               # (gp,  L, L)

    # fold BatchNorms (inference mode)
    qs, qb = _fold_bn(*params["bn_qkv"])                    # (2*Op,)
    ss, _ = _fold_bn(*params["bn_sim"])                     # (3*G,)   bias dropped (softmax no-op)
    os_, ob_ = _fold_bn(*params["bn_out"])                  # (2*Op,)
    os_r = os_.reshape(G, gp, 2)
    ob_r = ob_.reshape(G, gp, 2)
    osv = os_r[..., 0]                                      # (G, gp) scale for sv channels
    osve = os_r[..., 1]                                     # (G, gp) scale for sve channels
    obias = ob_r.sum(-1).reshape(Op, 1)                     # (Op, 1) sv+sve biases summed

    # fold bn_qkv scale into the 1x1-conv weight, reorder rows to [Q | K | V] blocks,
    # and fold the bn_output sv-scale into the V rows (weight + bias).
    w = params["w_qkv"] * qs[:, None]                       # (2*Op, C)
    b = qb                                                  # (2*Op,)
    idx = np.arange(2 * Op).reshape(G, 2 * gp)
    q_rows = idx[:, :gph].reshape(-1)
    k_rows = idx[:, gph:gp].reshape(-1)
    v_rows = idx[:, gp:].reshape(-1)
    osv_flat = osv.reshape(-1)                              # (Op,), (g, c) order
    w_r = jnp.concatenate(
        [w[q_rows], w[k_rows], w[v_rows] * osv_flat[:, None]], axis=0)
    b_r = jnp.concatenate(
        [b[q_rows], b[k_rows], b[v_rows] * osv_flat], axis=0)[:, None]

    # group-tiled embeddings so the kernel's channel axis is the flattened (g, c) order;
    # the bn_output sve-scale is folded into the value embedding.
    q_emb_x = jnp.tile(q_emb, (G, 1, 1))                                     # (GQ, L, L)
    k_embT_x = jnp.tile(jnp.transpose(k_emb, (0, 2, 1)), (G, 1, 1))          # (GQ, L, L)
    v_emb_x = (v_emb[None] * osve[:, :, None, None]).reshape(Op, L, L)       # (Op, L, L)

    sim_scale = ss.reshape(3, G, 1, 1)

    kernel = functools.partial(
        _axial_attention_kernel,
        groups=G, group_planes=gp, tb=TB, length=L, precision=matmul_precision)

    out_flat = pl.pallas_call(
        kernel,
        out_shape=jax.ShapeDtypeStruct((Op, B * L), jnp.float32),
        grid=(B // TB,),
        in_specs=[
            pl.BlockSpec((C, TB * L), lambda i: (0, i)),              # x rows (lane dense)
            pl.BlockSpec((2 * Op, C), lambda i: (0, 0)),              # qkv weight
            pl.BlockSpec((2 * Op, 1), lambda i: (0, 0)),              # qkv bias
            pl.BlockSpec((GQ, L, L), lambda i: (0, 0, 0)),            # q embedding
            pl.BlockSpec((GQ, L, L), lambda i: (0, 0, 0)),            # k embedding (transposed)
            pl.BlockSpec((Op, L, L), lambda i: (0, 0, 0)),            # v embedding (scaled)
            pl.BlockSpec((3, G, 1, 1), lambda i: (0, 0, 0, 0)),       # bn_similarity scales
            pl.BlockSpec((Op, 1), lambda i: (0, 0)),                  # bn_output bias
        ],
        out_specs=pl.BlockSpec((Op, TB * L), lambda i: (0, i)),
        scratch_shapes=[pltpu.VMEM((TB, 2 * Op, L), jnp.float32)],
        compiler_params=pltpu.CompilerParams(
            dimension_semantics=("parallel",),
            vmem_limit_bytes=32 * 1024 * 1024,   # TODO(synk): retune for large configs / v7x 64MiB VMEM
        ),
    )(xf, w_r, b_r, q_emb_x, k_embT_x, v_emb_x, sim_scale, obias)

    # (Op, B*L) -> (B, Op, L) -> (N, W, Op, H) -> (N, Op, H, W)
    out = out_flat.reshape(Op, B, L).transpose(1, 0, 2)
    return out.reshape(N, W, Op, L).transpose(0, 2, 3, 1)


# -------------------------------------------------------------------- pure-JAX reference
def axial_attention_reference(x, params, *, groups, out_planes, kernel_size):
    N, C, H, W = x.shape
    gp = out_planes // groups
    gph = gp // 2
    B = N * W
    ks = kernel_size
    prec = lax.Precision.HIGHEST

    xb = jnp.transpose(x, (0, 3, 1, 2)).reshape(B, C, H)

    g_q, b_q, rm_q, rv_q = params["bn_qkv"]
    qkv = jnp.einsum("oc,bch->boh", params["w_qkv"], xb, precision=prec)
    qkv = (qkv - rm_q[None, :, None]) / jnp.sqrt(rv_q[None, :, None] + EPS) \
          * g_q[None, :, None] + b_q[None, :, None]
    qkv = qkv.reshape(B, groups, 2 * gp, H)
    q, k, v = qkv[:, :, :gph], qkv[:, :, gph:gp], qkv[:, :, gp:]

    q_idx = jnp.arange(ks)[None, :]
    k_idx = jnp.arange(ks)[:, None]
    rel_idx = (k_idx - q_idx + ks - 1).reshape(-1)
    all_emb = params["relative"][:, rel_idx].reshape(2 * gp, ks, ks)
    q_emb, k_emb, v_emb = all_emb[:gph], all_emb[gph:2 * gph], all_emb[2 * gph:]

    qr = jnp.einsum("bgci,cij->bgij", q, q_emb, precision=prec)
    kr = jnp.einsum("bgci,cij->bgij", k, k_emb, precision=prec).transpose(0, 1, 3, 2)
    qk = jnp.einsum("bgci,bgcj->bgij", q, k, precision=prec)
    stacked = jnp.concatenate([qk, qr, kr], axis=1)

    g_s, b_s, rm_s, rv_s = params["bn_sim"]
    stacked = (stacked - rm_s[None, :, None, None]) / jnp.sqrt(rv_s[None, :, None, None] + EPS) \
              * g_s[None, :, None, None] + b_s[None, :, None, None]
    stacked = stacked.reshape(B, 3, groups, H, H).sum(axis=1)
    sim = jax.nn.softmax(stacked, axis=3)

    sv = jnp.einsum("bgij,bgcj->bgci", sim, v, precision=prec)
    sve = jnp.einsum("bgij,cij->bgci", sim, v_emb, precision=prec)
    so = jnp.concatenate([sv, sve], axis=-1).reshape(B, 2 * out_planes, H)

    g_o, b_o, rm_o, rv_o = params["bn_out"]
    so = (so - rm_o[None, :, None]) / jnp.sqrt(rv_o[None, :, None] + EPS) \
         * g_o[None, :, None] + b_o[None, :, None]
    out = so.reshape(N, W, out_planes, 2, H).sum(axis=-2)
    return jnp.transpose(out, (0, 2, 3, 1))


# -------------------------------------------------------------------------------- params
def make_params(key, in_planes, out_planes, groups, kernel_size):
    gp = out_planes // groups
    keys = jax.random.split(key, 8)

    def bn_params(kk, n):
        k1, k2, k3, k4 = jax.random.split(kk, 4)
        gamma = 1.0 + 0.1 * jax.random.normal(k1, (n,), jnp.float32)
        beta = 0.1 * jax.random.normal(k2, (n,), jnp.float32)
        rmean = 0.1 * jax.random.normal(k3, (n,), jnp.float32)
        rvar = 1.0 + 0.25 * jax.random.uniform(k4, (n,), jnp.float32)
        return gamma, beta, rmean, rvar

    return {
        "w_qkv": jax.random.normal(keys[0], (2 * out_planes, in_planes), jnp.float32)
                 * np.sqrt(1.0 / in_planes),
        "relative": jax.random.normal(keys[1], (2 * gp, 2 * kernel_size - 1), jnp.float32)
                    * np.sqrt(1.0 / gp),
        "bn_qkv": bn_params(keys[2], 2 * out_planes),
        "bn_sim": bn_params(keys[3], 3 * groups),
        "bn_out": bn_params(keys[4], 2 * out_planes),
    }


if __name__ == "__main__":
    # Small shapes consistent with the module: in_planes % groups == 0, H == kernel_size.
    N, in_planes, out_planes, groups, kernel_size = 2, 8, 8, 2, 16
    H = W = kernel_size

    key = jax.random.PRNGKey(0)
    kx, kp = jax.random.split(key)
    x = jax.random.normal(kx, (N, in_planes, H, W), jnp.float32)
    params = make_params(kp, in_planes, out_planes, groups, kernel_size)

    out = axial_attention_pallas(x, params, groups=groups,
                                 out_planes=out_planes, kernel_size=kernel_size)
    out = jax.block_until_ready(out)

    ref = axial_attention_reference(x, params, groups=groups,
                                    out_planes=out_planes, kernel_size=kernel_size)
    ref = jax.block_until_ready(ref)

    assert out.shape == (N, out_planes, H, W)
    # tolerance covers the EUP approximate-reciprocal softmax; matmul is exact f32 here.
    np.testing.assert_allclose(np.asarray(out), np.asarray(ref), rtol=5e-3, atol=5e-3)
    print("KERNEL_OK")
</pallas_src>

<mosaic_0001>
module attributes {stable_mosaic.version = 11 : i64} {
  func.func @_axial_attention_kernel(%arg0: i32, %arg1: memref<8x256xf32, #tpu.memory_space<vmem>>, %arg2: memref<16x8xf32, #tpu.memory_space<vmem>>, %arg3: memref<16x1xf32, #tpu.memory_space<vmem>>, %arg4: memref<4x16x16xf32, #tpu.memory_space<vmem>>, %arg5: memref<4x16x16xf32, #tpu.memory_space<vmem>>, %arg6: memref<8x16x16xf32, #tpu.memory_space<vmem>>, %arg7: memref<3x2x1x1xf32, #tpu.memory_space<vmem>>, %arg8: memref<8x1xf32, #tpu.memory_space<vmem>>, %arg9: memref<8x256xf32, #tpu.memory_space<vmem>>, %arg10: memref<16x16x16xf32, #tpu.memory_space<vmem>>) attributes {dimension_semantics = [#tpu.dimension_semantics<parallel>], iteration_bounds = array<i64: 2>, scalar_prefetch = 0 : i64, scratch_operands = 1 : i64, tpu.core_type = #tpu.core_type<tc>, window_params = [{transform_indices = @transform_0, window_bounds = array<i64: 8, 256>}, {pipeline_mode = #tpu.pipeline_mode<synchronous>, transform_indices = @transform_1, window_bounds = array<i64: 16, 8>}, {pipeline_mode = #tpu.pipeline_mode<synchronous>, transform_indices = @transform_2, window_bounds = array<i64: 16, 1>}, {pipeline_mode = #tpu.pipeline_mode<synchronous>, transform_indices = @transform_3, window_bounds = array<i64: 4, 16, 16>}, {pipeline_mode = #tpu.pipeline_mode<synchronous>, transform_indices = @transform_4, window_bounds = array<i64: 4, 16, 16>}, {pipeline_mode = #tpu.pipeline_mode<synchronous>, transform_indices = @transform_5, window_bounds = array<i64: 8, 16, 16>}, {pipeline_mode = #tpu.pipeline_mode<synchronous>, transform_indices = @transform_6, window_bounds = array<i64: 3, 2, 1, 1>}, {pipeline_mode = #tpu.pipeline_mode<synchronous>, transform_indices = @transform_7, window_bounds = array<i64: 8, 1>}, {transform_indices = @transform_8, window_bounds = array<i64: 8, 256>}]} {
    %c0 = arith.constant 0 : index
    %c0_0 = arith.constant 0 : index
    %0 = vector.load %arg2[%c0, %c0_0] : memref<16x8xf32, #tpu.memory_space<vmem>>, vector<16x8xf32>
    %c0_1 = arith.constant 0 : index
    %c0_2 = arith.constant 0 : index
    %1 = vector.load %arg1[%c0_1, %c0_2] : memref<8x256xf32, #tpu.memory_space<vmem>>, vector<8x256xf32>
    %cst = arith.constant dense<0.000000e+00> : vector<16x256xf32>
    %2 = tpu.matmul %0, %1, %cst {dimension_numbers = #tpu.dot_dimension_numbers<[1], [0], [0], [1], [0, 0, 1, 1], [], []>, precision = #tpu.contract_precision<fp32>} : vector<16x8xf32>, vector<8x256xf32>, vector<16x256xf32> -> vector<16x256xf32>
    %c0_3 = arith.constant 0 : index
    %c0_4 = arith.constant 0 : index
    %3 = vector.load %arg3[%c0_3, %c0_4] : memref<16x1xf32, #tpu.memory_space<vmem>>, vector<16x1xf32>
    %4 = vector.broadcast %3 : vector<16x1xf32> to vector<16x256xf32>
    %5 = arith.addf %2, %4 : vector<16x256xf32>
    %6 = vector.extract_strided_slice %5 {offsets = [0, 0], sizes = [16, 16], strides = [1, 1]} : vector<16x256xf32> to vector<16x16xf32>
    %c0_5 = arith.constant 0 : index
    %c0_6 = arith.constant 0 : index
    %c0_7 = arith.constant 0 : index
    %7 = vector.load %arg10[%c0_5, %c0_6, %c0_7] : memref<16x16x16xf32, #tpu.memory_space<vmem>>, vector<1x16x16xf32>
    %8 = vector.shape_cast %7 : vector<1x16x16xf32> to vector<16x16xf32>
    %9 = vector.shape_cast %6 : vector<16x16xf32> to vector<1x16x16xf32>
    tpu.vector_store %arg10[%c0_5, %c0_6, %c0_7], %9 {strides = array<i32>} : memref<16x16x16xf32, #tpu.memory_space<vmem>>, vector<1x16x16xf32>,
    %10 = vector.extract_strided_slice %5 {offsets = [0, 16], sizes = [16, 16], strides = [1, 1]} : vector<16x256xf32> to vector<16x16xf32>
    %c1 = arith.constant 1 : index
    %c0_8 = arith.constant 0 : index
    %c0_9 = arith.constant 0 : index
    %11 = vector.load %arg10[%c1, %c0_8, %c0_9] : memref<16x16x16xf32, #tpu.memory_space<vmem>>, vector<1x16x16xf32>
    %12 = vector.shape_cast %11 : vector<1x16x16xf32> to vector<16x16xf32>
    %13 = vector.shape_cast %10 : vector<16x16xf32> to vector<1x16x16xf32>
    tpu.vector_store %arg10[%c1, %c0_8, %c0_9], %13 {strides = array<i32>} : memref<16x16x16xf32, #tpu.memory_space<vmem>>, vector<1x16x16xf32>,
    %14 = vector.extract_strided_slice %5 {offsets = [0, 32], sizes = [16, 16], strides = [1, 1]} : vector<16x256xf32> to vector<16x16xf32>
    %c2 = arith.constant 2 : index
    %c0_10 = arith.constant 0 : index
    %c0_11 = arith.constant 0 : index
    %15 = vector.load %arg10[%c2, %c0_10, %c0_11] : memref<16x16x16xf32, #tpu.memory_space<vmem>>, vector<1x16x16xf32>
    %16 = vector.shape_cast %15 : vector<1x16x16xf32> to vector<16x16xf32>
    %17 = vector.shape_cast %14 : vector<16x16xf32> to vector<1x16x16xf32>
    tpu.vector_store %arg10[%c2, %c0_10, %c0_11], %17 {strides = array<i32>} : memref<16x16x16xf32, #tpu.memory_space<vmem>>, vector<1x16x16xf32>,
    %18 = vector.extract_strided_slice %5 {offsets = [0, 48], sizes = [16, 16], strides = [1, 1]} : vector<16x256xf32> to vector<16x16xf32>
    %c3 = arith.constant 3 : index
    %c0_12 = arith.constant 0 : index
    %c0_13 = arith.constant 0 : index
    %19 = vector.load %arg10[%c3, %c0_12, %c0_13] : memref<16x16x16xf32, #tpu.memory_space<vmem>>, vector<1x16x16xf32>
    %20 = vector.shape_cast %19 : vector<1x16x16xf32> to vector<16x16xf32>
    %21 = vector.shape_cast %18 : vector<16x16xf32> to vector<1x16x16xf32>
    tpu.vector_store %arg10[%c3, %c0_12, %c0_13], %21 {strides = array<i32>} : memref<16x16x16xf32, #tpu.memory_space<vmem>>, vector<1x16x16xf32>,
    %22 = vector.extract_strided_slice %5 {offsets = [0, 64], sizes = [16, 16], strides = [1, 1]} : vector<16x256xf32> to vector<16x16xf32>
    %c4 = arith.constant 4 : index
    %c0_14 = arith.constant 0 : index
    %c0_15 = arith.constant 0 : index
    %23 = vector.load %arg10[%c4, %c0_14, %c0_15] : memref<16x16x16xf32, #tpu.memory_space<vmem>>, vector<1x16x16xf32>
    %24 = vector.shape_cast %23 : vector<1x16x16xf32> to vector<16x16xf32>
    %25 = vector.shape_cast %22 : vector<16x16xf32> to vector<1x16x16xf32>
    tpu.vector_store %arg10[%c4, %c0_14, %c0_15], %25 {strides = array<i32>} : memref<16x16x16xf32, #tpu.memory_space<vmem>>, vector<1x16x16xf32>,
    %26 = vector.extract_strided_slice %5 {offsets = [0, 80], sizes = [16, 16], strides = [1, 1]} : vector<16x256xf32> to vector<16x16xf32>
    %c5 = arith.constant 5 : index
    %c0_16 = arith.constant 0 : index
    %c0_17 = arith.constant 0 : index
    %27 = vector.load %arg10[%c5, %c0_16, %c0_17] : memref<16x16x16xf32, #tpu.memory_space<vmem>>, vector<1x16x16xf32>
    %28 = vector.shape_cast %27 : vector<1x16x16xf32> to vector<16x16xf32>
    %29 = vector.shape_cast %26 : vector<16x16xf32> to vector<1x16x16xf32>
    tpu.vector_store %arg10[%c5, %c0_16, %c0_17], %29 {strides = array<i32>} : memref<16x16x16xf32, #tpu.memory_space<vmem>>, vector<1x16x16xf32>,
    %30 = vector.extract_strided_slice %5 {offsets = [0, 96], sizes = [16, 16], strides = [1, 1]} : vector<16x256xf32> to vector<16x16xf32>
    %c6 = arith.constant 6 : index
    %c0_18 = arith.constant 0 : index
    %c0_19 = arith.constant 0 : index
    %31 = vector.load %arg10[%c6, %c0_18, %c0_19] : memref<16x16x16xf32, #tpu.memory_space<vmem>>, vector<1x16x16xf32>
    %32 = vector.shape_cast %31 : vector<1x16x16xf32> to vector<16x16xf32>
    %33 = vector.shape_cast %30 : vector<16x16xf32> to vector<1x16x16xf32>
    tpu.vector_store %arg10[%c6, %c0_18, %c0_19], %33 {strides = array<i32>} : memref<16x16x16xf32, #tpu.memory_space<vmem>>, vector<1x16x16xf32>,
    %34 = vector.extract_strided_slice %5 {offsets = [0, 112], sizes = [16, 16], strides = [1, 1]} : vector<16x256xf32> to vector<16x16xf32>
    %c7 = arith.constant 7 : index
    %c0_20 = arith.constant 0 : index
    %c0_21 = arith.constant 0 : index
    %35 = vector.load %arg10[%c7, %c0_20, %c0_21] : memref<16x16x16xf32, #tpu.memory_space<vmem>>, vector<1x16x16xf32>
    %36 = vector.shape_cast %35 : vector<1x16x16xf32> to vector<16x16xf32>
    %37 = vector.shape_cast %34 : vector<16x16xf32> to vector<1x16x16xf32>
    tpu.vector_store %arg10[%c7, %c0_20, %c0_21], %37 {strides = array<i32>} : memref<16x16x16xf32, #tpu.memory_space<vmem>>, vector<1x16x16xf32>,
    %38 = vector.extract_strided_slice %5 {offsets = [0, 128], sizes = [16, 16], strides = [1, 1]} : vector<16x256xf32> to vector<16x16xf32>
    %c8 = arith.constant 8 : index
    %c0_22 = arith.constant 0 : index
    %c0_23 = arith.constant 0 : index
    %39 = vector.load %arg10[%c8, %c0_22, %c0_23] : memref<16x16x16xf32, #tpu.memory_space<vmem>>, vector<1x16x16xf32>
    %40 = vector.shape_cast %39 : vector<1x16x16xf32> to vector<16x16xf32>
    %41 = vector.shape_cast %38 : vector<16x16xf32> to vector<1x16x16xf32>
    tpu.vector_store %arg10[%c8, %c0_22, %c0_23], %41 {strides = array<i32>} : memref<16x16x16xf32, #tpu.memory_space<vmem>>, vector<1x16x16xf32>,
    %42 = vector.extract_strided_slice %5 {offsets = [0, 144], sizes = [16, 16], strides = [1, 1]} : vector<16x256xf32> to vector<16x16xf32>
    %c9 = arith.constant 9 : index
    %c0_24 = arith.constant 0 : index
    %c0_25 = arith.constant 0 : index
    %43 = vector.load %arg10[%c9, %c0_24, %c0_25] : memref<16x16x16xf32, #tpu.memory_space<vmem>>, vector<1x16x16xf32>
    %44 = vector.shape_cast %43 : vector<1x16x16xf32> to vector<16x16xf32>
    %45 = vector.shape_cast %42 : vector<16x16xf32> to vector<1x16x16xf32>
    tpu.vector_store %arg10[%c9, %c0_24, %c0_25], %45 {strides = array<i32>} : memref<16x16x16xf32, #tpu.memory_space<vmem>>, vector<1x16x16xf32>,
    %46 = vector.extract_strided_slice %5 {offsets = [0, 160], sizes = [16, 16], strides = [1, 1]} : vector<16x256xf32> to vector<16x16xf32>
    %c10 = arith.constant 10 : index
    %c0_26 = arith.constant 0 : index
    %c0_27 = arith.constant 0 : index
    %47 = vector.load %arg10[%c10, %c0_26, %c0_27] : memref<16x16x16xf32, #tpu.memory_space<vmem>>, vector<1x16x16xf32>
    %48 = vector.shape_cast %47 : vector<1x16x16xf32> to vector<16x16xf32>
    %49 = vector.shape_cast %46 : vector<16x16xf32> to vector<1x16x16xf32>
    tpu.vector_store %arg10[%c10, %c0_26, %c0_27], %49 {strides = array<i32>} : memref<16x16x16xf32, #tpu.memory_space<vmem>>, vector<1x16x16xf32>,
    %50 = vector.extract_strided_slice %5 {offsets = [0, 176], sizes = [16, 16], strides = [1, 1]} : vector<16x256xf32> to vector<16x16xf32>
    %c11 = arith.constant 11 : index
    %c0_28 = arith.constant 0 : index
    %c0_29 = arith.constant 0 : index
    %51 = vector.load %arg10[%c11, %c0_28, %c0_29] : memref<16x16x16xf32, #tpu.memory_space<vmem>>, vector<1x16x16xf32>
    %52 = vector.shape_cast %51 : vector<1x16x16xf32> to vector<16x16xf32>
    %53 = vector.shape_cast %50 : vector<16x16xf32> to vector<1x16x16xf32>
    tpu.vector_store %arg10[%c11, %c0_28, %c0_29], %53 {strides = array<i32>} : memref<16x16x16xf32, #tpu.memory_space<vmem>>, vector<1x16x16xf32>,
    %54 = vector.extract_strided_slice %5 {offsets = [0, 192], sizes = [16, 16], strides = [1, 1]} : vector<16x256xf32> to vector<16x16xf32>
    %c12 = arith.constant 12 : index
    %c0_30 = arith.constant 0 : index
    %c0_31 = arith.constant 0 : index
    %55 = vector.load %arg10[%c12, %c0_30, %c0_31] : memref<16x16x16xf32, #tpu.memory_space<vmem>>, vector<1x16x16xf32>
    %56 = vector.shape_cast %55 : vector<1x16x16xf32> to vector<16x16xf32>
    %57 = vector.shape_cast %54 : vector<16x16xf32> to vector<1x16x16xf32>
    tpu.vector_store %arg10[%c12, %c0_30, %c0_31], %57 {strides = array<i32>} : memref<16x16x16xf32, #tpu.memory_space<vmem>>, vector<1x16x16xf32>,
    %58 = vector.extract_strided_slice %5 {offsets = [0, 208], sizes = [16, 16], strides = [1, 1]} : vector<16x256xf32> to vector<16x16xf32>
    %c13 = arith.constant 13 : index
    %c0_32 = arith.constant 0 : index
    %c0_33 = arith.constant 0 : index
    %59 = vector.load %arg10[%c13, %c0_32, %c0_33] : memref<16x16x16xf32, #tpu.memory_space<vmem>>, vector<1x16x16xf32>
    %60 = vector.shape_cast %59 : vector<1x16x16xf32> to vector<16x16xf32>
    %61 = vector.shape_cast %58 : vector<16x16xf32> to vector<1x16x16xf32>
    tpu.vector_store %arg10[%c13, %c0_32, %c0_33], %61 {strides = array<i32>} : memref<16x16x16xf32, #tpu.memory_space<vmem>>, vector<1x16x16xf32>,
    %62 = vector.extract_strided_slice %5 {offsets = [0, 224], sizes = [16, 16], strides = [1, 1]} : vector<16x256xf32> to vector<16x16xf32>
    %c14 = arith.constant 14 : index
    %c0_34 = arith.constant 0 : index
    %c0_35 = arith.constant 0 : index
    %63 = vector.load %arg10[%c14, %c0_34, %c0_35] : memref<16x16x16xf32, #tpu.memory_space<vmem>>, vector<1x16x16xf32>
    %64 = vector.shape_cast %63 : vector<1x16x16xf32> to vector<16x16xf32>
    %65 = vector.shape_cast %62 : vector<16x16xf32> to vector<1x16x16xf32>
    tpu.vector_store %arg10[%c14, %c0_34, %c0_35], %65 {strides = array<i32>} : memref<16x16x16xf32, #tpu.memory_space<vmem>>, vector<1x16x16xf32>,
    %66 = vector.extract_strided_slice %5 {offsets = [0, 240], sizes = [16, 16], strides = [1, 1]} : vector<16x256xf32> to vector<16x16xf32>
    %c15 = arith.constant 15 : index
    %c0_36 = arith.constant 0 : index
    %c0_37 = arith.constant 0 : index
    %67 = vector.load %arg10[%c15, %c0_36, %c0_37] : memref<16x16x16xf32, #tpu.memory_space<vmem>>, vector<1x16x16xf32>
    %68 = vector.shape_cast %67 : vector<1x16x16xf32> to vector<16x16xf32>
    %69 = vector.shape_cast %66 : vector<16x16xf32> to vector<1x16x16xf32>
    tpu.vector_store %arg10[%c15, %c0_36, %c0_37], %69 {strides = array<i32>} : memref<16x16x16xf32, #tpu.memory_space<vmem>>, vector<1x16x16xf32>,
    %c0_38 = arith.constant 0 : index
    %c0_39 = arith.constant 0 : index
    %c0_40 = arith.constant 0 : index
    %70 = vector.load %arg10[%c0_38, %c0_39, %c0_40] : memref<16x16x16xf32, #tpu.memory_space<vmem>>, vector<16x16x16xf32>
    %71 = vector.extract_strided_slice %70 {offsets = [0, 0, 0], sizes = [16, 4, 16], strides = [1, 1, 1]} : vector<16x16x16xf32> to vector<16x4x16xf32>
    %72 = vector.extract_strided_slice %70 {offsets = [0, 4, 0], sizes = [16, 4, 16], strides = [1, 1, 1]} : vector<16x16x16xf32> to vector<16x4x16xf32>
    %73 = vector.extract_strided_slice %70 {offsets = [0, 8, 0], sizes = [16, 8, 16], strides = [1, 1, 1]} : vector<16x16x16xf32> to vector<16x8x16xf32>
    %c0_41 = arith.constant 0 : index
    %c0_42 = arith.constant 0 : index
    %c0_43 = arith.constant 0 : index
    %74 = vector.load %arg4[%c0_41, %c0_42, %c0_43] : memref<4x16x16xf32, #tpu.memory_space<vmem>>, vector<4x16x16xf32>
    %c0_44 = arith.constant 0 : index
    %c0_45 = arith.constant 0 : index
    %c0_46 = arith.constant 0 : index
    %75 = vector.load %arg5[%c0_44, %c0_45, %c0_46] : memref<4x16x16xf32, #tpu.memory_space<vmem>>, vector<4x16x16xf32>
    %c0_47 = arith.constant 0 : index
    %c0_48 = arith.constant 0 : index
    %c0_49 = arith.constant 0 : index
    %76 = vector.load %arg6[%c0_47, %c0_48, %c0_49] : memref<8x16x16xf32, #tpu.memory_space<vmem>>, vector<8x16x16xf32>
    %77 = vector.shape_cast %71 : vector<16x4x16xf32> to vector<16x4x16x1xf32>
    %78 = vector.shape_cast %72 : vector<16x4x16xf32> to vector<16x4x1x16xf32>
    %79 = vector.broadcast %77 : vector<16x4x16x1xf32> to vector<16x4x16x16xf32>
    %80 = vector.broadcast %78 : vector<16x4x1x16xf32> to vector<16x4x16x16xf32>
    %81 = arith.mulf %79, %80 : vector<16x4x16x16xf32>
    %82 = vector.shape_cast %81 : vector<16x4x16x16xf32> to vector<16x2x2x16x16xf32>
    %cst_50 = arith.constant dense<0.000000e+00> : vector<16x2x16x16xf32>
    %83 = vector.multi_reduction <add>, %82, %cst_50 [2] : vector<16x2x2x16x16xf32> to vector<16x2x16x16xf32>
    %84 = vector.shape_cast %71 : vector<16x4x16xf32> to vector<16x4x16x1xf32>
    %85 = vector.shape_cast %74 : vector<4x16x16xf32> to vector<1x4x16x16xf32>
    %86 = vector.broadcast %84 : vector<16x4x16x1xf32> to vector<16x4x16x16xf32>
    %87 = vector.broadcast %85 : vector<1x4x16x16xf32> to vector<16x4x16x16xf32>
    %88 = arith.mulf %86, %87 : vector<16x4x16x16xf32>
    %89 = vector.shape_cast %88 : vector<16x4x16x16xf32> to vector<16x2x2x16x16xf32>
    %cst_51 = arith.constant dense<0.000000e+00> : vector<16x2x16x16xf32>
    %90 = vector.multi_reduction <add>, %89, %cst_51 [2] : vector<16x2x2x16x16xf32> to vector<16x2x16x16xf32>
    %91 = vector.shape_cast %72 : vector<16x4x16xf32> to vector<16x4x1x16xf32>
    %92 = vector.shape_cast %75 : vector<4x16x16xf32> to vector<1x4x16x16xf32>
    %93 = vector.broadcast %91 : vector<16x4x1x16xf32> to vector<16x4x16x16xf32>
    %94 = vector.broadcast %92 : vector<1x4x16x16xf32> to vector<16x4x16x16xf32>
    %95 = arith.mulf %93, %94 : vector<16x4x16x16xf32>
    %96 = vector.shape_cast %95 : vector<16x4x16x16xf32> to vector<16x2x2x16x16xf32>
    %cst_52 = arith.constant dense<0.000000e+00> : vector<16x2x16x16xf32>
    %97 = vector.multi_reduction <add>, %96, %cst_52 [2] : vector<16x2x2x16x16xf32> to vector<16x2x16x16xf32>
    %c0_53 = arith.constant 0 : index
    %c0_54 = arith.constant 0 : index
    %c0_55 = arith.constant 0 : index
    %c0_56 = arith.constant 0 : index
    %98 = vector.load %arg7[%c0_53, %c0_54, %c0_55, %c0_56] : memref<3x2x1x1xf32, #tpu.memory_space<vmem>>, vector<3x2x1x1xf32>
    %99 = vector.extract_strided_slice %98 {offsets = [0, 0, 0, 0], sizes = [1, 2, 1, 1], strides = [1, 1, 1, 1]} : vector<3x2x1x1xf32> to vector<1x2x1x1xf32>
    %100 = vector.shape_cast %99 : vector<1x2x1x1xf32> to vector<2x1x1xf32>
    %101 = vector.shape_cast %100 : vector<2x1x1xf32> to vector<1x2x1x1xf32>
    %102 = vector.broadcast %101 : vector<1x2x1x1xf32> to vector<16x2x16x16xf32>
    %103 = arith.mulf %83, %102 : vector<16x2x16x16xf32>
    %104 = vector.extract_strided_slice %98 {offsets = [1, 0, 0, 0], sizes = [1, 2, 1, 1], strides = [1, 1, 1, 1]} : vector<3x2x1x1xf32> to vector<1x2x1x1xf32>
    %105 = vector.shape_cast %104 : vector<1x2x1x1xf32> to vector<2x1x1xf32>
    %106 = vector.shape_cast %105 : vector<2x1x1xf32> to vector<1x2x1x1xf32>
    %107 = vector.broadcast %106 : vector<1x2x1x1xf32> to vector<16x2x16x16xf32>
    %108 = arith.mulf %90, %107 : vector<16x2x16x16xf32>
    %109 = arith.addf %103, %108 : vector<16x2x16x16xf32>
    %110 = vector.extract_strided_slice %98 {offsets = [2, 0, 0, 0], sizes = [1, 2, 1, 1], strides = [1, 1, 1, 1]} : vector<3x2x1x1xf32> to vector<1x2x1x1xf32>
    %111 = vector.shape_cast %110 : vector<1x2x1x1xf32> to vector<2x1x1xf32>
    %112 = vector.shape_cast %111 : vector<2x1x1xf32> to vector<1x2x1x1xf32>
    %113 = vector.broadcast %112 : vector<1x2x1x1xf32> to vector<16x2x16x16xf32>
    %114 = arith.mulf %97, %113 : vector<16x2x16x16xf32>
    %115 = arith.addf %109, %114 : vector<16x2x16x16xf32>
    %cst_57 = arith.constant dense<0xFF800000> : vector<16x2x16xf32>
    %116 = vector.multi_reduction <maximumf>, %115, %cst_57 [3] : vector<16x2x16x16xf32> to vector<16x2x16xf32>
    %117 = vector.shape_cast %116 : vector<16x2x16xf32> to vector<16x2x16x1xf32>
    %118 = vector.broadcast %117 : vector<16x2x16x1xf32> to vector<16x2x16x16xf32>
    %119 = arith.subf %115, %118 : vector<16x2x16x16xf32>
    %120 = math.exp %119 : vector<16x2x16x16xf32>
    %cst_58 = arith.constant dense<0.000000e+00> : vector<16x2x16xf32>
    %121 = vector.multi_reduction <add>, %120, %cst_58 [3] : vector<16x2x16x16xf32> to vector<16x2x16xf32>
    %122 = vector.shape_cast %121 : vector<16x2x16xf32> to vector<16x2x16x1xf32>
    %123 = tpu.reciprocal %122 {approx = true} : vector<16x2x16x1xf32> -> vector<16x2x16x1xf32>
    %124 = vector.broadcast %123 : vector<16x2x16x1xf32> to vector<16x2x16x16xf32>
    %125 = arith.mulf %120, %124 : vector<16x2x16x16xf32>
    %126 = vector.shape_cast %125 : vector<16x2x16x16xf32> to vector<16x2x1x16x16xf32>
    %127 = vector.shape_cast %126 : vector<16x2x1x16x16xf32> to vector<16x2x1x16x16xf32>
    %128 = vector.broadcast %127 : vector<16x2x1x16x16xf32> to vector<16x2x4x16x16xf32>
    %129 = vector.shape_cast %128 : vector<16x2x4x16x16xf32> to vector<16x8x16x16xf32>
    %130 = vector.shape_cast %73 : vector<16x8x16xf32> to vector<16x8x1x16xf32>
    %131 = vector.broadcast %130 : vector<16x8x1x16xf32> to vector<16x8x16x16xf32>
    %132 = arith.mulf %129, %131 : vector<16x8x16x16xf32>
    %cst_59 = arith.constant dense<0.000000e+00> : vector<16x8x16xf32>
    %133 = vector.multi_reduction <add>, %132, %cst_59 [3] : vector<16x8x16x16xf32> to vector<16x8x16xf32>
    %134 = vector.shape_cast %76 : vector<8x16x16xf32> to vector<1x8x16x16xf32>
    %135 = vector.broadcast %134 : vector<1x8x16x16xf32> to vector<16x8x16x16xf32>
    %136 = arith.mulf %129, %135 : vector<16x8x16x16xf32>
    %cst_60 = arith.constant dense<0.000000e+00> : vector<16x8x16xf32>
    %137 = vector.multi_reduction <add>, %136, %cst_60 [3] : vector<16x8x16x16xf32> to vector<16x8x16xf32>
    %138 = arith.addf %133, %137 : vector<16x8x16xf32>
    %c0_61 = arith.constant 0 : index
    %c0_62 = arith.constant 0 : index
    %139 = vector.load %arg8[%c0_61, %c0_62] : memref<8x1xf32, #tpu.memory_space<vmem>>, vector<8x1xf32>
    %140 = vector.shape_cast %139 : vector<8x1xf32> to vector<1x8x1xf32>
    %141 = vector.broadcast %140 : vector<1x8x1xf32> to vector<16x8x16xf32>
    %142 = arith.addf %138, %141 : vector<16x8x16xf32>
    %143 = vector.extract_strided_slice %142 {offsets = [0, 0, 0], sizes = [1, 8, 16], strides = [1, 1, 1]} : vector<16x8x16xf32> to vector<1x8x16xf32>
    %144 = vector.shape_cast %143 : vector<1x8x16xf32> to vector<8x16xf32>
    %c0_63 = arith.constant 0 : index
    %c0_64 = arith.constant 0 : index
    %145 = vector.load %arg9[%c0_63, %c0_64] : memref<8x256xf32, #tpu.memory_space<vmem>>, vector<8x16xf32>
    tpu.vector_store %arg9[%c0_63, %c0_64], %144 {strides = array<i32>} : memref<8x256xf32, #tpu.memory_space<vmem>>, vector<8x16xf32>,
    %146 = vector.extract_strided_slice %142 {offsets = [1, 0, 0], sizes = [1, 8, 16], strides = [1, 1, 1]} : vector<16x8x16xf32> to vector<1x8x16xf32>
    %147 = vector.shape_cast %146 : vector<1x8x16xf32> to vector<8x16xf32>
    %c0_65 = arith.constant 0 : index
    %c16 = arith.constant 16 : index
    %148 = vector.load %arg9[%c0_65, %c16] : memref<8x256xf32, #tpu.memory_space<vmem>>, vector<8x16xf32>
    tpu.vector_store %arg9[%c0_65, %c16], %147 {strides = array<i32>} : memref<8x256xf32, #tpu.memory_space<vmem>>, vector<8x16xf32>,
    %149 = vector.extract_strided_slice %142 {offsets = [2, 0, 0], sizes = [1, 8, 16], strides = [1, 1, 1]} : vector<16x8x16xf32> to vector<1x8x16xf32>
    %150 = vector.shape_cast %149 : vector<1x8x16xf32> to vector<8x16xf32>
    %c0_66 = arith.constant 0 : index
    %c32 = arith.constant 32 : index
    %151 = vector.load %arg9[%c0_66, %c32] : memref<8x256xf32, #tpu.memory_space<vmem>>, vector<8x16xf32>
    tpu.vector_store %arg9[%c0_66, %c32], %150 {strides = array<i32>} : memref<8x256xf32, #tpu.memory_space<vmem>>, vector<8x16xf32>,
    %152 = vector.extract_strided_slice %142 {offsets = [3, 0, 0], sizes = [1, 8, 16], strides = [1, 1, 1]} : vector<16x8x16xf32> to vector<1x8x16xf32>
    %153 = vector.shape_cast %152 : vector<1x8x16xf32> to vector<8x16xf32>
    %c0_67 = arith.constant 0 : index
    %c48 = arith.constant 48 : index
    %154 = vector.load %arg9[%c0_67, %c48] : memref<8x256xf32, #tpu.memory_space<vmem>>, vector<8x16xf32>
    tpu.vector_store %arg9[%c0_67, %c48], %153 {strides = array<i32>} : memref<8x256xf32, #tpu.memory_space<vmem>>, vector<8x16xf32>,
    %155 = vector.extract_strided_slice %142 {offsets = [4, 0, 0], sizes = [1, 8, 16], strides = [1, 1, 1]} : vector<16x8x16xf32> to vector<1x8x16xf32>
    %156 = vector.shape_cast %155 : vector<1x8x16xf32> to vector<8x16xf32>
    %c0_68 = arith.constant 0 : index
    %c64 = arith.constant 64 : index
    %157 = vector.load %arg9[%c0_68, %c64] : memref<8x256xf32, #tpu.memory_space<vmem>>, vector<8x16xf32>
    tpu.vector_store %arg9[%c0_68, %c64], %156 {strides = array<i32>} : memref<8x256xf32, #tpu.memory_space<vmem>>, vector<8x16xf32>,
    %158 = vector.extract_strided_slice %142 {offsets = [5, 0, 0], sizes = [1, 8, 16], strides = [1, 1, 1]} : vector<16x8x16xf32> to vector<1x8x16xf32>
    %159 = vector.shape_cast %158 : vector<1x8x16xf32> to vector<8x16xf32>
    %c0_69 = arith.constant 0 : index
    %c80 = arith.constant 80 : index
    %160 = vector.load %arg9[%c0_69, %c80] : memref<8x256xf32, #tpu.memory_space<vmem>>, vector<8x16xf32>
    tpu.vector_store %arg9[%c0_69, %c80], %159 {strides = array<i32>} : memref<8x256xf32, #tpu.memory_space<vmem>>, vector<8x16xf32>,
    %161 = vector.extract_strided_slice %142 {offsets = [6, 0, 0], sizes = [1, 8, 16], strides = [1, 1, 1]} : vector<16x8x16xf32> to vector<1x8x16xf32>
    %162 = vector.shape_cast %161 : vector<1x8x16xf32> to vector<8x16xf32>
    %c0_70 = arith.constant 0 : index
    %c96 = arith.constant 96 : index
    %163 = vector.load %arg9[%c0_70, %c96] : memref<8x256xf32, #tpu.memory_space<vmem>>, vector<8x16xf32>
    tpu.vector_store %arg9[%c0_70, %c96], %162 {strides = array<i32>} : memref<8x256xf32, #tpu.memory_space<vmem>>, vector<8x16xf32>,
    %164 = vector.extract_strided_slice %142 {offsets = [7, 0, 0], sizes = [1, 8, 16], strides = [1, 1, 1]} : vector<16x8x16xf32> to vector<1x8x16xf32>
    %165 = vector.shape_cast %164 : vector<1x8x16xf32> to vector<8x16xf32>
    %c0_71 = arith.constant 0 : index
    %c112 = arith.constant 112 : index
    %166 = vector.load %arg9[%c0_71, %c112] : memref<8x256xf32, #tpu.memory_space<vmem>>, vector<8x16xf32>
    tpu.vector_store %arg9[%c0_71, %c112], %165 {strides = array<i32>} : memref<8x256xf32, #tpu.memory_space<vmem>>, vector<8x16xf32>,
    %167 = vector.extract_strided_slice %142 {offsets = [8, 0, 0], sizes = [1, 8, 16], strides = [1, 1, 1]} : vector<16x8x16xf32> to vector<1x8x16xf32>
    %168 = vector.shape_cast %167 : vector<1x8x16xf32> to vector<8x16xf32>
    %c0_72 = arith.constant 0 : index
    %c128 = arith.constant 128 : index
    %169 = vector.load %arg9[%c0_72, %c128] : memref<8x256xf32, #tpu.memory_space<vmem>>, vector<8x16xf32>
    tpu.vector_store %arg9[%c0_72, %c128], %168 {strides = array<i32>} : memref<8x256xf32, #tpu.memory_space<vmem>>, vector<8x16xf32>,
    %170 = vector.extract_strided_slice %142 {offsets = [9, 0, 0], sizes = [1, 8, 16], strides = [1, 1, 1]} : vector<16x8x16xf32> to vector<1x8x16xf32>
    %171 = vector.shape_cast %170 : vector<1x8x16xf32> to vector<8x16xf32>
    %c0_73 = arith.constant 0 : index
    %c144 = arith.constant 144 : index
    %172 = vector.load %arg9[%c0_73, %c144] : memref<8x256xf32, #tpu.memory_space<vmem>>, vector<8x16xf32>
    tpu.vector_store %arg9[%c0_73, %c144], %171 {strides = array<i32>} : memref<8x256xf32, #tpu.memory_space<vmem>>, vector<8x16xf32>,
    %173 = vector.extract_strided_slice %142 {offsets = [10, 0, 0], sizes = [1, 8, 16], strides = [1, 1, 1]} : vector<16x8x16xf32> to vector<1x8x16xf32>
    %174 = vector.shape_cast %173 : vector<1x8x16xf32> to vector<8x16xf32>
    %c0_74 = arith.constant 0 : index
    %c160 = arith.constant 160 : index
    %175 = vector.load %arg9[%c0_74, %c160] : memref<8x256xf32, #tpu.memory_space<vmem>>, vector<8x16xf32>
    tpu.vector_store %arg9[%c0_74, %c160], %174 {strides = array<i32>} : memref<8x256xf32, #tpu.memory_space<vmem>>, vector<8x16xf32>,
    %176 = vector.extract_strided_slice %142 {offsets = [11, 0, 0], sizes = [1, 8, 16], strides = [1, 1, 1]} : vector<16x8x16xf32> to vector<1x8x16xf32>
    %177 = vector.shape_cast %176 : vector<1x8x16xf32> to vector<8x16xf32>
    %c0_75 = arith.constant 0 : index
    %c176 = arith.constant 176 : index
    %178 = vector.load %arg9[%c0_75, %c176] : memref<8x256xf32, #tpu.memory_space<vmem>>, vector<8x16xf32>
    tpu.vector_store %arg9[%c0_75, %c176], %177 {strides = array<i32>} : memref<8x256xf32, #tpu.memory_space<vmem>>, vector<8x16xf32>,
    %179 = vector.extract_strided_slice %142 {offsets = [12, 0, 0], sizes = [1, 8, 16], strides = [1, 1, 1]} : vector<16x8x16xf32> to vector<1x8x16xf32>
    %180 = vector.shape_cast %179 : vector<1x8x16xf32> to vector<8x16xf32>
    %c0_76 = arith.constant 0 : index
    %c192 = arith.constant 192 : index
    %181 = vector.load %arg9[%c0_76, %c192] : memref<8x256xf32, #tpu.memory_space<vmem>>, vector<8x16xf32>
    tpu.vector_store %arg9[%c0_76, %c192], %180 {strides = array<i32>} : memref<8x256xf32, #tpu.memory_space<vmem>>, vector<8x16xf32>,
    %182 = vector.extract_strided_slice %142 {offsets = [13, 0, 0], sizes = [1, 8, 16], strides = [1, 1, 1]} : vector<16x8x16xf32> to vector<1x8x16xf32>
    %183 = vector.shape_cast %182 : vector<1x8x16xf32> to vector<8x16xf32>
    %c0_77 = arith.constant 0 : index
    %c208 = arith.constant 208 : index
    %184 = vector.load %arg9[%c0_77, %c208] : memref<8x256xf32, #tpu.memory_space<vmem>>, vector<8x16xf32>
    tpu.vector_store %arg9[%c0_77, %c208], %183 {strides = array<i32>} : memref<8x256xf32, #tpu.memory_space<vmem>>, vector<8x16xf32>,
    %185 = vector.extract_strided_slice %142 {offsets = [14, 0, 0], sizes = [1, 8, 16], strides = [1, 1, 1]} : vector<16x8x16xf32> to vector<1x8x16xf32>
    %186 = vector.shape_cast %185 : vector<1x8x16xf32> to vector<8x16xf32>
    %c0_78 = arith.constant 0 : index
    %c224 = arith.constant 224 : index
    %187 = vector.load %arg9[%c0_78, %c224] : memref<8x256xf32, #tpu.memory_space<vmem>>, vector<8x16xf32>
    tpu.vector_store %arg9[%c0_78, %c224], %186 {strides = array<i32>} : memref<8x256xf32, #tpu.memory_space<vmem>>, vector<8x16xf32>,
    %188 = vector.extract_strided_slice %142 {offsets = [15, 0, 0], sizes = [1, 8, 16], strides = [1, 1, 1]} : vector<16x8x16xf32> to vector<1x8x16xf32>
    %189 = vector.shape_cast %188 : vector<1x8x16xf32> to vector<8x16xf32>
    %c0_79 = arith.constant 0 : index
    %c240 = arith.constant 240 : index
    %190 = vector.load %arg9[%c0_79, %c240] : memref<8x256xf32, #tpu.memory_space<vmem>>, vector<8x16xf32>
    tpu.vector_store %arg9[%c0_79, %c240], %189 {strides = array<i32>} : memref<8x256xf32, #tpu.memory_space<vmem>>, vector<8x16xf32>,
    return
  }
  func.func @transform_0(%arg0: i32) -> (i32, i32) {
    %c0_i32 = arith.constant 0 : i32
    %c0_i32_0 = arith.constant 0 : i32
    return %c0_i32, %arg0 : i32, i32
  }
  func.func @transform_1(%arg0: i32) -> (i32, i32) {
    %c0_i32 = arith.constant 0 : i32
    %c0_i32_0 = arith.constant 0 : i32
    %c0_i32_1 = arith.constant 0 : i32
    return %c0_i32, %c0_i32_0 : i32, i32
  }
  func.func @transform_2(%arg0: i32) -> (i32, i32) {
    %c0_i32 = arith.constant 0 : i32
    %c0_i32_0 = arith.constant 0 : i32
    %c0_i32_1 = arith.constant 0 : i32
    return %c0_i32, %c0_i32_0 : i32, i32
  }
  func.func @transform_3(%arg0: i32) -> (i32, i32, i32) {
    %c0_i32 = arith.constant 0 : i32
    %c0_i32_0 = arith.constant 0 : i32
    %c0_i32_1 = arith.constant 0 : i32
    %c0_i32_2 = arith.constant 0 : i32
    return %c0_i32, %c0_i32_0, %c0_i32_1 : i32, i32, i32
  }
  func.func @transform_4(%arg0: i32) -> (i32, i32, i32) {
    %c0_i32 = arith.constant 0 : i32
    %c0_i32_0 = arith.constant 0 : i32
    %c0_i32_1 = arith.constant 0 : i32
    %c0_i32_2 = arith.constant 0 : i32
    return %c0_i32, %c0_i32_0, %c0_i32_1 : i32, i32, i32
  }
  func.func @transform_5(%arg0: i32) -> (i32, i32, i32) {
    %c0_i32 = arith.constant 0 : i32
    %c0_i32_0 = arith.constant 0 : i32
    %c0_i32_1 = arith.constant 0 : i32
    %c0_i32_2 = arith.constant 0 : i32
    return %c0_i32, %c0_i32_0, %c0_i32_1 : i32, i32, i32
  }
  func.func @transform_6(%arg0: i32) -> (i32, i32, i32, i32) {
    %c0_i32 = arith.constant 0 : i32
    %c0_i32_0 = arith.constant 0 : i32
    %c0_i32_1 = arith.constant 0 : i32
    %c0_i32_2 = arith.constant 0 : i32
    %c0_i32_3 = arith.constant 0 : i32
    return %c0_i32, %c0_i32_0, %c0_i32_1, %c0_i32_2 : i32, i32, i32, i32
  }
  func.func @transform_7(%arg0: i32) -> (i32, i32) {
    %c0_i32 = arith.constant 0 : i32
    %c0_i32_0 = arith.constant 0 : i32
    %c0_i32_1 = arith.constant 0 : i32
    return %c0_i32, %c0_i32_0 : i32, i32
  }
  func.func @transform_8(%arg0: i32) -> (i32, i32) {
    %c0_i32 = arith.constant 0 : i32
    %c0_i32_0 = arith.constant 0 : i32
    return %c0_i32, %arg0 : i32, i32
  }
}

</mosaic_0001>

<llo_original>
// kernel: tpu_custom_call.1
$region0: #{tpu_custom_call.1}
  #allocation0 [shape = 'u32[]', space=smem, size = 0x4, offset = 0x4, fixed_abs, tag = 'smem constant byte address 0x4 - core index']
  #allocation1 [shape = 'u32[144,128]{1,0:T(1,128)}', space=vmem, size = 0x12000, scoped, tag = 'internal scratch']
  #allocation2 [shape = 'f32[16,16,16]{2,1,0:T(8,128)}', space=vmem, size = 0x20000, scoped, tag = 'scratch operand']
  %s0 = inlined_call_operand.hbm [shape: f32[8,512], index: 0, kind: input, shape index: {}]
  %s1 = inlined_call_operand.vmem [shape: f32[16,8], index: 1, kind: input, shape index: {}]
  %s2 = inlined_call_operand.vmem [shape: f32[16,1], index: 2, kind: input, shape index: {}]
  %s3 = inlined_call_operand.hbm [shape: f32[4,16,16], index: 3, kind: input, shape index: {}]
  %s4 = inlined_call_operand.vmem [shape: f32[4,16,16], index: 4, kind: input, shape index: {}]
  %s5 = inlined_call_operand.hbm [shape: f32[8,16,16], index: 5, kind: input, shape index: {}]
  %s6 = inlined_call_operand.vmem [shape: f32[3,2,1,1], index: 6, kind: input, shape index: {}]
  %s7 = inlined_call_operand.vmem [shape: f32[8,1], index: 7, kind: input, shape index: {}]
  %s8 = inlined_call_operand.hbm [shape: f32[8,512], index: 8, kind: output, shape index: {}]
  %s9 = sld [smem:[#allocation0]]
  $region77: #{tpu_custom_call.1} parent=0
    _
  %s11 = ssub.s32 1, %s9
  %s12 = scalar_select 0, %s11, %s9
  $region1: #{tpu_custom_call.1} parent=0
    #allocation3 [shape = 'u8[16384]{0}', space=vmem, size = 0x4000, scoped, tag = 'input window, operand 0']
    #allocation4 [shape = 's32[2]{0}', space=sflag, size = 0x8, scoped, tag = 'scoped memory for tpu_custom_call.1']
    #allocation5 [shape = 's32[2]{0}', space=sflag, size = 0x8, scoped, tag = 'scoped memory for tpu_custom_call.1']
    #allocation6 [shape = 'u8[32768]{0}', space=vmem, size = 0x8000, scoped, tag = 'input window, operand 3, single buffered']
    #allocation7 [shape = 's32[1]{0}', space=sflag, size = 0x4, scoped, tag = 'scoped memory for tpu_custom_call.1']
    #allocation8 [shape = 'u8[65536]{0}', space=vmem, size = 0x10000, scoped, tag = 'input window, operand 5, single buffered']
    #allocation9 [shape = 'u8[16384]{0}', space=vmem, size = 0x4000, scoped, tag = 'output window, operand 0']
    %13 = vsyncpa [#allocation4], 0
    %s14 = scalar_lea.sflag [#allocation4], 1
    %15 = vsyncpa %s14, 0
    %16 = vsyncpa [#allocation7], 0
    %17 = vsyncpa [#allocation5], 0
    %s18 = scalar_lea.sflag [#allocation5], 1
    %19 = vsyncpa %s18, 0
    loop: start=0, step=1, limit=4
    $region2: #{tpu_custom_call.1} parent=1 // loop_pre_header
      _
    $region3: #{tpu_custom_call.1} parent=1 // loop_header
      %s21 = sphi 0, %s25
      %p22 = scmp.ge.s32.totalorder %s21, 4
      %s31 = sphi 0, %s33
      %s34 = sphi 0, %s31
      %s35 = sphi 0, %s34
      %s51 = sphi 0, %s35
      %s55 = sphi 0, %s55
      %s57 = sphi 0, %s55
      %s58 = sphi 0, %s57
      %s72 = sphi 0, %s58
      %s76 = sphi 0, %s76
      %s78 = sphi 0, %s76
      %s79 = sphi 0, %s78
      %s93 = sphi 0, %s79
      %s97 = sphi 0, %s97
      %s99 = sphi 0, %s97
      %s100 = sphi 0, %s99
      %s114 = sphi 0, %s100
      %s118 = sphi 0, %s118
      %s120 = sphi 0, %s118
      %s121 = sphi 0, %s120
      %s135 = sphi 0, %s121
      %s139 = sphi 0, %s139
      %s141 = sphi 0, %s139
      %s142 = sphi 0, %s141
      %s156 = sphi 0, %s142
      %s160 = sphi 0, %s160
      %s162 = sphi 0, %s160
      %s163 = sphi 0, %s162
      %s177 = sphi 0, %s163
      %s181 = sphi 0, %s181
      %s183 = sphi 0, %s181
      %s184 = sphi 0, %s183
      %s198 = sphi 0, %s184
      %s204 = sphi 0, %s206
      %s207 = sphi 0, %s204
      %s208 = sphi 0, %s207
      %s224 = sphi 0, %s208
    $region4: #{tpu_custom_call.1} parent=1 // loop_header_branch
      %24 = sbr.rel (%p22) target = $region8
    $region5: #{tpu_custom_call.1} parent=1 // loop_body
      %s26 = ssub.s32 %s21, 1
      %s27 = ssub.s32 %s21, 2
      %s28 = sadd.s32 %s21, 1
      %s29 = ssub.s32 %s21, %s28
      %p30 = scmp.eq.s32.totalorder %s29, 0
      %s32 = sadd.s32 %s31, 1
      %s33 = scalar_select %p30, %s31, %s32
      %p36 = pneg %p30
      %p37 = scmp.eq.s32.totalorder %s21, 1
      %p38 = por %p36, %p37
      %p39 = scmp.ne.s32.totalorder %s31, %s34
      %p40 = scmp.eq.s32.totalorder %s21, 0
      %p41 = por %p39, %p40
      %p42 = scmp.ne.s32.totalorder %s31, %s34
      %p43 = scmp.eq.s32.totalorder %s26, 1
      %p44 = por %p42, %p43
      %p45 = scmp.ne.s32.totalorder %s34, %s35
      %p46 = scmp.eq.s32.totalorder %s26, 0
      %p47 = por %p45, %p46
      %p48 = scmp.ne.s32.totalorder %s34, %s35
      %p49 = scmp.eq.s32.totalorder %s27, 1
      %p50 = por %p48, %p49
      %p52 = scmp.ne.s32.totalorder %s35, %s51
      %p53 = scmp.eq.s32.totalorder %s27, 0
      %p54 = por %p52, %p53
      %s56 = sadd.s32 %s55, 1
      %p59 = scmp.eq.s32.totalorder %s21, 1
      %p60 = scmp.ne.s32.totalorder %s55, %s57
      %p61 = scmp.eq.s32.totalorder %s21, 0
      %p62 = por %p60, %p61
      %p63 = scmp.ne.s32.totalorder %s55, %s57
      %p64 = scmp.eq.s32.totalorder %s26, 1
      %p65 = por %p63, %p64
      %p66 = scmp.ne.s32.totalorder %s57, %s58
      %p67 = scmp.eq.s32.totalorder %s26, 0
      %p68 = por %p66, %p67
      %p69 = scmp.ne.s32.totalorder %s57, %s58
      %p70 = scmp.eq.s32.totalorder %s27, 1
      %p71 = por %p69, %p70
      %p73 = scmp.ne.s32.totalorder %s58, %s72
      %p74 = scmp.eq.s32.totalorder %s27, 0
      %p75 = por %p73, %p74
      %s77 = sadd.s32 %s76, 1
      %p80 = scmp.eq.s32.totalorder %s21, 1
      %p81 = scmp.ne.s32.totalorder %s76, %s78
      %p82 = scmp.eq.s32.totalorder %s21, 0
      %p83 = por %p81, %p82
      %p84 = scmp.ne.s32.totalorder %s76, %s78
      %p85 = scmp.eq.s32.totalorder %s26, 1
      %p86 = por %p84, %p85
      %p87 = scmp.ne.s32.totalorder %s78, %s79
      %p88 = scmp.eq.s32.totalorder %s26, 0
      %p89 = por %p87, %p88
      %p90 = scmp.ne.s32.totalorder %s78, %s79
      %p91 = scmp.eq.s32.totalorder %s27, 1
      %p92 = por %p90, %p91
      %p94 = scmp.ne.s32.totalorder %s79, %s93
      %p95 = scmp.eq.s32.totalorder %s27, 0
      %p96 = por %p94, %p95
      %s98 = sadd.s32 %s97, 1
      %p101 = scmp.eq.s32.totalorder %s21, 1
      %p102 = scmp.ne.s32.totalorder %s97, %s99
      %p103 = scmp.eq.s32.totalorder %s21, 0
      %p104 = por %p102, %p103
      %p105 = scmp.ne.s32.totalorder %s97, %s99
      %p106 = scmp.eq.s32.totalorder %s26, 1
      %p107 = por %p105, %p106
      %p108 = scmp.ne.s32.totalorder %s99, %s100
      %p109 = scmp.eq.s32.totalorder %s26, 0
      %p110 = por %p108, %p109
      %p111 = scmp.ne.s32.totalorder %s99, %s100
      %p112 = scmp.eq.s32.totalorder %s27, 1
      %p113 = por %p111, %p112
      %p115 = scmp.ne.s32.totalorder %s100, %s114
      %p116 = scmp.eq.s32.totalorder %s27, 0
      %p117 = por %p115, %p116
      %s119 = sadd.s32 %s118, 1
      %p122 = scmp.eq.s32.totalorder %s21, 1
      %p123 = scmp.ne.s32.totalorder %s118, %s120
      %p124 = scmp.eq.s32.totalorder %s21, 0
      %p125 = por %p123, %p124
      %p126 = scmp.ne.s32.totalorder %s118, %s120
      %p127 = scmp.eq.s32.totalorder %s26, 1
      %p128 = por %p126, %p127
      %p129 = scmp.ne.s32.totalorder %s120, %s121
      %p130 = scmp.eq.s32.totalorder %s26, 0
      %p131 = por %p129, %p130
      %p132 = scmp.ne.s32.totalorder %s120, %s121
      %p133 = scmp.eq.s32.totalorder %s27, 1
      %p134 = por %p132, %p133
      %p136 = scmp.ne.s32.totalorder %s121, %s135
      %p137 = scmp.eq.s32.totalorder %s27, 0
      %p138 = por %p136, %p137
      %s140 = sadd.s32 %s139, 1
      %p143 = scmp.eq.s32.totalorder %s21, 1
      %p144 = scmp.ne.s32.totalorder %s139, %s141
      %p145 = scmp.eq.s32.totalorder %s21, 0
      %p146 = por %p144, %p145
      %p147 = scmp.ne.s32.totalorder %s139, %s141
      %p148 = scmp.eq.s32.totalorder %s26, 1
      %p149 = por %p147, %p148
      %p150 = scmp.ne.s32.totalorder %s141, %s142
      %p151 = scmp.eq.s32.totalorder %s26, 0
      %p152 = por %p150, %p151
      %p153 = scmp.ne.s32.totalorder %s141, %s142
      %p154 = scmp.eq.s32.totalorder %s27, 1
      %p155 = por %p153, %p154
      %p157 = scmp.ne.s32.totalorder %s142, %s156
      %p158 = scmp.eq.s32.totalorder %s27, 0
      %p159 = por %p157, %p158
      %s161 = sadd.s32 %s160, 1
      %p164 = scmp.eq.s32.totalorder %s21, 1
      %p165 = scmp.ne.s32.totalorder %s160, %s162
      %p166 = scmp.eq.s32.totalorder %s21, 0
      %p167 = por %p165, %p166
      %p168 = scmp.ne.s32.totalorder %s160, %s162
      %p169 = scmp.eq.s32.totalorder %s26, 1
      %p170 = por %p168, %p169
      %p171 = scmp.ne.s32.totalorder %s162, %s163
      %p172 = scmp.eq.s32.totalorder %s26, 0
      %p173 = por %p171, %p172
      %p174 = scmp.ne.s32.totalorder %s162, %s163
      %p175 = scmp.eq.s32.totalorder %s27, 1
      %p176 = por %p174, %p175
      %p178 = scmp.ne.s32.totalorder %s163, %s177
      %p179 = scmp.eq.s32.totalorder %s27, 0
      %p180 = por %p178, %p179
      %s182 = sadd.s32 %s181, 1
      %p185 = scmp.eq.s32.totalorder %s21, 1
      %p186 = scmp.ne.s32.totalorder %s181, %s183
      %p187 = scmp.eq.s32.totalorder %s21, 0
      %p188 = por %p186, %p187
      %p189 = scmp.ne.s32.totalorder %s181, %s183
      %p190 = scmp.eq.s32.totalorder %s26, 1
      %p191 = por %p189, %p190
      %p192 = scmp.ne.s32.totalorder %s183, %s184
      %p193 = scmp.eq.s32.totalorder %s26, 0
      %p194 = por %p192, %p193
      %p195 = scmp.ne.s32.totalorder %s183, %s184
      %p196 = scmp.eq.s32.totalorder %s27, 1
      %p197 = por %p195, %p196
      %p199 = scmp.ne.s32.totalorder %s184, %s198
      %p200 = scmp.eq.s32.totalorder %s27, 0
      %p201 = por %p199, %p200
      %s202 = ssub.s32 %s21, %s28
      %p203 = scmp.eq.s32.totalorder %s202, 0
      %s205 = sadd.s32 %s204, 1
      %s206 = scalar_select %p203, %s204, %s205
      %p209 = pneg %p203
      %p210 = scmp.eq.s32.totalorder %s21, 1
      %p211 = por %p209, %p210
      %p212 = scmp.ne.s32.totalorder %s204, %s207
      %p213 = scmp.eq.s32.totalorder %s21, 0
      %p214 = por %p212, %p213
      %p215 = scmp.ne.s32.totalorder %s204, %s207
      %p216 = scmp.eq.s32.totalorder %s26, 1
      %p217 = por %p215, %p216
      %p218 = scmp.ne.s32.totalorder %s207, %s208
      %p219 = scmp.eq.s32.totalorder %s26, 0
      %p220 = por %p218, %p219
      %p221 = scmp.ne.s32.totalorder %s207, %s208
      %p222 = scmp.eq.s32.totalorder %s27, 1
      %p223 = por %p221, %p222
      %p225 = scmp.ne.s32.totalorder %s208, %s224
      %p226 = scmp.eq.s32.totalorder %s27, 0
      %p227 = por %p225, %p226
      %p228 = scmp.le.s32.totalorder 1, %s21
      %p229 = scmp.lt.s32.totalorder %s21, 3
      %p230 = pnand %p228, %p229
      %p231 = pneg %p230
      // Predicated region
      $region9: #{tpu_custom_call.1} parent=5 // pred_check
        _
      $region10: #{tpu_custom_call.1} parent=5 // pred_check_branch
        %233 = sbr.rel (%p230) target = $region12
      $region11: #{tpu_custom_call.1} parent=5 // pred_region
        %s234 = ssub.s32 %s21, 1
        // Predicated region
        $region13: #{tpu_custom_call.1} parent=11 // pred_check
          %p235 = pneg %p68
        $region14: #{tpu_custom_call.1} parent=11 // pred_check_branch
          %237 = sbr.rel (%p235) target = $region16
        $region15: #{tpu_custom_call.1} parent=11 // pred_region
          _
        $region16: #{tpu_custom_call.1} parent=11 // pred_fallthru
          _
        // Predicated region
        $region17: #{tpu_custom_call.1} parent=11 // pred_check
          %p238 = pneg %p89
        $region18: #{tpu_custom_call.1} parent=11 // pred_check_branch
          %240 = sbr.rel (%p238) target = $region20
        $region19: #{tpu_custom_call.1} parent=11 // pred_region
          _
        $region20: #{tpu_custom_call.1} parent=11 // pred_fallthru
          _
        // Predicated region
        $region21: #{tpu_custom_call.1} parent=11 // pred_check
          %p241 = pneg %p110
        $region22: #{tpu_custom_call.1} parent=11 // pred_check_branch
          %243 = sbr.rel (%p241) target = $region24
        $region23: #{tpu_custom_call.1} parent=11 // pred_region
          %s245 = ssub.s32 1024, 1024
          %246 = vsyncadd [#allocation7], %s245
          %s247 = sshll.u32 [#allocation6], 4
          %s248 = int_to_ptr.vmem [resolvable:$true] %s247
          %253 = dma.hbm_to_vmem [thread:$0]  %s3, 1024, %s248, [#allocation7], 128, 128, 8
        $region24: #{tpu_custom_call.1} parent=11 // pred_fallthru
          _
        // Predicated region
        $region25: #{tpu_custom_call.1} parent=11 // pred_check
          %p254 = pneg %p131
        $region26: #{tpu_custom_call.1} parent=11 // pred_check_branch
          %256 = sbr.rel (%p254) target = $region28
        $region27: #{tpu_custom_call.1} parent=11 // pred_region
          _
        $region28: #{tpu_custom_call.1} parent=11 // pred_fallthru
          _
        // Predicated region
        $region29: #{tpu_custom_call.1} parent=11 // pred_check
          %p257 = pneg %p152
        $region30: #{tpu_custom_call.1} parent=11 // pred_check_branch
          %259 = sbr.rel (%p257) target = $region32
        $region31: #{tpu_custom_call.1} parent=11 // pred_region
          %s261 = ssub.s32 2048, 2048
          %262 = vsyncadd [#allocation7], %s261
          %s263 = sshll.u32 [#allocation8], 4
          %s264 = int_to_ptr.vmem [resolvable:$true] %s263
          %269 = dma.hbm_to_vmem [thread:$0]  %s5, 2048, %s264, [#allocation7], 128, 128, 8
        $region32: #{tpu_custom_call.1} parent=11 // pred_fallthru
          _
        // Predicated region
        $region33: #{tpu_custom_call.1} parent=11 // pred_check
          %p270 = pneg %p173
        $region34: #{tpu_custom_call.1} parent=11 // pred_check_branch
          %272 = sbr.rel (%p270) target = $region36
        $region35: #{tpu_custom_call.1} parent=11 // pred_region
          _
        $region36: #{tpu_custom_call.1} parent=11 // pred_fallthru
          _
        // Predicated region
        $region37: #{tpu_custom_call.1} parent=11 // pred_check
          %p273 = pneg %p194
        $region38: #{tpu_custom_call.1} parent=11 // pred_check_branch
          %275 = sbr.rel (%p273) target = $region40
        $region39: #{tpu_custom_call.1} parent=11 // pred_region
          _
        $region40: #{tpu_custom_call.1} parent=11 // pred_fallthru
          _
      $region12: #{tpu_custom_call.1} parent=5 // pred_fallthru
        _
      %p276 = scmp.lt.s32.totalorder %s21, 2
      // Predicated region
      $region41: #{tpu_custom_call.1} parent=5 // pred_check
        %p277 = pneg %p276
      $region42: #{tpu_custom_call.1} parent=5 // pred_check_branch
        %279 = sbr.rel (%p277) target = $region44
      $region43: #{tpu_custom_call.1} parent=5 // pred_region
        // Predicated region
        $region45: #{tpu_custom_call.1} parent=43 // pred_check
          %p280 = pneg %p41
        $region46: #{tpu_custom_call.1} parent=43 // pred_check_branch
          %282 = sbr.rel (%p280) target = $region48
        $region47: #{tpu_custom_call.1} parent=43 // pred_region
          %s283 = sand.u32 %s31, 1
          %s284 = scalar_lea.sflag [#allocation4], %s283
          %s285 = sand.u32 %s31, 1
          %s286 = smul.addr %s285, 16
          %s287 = scalar_lea.vmem [#allocation3], %s286
          %s288 = smul.u32 2, %s21
          %s290 = ssub.s32 256, 256
          %291 = vsyncadd %s284, %s290
          %s292 = smul.addr %s288, 128
          %s293 = scalar_lea.hbm %s0, %s292
          %s295 = sshll.u32 %s287, 4
          %s296 = int_to_ptr.vmem [resolvable:$true] %s295
          %298 = dma.hbm_to_vmem [thread:$0]  %s293, 256, %s296, %s284
        $region48: #{tpu_custom_call.1} parent=43 // pred_fallthru
          _
      $region44: #{tpu_custom_call.1} parent=5 // pred_fallthru
        _
      %p299 = scmp.le.s32.totalorder 1, %s21
      %p300 = scmp.lt.s32.totalorder %s21, 3
      %p301 = pnand %p299, %p300
      %p302 = pneg %p301
      // Predicated region
      $region49: #{tpu_custom_call.1} parent=5 // pred_check
        _
      $region50: #{tpu_custom_call.1} parent=5 // pred_check_branch
        %304 = sbr.rel (%p301) target = $region52
      $region51: #{tpu_custom_call.1} parent=5 // pred_region
        %s305 = ssub.s32 %s21, 1
        %s306 = sand.u32 %s34, 1
        %s307 = scalar_lea.sflag [#allocation4], %s306
        %s308 = sand.u32 %s34, 1
        %s309 = smul.addr %s308, 16
        %s310 = scalar_lea.vmem [#allocation3], %s309
        // Predicated region
        $region53: #{tpu_custom_call.1} parent=51 // pred_check
          %p311 = pneg %p47
        $region54: #{tpu_custom_call.1} parent=51 // pred_check_branch
          %313 = sbr.rel (%p311) target = $region56
        $region55: #{tpu_custom_call.1} parent=51 // pred_region
          %314 = dma.done %s307, 256
        $region56: #{tpu_custom_call.1} parent=51 // pred_fallthru
          _
        // Predicated region
        $region57: #{tpu_custom_call.1} parent=51 // pred_check
          %p315 = pneg %p110
        $region58: #{tpu_custom_call.1} parent=51 // pred_check_branch
          %317 = sbr.rel (%p315) target = $region60
        $region59: #{tpu_custom_call.1} parent=51 // pred_region
          %318 = dma.done [#allocation7], 1024
        $region60: #{tpu_custom_call.1} parent=51 // pred_fallthru
          _
        // Predicated region
        $region61: #{tpu_custom_call.1} parent=51 // pred_check
          %p319 = pneg %p152
        $region62: #{tpu_custom_call.1} parent=51 // pred_check_branch
          %321 = sbr.rel (%p319) target = $region64
        $region63: #{tpu_custom_call.1} parent=51 // pred_region
          %322 = dma.done [#allocation7], 2048
        $region64: #{tpu_custom_call.1} parent=51 // pred_fallthru
          _
        %s323 = sand.u32 %s34, 1
        %s324 = scalar_lea.sflag [#allocation4], %s323
        %s325 = sand.u32 %s34, 1
        %s326 = smul.addr %s325, 16
        %s327 = scalar_lea.vmem [#allocation3], %s326
        %p328 = pneg %p47
        %p329 = pneg %p44
        %p330 = pneg %p68
        %p331 = pneg %p65
        %p332 = pneg %p89
        %p333 = pneg %p86
        %p334 = pneg %p110
        %p335 = pneg %p107
        %p336 = pneg %p131
        %p337 = pneg %p128
        %p338 = pneg %p152
        %p339 = pneg %p149
        %p340 = pneg %p173
        %p341 = pneg %p170
        %p342 = pneg %p194
        %p343 = pneg %p191
        %p344 = pneg %p220
        %p345 = pneg %p217
        %s346 = sand.u32 %s207, 1
        %s347 = scalar_lea.sflag [#allocation5], %s346
        %s348 = sand.u32 %s207, 1
        %s349 = smul.addr %s348, 16
        %s350 = scalar_lea.vmem [#allocation9], %s349
        %s351 = smul.u32 2, %s26
        %s352 = smul.u32 2, %s26
        %v353 = vld [vmem:[%s1] sm:$0xff]
        %v354 = vld [vmem:[%s1 + $0x8] sm:$0xff]
        %v355 = vld [vmem:[%s310] sm:$0xff]
        %v356 = vld [vmem:[%s310 + $0x8] sm:$0xff]
        %v357 = vld [vmem:[%s2] sm:$0xff]
        %v358 = vld [vmem:[%s2 + $0x8] sm:$0xff]
        %360 = vset.pattern.permute.xlu0 0
        %361 = vperm.xlu0 %360, %v357
        %v362 = vpop.permute.xlu0 %361
        %365 = vset.pattern.permute.xlu0 0
        %366 = vperm.xlu0 %365, %v358
        %v367 = vpop.permute.xlu0 %366
        %vm369 = vcmask 64512
        %v371 = vsel %vm369, %v353, 0
        %v374 = vsel %vm369, %v354, 0
        %376 = vmatprep.subr.mxu0 0.0
        %377 = vmatpush1.msra.mxu0 0.0
        %378 = vmatprep.subr.mxu0 0.0
        %379 = vmatpush1.msra.mxu0 0.0
        %380 = vmatprep.subr.mxu0 0.0
        %381 = vmatpush1.msra.mxu0 0.0
        %382 = vmatprep.subr.mxu0 0.0
        %383 = vmatpush1.msra.mxu0 0.0
        %384 = vmatprep.subr.mxu0 0.0
        %385 = vmatpush1.msra.mxu0 0.0
        %386 = vmatprep.subr.mxu0 0.0
        %387 = vmatpush1.msra.mxu0 0.0
        %388 = vmatprep.subr.mxu0 0.0
        %389 = vmatpush1.msra.mxu0 0.0
        %390 = vmatprep.subr.mxu0 0.0
        %391 = vmatpush1.msra.mxu0 0.0
        %392 = vmatprep.subr.mxu0 0.0
        %393 = vmatpush1.msra.mxu0 0.0
        %394 = vmatprep.subr.mxu0 0.0
        %395 = vmatpush1.msra.mxu0 0.0
        %396 = vmatprep.subr.mxu0 0.0
        %397 = vmatpush1.msra.mxu0 0.0
        %398 = vmatprep.subr.mxu0 0.0
        %399 = vmatpush1.msra.mxu0 0.0
        %400 = vmatprep.subr.mxu0 0.0
        %401 = vmatpush1.msra.mxu0 0.0
        %402 = vmatprep.subr.mxu0 0.0
        %403 = vmatpush1.msra.mxu0 0.0
        %404 = vmatprep.subr.mxu0 0.0
        %405 = vmatpush1.msra.mxu0 0.0
        %v406 = vand.u32 %v356, 4294901760
        %407 = vmatprep.subr.mxu0 %v406
        %v408 = vand.u32 %v355, 4294901760
        %409 = vmatpush1.msra.mxu0 %v408
        %410 = vmatprep.subr.mxu0 0.0
        %411 = vmatpush2.msra.mxu0 0.0
        %412 = vmatprep.subr.mxu0 0.0
        %413 = vmatpush2.msra.mxu0 0.0
        %414 = vmatprep.subr.mxu0 0.0
        %415 = vmatpush2.msra.mxu0 0.0
        %416 = vmatprep.subr.mxu0 0.0
        %417 = vmatpush2.msra.mxu0 0.0
        %418 = vmatprep.subr.mxu0 0.0
        %419 = vmatpush2.msra.mxu0 0.0
        %420 = vmatprep.subr.mxu0 0.0
        %421 = vmatpush2.msra.mxu0 0.0
        %422 = vmatprep.subr.mxu0 0.0
        %423 = vmatpush2.msra.mxu0 0.0
        %424 = vmatprep.subr.mxu0 0.0
        %425 = vmatpush2.msra.mxu0 0.0
        %426 = vmatprep.subr.mxu0 0.0
        %427 = vmatpush2.msra.mxu0 0.0
        %428 = vmatprep.subr.mxu0 0.0
        %429 = vmatpush2.msra.mxu0 0.0
        %430 = vmatprep.subr.mxu0 0.0
        %431 = vmatpush2.msra.mxu0 0.0
        %432 = vmatprep.subr.mxu0 0.0
        %433 = vmatpush2.msra.mxu0 0.0
        %434 = vmatprep.subr.mxu0 0.0
        %435 = vmatpush2.msra.mxu0 0.0
        %436 = vmatprep.subr.mxu0 0.0
        %437 = vmatpush2.msra.mxu0 0.0
        %438 = vmatprep.subr.mxu0 0.0
        %439 = vmatpush2.msra.mxu0 0.0
        %440 = vmatprep.subr.mxu0 0.0
        %441 = vmatpush2.msra.mxu0 0.0
        %442 = vmatprep.mubr.f32.mxu0 0.0
        %v443 = vand.u32 %v371, 4294901760
        %v444 = vsub.f32 %v371, %v443
        %v445 = vand.u32 %v444, 4294901760
        %v446 = vsub.f32 %v444, %v445
        %v447 = vand.u32 %v446, 4294901760
        %448 = vmatmul.mubr.f32.gmra.mxu0 %v447
        %v449 = vpop.f32.mrf.mxu0
        %v450 = vadd.f32 %v362, %v449
        %v451 = vpop.f32.mrf.mxu0
        %v452 = vadd.f32 %v362, %v451
        %453 = vmatprep.mubr.f32.mxu0 0.0
        %v454 = vand.u32 %v374, 4294901760
        %v455 = vsub.f32 %v374, %v454
        %v456 = vand.u32 %v455, 4294901760
        %v457 = vsub.f32 %v455, %v456
        %v458 = vand.u32 %v457, 4294901760
        %459 = vmatmul.mubr.f32.gmra.mxu0 %v458
        %v460 = vpop.f32.mrf.mxu0
        %v461 = vadd.f32 %v367, %v460
        %v462 = vpop.f32.mrf.mxu0
        %v463 = vadd.f32 %v367, %v462
        %464 = vdwg.mxu0
        %465 = vmatprep.subr.mxu0 0.0
        %466 = vmatpush1.msra.mxu0 0.0
        %467 = vmatprep.subr.mxu0 0.0
        %468 = vmatpush1.msra.mxu0 0.0
        %469 = vmatprep.subr.mxu0 0.0
        %470 = vmatpush1.msra.mxu0 0.0
        %471 = vmatprep.subr.mxu0 0.0
        %472 = vmatpush1.msra.mxu0 0.0
        %473 = vmatprep.subr.mxu0 0.0
        %474 = vmatpush1.msra.mxu0 0.0
        %475 = vmatprep.subr.mxu0 0.0
        %476 = vmatpush1.msra.mxu0 0.0
        %477 = vmatprep.subr.mxu0 0.0
        %478 = vmatpush1.msra.mxu0 0.0
        %479 = vmatprep.subr.mxu0 0.0
        %480 = vmatpush1.msra.mxu0 0.0
        %481 = vmatprep.subr.mxu0 0.0
        %482 = vmatpush1.msra.mxu0 0.0
        %483 = vmatprep.subr.mxu0 0.0
        %484 = vmatpush1.msra.mxu0 0.0
        %485 = vmatprep.subr.mxu0 0.0
        %486 = vmatpush1.msra.mxu0 0.0
        %487 = vmatprep.subr.mxu0 0.0
        %488 = vmatpush1.msra.mxu0 0.0
        %489 = vmatprep.subr.mxu0 0.0
        %490 = vmatpush1.msra.mxu0 0.0
        %491 = vmatprep.subr.mxu0 0.0
        %492 = vmatpush1.msra.mxu0 0.0
        %493 = vmatprep.subr.mxu0 0.0
        %494 = vmatpush1.msra.mxu0 0.0
        %v495 = vand.u32 %v356, 4294901760
        %v496 = vsub.f32 %v356, %v495
        %v497 = vand.u32 %v496, 4294901760
        %v498 = vsub.f32 %v496, %v497
        %v499 = vand.u32 %v498, 4294901760
        %500 = vmatprep.subr.mxu0 %v499
        %v501 = vand.u32 %v355, 4294901760
        %v502 = vsub.f32 %v355, %v501
        %v503 = vand.u32 %v502, 4294901760
        %v504 = vsub.f32 %v502, %v503
        %v505 = vand.u32 %v504, 4294901760
        %506 = vmatpush1.msra.mxu0 %v505
        %507 = vmatprep.subr.mxu0 0.0
        %508 = vmatpush2.msra.mxu0 0.0
        %509 = vmatprep.subr.mxu0 0.0
        %510 = vmatpush2.msra.mxu0 0.0
        %511 = vmatprep.subr.mxu0 0.0
        %512 = vmatpush2.msra.mxu0 0.0
        %513 = vmatprep.subr.mxu0 0.0
        %514 = vmatpush2.msra.mxu0 0.0
        %515 = vmatprep.subr.mxu0 0.0
        %516 = vmatpush2.msra.mxu0 0.0
        %517 = vmatprep.subr.mxu0 0.0
        %518 = vmatpush2.msra.mxu0 0.0
        %519 = vmatprep.subr.mxu0 0.0
        %520 = vmatpush2.msra.mxu0 0.0
        %521 = vmatprep.subr.mxu0 0.0
        %522 = vmatpush2.msra.mxu0 0.0
        %523 = vmatprep.subr.mxu0 0.0
        %524 = vmatpush2.msra.mxu0 0.0
        %525 = vmatprep.subr.mxu0 0.0
        %526 = vmatpush2.msra.mxu0 0.0
        %527 = vmatprep.subr.mxu0 0.0
        %528 = vmatpush2.msra.mxu0 0.0
        %529 = vmatprep.subr.mxu0 0.0
        %530 = vmatpush2.msra.mxu0 0.0
        %531 = vmatprep.subr.mxu0 0.0
        %532 = vmatpush2.msra.mxu0 0.0
        %533 = vmatprep.subr.mxu0 0.0
        %534 = vmatpush2.msra.mxu0 0.0
        %535 = vmatprep.subr.mxu0 0.0
        %536 = vmatpush2.msra.mxu0 0.0
        %537 = vmatprep.subr.mxu0 0.0
        %538 = vmatpush2.msra.mxu0 0.0
        %539 = vmatprep.mubr.f32.mxu0 0.0
        %v540 = vand.u32 %v371, 4294901760
        %541 = vmatmul.mubr.f32.gmra.mxu0 %v540
        %v542 = vpop.f32.mrf.mxu0
        %v543 = vadd.f32 %v450, %v542
        %v544 = vpop.f32.mrf.mxu0
        %v545 = vadd.f32 %v452, %v544
        %546 = vmatprep.mubr.f32.mxu0 0.0
        %v547 = vand.u32 %v374, 4294901760
        %548 = vmatmul.mubr.f32.gmra.mxu0 %v547
        %v549 = vpop.f32.mrf.mxu0
        %v550 = vadd.f32 %v461, %v549
        %v551 = vpop.f32.mrf.mxu0
        %v552 = vadd.f32 %v463, %v551
        %553 = vdwg.mxu0
        %554 = vmatprep.subr.mxu0 0.0
        %555 = vmatpush1.msra.mxu0 0.0
        %556 = vmatprep.subr.mxu0 0.0
        %557 = vmatpush1.msra.mxu0 0.0
        %558 = vmatprep.subr.mxu0 0.0
        %559 = vmatpush1.msra.mxu0 0.0
        %560 = vmatprep.subr.mxu0 0.0
        %561 = vmatpush1.msra.mxu0 0.0
        %562 = vmatprep.subr.mxu0 0.0
        %563 = vmatpush1.msra.mxu0 0.0
        %564 = vmatprep.subr.mxu0 0.0
        %565 = vmatpush1.msra.mxu0 0.0
        %566 = vmatprep.subr.mxu0 0.0
        %567 = vmatpush1.msra.mxu0 0.0
        %568 = vmatprep.subr.mxu0 0.0
        %569 = vmatpush1.msra.mxu0 0.0
        %570 = vmatprep.subr.mxu0 0.0
        %571 = vmatpush1.msra.mxu0 0.0
        %572 = vmatprep.subr.mxu0 0.0
        %573 = vmatpush1.msra.mxu0 0.0
        %574 = vmatprep.subr.mxu0 0.0
        %575 = vmatpush1.msra.mxu0 0.0
        %576 = vmatprep.subr.mxu0 0.0
        %577 = vmatpush1.msra.mxu0 0.0
        %578 = vmatprep.subr.mxu0 0.0
        %579 = vmatpush1.msra.mxu0 0.0
        %580 = vmatprep.subr.mxu0 0.0
        %581 = vmatpush1.msra.mxu0 0.0
        %582 = vmatprep.subr.mxu0 0.0
        %583 = vmatpush1.msra.mxu0 0.0
        %v584 = vand.u32 %v356, 4294901760
        %v585 = vsub.f32 %v356, %v584
        %586 = vmatprep.subr.mxu0 %v585
        %v587 = vand.u32 %v355, 4294901760
        %v588 = vsub.f32 %v355, %v587
        %589 = vmatpush1.msra.mxu0 %v588
        %590 = vmatprep.subr.mxu0 0.0
        %591 = vmatpush2.msra.mxu0 0.0
        %592 = vmatprep.subr.mxu0 0.0
        %593 = vmatpush2.msra.mxu0 0.0
        %594 = vmatprep.subr.mxu0 0.0
        %595 = vmatpush2.msra.mxu0 0.0
        %596 = vmatprep.subr.mxu0 0.0
        %597 = vmatpush2.msra.mxu0 0.0
        %598 = vmatprep.subr.mxu0 0.0
        %599 = vmatpush2.msra.mxu0 0.0
        %600 = vmatprep.subr.mxu0 0.0
        %601 = vmatpush2.msra.mxu0 0.0
        %602 = vmatprep.subr.mxu0 0.0
        %603 = vmatpush2.msra.mxu0 0.0
        %604 = vmatprep.subr.mxu0 0.0
        %605 = vmatpush2.msra.mxu0 0.0
        %606 = vmatprep.subr.mxu0 0.0
        %607 = vmatpush2.msra.mxu0 0.0
        %608 = vmatprep.subr.mxu0 0.0
        %609 = vmatpush2.msra.mxu0 0.0
        %610 = vmatprep.subr.mxu0 0.0
        %611 = vmatpush2.msra.mxu0 0.0
        %612 = vmatprep.subr.mxu0 0.0
        %613 = vmatpush2.msra.mxu0 0.0
        %614 = vmatprep.subr.mxu0 0.0
        %615 = vmatpush2.msra.mxu0 0.0
        %616 = vmatprep.subr.mxu0 0.0
        %617 = vmatpush2.msra.mxu0 0.0
        %618 = vmatprep.subr.mxu0 0.0
        %619 = vmatpush2.msra.mxu0 0.0
        %620 = vmatprep.subr.mxu0 0.0
        %621 = vmatpush2.msra.mxu0 0.0
        %622 = vmatprep.mubr.f32.mxu0 0.0
        %v623 = vand.u32 %v371, 4294901760
        %v624 = vsub.f32 %v371, %v623
        %625 = vmatmul.mubr.f32.gmra.mxu0 %v624
        %v626 = vpop.f32.mrf.mxu0
        %v627 = vadd.f32 %v543, %v626
        %v628 = vpop.f32.mrf.mxu0
        %v629 = vadd.f32 %v545, %v628
        %630 = vmatprep.mubr.f32.mxu0 0.0
        %v631 = vand.u32 %v374, 4294901760
        %v632 = vsub.f32 %v374, %v631
        %633 = vmatmul.mubr.f32.gmra.mxu0 %v632
        %v634 = vpop.f32.mrf.mxu0
        %v635 = vadd.f32 %v550, %v634
        %v636 = vpop.f32.mrf.mxu0
        %v637 = vadd.f32 %v552, %v636
        %638 = vdwg.mxu0
        %639 = vmatprep.subr.mxu0 0.0
        %640 = vmatpush1.msra.mxu0 0.0
        %641 = vmatprep.subr.mxu0 0.0
        %642 = vmatpush1.msra.mxu0 0.0
        %643 = vmatprep.subr.mxu0 0.0
        %644 = vmatpush1.msra.mxu0 0.0
        %645 = vmatprep.subr.mxu0 0.0
        %646 = vmatpush1.msra.mxu0 0.0
        %647 = vmatprep.subr.mxu0 0.0
        %648 = vmatpush1.msra.mxu0 0.0
        %649 = vmatprep.subr.mxu0 0.0
        %650 = vmatpush1.msra.mxu0 0.0
        %651 = vmatprep.subr.mxu0 0.0
        %652 = vmatpush1.msra.mxu0 0.0
        %653 = vmatprep.subr.mxu0 0.0
        %654 = vmatpush1.msra.mxu0 0.0
        %655 = vmatprep.subr.mxu0 0.0
        %656 = vmatpush1.msra.mxu0 0.0
        %657 = vmatprep.subr.mxu0 0.0
        %658 = vmatpush1.msra.mxu0 0.0
        %659 = vmatprep.subr.mxu0 0.0
        %660 = vmatpush1.msra.mxu0 0.0
        %661 = vmatprep.subr.mxu0 0.0
        %662 = vmatpush1.msra.mxu0 0.0
        %663 = vmatprep.subr.mxu0 0.0
        %664 = vmatpush1.msra.mxu0 0.0
        %665 = vmatprep.subr.mxu0 0.0
        %666 = vmatpush1.msra.mxu0 0.0
        %667 = vmatprep.subr.mxu0 0.0
        %668 = vmatpush1.msra.mxu0 0.0
        %v669 = vand.u32 %v356, 4294901760
        %670 = vmatprep.subr.mxu0 %v669
        %v671 = vand.u32 %v355, 4294901760
        %672 = vmatpush1.msra.mxu0 %v671
        %673 = vmatprep.subr.mxu0 0.0
        %674 = vmatpush2.msra.mxu0 0.0
        %675 = vmatprep.subr.mxu0 0.0
        %676 = vmatpush2.msra.mxu0 0.0
        %677 = vmatprep.subr.mxu0 0.0
        %678 = vmatpush2.msra.mxu0 0.0
        %679 = vmatprep.subr.mxu0 0.0
        %680 = vmatpush2.msra.mxu0 0.0
        %681 = vmatprep.subr.mxu0 0.0
        %682 = vmatpush2.msra.mxu0 0.0
        %683 = vmatprep.subr.mxu0 0.0
        %684 = vmatpush2.msra.mxu0 0.0
        %685 = vmatprep.subr.mxu0 0.0
        %686 = vmatpush2.msra.mxu0 0.0
        %687 = vmatprep.subr.mxu0 0.0
        %688 = vmatpush2.msra.mxu0 0.0
        %689 = vmatprep.subr.mxu0 0.0
        %690 = vmatpush2.msra.mxu0 0.0
        %691 = vmatprep.subr.mxu0 0.0
        %692 = vmatpush2.msra.mxu0 0.0
        %693 = vmatprep.subr.mxu0 0.0
        %694 = vmatpush2.msra.mxu0 0.0
        %695 = vmatprep.subr.mxu0 0.0
        %696 = vmatpush2.msra.mxu0 0.0
        %697 = vmatprep.subr.mxu0 0.0
        %698 = vmatpush2.msra.mxu0 0.0
        %699 = vmatprep.subr.mxu0 0.0
        %700 = vmatpush2.msra.mxu0 0.0
        %701 = vmatprep.subr.mxu0 0.0
        %702 = vmatpush2.msra.mxu0 0.0
        %703 = vmatprep.subr.mxu0 0.0
        %704 = vmatpush2.msra.mxu0 0.0
        %705 = vmatprep.mubr.f32.mxu0 0.0
        %v706 = vand.u32 %v371, 4294901760
        %v707 = vsub.f32 %v371, %v706
        %v708 = vand.u32 %v707, 4294901760
        %709 = vmatmul.mubr.f32.gmra.mxu0 %v708
        %v710 = vpop.f32.mrf.mxu0
        %v711 = vadd.f32 %v627, %v710
        %v712 = vpop.f32.mrf.mxu0
        %v713 = vadd.f32 %v629, %v712
        %714 = vmatprep.mubr.f32.mxu0 0.0
        %v715 = vand.u32 %v374, 4294901760
        %v716 = vsub.f32 %v374, %v715
        %v717 = vand.u32 %v716, 4294901760
        %718 = vmatmul.mubr.f32.gmra.mxu0 %v717
        %v719 = vpop.f32.mrf.mxu0
        %v720 = vadd.f32 %v635, %v719
        %v721 = vpop.f32.mrf.mxu0
        %v722 = vadd.f32 %v637, %v721
        %723 = vdwg.mxu0
        %724 = vmatprep.subr.mxu0 0.0
        %725 = vmatpush1.msra.mxu0 0.0
        %726 = vmatprep.subr.mxu0 0.0
        %727 = vmatpush1.msra.mxu0 0.0
        %728 = vmatprep.subr.mxu0 0.0
        %729 = vmatpush1.msra.mxu0 0.0
        %730 = vmatprep.subr.mxu0 0.0
        %731 = vmatpush1.msra.mxu0 0.0
        %732 = vmatprep.subr.mxu0 0.0
        %733 = vmatpush1.msra.mxu0 0.0
        %734 = vmatprep.subr.mxu0 0.0
        %735 = vmatpush1.msra.mxu0 0.0
        %736 = vmatprep.subr.mxu0 0.0
        %737 = vmatpush1.msra.mxu0 0.0
        %738 = vmatprep.subr.mxu0 0.0
        %739 = vmatpush1.msra.mxu0 0.0
        %740 = vmatprep.subr.mxu0 0.0
        %741 = vmatpush1.msra.mxu0 0.0
        %742 = vmatprep.subr.mxu0 0.0
        %743 = vmatpush1.msra.mxu0 0.0
        %744 = vmatprep.subr.mxu0 0.0
        %745 = vmatpush1.msra.mxu0 0.0
        %746 = vmatprep.subr.mxu0 0.0
        %747 = vmatpush1.msra.mxu0 0.0
        %748 = vmatprep.subr.mxu0 0.0
        %749 = vmatpush1.msra.mxu0 0.0
        %750 = vmatprep.subr.mxu0 0.0
        %751 = vmatpush1.msra.mxu0 0.0
        %752 = vmatprep.subr.mxu0 0.0
        %753 = vmatpush1.msra.mxu0 0.0
        %v754 = vand.u32 %v356, 4294901760
        %v755 = vsub.f32 %v356, %v754
        %v756 = vand.u32 %v755, 4294901760
        %757 = vmatprep.subr.mxu0 %v756
        %v758 = vand.u32 %v355, 4294901760
        %v759 = vsub.f32 %v355, %v758
        %v760 = vand.u32 %v759, 4294901760
        %761 = vmatpush1.msra.mxu0 %v760
        %762 = vmatprep.subr.mxu0 0.0
        %763 = vmatpush2.msra.mxu0 0.0
        %764 = vmatprep.subr.mxu0 0.0
        %765 = vmatpush2.msra.mxu0 0.0
        %766 = vmatprep.subr.mxu0 0.0
        %767 = vmatpush2.msra.mxu0 0.0
        %768 = vmatprep.subr.mxu0 0.0
        %769 = vmatpush2.msra.mxu0 0.0
        %770 = vmatprep.subr.mxu0 0.0
        %771 = vmatpush2.msra.mxu0 0.0
        %772 = vmatprep.subr.mxu0 0.0
        %773 = vmatpush2.msra.mxu0 0.0
        %774 = vmatprep.subr.mxu0 0.0
        %775 = vmatpush2.msra.mxu0 0.0
        %776 = vmatprep.subr.mxu0 0.0
        %777 = vmatpush2.msra.mxu0 0.0
        %778 = vmatprep.subr.mxu0 0.0
        %779 = vmatpush2.msra.mxu0 0.0
        %780 = vmatprep.subr.mxu0 0.0
        %781 = vmatpush2.msra.mxu0 0.0
        %782 = vmatprep.subr.mxu0 0.0
        %783 = vmatpush2.msra.mxu0 0.0
        %784 = vmatprep.subr.mxu0 0.0
        %785 = vmatpush2.msra.mxu0 0.0
        %786 = vmatprep.subr.mxu0 0.0
        %787 = vmatpush2.msra.mxu0 0.0
        %788 = vmatprep.subr.mxu0 0.0
        %789 = vmatpush2.msra.mxu0 0.0
        %790 = vmatprep.subr.mxu0 0.0
        %791 = vmatpush2.msra.mxu0 0.0
        %792 = vmatprep.subr.mxu0 0.0
        %793 = vmatpush2.msra.mxu0 0.0
        %794 = vmatprep.mubr.f32.mxu0 0.0
        %v795 = vand.u32 %v371, 4294901760
        %796 = vmatmul.mubr.f32.gmra.mxu0 %v795
        %v797 = vpop.f32.mrf.mxu0
        %v798 = vadd.f32 %v711, %v797
        %v799 = vpop.f32.mrf.mxu0
        %v800 = vadd.f32 %v713, %v799
        %801 = vmatprep.mubr.f32.mxu0 0.0
        %v802 = vand.u32 %v374, 4294901760
        %803 = vmatmul.mubr.f32.gmra.mxu0 %v802
        %v804 = vpop.f32.mrf.mxu0
        %v805 = vadd.f32 %v720, %v804
        %v806 = vpop.f32.mrf.mxu0
        %v807 = vadd.f32 %v722, %v806
        %808 = vdwg.mxu0
        %809 = vmatprep.subr.mxu0 0.0
        %810 = vmatpush1.msra.mxu0 0.0
        %811 = vmatprep.subr.mxu0 0.0
        %812 = vmatpush1.msra.mxu0 0.0
        %813 = vmatprep.subr.mxu0 0.0
        %814 = vmatpush1.msra.mxu0 0.0
        %815 = vmatprep.subr.mxu0 0.0
        %816 = vmatpush1.msra.mxu0 0.0
        %817 = vmatprep.subr.mxu0 0.0
        %818 = vmatpush1.msra.mxu0 0.0
        %819 = vmatprep.subr.mxu0 0.0
        %820 = vmatpush1.msra.mxu0 0.0
        %821 = vmatprep.subr.mxu0 0.0
        %822 = vmatpush1.msra.mxu0 0.0
        %823 = vmatprep.subr.mxu0 0.0
        %824 = vmatpush1.msra.mxu0 0.0
        %825 = vmatprep.subr.mxu0 0.0
        %826 = vmatpush1.msra.mxu0 0.0
        %827 = vmatprep.subr.mxu0 0.0
        %828 = vmatpush1.msra.mxu0 0.0
        %829 = vmatprep.subr.mxu0 0.0
        %830 = vmatpush1.msra.mxu0 0.0
        %831 = vmatprep.subr.mxu0 0.0
        %832 = vmatpush1.msra.mxu0 0.0
        %833 = vmatprep.subr.mxu0 0.0
        %834 = vmatpush1.msra.mxu0 0.0
        %835 = vmatprep.subr.mxu0 0.0
        %836 = vmatpush1.msra.mxu0 0.0
        %837 = vmatprep.subr.mxu0 0.0
        %838 = vmatpush1.msra.mxu0 0.0
        %v839 = vand.u32 %v356, 4294901760
        %840 = vmatprep.subr.mxu0 %v839
        %v841 = vand.u32 %v355, 4294901760
        %842 = vmatpush1.msra.mxu0 %v841
        %843 = vmatprep.subr.mxu0 0.0
        %844 = vmatpush2.msra.mxu0 0.0
        %845 = vmatprep.subr.mxu0 0.0
        %846 = vmatpush2.msra.mxu0 0.0
        %847 = vmatprep.subr.mxu0 0.0
        %848 = vmatpush2.msra.mxu0 0.0
        %849 = vmatprep.subr.mxu0 0.0
        %850 = vmatpush2.msra.mxu0 0.0
        %851 = vmatprep.subr.mxu0 0.0
        %852 = vmatpush2.msra.mxu0 0.0
        %853 = vmatprep.subr.mxu0 0.0
        %854 = vmatpush2.msra.mxu0 0.0
        %855 = vmatprep.subr.mxu0 0.0
        %856 = vmatpush2.msra.mxu0 0.0
        %857 = vmatprep.subr.mxu0 0.0
        %858 = vmatpush2.msra.mxu0 0.0
        %859 = vmatprep.subr.mxu0 0.0
        %860 = vmatpush2.msra.mxu0 0.0
        %861 = vmatprep.subr.mxu0 0.0
        %862 = vmatpush2.msra.mxu0 0.0
        %863 = vmatprep.subr.mxu0 0.0
        %864 = vmatpush2.msra.mxu0 0.0
        %865 = vmatprep.subr.mxu0 0.0
        %866 = vmatpush2.msra.mxu0 0.0
        %867 = vmatprep.subr.mxu0 0.0
        %868 = vmatpush2.msra.mxu0 0.0
        %869 = vmatprep.subr.mxu0 0.0
        %870 = vmatpush2.msra.mxu0 0.0
        %871 = vmatprep.subr.mxu0 0.0
        %872 = vmatpush2.msra.mxu0 0.0
        %873 = vmatprep.subr.mxu0 0.0
        %874 = vmatpush2.msra.mxu0 0.0
        %875 = vmatprep.mubr.f32.mxu0 0.0
        %v876 = vand.u32 %v371, 4294901760
        %877 = vmatmul.mubr.f32.gmra.mxu0 %v876
        %v878 = vpop.f32.mrf.mxu0
        %v879 = vadd.f32 %v798, %v878
        %v880 = vpop.f32.mrf.mxu0
        %v881 = vadd.f32 %v800, %v880
        %882 = vmatprep.mubr.f32.mxu0 0.0
        %v883 = vand.u32 %v374, 4294901760
        %884 = vmatmul.mubr.f32.gmra.mxu0 %v883
        %v885 = vpop.f32.mrf.mxu0
        %v886 = vadd.f32 %v805, %v885
        %v887 = vpop.f32.mrf.mxu0
        %v888 = vadd.f32 %v807, %v887
        %889 = vdwg.mxu0
        %vm890 = vcmask 130048
        %891 = vst.msk [vmem:[#allocation2] sm:$0xff] %vm890, %v879
        %892 = vst.msk [vmem:[#allocation2 + $0x8] sm:$0xff] %vm890, %v886
        %895 = vrot.lane.b32.xlu0 %v879, 112
        %v896 = vpop.permute.xlu0 %895
        %897 = vrot.lane.b32.xlu0 %v886, 112
        %v898 = vpop.permute.xlu0 %897
        %s901 = scalar_lea.vmem [#allocation2], 16
        %902 = vst.msk [vmem:[%s901] sm:$0xff] %vm890, %v896
        %903 = vst.msk [vmem:[%s901 + $0x8] sm:$0xff] %vm890, %v898
        %904 = vrot.lane.b32.xlu0 %v879, 96
        %v905 = vpop.permute.xlu0 %904
        %906 = vrot.lane.b32.xlu0 %v886, 96
        %v907 = vpop.permute.xlu0 %906
        %s910 = scalar_lea.vmem [#allocation2], 32
        %911 = vst.msk [vmem:[%s910] sm:$0xff] %vm890, %v905
        %912 = vst.msk [vmem:[%s910 + $0x8] sm:$0xff] %vm890, %v907
        %913 = vrot.lane.b32.xlu0 %v879, 80
        %v914 = vpop.permute.xlu0 %913
        %915 = vrot.lane.b32.xlu0 %v886, 80
        %v916 = vpop.permute.xlu0 %915
        %s919 = scalar_lea.vmem [#allocation2], 48
        %920 = vst.msk [vmem:[%s919] sm:$0xff] %vm890, %v914
        %921 = vst.msk [vmem:[%s919 + $0x8] sm:$0xff] %vm890, %v916
        %922 = vrot.lane.b32.xlu0 %v879, 64
        %v923 = vpop.permute.xlu0 %922
        %924 = vrot.lane.b32.xlu0 %v886, 64
        %v925 = vpop.permute.xlu0 %924
        %s928 = scalar_lea.vmem [#allocation2], 64
        %929 = vst.msk [vmem:[%s928] sm:$0xff] %vm890, %v923
        %930 = vst.msk [vmem:[%s928 + $0x8] sm:$0xff] %vm890, %v925
        %931 = vrot.lane.b32.xlu0 %v879, 48
        %v932 = vpop.permute.xlu0 %931
        %933 = vrot.lane.b32.xlu0 %v886, 48
        %v934 = vpop.permute.xlu0 %933
        %s937 = scalar_lea.vmem [#allocation2], 80
        %938 = vst.msk [vmem:[%s937] sm:$0xff] %vm890, %v932
        %939 = vst.msk [vmem:[%s937 + $0x8] sm:$0xff] %vm890, %v934
        %940 = vrot.lane.b32.xlu0 %v879, 32
        %v941 = vpop.permute.xlu0 %940
        %942 = vrot.lane.b32.xlu0 %v886, 32
        %v943 = vpop.permute.xlu0 %942
        %s946 = scalar_lea.vmem [#allocation2], 96
        %947 = vst.msk [vmem:[%s946] sm:$0xff] %vm890, %v941
        %948 = vst.msk [vmem:[%s946 + $0x8] sm:$0xff] %vm890, %v943
        %949 = vrot.lane.b32.xlu0 %v879, 16
        %v950 = vpop.permute.xlu0 %949
        %951 = vrot.lane.b32.xlu0 %v886, 16
        %v952 = vpop.permute.xlu0 %951
        %s955 = scalar_lea.vmem [#allocation2], 112
        %956 = vst.msk [vmem:[%s955] sm:$0xff] %vm890, %v950
        %957 = vst.msk [vmem:[%s955 + $0x8] sm:$0xff] %vm890, %v952
        %s958 = scalar_lea.vmem [#allocation2], 128
        %959 = vst.msk [vmem:[%s958] sm:$0xff] %vm890, %v881
        %960 = vst.msk [vmem:[%s958 + $0x8] sm:$0xff] %vm890, %v888
        %963 = vrot.lane.b32.xlu0 %v881, 112
        %v964 = vpop.permute.xlu0 %963
        %965 = vrot.lane.b32.xlu0 %v888, 112
        %v966 = vpop.permute.xlu0 %965
        %s969 = scalar_lea.vmem [#allocation2], 144
        %970 = vst.msk [vmem:[%s969] sm:$0xff] %vm890, %v964
        %971 = vst.msk [vmem:[%s969 + $0x8] sm:$0xff] %vm890, %v966
        %972 = vrot.lane.b32.xlu0 %v881, 96
        %v973 = vpop.permute.xlu0 %972
        %974 = vrot.lane.b32.xlu0 %v888, 96
        %v975 = vpop.permute.xlu0 %974
        %s978 = scalar_lea.vmem [#allocation2], 160
        %979 = vst.msk [vmem:[%s978] sm:$0xff] %vm890, %v973
        %980 = vst.msk [vmem:[%s978 + $0x8] sm:$0xff] %vm890, %v975
        %981 = vrot.lane.b32.xlu0 %v881, 80
        %v982 = vpop.permute.xlu0 %981
        %983 = vrot.lane.b32.xlu0 %v888, 80
        %v984 = vpop.permute.xlu0 %983
        %s987 = scalar_lea.vmem [#allocation2], 176
        %988 = vst.msk [vmem:[%s987] sm:$0xff] %vm890, %v982
        %989 = vst.msk [vmem:[%s987 + $0x8] sm:$0xff] %vm890, %v984
        %990 = vrot.lane.b32.xlu0 %v881, 64
        %v991 = vpop.permute.xlu0 %990
        %992 = vrot.lane.b32.xlu0 %v888, 64
        %v993 = vpop.permute.xlu0 %992
        %s996 = scalar_lea.vmem [#allocation2], 192
        %997 = vst.msk [vmem:[%s996] sm:$0xff] %vm890, %v991
        %998 = vst.msk [vmem:[%s996 + $0x8] sm:$0xff] %vm890, %v993
        %999 = vrot.lane.b32.xlu0 %v881, 48
        %v1000 = vpop.permute.xlu0 %999
        %1001 = vrot.lane.b32.xlu0 %v888, 48
        %v1002 = vpop.permute.xlu0 %1001
        %s1005 = scalar_lea.vmem [#allocation2], 208
        %1006 = vst.msk [vmem:[%s1005] sm:$0xff] %vm890, %v1000
        %1007 = vst.msk [vmem:[%s1005 + $0x8] sm:$0xff] %vm890, %v1002
        %1008 = vrot.lane.b32.xlu0 %v881, 32
        %v1009 = vpop.permute.xlu0 %1008
        %1010 = vrot.lane.b32.xlu0 %v888, 32
        %v1011 = vpop.permute.xlu0 %1010
        %s1014 = scalar_lea.vmem [#allocation2], 224
        %1015 = vst.msk [vmem:[%s1014] sm:$0xff] %vm890, %v1009
        %1016 = vst.msk [vmem:[%s1014 + $0x8] sm:$0xff] %vm890, %v1011
        %1017 = vrot.lane.b32.xlu0 %v881, 16
        %v1018 = vpop.permute.xlu0 %1017
        %1019 = vrot.lane.b32.xlu0 %v888, 16
        %v1020 = vpop.permute.xlu0 %1019
        %s1023 = scalar_lea.vmem [#allocation2], 240
        %1024 = vst.msk [vmem:[%s1023] sm:$0xff] %vm890, %v1018
        %1025 = vst.msk [vmem:[%s1023 + $0x8] sm:$0xff] %vm890, %v1020
        %v1026 = vld [vmem:[#allocation2] sm:$0xff]
        %v1027 = vld [vmem:[#allocation2 + $0x8] sm:$0xff]
        %v1028 = vld [vmem:[#allocation2 + $0x10] sm:$0xff]
        %v1029 = vld [vmem:[#allocation2 + $0x18] sm:$0xff]
        %v1030 = vld [vmem:[#allocation2 + $0x20] sm:$0xff]
        %v1031 = vld [vmem:[#allocation2 + $0x28] sm:$0xff]
        %v1032 = vld [vmem:[#allocation2 + $0x30] sm:$0xff]
        %v1033 = vld [vmem:[#allocation2 + $0x38] sm:$0xff]
        %v1034 = vld [vmem:[#allocation2 + $0x40] sm:$0xff]
        %v1035 = vld [vmem:[#allocation2 + $0x48] sm:$0xff]
        %v1036 = vld [vmem:[#allocation2 + $0x50] sm:$0xff]
        %v1037 = vld [vmem:[#allocation2 + $0x58] sm:$0xff]
        %v1038 = vld [vmem:[#allocation2 + $0x60] sm:$0xff]
        %v1039 = vld [vmem:[#allocation2 + $0x68] sm:$0xff]
        %v1040 = vld [vmem:[#allocation2 + $0x70] sm:$0xff]
        %v1041 = vld [vmem:[#allocation2 + $0x78] sm:$0xff]
        %v1042 = vld [vmem:[#allocation2 + $0x80] sm:$0xff]
        %v1043 = vld [vmem:[#allocation2 + $0x88] sm:$0xff]
        %v1044 = vld [vmem:[#allocation2 + $0x90] sm:$0xff]
        %v1045 = vld [vmem:[#allocation2 + $0x98] sm:$0xff]
        %v1046 = vld [vmem:[#allocation2 + $0xa0] sm:$0xff]
        %v1047 = vld [vmem:[#allocation2 + $0xa8] sm:$0xff]
        %v1048 = vld [vmem:[#allocation2 + $0xb0] sm:$0xff]
        %v1049 = vld [vmem:[#allocation2 + $0xb8] sm:$0xff]
        %v1050 = vld [vmem:[#allocation2 + $0xc0] sm:$0xff]
        %v1051 = vld [vmem:[#allocation2 + $0xc8] sm:$0xff]
        %v1052 = vld [vmem:[#allocation2 + $0xd0] sm:$0xff]
        %v1053 = vld [vmem:[#allocation2 + $0xd8] sm:$0xff]
        %v1054 = vld [vmem:[#allocation2 + $0xe0] sm:$0xff]
        %v1055 = vld [vmem:[#allocation2 + $0xe8] sm:$0xff]
        %v1056 = vld [vmem:[#allocation2 + $0xf0] sm:$0xff]
        %v1057 = vld [vmem:[#allocation2 + $0xf8] sm:$0xff]
        %v1058 = vld [vmem:[#allocation6] sm:$0xff]
        %v1059 = vld [vmem:[#allocation6 + $0x8] sm:$0xff]
        %v1060 = vld [vmem:[#allocation6 + $0x10] sm:$0xff]
        %v1061 = vld [vmem:[#allocation6 + $0x18] sm:$0xff]
        %v1062 = vld [vmem:[#allocation6 + $0x20] sm:$0xff]
        %v1063 = vld [vmem:[#allocation6 + $0x28] sm:$0xff]
        %v1064 = vld [vmem:[#allocation6 + $0x30] sm:$0xff]
        %v1065 = vld [vmem:[#allocation6 + $0x38] sm:$0xff]
        %v1066 = vld [vmem:[%s4] sm:$0xff]
        %v1067 = vld [vmem:[%s4 + $0x8] sm:$0xff]
        %v1068 = vld [vmem:[%s4 + $0x10] sm:$0xff]
        %v1069 = vld [vmem:[%s4 + $0x18] sm:$0xff]
        %v1070 = vld [vmem:[%s4 + $0x20] sm:$0xff]
        %v1071 = vld [vmem:[%s4 + $0x28] sm:$0xff]
        %v1072 = vld [vmem:[%s4 + $0x30] sm:$0xff]
        %v1073 = vld [vmem:[%s4 + $0x38] sm:$0xff]
        %v1074 = vld [vmem:[#allocation8] sm:$0xff]
        %v1075 = vld [vmem:[#allocation8 + $0x8] sm:$0xff]
        %v1076 = vld [vmem:[#allocation8 + $0x10] sm:$0xff]
        %v1077 = vld [vmem:[#allocation8 + $0x18] sm:$0xff]
        %v1078 = vld [vmem:[#allocation8 + $0x20] sm:$0xff]
        %v1079 = vld [vmem:[#allocation8 + $0x28] sm:$0xff]
        %v1080 = vld [vmem:[#allocation8 + $0x30] sm:$0xff]
        %v1081 = vld [vmem:[#allocation8 + $0x38] sm:$0xff]
        %v1082 = vld [vmem:[#allocation8 + $0x40] sm:$0xff]
        %v1083 = vld [vmem:[#allocation8 + $0x48] sm:$0xff]
        %v1084 = vld [vmem:[#allocation8 + $0x50] sm:$0xff]
        %v1085 = vld [vmem:[#allocation8 + $0x58] sm:$0xff]
        %v1086 = vld [vmem:[#allocation8 + $0x60] sm:$0xff]
        %v1087 = vld [vmem:[#allocation8 + $0x68] sm:$0xff]
        %v1088 = vld [vmem:[#allocation8 + $0x70] sm:$0xff]
        %v1089 = vld [vmem:[#allocation8 + $0x78] sm:$0xff]
        %v1090 = vlaneseq
        %v1091 = vshrl.u32 %v1090, 7
        %v1092 = vsub.s32 0, %v1091
        %v1093 = vrot.slane %v1026, %v1092
        %1095 = vbcast.lane.b32.xlu0 %v1093, 256
        %v1096 = vpop.permute.xlu0 %1095
        %s1098 = sor.u32 256, 8
        %1099 = vbcast.lane.b32.xlu0 %v1093, %s1098
        %v1100 = vpop.permute.xlu0 %1099
        %v1101 = vlaneseq
        %v1102 = vshrl.u32 %v1101, 7
        %v1103 = vsub.s32 1, %v1102
        %v1104 = vrot.slane %v1026, %v1103
        %1106 = vbcast.lane.b32.xlu0 %v1104, 256
        %v1107 = vpop.permute.xlu0 %1106
        %s1109 = sor.u32 256, 8
        %1110 = vbcast.lane.b32.xlu0 %v1104, %s1109
        %v1111 = vpop.permute.xlu0 %1110
        %v1112 = vlaneseq
        %v1113 = vshrl.u32 %v1112, 7
        %v1114 = vsub.s32 2, %v1113
        %v1115 = vrot.slane %v1026, %v1114
        %1117 = vbcast.lane.b32.xlu0 %v1115, 256
        %v1118 = vpop.permute.xlu0 %1117
        %s1120 = sor.u32 256, 8
        %1121 = vbcast.lane.b32.xlu0 %v1115, %s1120
        %v1122 = vpop.permute.xlu0 %1121
        %v1123 = vlaneseq
        %v1124 = vshrl.u32 %v1123, 7
        %v1125 = vsub.s32 3, %v1124
        %v1126 = vrot.slane %v1026, %v1125
        %1128 = vbcast.lane.b32.xlu0 %v1126, 256
        %v1129 = vpop.permute.xlu0 %1128
        %s1131 = sor.u32 256, 8
        %1132 = vbcast.lane.b32.xlu0 %v1126, %s1131
        %v1133 = vpop.permute.xlu0 %1132
        %v1134 = vlaneseq
        %v1135 = vshrl.u32 %v1134, 7
        %v1136 = vsub.s32 0, %v1135
        %v1137 = vrot.slane %v1028, %v1136
        %1139 = vbcast.lane.b32.xlu0 %v1137, 256
        %v1140 = vpop.permute.xlu0 %1139
        %s1142 = sor.u32 256, 8
        %1143 = vbcast.lane.b32.xlu0 %v1137, %s1142
        %v1144 = vpop.permute.xlu0 %1143
        %v1145 = vlaneseq
        %v1146 = vshrl.u32 %v1145, 7
        %v1147 = vsub.s32 1, %v1146
        %v1148 = vrot.slane %v1028, %v1147
        %1150 = vbcast.lane.b32.xlu0 %v1148, 256
        %v1151 = vpop.permute.xlu0 %1150
        %s1153 = sor.u32 256, 8
        %1154 = vbcast.lane.b32.xlu0 %v1148, %s1153
        %v1155 = vpop.permute.xlu0 %1154
        %v1156 = vlaneseq
        %v1157 = vshrl.u32 %v1156, 7
        %v1158 = vsub.s32 2, %v1157
        %v1159 = vrot.slane %v1028, %v1158
        %1161 = vbcast.lane.b32.xlu0 %v1159, 256
        %v1162 = vpop.permute.xlu0 %1161
        %s1164 = sor.u32 256, 8
        %1165 = vbcast.lane.b32.xlu0 %v1159, %s1164
        %v1166 = vpop.permute.xlu0 %1165
        %v1167 = vlaneseq
        %v1168 = vshrl.u32 %v1167, 7
        %v1169 = vsub.s32 3, %v1168
        %v1170 = vrot.slane %v1028, %v1169
        %1172 = vbcast.lane.b32.xlu0 %v1170, 256
        %v1173 = vpop.permute.xlu0 %1172
        %s1175 = sor.u32 256, 8
        %1176 = vbcast.lane.b32.xlu0 %v1170, %s1175
        %v1177 = vpop.permute.xlu0 %1176
        %v1178 = vlaneseq
        %v1179 = vshrl.u32 %v1178, 7
        %v1180 = vsub.s32 0, %v1179
        %v1181 = vrot.slane %v1030, %v1180
        %1183 = vbcast.lane.b32.xlu0 %v1181, 256
        %v1184 = vpop.permute.xlu0 %1183
        %s1186 = sor.u32 256, 8
        %1187 = vbcast.lane.b32.xlu0 %v1181, %s1186
        %v1188 = vpop.permute.xlu0 %1187
        %v1189 = vlaneseq
        %v1190 = vshrl.u32 %v1189, 7
        %v1191 = vsub.s32 1, %v1190
        %v1192 = vrot.slane %v1030, %v1191
        %1194 = vbcast.lane.b32.xlu0 %v1192, 256
        %v1195 = vpop.permute.xlu0 %1194
        %s1197 = sor.u32 256, 8
        %1198 = vbcast.lane.b32.xlu0 %v1192, %s1197
        %v1199 = vpop.permute.xlu0 %1198
        %v1200 = vlaneseq
        %v1201 = vshrl.u32 %v1200, 7
        %v1202 = vsub.s32 2, %v1201
        %v1203 = vrot.slane %v1030, %v1202
        %1205 = vbcast.lane.b32.xlu0 %v1203, 256
        %v1206 = vpop.permute.xlu0 %1205
        %s1208 = sor.u32 256, 8
        %1209 = vbcast.lane.b32.xlu0 %v1203, %s1208
        %v1210 = vpop.permute.xlu0 %1209
        %v1211 = vlaneseq
        %v1212 = vshrl.u32 %v1211, 7
        %v1213 = vsub.s32 3, %v1212
        %v1214 = vrot.slane %v1030, %v1213
        %1216 = vbcast.lane.b32.xlu0 %v1214, 256
        %v1217 = vpop.permute.xlu0 %1216
        %s1219 = sor.u32 256, 8
        %1220 = vbcast.lane.b32.xlu0 %v1214, %s1219
        %v1221 = vpop.permute.xlu0 %1220
        %v1222 = vlaneseq
        %v1223 = vshrl.u32 %v1222, 7
        %v1224 = vsub.s32 0, %v1223
        %v1225 = vrot.slane %v1032, %v1224
        %1227 = vbcast.lane.b32.xlu0 %v1225, 256
        %v1228 = vpop.permute.xlu0 %1227
        %s1230 = sor.u32 256, 8
        %1231 = vbcast.lane.b32.xlu0 %v1225, %s1230
        %v1232 = vpop.permute.xlu0 %1231
        %v1233 = vlaneseq
        %v1234 = vshrl.u32 %v1233, 7
        %v1235 = vsub.s32 1, %v1234
        %v1236 = vrot.slane %v1032, %v1235
        %1238 = vbcast.lane.b32.xlu0 %v1236, 256
        %v1239 = vpop.permute.xlu0 %1238
        %s1241 = sor.u32 256, 8
        %1242 = vbcast.lane.b32.xlu0 %v1236, %s1241
        %v1243 = vpop.permute.xlu0 %1242
        %v1244 = vlaneseq
        %v1245 = vshrl.u32 %v1244, 7
        %v1246 = vsub.s32 2, %v1245
        %v1247 = vrot.slane %v1032, %v1246
        %1249 = vbcast.lane.b32.xlu0 %v1247, 256
        %v1250 = vpop.permute.xlu0 %1249
        %s1252 = sor.u32 256, 8
        %1253 = vbcast.lane.b32.xlu0 %v1247, %s1252
        %v1254 = vpop.permute.xlu0 %1253
        %v1255 = vlaneseq
        %v1256 = vshrl.u32 %v1255, 7
        %v1257 = vsub.s32 3, %v1256
        %v1258 = vrot.slane %v1032, %v1257
        %1260 = vbcast.lane.b32.xlu0 %v1258, 256
        %v1261 = vpop.permute.xlu0 %1260
        %s1263 = sor.u32 256, 8
        %1264 = vbcast.lane.b32.xlu0 %v1258, %s1263
        %v1265 = vpop.permute.xlu0 %1264
        %v1266 = vlaneseq
        %v1267 = vshrl.u32 %v1266, 7
        %v1268 = vsub.s32 0, %v1267
        %v1269 = vrot.slane %v1034, %v1268
        %1271 = vbcast.lane.b32.xlu0 %v1269, 256
        %v1272 = vpop.permute.xlu0 %1271
        %s1274 = sor.u32 256, 8
        %1275 = vbcast.lane.b32.xlu0 %v1269, %s1274
        %v1276 = vpop.permute.xlu0 %1275
        %v1277 = vlaneseq
        %v1278 = vshrl.u32 %v1277, 7
        %v1279 = vsub.s32 1, %v1278
        %v1280 = vrot.slane %v1034, %v1279
        %1282 = vbcast.lane.b32.xlu0 %v1280, 256
        %v1283 = vpop.permute.xlu0 %1282
        %s1285 = sor.u32 256, 8
        %1286 = vbcast.lane.b32.xlu0 %v1280, %s1285
        %v1287 = vpop.permute.xlu0 %1286
        %v1288 = vlaneseq
        %v1289 = vshrl.u32 %v1288, 7
        %v1290 = vsub.s32 2, %v1289
        %v1291 = vrot.slane %v1034, %v1290
        %1293 = vbcast.lane.b32.xlu0 %v1291, 256
        %v1294 = vpop.permute.xlu0 %1293
        %s1296 = sor.u32 256, 8
        %1297 = vbcast.lane.b32.xlu0 %v1291, %s1296
        %v1298 = vpop.permute.xlu0 %1297
        %v1299 = vlaneseq
        %v1300 = vshrl.u32 %v1299, 7
        %v1301 = vsub.s32 3, %v1300
        %v1302 = vrot.slane %v1034, %v1301
        %1304 = vbcast.lane.b32.xlu0 %v1302, 256
        %v1305 = vpop.permute.xlu0 %1304
        %s1307 = sor.u32 256, 8
        %1308 = vbcast.lane.b32.xlu0 %v1302, %s1307
        %v1309 = vpop.permute.xlu0 %1308
        %v1310 = vlaneseq
        %v1311 = vshrl.u32 %v1310, 7
        %v1312 = vsub.s32 0, %v1311
        %v1313 = vrot.slane %v1036, %v1312
        %1315 = vbcast.lane.b32.xlu0 %v1313, 256
        %v1316 = vpop.permute.xlu0 %1315
        %s1318 = sor.u32 256, 8
        %1319 = vbcast.lane.b32.xlu0 %v1313, %s1318
        %v1320 = vpop.permute.xlu0 %1319
        %v1321 = vlaneseq
        %v1322 = vshrl.u32 %v1321, 7
        %v1323 = vsub.s32 1, %v1322
        %v1324 = vrot.slane %v1036, %v1323
        %1326 = vbcast.lane.b32.xlu0 %v1324, 256
        %v1327 = vpop.permute.xlu0 %1326
        %s1329 = sor.u32 256, 8
        %1330 = vbcast.lane.b32.xlu0 %v1324, %s1329
        %v1331 = vpop.permute.xlu0 %1330
        %v1332 = vlaneseq
        %v1333 = vshrl.u32 %v1332, 7
        %v1334 = vsub.s32 2, %v1333
        %v1335 = vrot.slane %v1036, %v1334
        %1337 = vbcast.lane.b32.xlu0 %v1335, 256
        %v1338 = vpop.permute.xlu0 %1337
        %s1340 = sor.u32 256, 8
        %1341 = vbcast.lane.b32.xlu0 %v1335, %s1340
        %v1342 = vpop.permute.xlu0 %1341
        %v1343 = vlaneseq
        %v1344 = vshrl.u32 %v1343, 7
        %v1345 = vsub.s32 3, %v1344
        %v1346 = vrot.slane %v1036, %v1345
        %1348 = vbcast.lane.b32.xlu0 %v1346, 256
        %v1349 = vpop.permute.xlu0 %1348
        %s1351 = sor.u32 256, 8
        %1352 = vbcast.lane.b32.xlu0 %v1346, %s1351
        %v1353 = vpop.permute.xlu0 %1352
        %v1354 = vlaneseq
        %v1355 = vshrl.u32 %v1354, 7
        %v1356 = vsub.s32 0, %v1355
        %v1357 = vrot.slane %v1038, %v1356
        %1359 = vbcast.lane.b32.xlu0 %v1357, 256
        %v1360 = vpop.permute.xlu0 %1359
        %s1362 = sor.u32 256, 8
        %1363 = vbcast.lane.b32.xlu0 %v1357, %s1362
        %v1364 = vpop.permute.xlu0 %1363
        %v1365 = vlaneseq
        %v1366 = vshrl.u32 %v1365, 7
        %v1367 = vsub.s32 1, %v1366
        %v1368 = vrot.slane %v1038, %v1367
        %1370 = vbcast.lane.b32.xlu0 %v1368, 256
        %v1371 = vpop.permute.xlu0 %1370
        %s1373 = sor.u32 256, 8
        %1374 = vbcast.lane.b32.xlu0 %v1368, %s1373
        %v1375 = vpop.permute.xlu0 %1374
        %v1376 = vlaneseq
        %v1377 = vshrl.u32 %v1376, 7
        %v1378 = vsub.s32 2, %v1377
        %v1379 = vrot.slane %v1038, %v1378
        %1381 = vbcast.lane.b32.xlu0 %v1379, 256
        %v1382 = vpop.permute.xlu0 %1381
        %s1384 = sor.u32 256, 8
        %1385 = vbcast.lane.b32.xlu0 %v1379, %s1384
        %v1386 = vpop.permute.xlu0 %1385
        %v1387 = vlaneseq
        %v1388 = vshrl.u32 %v1387, 7
        %v1389 = vsub.s32 3, %v1388
        %v1390 = vrot.slane %v1038, %v1389
        %1392 = vbcast.lane.b32.xlu0 %v1390, 256
        %v1393 = vpop.permute.xlu0 %1392
        %s1395 = sor.u32 256, 8
        %1396 = vbcast.lane.b32.xlu0 %v1390, %s1395
        %v1397 = vpop.permute.xlu0 %1396
        %v1398 = vlaneseq
        %v1399 = vshrl.u32 %v1398, 7
        %v1400 = vsub.s32 0, %v1399
        %v1401 = vrot.slane %v1040, %v1400
        %1403 = vbcast.lane.b32.xlu0 %v1401, 256
        %v1404 = vpop.permute.xlu0 %1403
        %s1406 = sor.u32 256, 8
        %1407 = vbcast.lane.b32.xlu0 %v1401, %s1406
        %v1408 = vpop.permute.xlu0 %1407
        %v1409 = vlaneseq
        %v1410 = vshrl.u32 %v1409, 7
        %v1411 = vsub.s32 1, %v1410
        %v1412 = vrot.slane %v1040, %v1411
        %1414 = vbcast.lane.b32.xlu0 %v1412, 256
        %v1415 = vpop.permute.xlu0 %1414
        %s1417 = sor.u32 256, 8
        %1418 = vbcast.lane.b32.xlu0 %v1412, %s1417
        %v1419 = vpop.permute.xlu0 %1418
        %v1420 = vlaneseq
        %v1421 = vshrl.u32 %v1420, 7
        %v1422 = vsub.s32 2, %v1421
        %v1423 = vrot.slane %v1040, %v1422
        %1425 = vbcast.lane.b32.xlu0 %v1423, 256
        %v1426 = vpop.permute.xlu0 %1425
        %s1428 = sor.u32 256, 8
        %1429 = vbcast.lane.b32.xlu0 %v1423, %s1428
        %v1430 = vpop.permute.xlu0 %1429
        %v1431 = vlaneseq
        %v1432 = vshrl.u32 %v1431, 7
        %v1433 = vsub.s32 3, %v1432
        %v1434 = vrot.slane %v1040, %v1433
        %1436 = vbcast.lane.b32.xlu0 %v1434, 256
        %v1437 = vpop.permute.xlu0 %1436
        %s1439 = sor.u32 256, 8
        %1440 = vbcast.lane.b32.xlu0 %v1434, %s1439
        %v1441 = vpop.permute.xlu0 %1440
        %v1442 = vlaneseq
        %v1443 = vshrl.u32 %v1442, 7
        %v1444 = vsub.s32 0, %v1443
        %v1445 = vrot.slane %v1042, %v1444
        %1447 = vbcast.lane.b32.xlu0 %v1445, 256
        %v1448 = vpop.permute.xlu0 %1447
        %s1450 = sor.u32 256, 8
        %1451 = vbcast.lane.b32.xlu0 %v1445, %s1450
        %v1452 = vpop.permute.xlu0 %1451
        %v1453 = vlaneseq
        %v1454 = vshrl.u32 %v1453, 7
        %v1455 = vsub.s32 1, %v1454
        %v1456 = vrot.slane %v1042, %v1455
        %1458 = vbcast.lane.b32.xlu0 %v1456, 256
        %v1459 = vpop.permute.xlu0 %1458
        %s1461 = sor.u32 256, 8
        %1462 = vbcast.lane.b32.xlu0 %v1456, %s1461
        %v1463 = vpop.permute.xlu0 %1462
        %v1464 = vlaneseq
        %v1465 = vshrl.u32 %v1464, 7
        %v1466 = vsub.s32 2, %v1465
        %v1467 = vrot.slane %v1042, %v1466
        %1469 = vbcast.lane.b32.xlu0 %v1467, 256
        %v1470 = vpop.permute.xlu0 %1469
        %s1472 = sor.u32 256, 8
        %1473 = vbcast.lane.b32.xlu0 %v1467, %s1472
        %v1474 = vpop.permute.xlu0 %1473
        %v1475 = vlaneseq
        %v1476 = vshrl.u32 %v1475, 7
        %v1477 = vsub.s32 3, %v1476
        %v1478 = vrot.slane %v1042, %v1477
        %1480 = vbcast.lane.b32.xlu0 %v1478, 256
        %v1481 = vpop.permute.xlu0 %1480
        %s1483 = sor.u32 256, 8
        %1484 = vbcast.lane.b32.xlu0 %v1478, %s1483
        %v1485 = vpop.permute.xlu0 %1484
        %v1486 = vlaneseq
        %v1487 = vshrl.u32 %v1486, 7
        %v1488 = vsub.s32 0, %v1487
        %v1489 = vrot.slane %v1044, %v1488
        %1491 = vbcast.lane.b32.xlu0 %v1489, 256
        %v1492 = vpop.permute.xlu0 %1491
        %s1494 = sor.u32 256, 8
        %1495 = vbcast.lane.b32.xlu0 %v1489, %s1494
        %v1496 = vpop.permute.xlu0 %1495
        %v1497 = vlaneseq
        %v1498 = vshrl.u32 %v1497, 7
        %v1499 = vsub.s32 1, %v1498
        %v1500 = vrot.slane %v1044, %v1499
        %1502 = vbcast.lane.b32.xlu0 %v1500, 256
        %v1503 = vpop.permute.xlu0 %1502
        %s1505 = sor.u32 256, 8
        %1506 = vbcast.lane.b32.xlu0 %v1500, %s1505
        %v1507 = vpop.permute.xlu0 %1506
        %v1508 = vlaneseq
        %v1509 = vshrl.u32 %v1508, 7
        %v1510 = vsub.s32 2, %v1509
        %v1511 = vrot.slane %v1044, %v1510
        %1513 = vbcast.lane.b32.xlu0 %v1511, 256
        %v1514 = vpop.permute.xlu0 %1513
        %s1516 = sor.u32 256, 8
        %1517 = vbcast.lane.b32.xlu0 %v1511, %s1516
        %v1518 = vpop.permute.xlu0 %1517
        %v1519 = vlaneseq
        %v1520 = vshrl.u32 %v1519, 7
        %v1521 = vsub.s32 3, %v1520
        %v1522 = vrot.slane %v1044, %v1521
        %1524 = vbcast.lane.b32.xlu0 %v1522, 256
        %v1525 = vpop.permute.xlu0 %1524
        %s1527 = sor.u32 256, 8
        %1528 = vbcast.lane.b32.xlu0 %v1522, %s1527
        %v1529 = vpop.permute.xlu0 %1528
        %v1530 = vlaneseq
        %v1531 = vshrl.u32 %v1530, 7
        %v1532 = vsub.s32 0, %v1531
        %v1533 = vrot.slane %v1046, %v1532
        %1535 = vbcast.lane.b32.xlu0 %v1533, 256
        %v1536 = vpop.permute.xlu0 %1535
        %s1538 = sor.u32 256, 8
        %1539 = vbcast.lane.b32.xlu0 %v1533, %s1538
        %v1540 = vpop.permute.xlu0 %1539
        %v1541 = vlaneseq
        %v1542 = vshrl.u32 %v1541, 7
        %v1543 = vsub.s32 1, %v1542
        %v1544 = vrot.slane %v1046, %v1543
        %1546 = vbcast.lane.b32.xlu0 %v1544, 256
        %v1547 = vpop.permute.xlu0 %1546
        %s1549 = sor.u32 256, 8
        %1550 = vbcast.lane.b32.xlu0 %v1544, %s1549
        %v1551 = vpop.permute.xlu0 %1550
        %v1552 = vlaneseq
        %v1553 = vshrl.u32 %v1552, 7
        %v1554 = vsub.s32 2, %v1553
        %v1555 = vrot.slane %v1046, %v1554
        %1557 = vbcast.lane.b32.xlu0 %v1555, 256
        %v1558 = vpop.permute.xlu0 %1557
        %s1560 = sor.u32 256, 8
        %1561 = vbcast.lane.b32.xlu0 %v1555, %s1560
        %v1562 = vpop.permute.xlu0 %1561
        %v1563 = vlaneseq
        %v1564 = vshrl.u32 %v1563, 7
        %v1565 = vsub.s32 3, %v1564
        %v1566 = vrot.slane %v1046, %v1565
        %1568 = vbcast.lane.b32.xlu0 %v1566, 256
        %v1569 = vpop.permute.xlu0 %1568
        %s1571 = sor.u32 256, 8
        %1572 = vbcast.lane.b32.xlu0 %v1566, %s1571
        %v1573 = vpop.permute.xlu0 %1572
        %v1574 = vlaneseq
        %v1575 = vshrl.u32 %v1574, 7
        %v1576 = vsub.s32 0, %v1575
        %v1577 = vrot.slane %v1048, %v1576
        %1579 = vbcast.lane.b32.xlu0 %v1577, 256
        %v1580 = vpop.permute.xlu0 %1579
        %s1582 = sor.u32 256, 8
        %1583 = vbcast.lane.b32.xlu0 %v1577, %s1582
        %v1584 = vpop.permute.xlu0 %1583
        %v1585 = vlaneseq
        %v1586 = vshrl.u32 %v1585, 7
        %v1587 = vsub.s32 1, %v1586
        %v1588 = vrot.slane %v1048, %v1587
        %1590 = vbcast.lane.b32.xlu0 %v1588, 256
        %v1591 = vpop.permute.xlu0 %1590
        %s1593 = sor.u32 256, 8
        %1594 = vbcast.lane.b32.xlu0 %v1588, %s1593
        %v1595 = vpop.permute.xlu0 %1594
        %v1596 = vlaneseq
        %v1597 = vshrl.u32 %v1596, 7
        %v1598 = vsub.s32 2, %v1597
        %v1599 = vrot.slane %v1048, %v1598
        %1601 = vbcast.lane.b32.xlu0 %v1599, 256
        %v1602 = vpop.permute.xlu0 %1601
        %s1604 = sor.u32 256, 8
        %1605 = vbcast.lane.b32.xlu0 %v1599, %s1604
        %v1606 = vpop.permute.xlu0 %1605
        %v1607 = vlaneseq
        %v1608 = vshrl.u32 %v1607, 7
        %v1609 = vsub.s32 3, %v1608
        %v1610 = vrot.slane %v1048, %v1609
        %1612 = vbcast.lane.b32.xlu0 %v1610, 256
        %v1613 = vpop.permute.xlu0 %1612
        %s1615 = sor.u32 256, 8
        %1616 = vbcast.lane.b32.xlu0 %v1610, %s1615
        %v1617 = vpop.permute.xlu0 %1616
        %v1618 = vlaneseq
        %v1619 = vshrl.u32 %v1618, 7
        %v1620 = vsub.s32 0, %v1619
        %v1621 = vrot.slane %v1050, %v1620
        %1623 = vbcast.lane.b32.xlu0 %v1621, 256
        %v1624 = vpop.permute.xlu0 %1623
        %s1626 = sor.u32 256, 8
        %1627 = vbcast.lane.b32.xlu0 %v1621, %s1626
        %v1628 = vpop.permute.xlu0 %1627
        %v1629 = vlaneseq
        %v1630 = vshrl.u32 %v1629, 7
        %v1631 = vsub.s32 1, %v1630
        %v1632 = vrot.slane %v1050, %v1631
        %1634 = vbcast.lane.b32.xlu0 %v1632, 256
        %v1635 = vpop.permute.xlu0 %1634
        %s1637 = sor.u32 256, 8
        %1638 = vbcast.lane.b32.xlu0 %v1632, %s1637
        %v1639 = vpop.permute.xlu0 %1638
        %v1640 = vlaneseq
        %v1641 = vshrl.u32 %v1640, 7
        %v1642 = vsub.s32 2, %v1641
        %v1643 = vrot.slane %v1050, %v1642
        %1645 = vbcast.lane.b32.xlu0 %v1643, 256
        %v1646 = vpop.permute.xlu0 %1645
        %s1648 = sor.u32 256, 8
        %1649 = vbcast.lane.b32.xlu0 %v1643, %s1648
        %v1650 = vpop.permute.xlu0 %1649
        %v1651 = vlaneseq
        %v1652 = vshrl.u32 %v1651, 7
        %v1653 = vsub.s32 3, %v1652
        %v1654 = vrot.slane %v1050, %v1653
        %1656 = vbcast.lane.b32.xlu0 %v1654, 256
        %v1657 = vpop.permute.xlu0 %1656
        %s1659 = sor.u32 256, 8
        %1660 = vbcast.lane.b32.xlu0 %v1654, %s1659
        %v1661 = vpop.permute.xlu0 %1660
        %v1662 = vlaneseq
        %v1663 = vshrl.u32 %v1662, 7
        %v1664 = vsub.s32 0, %v1663
        %v1665 = vrot.slane %v1052, %v1664
        %1667 = vbcast.lane.b32.xlu0 %v1665, 256
        %v1668 = vpop.permute.xlu0 %1667
        %s1670 = sor.u32 256, 8
        %1671 = vbcast.lane.b32.xlu0 %v1665, %s1670
        %v1672 = vpop.permute.xlu0 %1671
        %v1673 = vlaneseq
        %v1674 = vshrl.u32 %v1673, 7
        %v1675 = vsub.s32 1, %v1674
        %v1676 = vrot.slane %v1052, %v1675
        %1678 = vbcast.lane.b32.xlu0 %v1676, 256
        %v1679 = vpop.permute.xlu0 %1678
        %s1681 = sor.u32 256, 8
        %1682 = vbcast.lane.b32.xlu0 %v1676, %s1681
        %v1683 = vpop.permute.xlu0 %1682
        %v1684 = vlaneseq
        %v1685 = vshrl.u32 %v1684, 7
        %v1686 = vsub.s32 2, %v1685
        %v1687 = vrot.slane %v1052, %v1686
        %1689 = vbcast.lane.b32.xlu0 %v1687, 256
        %v1690 = vpop.permute.xlu0 %1689
        %s1692 = sor.u32 256, 8
        %1693 = vbcast.lane.b32.xlu0 %v1687, %s1692
        %v1694 = vpop.permute.xlu0 %1693
        %v1695 = vlaneseq
        %v1696 = vshrl.u32 %v1695, 7
        %v1697 = vsub.s32 3, %v1696
        %v1698 = vrot.slane %v1052, %v1697
        %1700 = vbcast.lane.b32.xlu0 %v1698, 256
        %v1701 = vpop.permute.xlu0 %1700
        %s1703 = sor.u32 256, 8
        %1704 = vbcast.lane.b32.xlu0 %v1698, %s1703
        %v1705 = vpop.permute.xlu0 %1704
        %v1706 = vlaneseq
        %v1707 = vshrl.u32 %v1706, 7
        %v1708 = vsub.s32 0, %v1707
        %v1709 = vrot.slane %v1054, %v1708
        %1711 = vbcast.lane.b32.xlu0 %v1709, 256
        %v1712 = vpop.permute.xlu0 %1711
        %s1714 = sor.u32 256, 8
        %1715 = vbcast.lane.b32.xlu0 %v1709, %s1714
        %v1716 = vpop.permute.xlu0 %1715
        %v1717 = vlaneseq
        %v1718 = vshrl.u32 %v1717, 7
        %v1719 = vsub.s32 1, %v1718
        %v1720 = vrot.slane %v1054, %v1719
        %1722 = vbcast.lane.b32.xlu0 %v1720, 256
        %v1723 = vpop.permute.xlu0 %1722
        %s1725 = sor.u32 256, 8
        %1726 = vbcast.lane.b32.xlu0 %v1720, %s1725
        %v1727 = vpop.permute.xlu0 %1726
        %v1728 = vlaneseq
        %v1729 = vshrl.u32 %v1728, 7
        %v1730 = vsub.s32 2, %v1729
        %v1731 = vrot.slane %v1054, %v1730
        %1733 = vbcast.lane.b32.xlu0 %v1731, 256
        %v1734 = vpop.permute.xlu0 %1733
        %s1736 = sor.u32 256, 8
        %1737 = vbcast.lane.b32.xlu0 %v1731, %s1736
        %v1738 = vpop.permute.xlu0 %1737
        %v1739 = vlaneseq
        %v1740 = vshrl.u32 %v1739, 7
        %v1741 = vsub.s32 3, %v1740
        %v1742 = vrot.slane %v1054, %v1741
        %1744 = vbcast.lane.b32.xlu0 %v1742, 256
        %v1745 = vpop.permute.xlu0 %1744
        %s1747 = sor.u32 256, 8
        %1748 = vbcast.lane.b32.xlu0 %v1742, %s1747
        %v1749 = vpop.permute.xlu0 %1748
        %v1750 = vlaneseq
        %v1751 = vshrl.u32 %v1750, 7
        %v1752 = vsub.s32 0, %v1751
        %v1753 = vrot.slane %v1056, %v1752
        %1755 = vbcast.lane.b32.xlu0 %v1753, 256
        %v1756 = vpop.permute.xlu0 %1755
        %s1758 = sor.u32 256, 8
        %1759 = vbcast.lane.b32.xlu0 %v1753, %s1758
        %v1760 = vpop.permute.xlu0 %1759
        %v1761 = vlaneseq
        %v1762 = vshrl.u32 %v1761, 7
        %v1763 = vsub.s32 1, %v1762
        %v1764 = vrot.slane %v1056, %v1763
        %1766 = vbcast.lane.b32.xlu0 %v1764, 256
        %v1767 = vpop.permute.xlu0 %1766
        %s1769 = sor.u32 256, 8
        %1770 = vbcast.lane.b32.xlu0 %v1764, %s1769
        %v1771 = vpop.permute.xlu0 %1770
        %v1772 = vlaneseq
        %v1773 = vshrl.u32 %v1772, 7
        %v1774 = vsub.s32 2, %v1773
        %v1775 = vrot.slane %v1056, %v1774
        %1777 = vbcast.lane.b32.xlu0 %v1775, 256
        %v1778 = vpop.permute.xlu0 %1777
        %s1780 = sor.u32 256, 8
        %1781 = vbcast.lane.b32.xlu0 %v1775, %s1780
        %v1782 = vpop.permute.xlu0 %1781
        %v1783 = vlaneseq
        %v1784 = vshrl.u32 %v1783, 7
        %v1785 = vsub.s32 3, %v1784
        %v1786 = vrot.slane %v1056, %v1785
        %1788 = vbcast.lane.b32.xlu0 %v1786, 256
        %v1789 = vpop.permute.xlu0 %1788
        %s1791 = sor.u32 256, 8
        %1792 = vbcast.lane.b32.xlu0 %v1786, %s1791
        %v1793 = vpop.permute.xlu0 %1792
        %v1810 = vcombine.high %v1026, %v1026
        %v1812 = vunpack.c.l.s4 1966171168
        %v1813 = vunpack.c.0.s8 %v1812
        %v1814 = vlaneseq
        %v1815 = vshrl.u32 %v1814, 7
        %v1816 = vsub.s32 %v1813, %v1815
        %v1817 = vrot.slane %v1810, %v1816
        %v1818 = vcombine.high %v1817, %v1817
        %v1820 = vunpack.c.l.s4 1966171168
        %v1821 = vunpack.c.0.s8 %v1820
        %v1822 = vlaneseq
        %v1823 = vshrl.u32 %v1822, 7
        %v1824 = vsub.s32 %v1821, %v1823
        %v1825 = vrot.slane %v1817, %v1824
        %v1827 = vunpack.c.l.s4 1966171168
        %v1828 = vunpack.c.0.s8 %v1827
        %v1829 = vlaneseq
        %v1830 = vshrl.u32 %v1829, 7
        %v1831 = vsub.s32 %v1828, %v1830
        %v1832 = vrot.slane %v1818, %v1831
        %v1833 = vcombine.high %v1825, %v1825
        %v1834 = vcombine.high %v1832, %v1832
        %v1835 = vcombine.high %v1028, %v1028
        %v1837 = vunpack.c.l.s4 1966171168
        %v1838 = vunpack.c.0.s8 %v1837
        %v1839 = vlaneseq
        %v1840 = vshrl.u32 %v1839, 7
        %v1841 = vsub.s32 %v1838, %v1840
        %v1842 = vrot.slane %v1835, %v1841
        %v1843 = vcombine.high %v1842, %v1842
        %v1845 = vunpack.c.l.s4 1966171168
        %v1846 = vunpack.c.0.s8 %v1845
        %v1847 = vlaneseq
        %v1848 = vshrl.u32 %v1847, 7
        %v1849 = vsub.s32 %v1846, %v1848
        %v1850 = vrot.slane %v1842, %v1849
        %v1852 = vunpack.c.l.s4 1966171168
        %v1853 = vunpack.c.0.s8 %v1852
        %v1854 = vlaneseq
        %v1855 = vshrl.u32 %v1854, 7
        %v1856 = vsub.s32 %v1853, %v1855
        %v1857 = vrot.slane %v1843, %v1856
        %v1858 = vcombine.high %v1850, %v1850
        %v1859 = vcombine.high %v1857, %v1857
        %v1860 = vcombine.high %v1030, %v1030
        %v1862 = vunpack.c.l.s4 1966171168
        %v1863 = vunpack.c.0.s8 %v1862
        %v1864 = vlaneseq
        %v1865 = vshrl.u32 %v1864, 7
        %v1866 = vsub.s32 %v1863, %v1865
        %v1867 = vrot.slane %v1860, %v1866
        %v1868 = vcombine.high %v1867, %v1867
        %v1870 = vunpack.c.l.s4 1966171168
        %v1871 = vunpack.c.0.s8 %v1870
        %v1872 = vlaneseq
        %v1873 = vshrl.u32 %v1872, 7
        %v1874 = vsub.s32 %v1871, %v1873
        %v1875 = vrot.slane %v1867, %v1874
        %v1877 = vunpack.c.l.s4 1966171168
        %v1878 = vunpack.c.0.s8 %v1877
        %v1879 = vlaneseq
        %v1880 = vshrl.u32 %v1879, 7
        %v1881 = vsub.s32 %v1878, %v1880
        %v1882 = vrot.slane %v1868, %v1881
        %v1883 = vcombine.high %v1875, %v1875
        %v1884 = vcombine.high %v1882, %v1882
        %v1885 = vcombine.high %v1032, %v1032
        %v1887 = vunpack.c.l.s4 1966171168
        %v1888 = vunpack.c.0.s8 %v1887
        %v1889 = vlaneseq
        %v1890 = vshrl.u32 %v1889, 7
        %v1891 = vsub.s32 %v1888, %v1890
        %v1892 = vrot.slane %v1885, %v1891
        %v1893 = vcombine.high %v1892, %v1892
        %v1895 = vunpack.c.l.s4 1966171168
        %v1896 = vunpack.c.0.s8 %v1895
        %v1897 = vlaneseq
        %v1898 = vshrl.u32 %v1897, 7
        %v1899 = vsub.s32 %v1896, %v1898
        %v1900 = vrot.slane %v1892, %v1899
        %v1902 = vunpack.c.l.s4 1966171168
        %v1903 = vunpack.c.0.s8 %v1902
        %v1904 = vlaneseq
        %v1905 = vshrl.u32 %v1904, 7
        %v1906 = vsub.s32 %v1903, %v1905
        %v1907 = vrot.slane %v1893, %v1906
        %v1908 = vcombine.high %v1900, %v1900
        %v1909 = vcombine.high %v1907, %v1907
        %v1910 = vcombine.high %v1034, %v1034
        %v1912 = vunpack.c.l.s4 1966171168
        %v1913 = vunpack.c.0.s8 %v1912
        %v1914 = vlaneseq
        %v1915 = vshrl.u32 %v1914, 7
        %v1916 = vsub.s32 %v1913, %v1915
        %v1917 = vrot.slane %v1910, %v1916
        %v1918 = vcombine.high %v1917, %v1917
        %v1920 = vunpack.c.l.s4 1966171168
        %v1921 = vunpack.c.0.s8 %v1920
        %v1922 = vlaneseq
        %v1923 = vshrl.u32 %v1922, 7
        %v1924 = vsub.s32 %v1921, %v1923
        %v1925 = vrot.slane %v1917, %v1924
        %v1927 = vunpack.c.l.s4 1966171168
        %v1928 = vunpack.c.0.s8 %v1927
        %v1929 = vlaneseq
        %v1930 = vshrl.u32 %v1929, 7
        %v1931 = vsub.s32 %v1928, %v1930
        %v1932 = vrot.slane %v1918, %v1931
        %v1933 = vcombine.high %v1925, %v1925
        %v1934 = vcombine.high %v1932, %v1932
        %v1935 = vcombine.high %v1036, %v1036
        %v1937 = vunpack.c.l.s4 1966171168
        %v1938 = vunpack.c.0.s8 %v1937
        %v1939 = vlaneseq
        %v1940 = vshrl.u32 %v1939, 7
        %v1941 = vsub.s32 %v1938, %v1940
        %v1942 = vrot.slane %v1935, %v1941
        %v1943 = vcombine.high %v1942, %v1942
        %v1945 = vunpack.c.l.s4 1966171168
        %v1946 = vunpack.c.0.s8 %v1945
        %v1947 = vlaneseq
        %v1948 = vshrl.u32 %v1947, 7
        %v1949 = vsub.s32 %v1946, %v1948
        %v1950 = vrot.slane %v1942, %v1949
        %v1952 = vunpack.c.l.s4 1966171168
        %v1953 = vunpack.c.0.s8 %v1952
        %v1954 = vlaneseq
        %v1955 = vshrl.u32 %v1954, 7
        %v1956 = vsub.s32 %v1953, %v1955
        %v1957 = vrot.slane %v1943, %v1956
        %v1958 = vcombine.high %v1950, %v1950
        %v1959 = vcombine.high %v1957, %v1957
        %v1960 = vcombine.high %v1038, %v1038
        %v1962 = vunpack.c.l.s4 1966171168
        %v1963 = vunpack.c.0.s8 %v1962
        %v1964 = vlaneseq
        %v1965 = vshrl.u32 %v1964, 7
        %v1966 = vsub.s32 %v1963, %v1965
        %v1967 = vrot.slane %v1960, %v1966
        %v1968 = vcombine.high %v1967, %v1967
        %v1970 = vunpack.c.l.s4 1966171168
        %v1971 = vunpack.c.0.s8 %v1970
        %v1972 = vlaneseq
        %v1973 = vshrl.u32 %v1972, 7
        %v1974 = vsub.s32 %v1971, %v1973
        %v1975 = vrot.slane %v1967, %v1974
        %v1977 = vunpack.c.l.s4 1966171168
        %v1978 = vunpack.c.0.s8 %v1977
        %v1979 = vlaneseq
        %v1980 = vshrl.u32 %v1979, 7
        %v1981 = vsub.s32 %v1978, %v1980
        %v1982 = vrot.slane %v1968, %v1981
        %v1983 = vcombine.high %v1975, %v1975
        %v1984 = vcombine.high %v1982, %v1982
        %v1985 = vcombine.high %v1040, %v1040
        %v1987 = vunpack.c.l.s4 1966171168
        %v1988 = vunpack.c.0.s8 %v1987
        %v1989 = vlaneseq
        %v1990 = vshrl.u32 %v1989, 7
        %v1991 = vsub.s32 %v1988, %v1990
        %v1992 = vrot.slane %v1985, %v1991
        %v1993 = vcombine.high %v1992, %v1992
        %v1995 = vunpack.c.l.s4 1966171168
        %v1996 = vunpack.c.0.s8 %v1995
        %v1997 = vlaneseq
        %v1998 = vshrl.u32 %v1997, 7
        %v1999 = vsub.s32 %v1996, %v1998
        %v2000 = vrot.slane %v1992, %v1999
        %v2002 = vunpack.c.l.s4 1966171168
        %v2003 = vunpack.c.0.s8 %v2002
        %v2004 = vlaneseq
        %v2005 = vshrl.u32 %v2004, 7
        %v2006 = vsub.s32 %v2003, %v2005
        %v2007 = vrot.slane %v1993, %v2006
        %v2008 = vcombine.high %v2000, %v2000
        %v2009 = vcombine.high %v2007, %v2007
        %v2010 = vcombine.high %v1042, %v1042
        %v2012 = vunpack.c.l.s4 1966171168
        %v2013 = vunpack.c.0.s8 %v2012
        %v2014 = vlaneseq
        %v2015 = vshrl.u32 %v2014, 7
        %v2016 = vsub.s32 %v2013, %v2015
        %v2017 = vrot.slane %v2010, %v2016
        %v2018 = vcombine.high %v2017, %v2017
        %v2020 = vunpack.c.l.s4 1966171168
        %v2021 = vunpack.c.0.s8 %v2020
        %v2022 = vlaneseq
        %v2023 = vshrl.u32 %v2022, 7
        %v2024 = vsub.s32 %v2021, %v2023
        %v2025 = vrot.slane %v2017, %v2024
        %v2027 = vunpack.c.l.s4 1966171168
        %v2028 = vunpack.c.0.s8 %v2027
        %v2029 = vlaneseq
        %v2030 = vshrl.u32 %v2029, 7
        %v2031 = vsub.s32 %v2028, %v2030
        %v2032 = vrot.slane %v2018, %v2031
        %v2033 = vcombine.high %v2025, %v2025
        %v2034 = vcombine.high %v2032, %v2032
        %v2035 = vcombine.high %v1044, %v1044
        %v2037 = vunpack.c.l.s4 1966171168
        %v2038 = vunpack.c.0.s8 %v2037
        %v2039 = vlaneseq
        %v2040 = vshrl.u32 %v2039, 7
        %v2041 = vsub.s32 %v2038, %v2040
        %v2042 = vrot.slane %v2035, %v2041
        %v2043 = vcombine.high %v2042, %v2042
        %v2045 = vunpack.c.l.s4 1966171168
        %v2046 = vunpack.c.0.s8 %v2045
        %v2047 = vlaneseq
        %v2048 = vshrl.u32 %v2047, 7
        %v2049 = vsub.s32 %v2046, %v2048
        %v2050 = vrot.slane %v2042, %v2049
        %v2052 = vunpack.c.l.s4 1966171168
        %v2053 = vunpack.c.0.s8 %v2052
        %v2054 = vlaneseq
        %v2055 = vshrl.u32 %v2054, 7
        %v2056 = vsub.s32 %v2053, %v2055
        %v2057 = vrot.slane %v2043, %v2056
        %v2058 = vcombine.high %v2050, %v2050
        %v2059 = vcombine.high %v2057, %v2057
        %v2060 = vcombine.high %v1046, %v1046
        %v2062 = vunpack.c.l.s4 1966171168
        %v2063 = vunpack.c.0.s8 %v2062
        %v2064 = vlaneseq
        %v2065 = vshrl.u32 %v2064, 7
        %v2066 = vsub.s32 %v2063, %v2065
        %v2067 = vrot.slane %v2060, %v2066
        %v2068 = vcombine.high %v2067, %v2067
        %v2070 = vunpack.c.l.s4 1966171168
        %v2071 = vunpack.c.0.s8 %v2070
        %v2072 = vlaneseq
        %v2073 = vshrl.u32 %v2072, 7
        %v2074 = vsub.s32 %v2071, %v2073
        %v2075 = vrot.slane %v2067, %v2074
        %v2077 = vunpack.c.l.s4 1966171168
        %v2078 = vunpack.c.0.s8 %v2077
        %v2079 = vlaneseq
        %v2080 = vshrl.u32 %v2079, 7
        %v2081 = vsub.s32 %v2078, %v2080
        %v2082 = vrot.slane %v2068, %v2081
        %v2083 = vcombine.high %v2075, %v2075
        %v2084 = vcombine.high %v2082, %v2082
        %v2085 = vcombine.high %v1048, %v1048
        %v2087 = vunpack.c.l.s4 1966171168
        %v2088 = vunpack.c.0.s8 %v2087
        %v2089 = vlaneseq
        %v2090 = vshrl.u32 %v2089, 7
        %v2091 = vsub.s32 %v2088, %v2090
        %v2092 = vrot.slane %v2085, %v2091
        %v2093 = vcombine.high %v2092, %v2092
        %v2095 = vunpack.c.l.s4 1966171168
        %v2096 = vunpack.c.0.s8 %v2095
        %v2097 = vlaneseq
        %v2098 = vshrl.u32 %v2097, 7
        %v2099 = vsub.s32 %v2096, %v2098
        %v2100 = vrot.slane %v2092, %v2099
        %v2102 = vunpack.c.l.s4 1966171168
        %v2103 = vunpack.c.0.s8 %v2102
        %v2104 = vlaneseq
        %v2105 = vshrl.u32 %v2104, 7
        %v2106 = vsub.s32 %v2103, %v2105
        %v2107 = vrot.slane %v2093, %v2106
        %v2108 = vcombine.high %v2100, %v2100
        %v2109 = vcombine.high %v2107, %v2107
        %v2110 = vcombine.high %v1050, %v1050
        %v2112 = vunpack.c.l.s4 1966171168
        %v2113 = vunpack.c.0.s8 %v2112
        %v2114 = vlaneseq
        %v2115 = vshrl.u32 %v2114, 7
        %v2116 = vsub.s32 %v2113, %v2115
        %v2117 = vrot.slane %v2110, %v2116
        %v2118 = vcombine.high %v2117, %v2117
        %v2120 = vunpack.c.l.s4 1966171168
        %v2121 = vunpack.c.0.s8 %v2120
        %v2122 = vlaneseq
        %v2123 = vshrl.u32 %v2122, 7
        %v2124 = vsub.s32 %v2121, %v2123
        %v2125 = vrot.slane %v2117, %v2124
        %v2127 = vunpack.c.l.s4 1966171168
        %v2128 = vunpack.c.0.s8 %v2127
        %v2129 = vlaneseq
        %v2130 = vshrl.u32 %v2129, 7
        %v2131 = vsub.s32 %v2128, %v2130
        %v2132 = vrot.slane %v2118, %v2131
        %v2133 = vcombine.high %v2125, %v2125
        %v2134 = vcombine.high %v2132, %v2132
        %v2135 = vcombine.high %v1052, %v1052
        %v2137 = vunpack.c.l.s4 1966171168
        %v2138 = vunpack.c.0.s8 %v2137
        %v2139 = vlaneseq
        %v2140 = vshrl.u32 %v2139, 7
        %v2141 = vsub.s32 %v2138, %v2140
        %v2142 = vrot.slane %v2135, %v2141
        %v2143 = vcombine.high %v2142, %v2142
        %v2145 = vunpack.c.l.s4 1966171168
        %v2146 = vunpack.c.0.s8 %v2145
        %v2147 = vlaneseq
        %v2148 = vshrl.u32 %v2147, 7
        %v2149 = vsub.s32 %v2146, %v2148
        %v2150 = vrot.slane %v2142, %v2149
        %v2152 = vunpack.c.l.s4 1966171168
        %v2153 = vunpack.c.0.s8 %v2152
        %v2154 = vlaneseq
        %v2155 = vshrl.u32 %v2154, 7
        %v2156 = vsub.s32 %v2153, %v2155
        %v2157 = vrot.slane %v2143, %v2156
        %v2158 = vcombine.high %v2150, %v2150
        %v2159 = vcombine.high %v2157, %v2157
        %v2160 = vcombine.high %v1054, %v1054
        %v2162 = vunpack.c.l.s4 1966171168
        %v2163 = vunpack.c.0.s8 %v2162
        %v2164 = vlaneseq
        %v2165 = vshrl.u32 %v2164, 7
        %v2166 = vsub.s32 %v2163, %v2165
        %v2167 = vrot.slane %v2160, %v2166
        %v2168 = vcombine.high %v2167, %v2167
        %v2170 = vunpack.c.l.s4 1966171168
        %v2171 = vunpack.c.0.s8 %v2170
        %v2172 = vlaneseq
        %v2173 = vshrl.u32 %v2172, 7
        %v2174 = vsub.s32 %v2171, %v2173
        %v2175 = vrot.slane %v2167, %v2174
        %v2177 = vunpack.c.l.s4 1966171168
        %v2178 = vunpack.c.0.s8 %v2177
        %v2179 = vlaneseq
        %v2180 = vshrl.u32 %v2179, 7
        %v2181 = vsub.s32 %v2178, %v2180
        %v2182 = vrot.slane %v2168, %v2181
        %v2183 = vcombine.high %v2175, %v2175
        %v2184 = vcombine.high %v2182, %v2182
        %v2185 = vcombine.high %v1056, %v1056
        %v2187 = vunpack.c.l.s4 1966171168
        %v2188 = vunpack.c.0.s8 %v2187
        %v2189 = vlaneseq
        %v2190 = vshrl.u32 %v2189, 7
        %v2191 = vsub.s32 %v2188, %v2190
        %v2192 = vrot.slane %v2185, %v2191
        %v2193 = vcombine.high %v2192, %v2192
        %v2195 = vunpack.c.l.s4 1966171168
        %v2196 = vunpack.c.0.s8 %v2195
        %v2197 = vlaneseq
        %v2198 = vshrl.u32 %v2197, 7
        %v2199 = vsub.s32 %v2196, %v2198
        %v2200 = vrot.slane %v2192, %v2199
        %v2202 = vunpack.c.l.s4 1966171168
        %v2203 = vunpack.c.0.s8 %v2202
        %v2204 = vlaneseq
        %v2205 = vshrl.u32 %v2204, 7
        %v2206 = vsub.s32 %v2203, %v2205
        %v2207 = vrot.slane %v2193, %v2206
        %v2208 = vcombine.high %v2200, %v2200
        %v2209 = vcombine.high %v2207, %v2207
        %v2210 = vlaneseq
        %v2211 = vshrl.u32 %v2210, 7
        %v2212 = vsub.s32 0, %v2211
        %v2213 = vrot.slane %v1825, %v2212
        %v2214 = vlaneseq
        %v2215 = vshrl.u32 %v2214, 7
        %v2216 = vsub.s32 0, %v2215
        %v2217 = vrot.slane %v1832, %v2216
        %v2218 = vlaneseq
        %v2219 = vshrl.u32 %v2218, 7
        %v2220 = vsub.s32 0, %v2219
        %v2221 = vrot.slane %v1833, %v2220
        %v2222 = vlaneseq
        %v2223 = vshrl.u32 %v2222, 7
        %v2224 = vsub.s32 0, %v2223
        %v2225 = vrot.slane %v1834, %v2224
        %v2226 = vlaneseq
        %v2227 = vshrl.u32 %v2226, 7
        %v2228 = vsub.s32 0, %v2227
        %v2229 = vrot.slane %v1850, %v2228
        %v2230 = vlaneseq
        %v2231 = vshrl.u32 %v2230, 7
        %v2232 = vsub.s32 0, %v2231
        %v2233 = vrot.slane %v1857, %v2232
        %v2234 = vlaneseq
        %v2235 = vshrl.u32 %v2234, 7
        %v2236 = vsub.s32 0, %v2235
        %v2237 = vrot.slane %v1858, %v2236
        %v2238 = vlaneseq
        %v2239 = vshrl.u32 %v2238, 7
        %v2240 = vsub.s32 0, %v2239
        %v2241 = vrot.slane %v1859, %v2240
        %v2242 = vlaneseq
        %v2243 = vshrl.u32 %v2242, 7
        %v2244 = vsub.s32 0, %v2243
        %v2245 = vrot.slane %v1875, %v2244
        %v2246 = vlaneseq
        %v2247 = vshrl.u32 %v2246, 7
        %v2248 = vsub.s32 0, %v2247
        %v2249 = vrot.slane %v1882, %v2248
        %v2250 = vlaneseq
        %v2251 = vshrl.u32 %v2250, 7
        %v2252 = vsub.s32 0, %v2251
        %v2253 = vrot.slane %v1883, %v2252
        %v2254 = vlaneseq
        %v2255 = vshrl.u32 %v2254, 7
        %v2256 = vsub.s32 0, %v2255
        %v2257 = vrot.slane %v1884, %v2256
        %v2258 = vlaneseq
        %v2259 = vshrl.u32 %v2258, 7
        %v2260 = vsub.s32 0, %v2259
        %v2261 = vrot.slane %v1900, %v2260
        %v2262 = vlaneseq
        %v2263 = vshrl.u32 %v2262, 7
        %v2264 = vsub.s32 0, %v2263
        %v2265 = vrot.slane %v1907, %v2264
        %v2266 = vlaneseq
        %v2267 = vshrl.u32 %v2266, 7
        %v2268 = vsub.s32 0, %v2267
        %v2269 = vrot.slane %v1908, %v2268
        %v2270 = vlaneseq
        %v2271 = vshrl.u32 %v2270, 7
        %v2272 = vsub.s32 0, %v2271
        %v2273 = vrot.slane %v1909, %v2272
        %v2274 = vlaneseq
        %v2275 = vshrl.u32 %v2274, 7
        %v2276 = vsub.s32 0, %v2275
        %v2277 = vrot.slane %v1925, %v2276
        %v2278 = vlaneseq
        %v2279 = vshrl.u32 %v2278, 7
        %v2280 = vsub.s32 0, %v2279
        %v2281 = vrot.slane %v1932, %v2280
        %v2282 = vlaneseq
        %v2283 = vshrl.u32 %v2282, 7
        %v2284 = vsub.s32 0, %v2283
        %v2285 = vrot.slane %v1933, %v2284
        %v2286 = vlaneseq
        %v2287 = vshrl.u32 %v2286, 7
        %v2288 = vsub.s32 0, %v2287
        %v2289 = vrot.slane %v1934, %v2288
        %v2290 = vlaneseq
        %v2291 = vshrl.u32 %v2290, 7
        %v2292 = vsub.s32 0, %v2291
        %v2293 = vrot.slane %v1950, %v2292
        %v2294 = vlaneseq
        %v2295 = vshrl.u32 %v2294, 7
        %v2296 = vsub.s32 0, %v2295
        %v2297 = vrot.slane %v1957, %v2296
        %v2298 = vlaneseq
        %v2299 = vshrl.u32 %v2298, 7
        %v2300 = vsub.s32 0, %v2299
        %v2301 = vrot.slane %v1958, %v2300
        %v2302 = vlaneseq
        %v2303 = vshrl.u32 %v2302, 7
        %v2304 = vsub.s32 0, %v2303
        %v2305 = vrot.slane %v1959, %v2304
        %v2306 = vlaneseq
        %v2307 = vshrl.u32 %v2306, 7
        %v2308 = vsub.s32 0, %v2307
        %v2309 = vrot.slane %v1975, %v2308
        %v2310 = vlaneseq
        %v2311 = vshrl.u32 %v2310, 7
        %v2312 = vsub.s32 0, %v2311
        %v2313 = vrot.slane %v1982, %v2312
        %v2314 = vlaneseq
        %v2315 = vshrl.u32 %v2314, 7
        %v2316 = vsub.s32 0, %v2315
        %v2317 = vrot.slane %v1983, %v2316
        %v2318 = vlaneseq
        %v2319 = vshrl.u32 %v2318, 7
        %v2320 = vsub.s32 0, %v2319
        %v2321 = vrot.slane %v1984, %v2320
        %v2322 = vlaneseq
        %v2323 = vshrl.u32 %v2322, 7
        %v2324 = vsub.s32 0, %v2323
        %v2325 = vrot.slane %v2000, %v2324
        %v2326 = vlaneseq
        %v2327 = vshrl.u32 %v2326, 7
        %v2328 = vsub.s32 0, %v2327
        %v2329 = vrot.slane %v2007, %v2328
        %v2330 = vlaneseq
        %v2331 = vshrl.u32 %v2330, 7
        %v2332 = vsub.s32 0, %v2331
        %v2333 = vrot.slane %v2008, %v2332
        %v2334 = vlaneseq
        %v2335 = vshrl.u32 %v2334, 7
        %v2336 = vsub.s32 0, %v2335
        %v2337 = vrot.slane %v2009, %v2336
        %v2338 = vlaneseq
        %v2339 = vshrl.u32 %v2338, 7
        %v2340 = vsub.s32 0, %v2339
        %v2341 = vrot.slane %v2025, %v2340
        %v2342 = vlaneseq
        %v2343 = vshrl.u32 %v2342, 7
        %v2344 = vsub.s32 0, %v2343
        %v2345 = vrot.slane %v2032, %v2344
        %v2346 = vlaneseq
        %v2347 = vshrl.u32 %v2346, 7
        %v2348 = vsub.s32 0, %v2347
        %v2349 = vrot.slane %v2033, %v2348
        %v2350 = vlaneseq
        %v2351 = vshrl.u32 %v2350, 7
        %v2352 = vsub.s32 0, %v2351
        %v2353 = vrot.slane %v2034, %v2352
        %v2354 = vlaneseq
        %v2355 = vshrl.u32 %v2354, 7
        %v2356 = vsub.s32 0, %v2355
        %v2357 = vrot.slane %v2050, %v2356
        %v2358 = vlaneseq
        %v2359 = vshrl.u32 %v2358, 7
        %v2360 = vsub.s32 0, %v2359
        %v2361 = vrot.slane %v2057, %v2360
        %v2362 = vlaneseq
        %v2363 = vshrl.u32 %v2362, 7
        %v2364 = vsub.s32 0, %v2363
        %v2365 = vrot.slane %v2058, %v2364
        %v2366 = vlaneseq
        %v2367 = vshrl.u32 %v2366, 7
        %v2368 = vsub.s32 0, %v2367
        %v2369 = vrot.slane %v2059, %v2368
        %v2370 = vlaneseq
        %v2371 = vshrl.u32 %v2370, 7
        %v2372 = vsub.s32 0, %v2371
        %v2373 = vrot.slane %v2075, %v2372
        %v2374 = vlaneseq
        %v2375 = vshrl.u32 %v2374, 7
        %v2376 = vsub.s32 0, %v2375
        %v2377 = vrot.slane %v2082, %v2376
        %v2378 = vlaneseq
        %v2379 = vshrl.u32 %v2378, 7
        %v2380 = vsub.s32 0, %v2379
        %v2381 = vrot.slane %v2083, %v2380
        %v2382 = vlaneseq
        %v2383 = vshrl.u32 %v2382, 7
        %v2384 = vsub.s32 0, %v2383
        %v2385 = vrot.slane %v2084, %v2384
        %v2386 = vlaneseq
        %v2387 = vshrl.u32 %v2386, 7
        %v2388 = vsub.s32 0, %v2387
        %v2389 = vrot.slane %v2100, %v2388
        %v2390 = vlaneseq
        %v2391 = vshrl.u32 %v2390, 7
        %v2392 = vsub.s32 0, %v2391
        %v2393 = vrot.slane %v2107, %v2392
        %v2394 = vlaneseq
        %v2395 = vshrl.u32 %v2394, 7
        %v2396 = vsub.s32 0, %v2395
        %v2397 = vrot.slane %v2108, %v2396
        %v2398 = vlaneseq
        %v2399 = vshrl.u32 %v2398, 7
        %v2400 = vsub.s32 0, %v2399
        %v2401 = vrot.slane %v2109, %v2400
        %v2402 = vlaneseq
        %v2403 = vshrl.u32 %v2402, 7
        %v2404 = vsub.s32 0, %v2403
        %v2405 = vrot.slane %v2125, %v2404
        %v2406 = vlaneseq
        %v2407 = vshrl.u32 %v2406, 7
        %v2408 = vsub.s32 0, %v2407
        %v2409 = vrot.slane %v2132, %v2408
        %v2410 = vlaneseq
        %v2411 = vshrl.u32 %v2410, 7
        %v2412 = vsub.s32 0, %v2411
        %v2413 = vrot.slane %v2133, %v2412
        %v2414 = vlaneseq
        %v2415 = vshrl.u32 %v2414, 7
        %v2416 = vsub.s32 0, %v2415
        %v2417 = vrot.slane %v2134, %v2416
        %v2418 = vlaneseq
        %v2419 = vshrl.u32 %v2418, 7
        %v2420 = vsub.s32 0, %v2419
        %v2421 = vrot.slane %v2150, %v2420
        %v2422 = vlaneseq
        %v2423 = vshrl.u32 %v2422, 7
        %v2424 = vsub.s32 0, %v2423
        %v2425 = vrot.slane %v2157, %v2424
        %v2426 = vlaneseq
        %v2427 = vshrl.u32 %v2426, 7
        %v2428 = vsub.s32 0, %v2427
        %v2429 = vrot.slane %v2158, %v2428
        %v2430 = vlaneseq
        %v2431 = vshrl.u32 %v2430, 7
        %v2432 = vsub.s32 0, %v2431
        %v2433 = vrot.slane %v2159, %v2432
        %v2434 = vlaneseq
        %v2435 = vshrl.u32 %v2434, 7
        %v2436 = vsub.s32 0, %v2435
        %v2437 = vrot.slane %v2175, %v2436
        %v2438 = vlaneseq
        %v2439 = vshrl.u32 %v2438, 7
        %v2440 = vsub.s32 0, %v2439
        %v2441 = vrot.slane %v2182, %v2440
        %v2442 = vlaneseq
        %v2443 = vshrl.u32 %v2442, 7
        %v2444 = vsub.s32 0, %v2443
        %v2445 = vrot.slane %v2183, %v2444
        %v2446 = vlaneseq
        %v2447 = vshrl.u32 %v2446, 7
        %v2448 = vsub.s32 0, %v2447
        %v2449 = vrot.slane %v2184, %v2448
        %v2450 = vlaneseq
        %v2451 = vshrl.u32 %v2450, 7
        %v2452 = vsub.s32 0, %v2451
        %v2453 = vrot.slane %v2200, %v2452
        %v2454 = vlaneseq
        %v2455 = vshrl.u32 %v2454, 7
        %v2456 = vsub.s32 0, %v2455
        %v2457 = vrot.slane %v2207, %v2456
        %v2458 = vlaneseq
        %v2459 = vshrl.u32 %v2458, 7
        %v2460 = vsub.s32 0, %v2459
        %v2461 = vrot.slane %v2208, %v2460
        %v2462 = vlaneseq
        %v2463 = vshrl.u32 %v2462, 7
        %v2464 = vsub.s32 0, %v2463
        %v2465 = vrot.slane %v2209, %v2464
        %v2530 = vmul.f32 %v1096, %v2213
        %v2531 = vmul.f32 %v1100, %v2213
        %v2532 = vmul.f32 %v1107, %v2217
        %v2533 = vmul.f32 %v1111, %v2217
        %v2534 = vmul.f32 %v1118, %v2221
        %v2535 = vmul.f32 %v1122, %v2221
        %v2536 = vmul.f32 %v1129, %v2225
        %v2537 = vmul.f32 %v1133, %v2225
        %v2538 = vmul.f32 %v1140, %v2229
        %v2539 = vmul.f32 %v1144, %v2229
        %v2540 = vmul.f32 %v1151, %v2233
        %v2541 = vmul.f32 %v1155, %v2233
        %v2542 = vmul.f32 %v1162, %v2237
        %v2543 = vmul.f32 %v1166, %v2237
        %v2544 = vmul.f32 %v1173, %v2241
        %v2545 = vmul.f32 %v1177, %v2241
        %v2546 = vmul.f32 %v1184, %v2245
        %v2547 = vmul.f32 %v1188, %v2245
        %v2548 = vmul.f32 %v1195, %v2249
        %v2549 = vmul.f32 %v1199, %v2249
        %v2550 = vmul.f32 %v1206, %v2253
        %v2551 = vmul.f32 %v1210, %v2253
        %v2552 = vmul.f32 %v1217, %v2257
        %v2553 = vmul.f32 %v1221, %v2257
        %v2554 = vmul.f32 %v1228, %v2261
        %v2555 = vmul.f32 %v1232, %v2261
        %v2556 = vmul.f32 %v1239, %v2265
        %v2557 = vmul.f32 %v1243, %v2265
        %v2558 = vmul.f32 %v1250, %v2269
        %v2559 = vmul.f32 %v1254, %v2269
        %v2560 = vmul.f32 %v1261, %v2273
        %v2561 = vmul.f32 %v1265, %v2273
        %v2562 = vmul.f32 %v1272, %v2277
        %v2563 = vmul.f32 %v1276, %v2277
        %v2564 = vmul.f32 %v1283, %v2281
        %v2565 = vmul.f32 %v1287, %v2281
        %v2566 = vmul.f32 %v1294, %v2285
        %v2567 = vmul.f32 %v1298, %v2285
        %v2568 = vmul.f32 %v1305, %v2289
        %v2569 = vmul.f32 %v1309, %v2289
        %v2570 = vmul.f32 %v1316, %v2293
        %v2571 = vmul.f32 %v1320, %v2293
        %v2572 = vmul.f32 %v1327, %v2297
        %v2573 = vmul.f32 %v1331, %v2297
        %v2574 = vmul.f32 %v1338, %v2301
        %v2575 = vmul.f32 %v1342, %v2301
        %v2576 = vmul.f32 %v1349, %v2305
        %v2577 = vmul.f32 %v1353, %v2305
        %v2578 = vmul.f32 %v1360, %v2309
        %v2579 = vmul.f32 %v1364, %v2309
        %v2580 = vmul.f32 %v1371, %v2313
        %v2581 = vmul.f32 %v1375, %v2313
        %v2582 = vmul.f32 %v1382, %v2317
        %v2583 = vmul.f32 %v1386, %v2317
        %v2584 = vmul.f32 %v1393, %v2321
        %v2585 = vmul.f32 %v1397, %v2321
        %v2586 = vmul.f32 %v1404, %v2325
        %v2587 = vmul.f32 %v1408, %v2325
        %v2588 = vmul.f32 %v1415, %v2329
        %v2589 = vmul.f32 %v1419, %v2329
        %v2590 = vmul.f32 %v1426, %v2333
        %v2591 = vmul.f32 %v1430, %v2333
        %v2592 = vmul.f32 %v1437, %v2337
        %v2593 = vmul.f32 %v1441, %v2337
        %v2594 = vmul.f32 %v1448, %v2341
        %v2595 = vmul.f32 %v1452, %v2341
        %v2596 = vmul.f32 %v1459, %v2345
        %v2597 = vmul.f32 %v1463, %v2345
        %v2598 = vmul.f32 %v1470, %v2349
        %v2599 = vmul.f32 %v1474, %v2349
        %v2600 = vmul.f32 %v1481, %v2353
        %v2601 = vmul.f32 %v1485, %v2353
        %v2602 = vmul.f32 %v1492, %v2357
        %v2603 = vmul.f32 %v1496, %v2357
        %v2604 = vmul.f32 %v1503, %v2361
        %v2605 = vmul.f32 %v1507, %v2361
        %v2606 = vmul.f32 %v1514, %v2365
        %v2607 = vmul.f32 %v1518, %v2365
        %v2608 = vmul.f32 %v1525, %v2369
        %v2609 = vmul.f32 %v1529, %v2369
        %v2610 = vmul.f32 %v1536, %v2373
        %v2611 = vmul.f32 %v1540, %v2373
        %v2612 = vmul.f32 %v1547, %v2377
        %v2613 = vmul.f32 %v1551, %v2377
        %v2614 = vmul.f32 %v1558, %v2381
        %v2615 = vmul.f32 %v1562, %v2381
        %v2616 = vmul.f32 %v1569, %v2385
        %v2617 = vmul.f32 %v1573, %v2385
        %v2618 = vmul.f32 %v1580, %v2389
        %v2619 = vmul.f32 %v1584, %v2389
        %v2620 = vmul.f32 %v1591, %v2393
        %v2621 = vmul.f32 %v1595, %v2393
        %v2622 = vmul.f32 %v1602, %v2397
        %v2623 = vmul.f32 %v1606, %v2397
        %v2624 = vmul.f32 %v1613, %v2401
        %v2625 = vmul.f32 %v1617, %v2401
        %v2626 = vmul.f32 %v1624, %v2405
        %v2627 = vmul.f32 %v1628, %v2405
        %v2628 = vmul.f32 %v1635, %v2409
        %v2629 = vmul.f32 %v1639, %v2409
        %v2630 = vmul.f32 %v1646, %v2413
        %v2631 = vmul.f32 %v1650, %v2413
        %v2632 = vmul.f32 %v1657, %v2417
        %v2633 = vmul.f32 %v1661, %v2417
        %v2634 = vmul.f32 %v1668, %v2421
        %v2635 = vmul.f32 %v1672, %v2421
        %v2636 = vmul.f32 %v1679, %v2425
        %v2637 = vmul.f32 %v1683, %v2425
        %v2638 = vmul.f32 %v1690, %v2429
        %v2639 = vmul.f32 %v1694, %v2429
        %v2640 = vmul.f32 %v1701, %v2433
        %v2641 = vmul.f32 %v1705, %v2433
        %v2642 = vmul.f32 %v1712, %v2437
        %v2643 = vmul.f32 %v1716, %v2437
        %v2644 = vmul.f32 %v1723, %v2441
        %v2645 = vmul.f32 %v1727, %v2441
        %v2646 = vmul.f32 %v1734, %v2445
        %v2647 = vmul.f32 %v1738, %v2445
        %v2648 = vmul.f32 %v1745, %v2449
        %v2649 = vmul.f32 %v1749, %v2449
        %v2650 = vmul.f32 %v1756, %v2453
        %v2651 = vmul.f32 %v1760, %v2453
        %v2652 = vmul.f32 %v1767, %v2457
        %v2653 = vmul.f32 %v1771, %v2457
        %v2654 = vmul.f32 %v1778, %v2461
        %v2655 = vmul.f32 %v1782, %v2461
        %v2656 = vmul.f32 %v1789, %v2465
        %v2657 = vmul.f32 %v1793, %v2465
        %v2658 = vsel %vm890, %v2530, 0.0
        %v2659 = vsel %vm890, %v2532, 0.0
        %v2660 = vadd.f32 %v2658, %v2659
        %v2661 = vsel %vm890, %v2531, 0.0
        %v2662 = vsel %vm890, %v2533, 0.0
        %v2663 = vadd.f32 %v2661, %v2662
        %v2664 = vsel %vm890, %v2534, 0.0
        %v2665 = vsel %vm890, %v2536, 0.0
        %v2666 = vadd.f32 %v2664, %v2665
        %v2667 = vsel %vm890, %v2535, 0.0
        %v2668 = vsel %vm890, %v2537, 0.0
        %v2669 = vadd.f32 %v2667, %v2668
        %v2670 = vsel %vm890, %v2538, 0.0
        %v2671 = vsel %vm890, %v2540, 0.0
        %v2672 = vadd.f32 %v2670, %v2671
        %v2673 = vsel %vm890, %v2539, 0.0
        %v2674 = vsel %vm890, %v2541, 0.0
        %v2675 = vadd.f32 %v2673, %v2674
        %v2676 = vsel %vm890, %v2542, 0.0
        %v2677 = vsel %vm890, %v2544, 0.0
        %v2678 = vadd.f32 %v2676, %v2677
        %v2679 = vsel %vm890, %v2543, 0.0
        %v2680 = vsel %vm890, %v2545, 0.0
        %v2681 = vadd.f32 %v2679, %v2680
        %v2682 = vsel %vm890, %v2546, 0.0
        %v2683 = vsel %vm890, %v2548, 0.0
        %v2684 = vadd.f32 %v2682, %v2683
        %v2685 = vsel %vm890, %v2547, 0.0
        %v2686 = vsel %vm890, %v2549, 0.0
        %v2687 = vadd.f32 %v2685, %v2686
        %v2688 = vsel %vm890, %v2550, 0.0
        %v2689 = vsel %vm890, %v2552, 0.0
        %v2690 = vadd.f32 %v2688, %v2689
        %v2691 = vsel %vm890, %v2551, 0.0
        %v2692 = vsel %vm890, %v2553, 0.0
        %v2693 = vadd.f32 %v2691, %v2692
        %v2694 = vsel %vm890, %v2554, 0.0
        %v2695 = vsel %vm890, %v2556, 0.0
        %v2696 = vadd.f32 %v2694, %v2695
        %v2697 = vsel %vm890, %v2555, 0.0
        %v2698 = vsel %vm890, %v2557, 0.0
        %v2699 = vadd.f32 %v2697, %v2698
        %v2700 = vsel %vm890, %v2558, 0.0
        %v2701 = vsel %vm890, %v2560, 0.0
        %v2702 = vadd.f32 %v2700, %v2701
        %v2703 = vsel %vm890, %v2559, 0.0
        %v2704 = vsel %vm890, %v2561, 0.0
        %v2705 = vadd.f32 %v2703, %v2704
        %v2706 = vsel %vm890, %v2562, 0.0
        %v2707 = vsel %vm890, %v2564, 0.0
        %v2708 = vadd.f32 %v2706, %v2707
        %v2709 = vsel %vm890, %v2563, 0.0
        %v2710 = vsel %vm890, %v2565, 0.0
        %v2711 = vadd.f32 %v2709, %v2710
        %v2712 = vsel %vm890, %v2566, 0.0
        %v2713 = vsel %vm890, %v2568, 0.0
        %v2714 = vadd.f32 %v2712, %v2713
        %v2715 = vsel %vm890, %v2567, 0.0
        %v2716 = vsel %vm890, %v2569, 0.0
        %v2717 = vadd.f32 %v2715, %v2716
        %v2718 = vsel %vm890, %v2570, 0.0
        %v2719 = vsel %vm890, %v2572, 0.0
        %v2720 = vadd.f32 %v2718, %v2719
        %v2721 = vsel %vm890, %v2571, 0.0
        %v2722 = vsel %vm890, %v2573, 0.0
        %v2723 = vadd.f32 %v2721, %v2722
        %v2724 = vsel %vm890, %v2574, 0.0
        %v2725 = vsel %vm890, %v2576, 0.0
        %v2726 = vadd.f32 %v2724, %v2725
        %v2727 = vsel %vm890, %v2575, 0.0
        %v2728 = vsel %vm890, %v2577, 0.0
        %v2729 = vadd.f32 %v2727, %v2728
        %v2730 = vsel %vm890, %v2578, 0.0
        %v2731 = vsel %vm890, %v2580, 0.0
        %v2732 = vadd.f32 %v2730, %v2731
        %v2733 = vsel %vm890, %v2579, 0.0
        %v2734 = vsel %vm890, %v2581, 0.0
        %v2735 = vadd.f32 %v2733, %v2734
        %v2736 = vsel %vm890, %v2582, 0.0
        %v2737 = vsel %vm890, %v2584, 0.0
        %v2738 = vadd.f32 %v2736, %v2737
        %v2739 = vsel %vm890, %v2583, 0.0
        %v2740 = vsel %vm890, %v2585, 0.0
        %v2741 = vadd.f32 %v2739, %v2740
        %v2742 = vsel %vm890, %v2586, 0.0
        %v2743 = vsel %vm890, %v2588, 0.0
        %v2744 = vadd.f32 %v2742, %v2743
        %v2745 = vsel %vm890, %v2587, 0.0
        %v2746 = vsel %vm890, %v2589, 0.0
        %v2747 = vadd.f32 %v2745, %v2746
        %v2748 = vsel %vm890, %v2590, 0.0
        %v2749 = vsel %vm890, %v2592, 0.0
        %v2750 = vadd.f32 %v2748, %v2749
        %v2751 = vsel %vm890, %v2591, 0.0
        %v2752 = vsel %vm890, %v2593, 0.0
        %v2753 = vadd.f32 %v2751, %v2752
        %v2754 = vsel %vm890, %v2594, 0.0
        %v2755 = vsel %vm890, %v2596, 0.0
        %v2756 = vadd.f32 %v2754, %v2755
        %v2757 = vsel %vm890, %v2595, 0.0
        %v2758 = vsel %vm890, %v2597, 0.0
        %v2759 = vadd.f32 %v2757, %v2758
        %v2760 = vsel %vm890, %v2598, 0.0
        %v2761 = vsel %vm890, %v2600, 0.0
        %v2762 = vadd.f32 %v2760, %v2761
        %v2763 = vsel %vm890, %v2599, 0.0
        %v2764 = vsel %vm890, %v2601, 0.0
        %v2765 = vadd.f32 %v2763, %v2764
        %v2766 = vsel %vm890, %v2602, 0.0
        %v2767 = vsel %vm890, %v2604, 0.0
        %v2768 = vadd.f32 %v2766, %v2767
        %v2769 = vsel %vm890, %v2603, 0.0
        %v2770 = vsel %vm890, %v2605, 0.0
        %v2771 = vadd.f32 %v2769, %v2770
        %v2772 = vsel %vm890, %v2606, 0.0
        %v2773 = vsel %vm890, %v2608, 0.0
        %v2774 = vadd.f32 %v2772, %v2773
        %v2775 = vsel %vm890, %v2607, 0.0
        %v2776 = vsel %vm890, %v2609, 0.0
        %v2777 = vadd.f32 %v2775, %v2776
        %v2778 = vsel %vm890, %v2610, 0.0
        %v2779 = vsel %vm890, %v2612, 0.0
        %v2780 = vadd.f32 %v2778, %v2779
        %v2781 = vsel %vm890, %v2611, 0.0
        %v2782 = vsel %vm890, %v2613, 0.0
        %v2783 = vadd.f32 %v2781, %v2782
        %v2784 = vsel %vm890, %v2614, 0.0
        %v2785 = vsel %vm890, %v2616, 0.0
        %v2786 = vadd.f32 %v2784, %v2785
        %v2787 = vsel %vm890, %v2615, 0.0
        %v2788 = vsel %vm890, %v2617, 0.0
        %v2789 = vadd.f32 %v2787, %v2788
        %v2790 = vsel %vm890, %v2618, 0.0
        %v2791 = vsel %vm890, %v2620, 0.0
        %v2792 = vadd.f32 %v2790, %v2791
        %v2793 = vsel %vm890, %v2619, 0.0
        %v2794 = vsel %vm890, %v2621, 0.0
        %v2795 = vadd.f32 %v2793, %v2794
        %v2796 = vsel %vm890, %v2622, 0.0
        %v2797 = vsel %vm890, %v2624, 0.0
        %v2798 = vadd.f32 %v2796, %v2797
        %v2799 = vsel %vm890, %v2623, 0.0
        %v2800 = vsel %vm890, %v2625, 0.0
        %v2801 = vadd.f32 %v2799, %v2800
        %v2802 = vsel %vm890, %v2626, 0.0
        %v2803 = vsel %vm890, %v2628, 0.0
        %v2804 = vadd.f32 %v2802, %v2803
        %v2805 = vsel %vm890, %v2627, 0.0
        %v2806 = vsel %vm890, %v2629, 0.0
        %v2807 = vadd.f32 %v2805, %v2806
        %v2808 = vsel %vm890, %v2630, 0.0
        %v2809 = vsel %vm890, %v2632, 0.0
        %v2810 = vadd.f32 %v2808, %v2809
        %v2811 = vsel %vm890, %v2631, 0.0
        %v2812 = vsel %vm890, %v2633, 0.0
        %v2813 = vadd.f32 %v2811, %v2812
        %v2814 = vsel %vm890, %v2634, 0.0
        %v2815 = vsel %vm890, %v2636, 0.0
        %v2816 = vadd.f32 %v2814, %v2815
        %v2817 = vsel %vm890, %v2635, 0.0
        %v2818 = vsel %vm890, %v2637, 0.0
        %v2819 = vadd.f32 %v2817, %v2818
        %v2820 = vsel %vm890, %v2638, 0.0
        %v2821 = vsel %vm890, %v2640, 0.0
        %v2822 = vadd.f32 %v2820, %v2821
        %v2823 = vsel %vm890, %v2639, 0.0
        %v2824 = vsel %vm890, %v2641, 0.0
        %v2825 = vadd.f32 %v2823, %v2824
        %v2826 = vsel %vm890, %v2642, 0.0
        %v2827 = vsel %vm890, %v2644, 0.0
        %v2828 = vadd.f32 %v2826, %v2827
        %v2829 = vsel %vm890, %v2643, 0.0
        %v2830 = vsel %vm890, %v2645, 0.0
        %v2831 = vadd.f32 %v2829, %v2830
        %v2832 = vsel %vm890, %v2646, 0.0
        %v2833 = vsel %vm890, %v2648, 0.0
        %v2834 = vadd.f32 %v2832, %v2833
        %v2835 = vsel %vm890, %v2647, 0.0
        %v2836 = vsel %vm890, %v2649, 0.0
        %v2837 = vadd.f32 %v2835, %v2836
        %v2838 = vsel %vm890, %v2650, 0.0
        %v2839 = vsel %vm890, %v2652, 0.0
        %v2840 = vadd.f32 %v2838, %v2839
        %v2841 = vsel %vm890, %v2651, 0.0
        %v2842 = vsel %vm890, %v2653, 0.0
        %v2843 = vadd.f32 %v2841, %v2842
        %v2844 = vsel %vm890, %v2654, 0.0
        %v2845 = vsel %vm890, %v2656, 0.0
        %v2846 = vadd.f32 %v2844, %v2845
        %v2847 = vsel %vm890, %v2655, 0.0
        %v2848 = vsel %vm890, %v2657, 0.0
        %v2849 = vadd.f32 %v2847, %v2848
        %v2850 = vmul.f32 %v1096, %v1058
        %v2851 = vmul.f32 %v1100, %v1059
        %v2852 = vmul.f32 %v1107, %v1060
        %v2853 = vmul.f32 %v1111, %v1061
        %v2854 = vmul.f32 %v1118, %v1062
        %v2855 = vmul.f32 %v1122, %v1063
        %v2856 = vmul.f32 %v1129, %v1064
        %v2857 = vmul.f32 %v1133, %v1065
        %v2858 = vmul.f32 %v1140, %v1058
        %v2859 = vmul.f32 %v1144, %v1059
        %v2860 = vmul.f32 %v1151, %v1060
        %v2861 = vmul.f32 %v1155, %v1061
        %v2862 = vmul.f32 %v1162, %v1062
        %v2863 = vmul.f32 %v1166, %v1063
        %v2864 = vmul.f32 %v1173, %v1064
        %v2865 = vmul.f32 %v1177, %v1065
        %v2866 = vmul.f32 %v1184, %v1058
        %v2867 = vmul.f32 %v1188, %v1059
        %v2868 = vmul.f32 %v1195, %v1060
        %v2869 = vmul.f32 %v1199, %v1061
        %v2870 = vmul.f32 %v1206, %v1062
        %v2871 = vmul.f32 %v1210, %v1063
        %v2872 = vmul.f32 %v1217, %v1064
        %v2873 = vmul.f32 %v1221, %v1065
        %v2874 = vmul.f32 %v1228, %v1058
        %v2875 = vmul.f32 %v1232, %v1059
        %v2876 = vmul.f32 %v1239, %v1060
        %v2877 = vmul.f32 %v1243, %v1061
        %v2878 = vmul.f32 %v1250, %v1062
        %v2879 = vmul.f32 %v1254, %v1063
        %v2880 = vmul.f32 %v1261, %v1064
        %v2881 = vmul.f32 %v1265, %v1065
        %v2882 = vmul.f32 %v1272, %v1058
        %v2883 = vmul.f32 %v1276, %v1059
        %v2884 = vmul.f32 %v1283, %v1060
        %v2885 = vmul.f32 %v1287, %v1061
        %v2886 = vmul.f32 %v1294, %v1062
        %v2887 = vmul.f32 %v1298, %v1063
        %v2888 = vmul.f32 %v1305, %v1064
        %v2889 = vmul.f32 %v1309, %v1065
        %v2890 = vmul.f32 %v1316, %v1058
        %v2891 = vmul.f32 %v1320, %v1059
        %v2892 = vmul.f32 %v1327, %v1060
        %v2893 = vmul.f32 %v1331, %v1061
        %v2894 = vmul.f32 %v1338, %v1062
        %v2895 = vmul.f32 %v1342, %v1063
        %v2896 = vmul.f32 %v1349, %v1064
        %v2897 = vmul.f32 %v1353, %v1065
        %v2898 = vmul.f32 %v1360, %v1058
        %v2899 = vmul.f32 %v1364, %v1059
        %v2900 = vmul.f32 %v1371, %v1060
        %v2901 = vmul.f32 %v1375, %v1061
        %v2902 = vmul.f32 %v1382, %v1062
        %v2903 = vmul.f32 %v1386, %v1063
        %v2904 = vmul.f32 %v1393, %v1064
        %v2905 = vmul.f32 %v1397, %v1065
        %v2906 = vmul.f32 %v1404, %v1058
        %v2907 = vmul.f32 %v1408, %v1059
        %v2908 = vmul.f32 %v1415, %v1060
        %v2909 = vmul.f32 %v1419, %v1061
        %v2910 = vmul.f32 %v1426, %v1062
        %v2911 = vmul.f32 %v1430, %v1063
        %v2912 = vmul.f32 %v1437, %v1064
        %v2913 = vmul.f32 %v1441, %v1065
        %v2914 = vmul.f32 %v1448, %v1058
        %v2915 = vmul.f32 %v1452, %v1059
        %v2916 = vmul.f32 %v1459, %v1060
        %v2917 = vmul.f32 %v1463, %v1061
        %v2918 = vmul.f32 %v1470, %v1062
        %v2919 = vmul.f32 %v1474, %v1063
        %v2920 = vmul.f32 %v1481, %v1064
        %v2921 = vmul.f32 %v1485, %v1065
        %v2922 = vmul.f32 %v1492, %v1058
        %v2923 = vmul.f32 %v1496, %v1059
        %v2924 = vmul.f32 %v1503, %v1060
        %v2925 = vmul.f32 %v1507, %v1061
        %v2926 = vmul.f32 %v1514, %v1062
        %v2927 = vmul.f32 %v1518, %v1063
        %v2928 = vmul.f32 %v1525, %v1064
        %v2929 = vmul.f32 %v1529, %v1065
        %v2930 = vmul.f32 %v1536, %v1058
        %v2931 = vmul.f32 %v1540, %v1059
        %v2932 = vmul.f32 %v1547, %v1060
        %v2933 = vmul.f32 %v1551, %v1061
        %v2934 = vmul.f32 %v1558, %v1062
        %v2935 = vmul.f32 %v1562, %v1063
        %v2936 = vmul.f32 %v1569, %v1064
        %v2937 = vmul.f32 %v1573, %v1065
        %v2938 = vmul.f32 %v1580, %v1058
        %v2939 = vmul.f32 %v1584, %v1059
        %v2940 = vmul.f32 %v1591, %v1060
        %v2941 = vmul.f32 %v1595, %v1061
        %v2942 = vmul.f32 %v1602, %v1062
        %v2943 = vmul.f32 %v1606, %v1063
        %v2944 = vmul.f32 %v1613, %v1064
        %v2945 = vmul.f32 %v1617, %v1065
        %v2946 = vmul.f32 %v1624, %v1058
        %v2947 = vmul.f32 %v1628, %v1059
        %v2948 = vmul.f32 %v1635, %v1060
        %v2949 = vmul.f32 %v1639, %v1061
        %v2950 = vmul.f32 %v1646, %v1062
        %v2951 = vmul.f32 %v1650, %v1063
        %v2952 = vmul.f32 %v1657, %v1064
        %v2953 = vmul.f32 %v1661, %v1065
        %v2954 = vmul.f32 %v1668, %v1058
        %v2955 = vmul.f32 %v1672, %v1059
        %v2956 = vmul.f32 %v1679, %v1060
        %v2957 = vmul.f32 %v1683, %v1061
        %v2958 = vmul.f32 %v1690, %v1062
        %v2959 = vmul.f32 %v1694, %v1063
        %v2960 = vmul.f32 %v1701, %v1064
        %v2961 = vmul.f32 %v1705, %v1065
        %v2962 = vmul.f32 %v1712, %v1058
        %v2963 = vmul.f32 %v1716, %v1059
        %v2964 = vmul.f32 %v1723, %v1060
        %v2965 = vmul.f32 %v1727, %v1061
        %v2966 = vmul.f32 %v1734, %v1062
        %v2967 = vmul.f32 %v1738, %v1063
        %v2968 = vmul.f32 %v1745, %v1064
        %v2969 = vmul.f32 %v1749, %v1065
        %v2970 = vmul.f32 %v1756, %v1058
        %v2971 = vmul.f32 %v1760, %v1059
        %v2972 = vmul.f32 %v1767, %v1060
        %v2973 = vmul.f32 %v1771, %v1061
        %v2974 = vmul.f32 %v1778, %v1062
        %v2975 = vmul.f32 %v1782, %v1063
        %v2976 = vmul.f32 %v1789, %v1064
        %v2977 = vmul.f32 %v1793, %v1065
        %v2978 = vsel %vm890, %v2850, 0.0
        %v2979 = vsel %vm890, %v2852, 0.0
        %v2980 = vadd.f32 %v2978, %v2979
        %v2981 = vsel %vm890, %v2851, 0.0
        %v2982 = vsel %vm890, %v2853, 0.0
        %v2983 = vadd.f32 %v2981, %v2982
        %v2984 = vsel %vm890, %v2854, 0.0
        %v2985 = vsel %vm890, %v2856, 0.0
        %v2986 = vadd.f32 %v2984, %v2985
        %v2987 = vsel %vm890, %v2855, 0.0
        %v2988 = vsel %vm890, %v2857, 0.0
        %v2989 = vadd.f32 %v2987, %v2988
        %v2990 = vsel %vm890, %v2858, 0.0
        %v2991 = vsel %vm890, %v2860, 0.0
        %v2992 = vadd.f32 %v2990, %v2991
        %v2993 = vsel %vm890, %v2859, 0.0
        %v2994 = vsel %vm890, %v2861, 0.0
        %v2995 = vadd.f32 %v2993, %v2994
        %v2996 = vsel %vm890, %v2862, 0.0
        %v2997 = vsel %vm890, %v2864, 0.0
        %v2998 = vadd.f32 %v2996, %v2997
        %v2999 = vsel %vm890, %v2863, 0.0
        %v3000 = vsel %vm890, %v2865, 0.0
        %v3001 = vadd.f32 %v2999, %v3000
        %v3002 = vsel %vm890, %v2866, 0.0
        %v3003 = vsel %vm890, %v2868, 0.0
        %v3004 = vadd.f32 %v3002, %v3003
        %v3005 = vsel %vm890, %v2867, 0.0
        %v3006 = vsel %vm890, %v2869, 0.0
        %v3007 = vadd.f32 %v3005, %v3006
        %v3008 = vsel %vm890, %v2870, 0.0
        %v3009 = vsel %vm890, %v2872, 0.0
        %v3010 = vadd.f32 %v3008, %v3009
        %v3011 = vsel %vm890, %v2871, 0.0
        %v3012 = vsel %vm890, %v2873, 0.0
        %v3013 = vadd.f32 %v3011, %v3012
        %v3014 = vsel %vm890, %v2874, 0.0
        %v3015 = vsel %vm890, %v2876, 0.0
        %v3016 = vadd.f32 %v3014, %v3015
        %v3017 = vsel %vm890, %v2875, 0.0
        %v3018 = vsel %vm890, %v2877, 0.0
        %v3019 = vadd.f32 %v3017, %v3018
        %v3020 = vsel %vm890, %v2878, 0.0
        %v3021 = vsel %vm890, %v2880, 0.0
        %v3022 = vadd.f32 %v3020, %v3021
        %v3023 = vsel %vm890, %v2879, 0.0
        %v3024 = vsel %vm890, %v2881, 0.0
        %v3025 = vadd.f32 %v3023, %v3024
        %v3026 = vsel %vm890, %v2882, 0.0
        %v3027 = vsel %vm890, %v2884, 0.0
        %v3028 = vadd.f32 %v3026, %v3027
        %v3029 = vsel %vm890, %v2883, 0.0
        %v3030 = vsel %vm890, %v2885, 0.0
        %v3031 = vadd.f32 %v3029, %v3030
        %v3032 = vsel %vm890, %v2886, 0.0
        %v3033 = vsel %vm890, %v2888, 0.0
        %v3034 = vadd.f32 %v3032, %v3033
        %v3035 = vsel %vm890, %v2887, 0.0
        %v3036 = vsel %vm890, %v2889, 0.0
        %v3037 = vadd.f32 %v3035, %v3036
        %v3038 = vsel %vm890, %v2890, 0.0
        %v3039 = vsel %vm890, %v2892, 0.0
        %v3040 = vadd.f32 %v3038, %v3039
        %v3041 = vsel %vm890, %v2891, 0.0
        %v3042 = vsel %vm890, %v2893, 0.0
        %v3043 = vadd.f32 %v3041, %v3042
        %v3044 = vsel %vm890, %v2894, 0.0
        %v3045 = vsel %vm890, %v2896, 0.0
        %v3046 = vadd.f32 %v3044, %v3045
        %v3047 = vsel %vm890, %v2895, 0.0
        %v3048 = vsel %vm890, %v2897, 0.0
        %v3049 = vadd.f32 %v3047, %v3048
        %v3050 = vsel %vm890, %v2898, 0.0
        %v3051 = vsel %vm890, %v2900, 0.0
        %v3052 = vadd.f32 %v3050, %v3051
        %v3053 = vsel %vm890, %v2899, 0.0
        %v3054 = vsel %vm890, %v2901, 0.0
        %v3055 = vadd.f32 %v3053, %v3054
        %v3056 = vsel %vm890, %v2902, 0.0
        %v3057 = vsel %vm890, %v2904, 0.0
        %v3058 = vadd.f32 %v3056, %v3057
        %v3059 = vsel %vm890, %v2903, 0.0
        %v3060 = vsel %vm890, %v2905, 0.0
        %v3061 = vadd.f32 %v3059, %v3060
        %v3062 = vsel %vm890, %v2906, 0.0
        %v3063 = vsel %vm890, %v2908, 0.0
        %v3064 = vadd.f32 %v3062, %v3063
        %v3065 = vsel %vm890, %v2907, 0.0
        %v3066 = vsel %vm890, %v2909, 0.0
        %v3067 = vadd.f32 %v3065, %v3066
        %v3068 = vsel %vm890, %v2910, 0.0
        %v3069 = vsel %vm890, %v2912, 0.0
        %v3070 = vadd.f32 %v3068, %v3069
        %v3071 = vsel %vm890, %v2911, 0.0
        %v3072 = vsel %vm890, %v2913, 0.0
        %v3073 = vadd.f32 %v3071, %v3072
        %v3074 = vsel %vm890, %v2914, 0.0
        %v3075 = vsel %vm890, %v2916, 0.0
        %v3076 = vadd.f32 %v3074, %v3075
        %v3077 = vsel %vm890, %v2915, 0.0
        %v3078 = vsel %vm890, %v2917, 0.0
        %v3079 = vadd.f32 %v3077, %v3078
        %v3080 = vsel %vm890, %v2918, 0.0
        %v3081 = vsel %vm890, %v2920, 0.0
        %v3082 = vadd.f32 %v3080, %v3081
        %v3083 = vsel %vm890, %v2919, 0.0
        %v3084 = vsel %vm890, %v2921, 0.0
        %v3085 = vadd.f32 %v3083, %v3084
        %v3086 = vsel %vm890, %v2922, 0.0
        %v3087 = vsel %vm890, %v2924, 0.0
        %v3088 = vadd.f32 %v3086, %v3087
        %v3089 = vsel %vm890, %v2923, 0.0
        %v3090 = vsel %vm890, %v2925, 0.0
        %v3091 = vadd.f32 %v3089, %v3090
        %v3092 = vsel %vm890, %v2926, 0.0
        %v3093 = vsel %vm890, %v2928, 0.0
        %v3094 = vadd.f32 %v3092, %v3093
        %v3095 = vsel %vm890, %v2927, 0.0
        %v3096 = vsel %vm890, %v2929, 0.0
        %v3097 = vadd.f32 %v3095, %v3096
        %v3098 = vsel %vm890, %v2930, 0.0
        %v3099 = vsel %vm890, %v2932, 0.0
        %v3100 = vadd.f32 %v3098, %v3099
        %v3101 = vsel %vm890, %v2931, 0.0
        %v3102 = vsel %vm890, %v2933, 0.0
        %v3103 = vadd.f32 %v3101, %v3102
        %v3104 = vsel %vm890, %v2934, 0.0
        %v3105 = vsel %vm890, %v2936, 0.0
        %v3106 = vadd.f32 %v3104, %v3105
        %v3107 = vsel %vm890, %v2935, 0.0
        %v3108 = vsel %vm890, %v2937, 0.0
        %v3109 = vadd.f32 %v3107, %v3108
        %v3110 = vsel %vm890, %v2938, 0.0
        %v3111 = vsel %vm890, %v2940, 0.0
        %v3112 = vadd.f32 %v3110, %v3111
        %v3113 = vsel %vm890, %v2939, 0.0
        %v3114 = vsel %vm890, %v2941, 0.0
        %v3115 = vadd.f32 %v3113, %v3114
        %v3116 = vsel %vm890, %v2942, 0.0
        %v3117 = vsel %vm890, %v2944, 0.0
        %v3118 = vadd.f32 %v3116, %v3117
        %v3119 = vsel %vm890, %v2943, 0.0
        %v3120 = vsel %vm890, %v2945, 0.0
        %v3121 = vadd.f32 %v3119, %v3120
        %v3122 = vsel %vm890, %v2946, 0.0
        %v3123 = vsel %vm890, %v2948, 0.0
        %v3124 = vadd.f32 %v3122, %v3123
        %v3125 = vsel %vm890, %v2947, 0.0
        %v3126 = vsel %vm890, %v2949, 0.0
        %v3127 = vadd.f32 %v3125, %v3126
        %v3128 = vsel %vm890, %v2950, 0.0
        %v3129 = vsel %vm890, %v2952, 0.0
        %v3130 = vadd.f32 %v3128, %v3129
        %v3131 = vsel %vm890, %v2951, 0.0
        %v3132 = vsel %vm890, %v2953, 0.0
        %v3133 = vadd.f32 %v3131, %v3132
        %v3134 = vsel %vm890, %v2954, 0.0
        %v3135 = vsel %vm890, %v2956, 0.0
        %v3136 = vadd.f32 %v3134, %v3135
        %v3137 = vsel %vm890, %v2955, 0.0
        %v3138 = vsel %vm890, %v2957, 0.0
        %v3139 = vadd.f32 %v3137, %v3138
        %v3140 = vsel %vm890, %v2958, 0.0
        %v3141 = vsel %vm890, %v2960, 0.0
        %v3142 = vadd.f32 %v3140, %v3141
        %v3143 = vsel %vm890, %v2959, 0.0
        %v3144 = vsel %vm890, %v2961, 0.0
        %v3145 = vadd.f32 %v3143, %v3144
        %v3146 = vsel %vm890, %v2962, 0.0
        %v3147 = vsel %vm890, %v2964, 0.0
        %v3148 = vadd.f32 %v3146, %v3147
        %v3149 = vsel %vm890, %v2963, 0.0
        %v3150 = vsel %vm890, %v2965, 0.0
        %v3151 = vadd.f32 %v3149, %v3150
        %v3152 = vsel %vm890, %v2966, 0.0
        %v3153 = vsel %vm890, %v2968, 0.0
        %v3154 = vadd.f32 %v3152, %v3153
        %v3155 = vsel %vm890, %v2967, 0.0
        %v3156 = vsel %vm890, %v2969, 0.0
        %v3157 = vadd.f32 %v3155, %v3156
        %v3158 = vsel %vm890, %v2970, 0.0
        %v3159 = vsel %vm890, %v2972, 0.0
        %v3160 = vadd.f32 %v3158, %v3159
        %v3161 = vsel %vm890, %v2971, 0.0
        %v3162 = vsel %vm890, %v2973, 0.0
        %v3163 = vadd.f32 %v3161, %v3162
        %v3164 = vsel %vm890, %v2974, 0.0
        %v3165 = vsel %vm890, %v2976, 0.0
        %v3166 = vadd.f32 %v3164, %v3165
        %v3167 = vsel %vm890, %v2975, 0.0
        %v3168 = vsel %vm890, %v2977, 0.0
        %v3169 = vadd.f32 %v3167, %v3168
        %v3170 = vmul.f32 %v2213, %v1066
        %v3171 = vmul.f32 %v2213, %v1067
        %v3172 = vmul.f32 %v2217, %v1068
        %v3173 = vmul.f32 %v2217, %v1069
        %v3174 = vmul.f32 %v2221, %v1070
        %v3175 = vmul.f32 %v2221, %v1071
        %v3176 = vmul.f32 %v2225, %v1072
        %v3177 = vmul.f32 %v2225, %v1073
        %v3178 = vmul.f32 %v2229, %v1066
        %v3179 = vmul.f32 %v2229, %v1067
        %v3180 = vmul.f32 %v2233, %v1068
        %v3181 = vmul.f32 %v2233, %v1069
        %v3182 = vmul.f32 %v2237, %v1070
        %v3183 = vmul.f32 %v2237, %v1071
        %v3184 = vmul.f32 %v2241, %v1072
        %v3185 = vmul.f32 %v2241, %v1073
        %v3186 = vmul.f32 %v2245, %v1066
        %v3187 = vmul.f32 %v2245, %v1067
        %v3188 = vmul.f32 %v2249, %v1068
        %v3189 = vmul.f32 %v2249, %v1069
        %v3190 = vmul.f32 %v2253, %v1070
        %v3191 = vmul.f32 %v2253, %v1071
        %v3192 = vmul.f32 %v2257, %v1072
        %v3193 = vmul.f32 %v2257, %v1073
        %v3194 = vmul.f32 %v2261, %v1066
        %v3195 = vmul.f32 %v2261, %v1067
        %v3196 = vmul.f32 %v2265, %v1068
        %v3197 = vmul.f32 %v2265, %v1069
        %v3198 = vmul.f32 %v2269, %v1070
        %v3199 = vmul.f32 %v2269, %v1071
        %v3200 = vmul.f32 %v2273, %v1072
        %v3201 = vmul.f32 %v2273, %v1073
        %v3202 = vmul.f32 %v2277, %v1066
        %v3203 = vmul.f32 %v2277, %v1067
        %v3204 = vmul.f32 %v2281, %v1068
        %v3205 = vmul.f32 %v2281, %v1069
        %v3206 = vmul.f32 %v2285, %v1070
        %v3207 = vmul.f32 %v2285, %v1071
        %v3208 = vmul.f32 %v2289, %v1072
        %v3209 = vmul.f32 %v2289, %v1073
        %v3210 = vmul.f32 %v2293, %v1066
        %v3211 = vmul.f32 %v2293, %v1067
        %v3212 = vmul.f32 %v2297, %v1068
        %v3213 = vmul.f32 %v2297, %v1069
        %v3214 = vmul.f32 %v2301, %v1070
        %v3215 = vmul.f32 %v2301, %v1071
        %v3216 = vmul.f32 %v2305, %v1072
        %v3217 = vmul.f32 %v2305, %v1073
        %v3218 = vmul.f32 %v2309, %v1066
        %v3219 = vmul.f32 %v2309, %v1067
        %v3220 = vmul.f32 %v2313, %v1068
        %v3221 = vmul.f32 %v2313, %v1069
        %v3222 = vmul.f32 %v2317, %v1070
        %v3223 = vmul.f32 %v2317, %v1071
        %v3224 = vmul.f32 %v2321, %v1072
        %v3225 = vmul.f32 %v2321, %v1073
        %v3226 = vmul.f32 %v2325, %v1066
        %v3227 = vmul.f32 %v2325, %v1067
        %v3228 = vmul.f32 %v2329, %v1068
        %v3229 = vmul.f32 %v2329, %v1069
        %v3230 = vmul.f32 %v2333, %v1070
        %v3231 = vmul.f32 %v2333, %v1071
        %v3232 = vmul.f32 %v2337, %v1072
        %v3233 = vmul.f32 %v2337, %v1073
        %v3234 = vmul.f32 %v2341, %v1066
        %v3235 = vmul.f32 %v2341, %v1067
        %v3236 = vmul.f32 %v2345, %v1068
        %v3237 = vmul.f32 %v2345, %v1069
        %v3238 = vmul.f32 %v2349, %v1070
        %v3239 = vmul.f32 %v2349, %v1071
        %v3240 = vmul.f32 %v2353, %v1072
        %v3241 = vmul.f32 %v2353, %v1073
        %v3242 = vmul.f32 %v2357, %v1066
        %v3243 = vmul.f32 %v2357, %v1067
        %v3244 = vmul.f32 %v2361, %v1068
        %v3245 = vmul.f32 %v2361, %v1069
        %v3246 = vmul.f32 %v2365, %v1070
        %v3247 = vmul.f32 %v2365, %v1071
        %v3248 = vmul.f32 %v2369, %v1072
        %v3249 = vmul.f32 %v2369, %v1073
        %v3250 = vmul.f32 %v2373, %v1066
        %v3251 = vmul.f32 %v2373, %v1067
        %v3252 = vmul.f32 %v2377, %v1068
        %v3253 = vmul.f32 %v2377, %v1069
        %v3254 = vmul.f32 %v2381, %v1070
        %v3255 = vmul.f32 %v2381, %v1071
        %v3256 = vmul.f32 %v2385, %v1072
        %v3257 = vmul.f32 %v2385, %v1073
        %v3258 = vmul.f32 %v2389, %v1066
        %v3259 = vmul.f32 %v2389, %v1067
        %v3260 = vmul.f32 %v2393, %v1068
        %v3261 = vmul.f32 %v2393, %v1069
        %v3262 = vmul.f32 %v2397, %v1070
        %v3263 = vmul.f32 %v2397, %v1071
        %v3264 = vmul.f32 %v2401, %v1072
        %v3265 = vmul.f32 %v2401, %v1073
        %v3266 = vmul.f32 %v2405, %v1066
        %v3267 = vmul.f32 %v2405, %v1067
        %v3268 = vmul.f32 %v2409, %v1068
        %v3269 = vmul.f32 %v2409, %v1069
        %v3270 = vmul.f32 %v2413, %v1070
        %v3271 = vmul.f32 %v2413, %v1071
        %v3272 = vmul.f32 %v2417, %v1072
        %v3273 = vmul.f32 %v2417, %v1073
        %v3274 = vmul.f32 %v2421, %v1066
        %v3275 = vmul.f32 %v2421, %v1067
        %v3276 = vmul.f32 %v2425, %v1068
        %v3277 = vmul.f32 %v2425, %v1069
        %v3278 = vmul.f32 %v2429, %v1070
        %v3279 = vmul.f32 %v2429, %v1071
        %v3280 = vmul.f32 %v2433, %v1072
        %v3281 = vmul.f32 %v2433, %v1073
        %v3282 = vmul.f32 %v2437, %v1066
        %v3283 = vmul.f32 %v2437, %v1067
        %v3284 = vmul.f32 %v2441, %v1068
        %v3285 = vmul.f32 %v2441, %v1069
        %v3286 = vmul.f32 %v2445, %v1070
        %v3287 = vmul.f32 %v2445, %v1071
        %v3288 = vmul.f32 %v2449, %v1072
        %v3289 = vmul.f32 %v2449, %v1073
        %v3290 = vmul.f32 %v2453, %v1066
        %v3291 = vmul.f32 %v2453, %v1067
        %v3292 = vmul.f32 %v2457, %v1068
        %v3293 = vmul.f32 %v2457, %v1069
        %v3294 = vmul.f32 %v2461, %v1070
        %v3295 = vmul.f32 %v2461, %v1071
        %v3296 = vmul.f32 %v2465, %v1072
        %v3297 = vmul.f32 %v2465, %v1073
        %v3298 = vsel %vm890, %v3170, 0.0
        %v3299 = vsel %vm890, %v3172, 0.0
        %v3300 = vadd.f32 %v3298, %v3299
        %v3301 = vsel %vm890, %v3171, 0.0
        %v3302 = vsel %vm890, %v3173, 0.0
        %v3303 = vadd.f32 %v3301, %v3302
        %v3304 = vsel %vm890, %v3174, 0.0
        %v3305 = vsel %vm890, %v3176, 0.0
        %v3306 = vadd.f32 %v3304, %v3305
        %v3307 = vsel %vm890, %v3175, 0.0
        %v3308 = vsel %vm890, %v3177, 0.0
        %v3309 = vadd.f32 %v3307, %v3308
        %v3310 = vsel %vm890, %v3178, 0.0
        %v3311 = vsel %vm890, %v3180, 0.0
        %v3312 = vadd.f32 %v3310, %v3311
        %v3313 = vsel %vm890, %v3179, 0.0
        %v3314 = vsel %vm890, %v3181, 0.0
        %v3315 = vadd.f32 %v3313, %v3314
        %v3316 = vsel %vm890, %v3182, 0.0
        %v3317 = vsel %vm890, %v3184, 0.0
        %v3318 = vadd.f32 %v3316, %v3317
        %v3319 = vsel %vm890, %v3183, 0.0
        %v3320 = vsel %vm890, %v3185, 0.0
        %v3321 = vadd.f32 %v3319, %v3320
        %v3322 = vsel %vm890, %v3186, 0.0
        %v3323 = vsel %vm890, %v3188, 0.0
        %v3324 = vadd.f32 %v3322, %v3323
        %v3325 = vsel %vm890, %v3187, 0.0
        %v3326 = vsel %vm890, %v3189, 0.0
        %v3327 = vadd.f32 %v3325, %v3326
        %v3328 = vsel %vm890, %v3190, 0.0
        %v3329 = vsel %vm890, %v3192, 0.0
        %v3330 = vadd.f32 %v3328, %v3329
        %v3331 = vsel %vm890, %v3191, 0.0
        %v3332 = vsel %vm890, %v3193, 0.0
        %v3333 = vadd.f32 %v3331, %v3332
        %v3334 = vsel %vm890, %v3194, 0.0
        %v3335 = vsel %vm890, %v3196, 0.0
        %v3336 = vadd.f32 %v3334, %v3335
        %v3337 = vsel %vm890, %v3195, 0.0
        %v3338 = vsel %vm890, %v3197, 0.0
        %v3339 = vadd.f32 %v3337, %v3338
        %v3340 = vsel %vm890, %v3198, 0.0
        %v3341 = vsel %vm890, %v3200, 0.0
        %v3342 = vadd.f32 %v3340, %v3341
        %v3343 = vsel %vm890, %v3199, 0.0
        %v3344 = vsel %vm890, %v3201, 0.0
        %v3345 = vadd.f32 %v3343, %v3344
        %v3346 = vsel %vm890, %v3202, 0.0
        %v3347 = vsel %vm890, %v3204, 0.0
        %v3348 = vadd.f32 %v3346, %v3347
        %v3349 = vsel %vm890, %v3203, 0.0
        %v3350 = vsel %vm890, %v3205, 0.0
        %v3351 = vadd.f32 %v3349, %v3350
        %v3352 = vsel %vm890, %v3206, 0.0
        %v3353 = vsel %vm890, %v3208, 0.0
        %v3354 = vadd.f32 %v3352, %v3353
        %v3355 = vsel %vm890, %v3207, 0.0
        %v3356 = vsel %vm890, %v3209, 0.0
        %v3357 = vadd.f32 %v3355, %v3356
        %v3358 = vsel %vm890, %v3210, 0.0
        %v3359 = vsel %vm890, %v3212, 0.0
        %v3360 = vadd.f32 %v3358, %v3359
        %v3361 = vsel %vm890, %v3211, 0.0
        %v3362 = vsel %vm890, %v3213, 0.0
        %v3363 = vadd.f32 %v3361, %v3362
        %v3364 = vsel %vm890, %v3214, 0.0
        %v3365 = vsel %vm890, %v3216, 0.0
        %v3366 = vadd.f32 %v3364, %v3365
        %v3367 = vsel %vm890, %v3215, 0.0
        %v3368 = vsel %vm890, %v3217, 0.0
        %v3369 = vadd.f32 %v3367, %v3368
        %v3370 = vsel %vm890, %v3218, 0.0
        %v3371 = vsel %vm890, %v3220, 0.0
        %v3372 = vadd.f32 %v3370, %v3371
        %v3373 = vsel %vm890, %v3219, 0.0
        %v3374 = vsel %vm890, %v3221, 0.0
        %v3375 = vadd.f32 %v3373, %v3374
        %v3376 = vsel %vm890, %v3222, 0.0
        %v3377 = vsel %vm890, %v3224, 0.0
        %v3378 = vadd.f32 %v3376, %v3377
        %v3379 = vsel %vm890, %v3223, 0.0
        %v3380 = vsel %vm890, %v3225, 0.0
        %v3381 = vadd.f32 %v3379, %v3380
        %v3382 = vsel %vm890, %v3226, 0.0
        %v3383 = vsel %vm890, %v3228, 0.0
        %v3384 = vadd.f32 %v3382, %v3383
        %v3385 = vsel %vm890, %v3227, 0.0
        %v3386 = vsel %vm890, %v3229, 0.0
        %v3387 = vadd.f32 %v3385, %v3386
        %v3388 = vsel %vm890, %v3230, 0.0
        %v3389 = vsel %vm890, %v3232, 0.0
        %v3390 = vadd.f32 %v3388, %v3389
        %v3391 = vsel %vm890, %v3231, 0.0
        %v3392 = vsel %vm890, %v3233, 0.0
        %v3393 = vadd.f32 %v3391, %v3392
        %v3394 = vsel %vm890, %v3234, 0.0
        %v3395 = vsel %vm890, %v3236, 0.0
        %v3396 = vadd.f32 %v3394, %v3395
        %v3397 = vsel %vm890, %v3235, 0.0
        %v3398 = vsel %vm890, %v3237, 0.0
        %v3399 = vadd.f32 %v3397, %v3398
        %v3400 = vsel %vm890, %v3238, 0.0
        %v3401 = vsel %vm890, %v3240, 0.0
        %v3402 = vadd.f32 %v3400, %v3401
        %v3403 = vsel %vm890, %v3239, 0.0
        %v3404 = vsel %vm890, %v3241, 0.0
        %v3405 = vadd.f32 %v3403, %v3404
        %v3406 = vsel %vm890, %v3242, 0.0
        %v3407 = vsel %vm890, %v3244, 0.0
        %v3408 = vadd.f32 %v3406, %v3407
        %v3409 = vsel %vm890, %v3243, 0.0
        %v3410 = vsel %vm890, %v3245, 0.0
        %v3411 = vadd.f32 %v3409, %v3410
        %v3412 = vsel %vm890, %v3246, 0.0
        %v3413 = vsel %vm890, %v3248, 0.0
        %v3414 = vadd.f32 %v3412, %v3413
        %v3415 = vsel %vm890, %v3247, 0.0
        %v3416 = vsel %vm890, %v3249, 0.0
        %v3417 = vadd.f32 %v3415, %v3416
        %v3418 = vsel %vm890, %v3250, 0.0
        %v3419 = vsel %vm890, %v3252, 0.0
        %v3420 = vadd.f32 %v3418, %v3419
        %v3421 = vsel %vm890, %v3251, 0.0
        %v3422 = vsel %vm890, %v3253, 0.0
        %v3423 = vadd.f32 %v3421, %v3422
        %v3424 = vsel %vm890, %v3254, 0.0
        %v3425 = vsel %vm890, %v3256, 0.0
        %v3426 = vadd.f32 %v3424, %v3425
        %v3427 = vsel %vm890, %v3255, 0.0
        %v3428 = vsel %vm890, %v3257, 0.0
        %v3429 = vadd.f32 %v3427, %v3428
        %v3430 = vsel %vm890, %v3258, 0.0
        %v3431 = vsel %vm890, %v3260, 0.0
        %v3432 = vadd.f32 %v3430, %v3431
        %v3433 = vsel %vm890, %v3259, 0.0
        %v3434 = vsel %vm890, %v3261, 0.0
        %v3435 = vadd.f32 %v3433, %v3434
        %v3436 = vsel %vm890, %v3262, 0.0
        %v3437 = vsel %vm890, %v3264, 0.0
        %v3438 = vadd.f32 %v3436, %v3437
        %v3439 = vsel %vm890, %v3263, 0.0
        %v3440 = vsel %vm890, %v3265, 0.0
        %v3441 = vadd.f32 %v3439, %v3440
        %v3442 = vsel %vm890, %v3266, 0.0
        %v3443 = vsel %vm890, %v3268, 0.0
        %v3444 = vadd.f32 %v3442, %v3443
        %v3445 = vsel %vm890, %v3267, 0.0
        %v3446 = vsel %vm890, %v3269, 0.0
        %v3447 = vadd.f32 %v3445, %v3446
        %v3448 = vsel %vm890, %v3270, 0.0
        %v3449 = vsel %vm890, %v3272, 0.0
        %v3450 = vadd.f32 %v3448, %v3449
        %v3451 = vsel %vm890, %v3271, 0.0
        %v3452 = vsel %vm890, %v3273, 0.0
        %v3453 = vadd.f32 %v3451, %v3452
        %v3454 = vsel %vm890, %v3274, 0.0
        %v3455 = vsel %vm890, %v3276, 0.0
        %v3456 = vadd.f32 %v3454, %v3455
        %v3457 = vsel %vm890, %v3275, 0.0
        %v3458 = vsel %vm890, %v3277, 0.0
        %v3459 = vadd.f32 %v3457, %v3458
        %v3460 = vsel %vm890, %v3278, 0.0
        %v3461 = vsel %vm890, %v3280, 0.0
        %v3462 = vadd.f32 %v3460, %v3461
        %v3463 = vsel %vm890, %v3279, 0.0
        %v3464 = vsel %vm890, %v3281, 0.0
        %v3465 = vadd.f32 %v3463, %v3464
        %v3466 = vsel %vm890, %v3282, 0.0
        %v3467 = vsel %vm890, %v3284, 0.0
        %v3468 = vadd.f32 %v3466, %v3467
        %v3469 = vsel %vm890, %v3283, 0.0
        %v3470 = vsel %vm890, %v3285, 0.0
        %v3471 = vadd.f32 %v3469, %v3470
        %v3472 = vsel %vm890, %v3286, 0.0
        %v3473 = vsel %vm890, %v3288, 0.0
        %v3474 = vadd.f32 %v3472, %v3473
        %v3475 = vsel %vm890, %v3287, 0.0
        %v3476 = vsel %vm890, %v3289, 0.0
        %v3477 = vadd.f32 %v3475, %v3476
        %v3478 = vsel %vm890, %v3290, 0.0
        %v3479 = vsel %vm890, %v3292, 0.0
        %v3480 = vadd.f32 %v3478, %v3479
        %v3481 = vsel %vm890, %v3291, 0.0
        %v3482 = vsel %vm890, %v3293, 0.0
        %v3483 = vadd.f32 %v3481, %v3482
        %v3484 = vsel %vm890, %v3294, 0.0
        %v3485 = vsel %vm890, %v3296, 0.0
        %v3486 = vadd.f32 %v3484, %v3485
        %v3487 = vsel %vm890, %v3295, 0.0
        %v3488 = vsel %vm890, %v3297, 0.0
        %v3489 = vadd.f32 %v3487, %v3488
        %v3490 = vld [vmem:[%s6] sm:$0x1]
        %v3491 = vld [vmem:[%s6 + $0x1] sm:$0x1]
        %v3492 = vld [vmem:[%s6 + $0x2] sm:$0x1]
        %v3493 = vld [vmem:[%s6 + $0x3] sm:$0x1]
        %v3494 = vld [vmem:[%s6 + $0x4] sm:$0x1]
        %v3495 = vld [vmem:[%s6 + $0x5] sm:$0x1]
        %v3498 = vlaneseq
        %v3499 = vshrl.u32 %v3498, 7
        %v3500 = vsub.s32 0, %v3499
        %v3501 = vrot.slane %v3490, %v3500
        %v3502 = vlaneseq
        %v3503 = vshrl.u32 %v3502, 7
        %v3504 = vsub.s32 0, %v3503
        %v3505 = vrot.slane %v3491, %v3504
        %3506 = vset.pattern.permute.xlu0 0
        %3507 = vperm.xlu0 %3506, %v3501
        %v3508 = vpop.permute.xlu0 %3507
        %3510 = vset.pattern.permute.xlu0 0
        %3511 = vperm.xlu0 %3510, %v3505
        %v3512 = vpop.permute.xlu0 %3511
        %v3514 = vmul.f32 %v2660, %v3508
        %v3515 = vmul.f32 %v2663, %v3508
        %v3516 = vmul.f32 %v2666, %v3512
        %v3517 = vmul.f32 %v2669, %v3512
        %v3518 = vmul.f32 %v2672, %v3508
        %v3519 = vmul.f32 %v2675, %v3508
        %v3520 = vmul.f32 %v2678, %v3512
        %v3521 = vmul.f32 %v2681, %v3512
        %v3522 = vmul.f32 %v2684, %v3508
        %v3523 = vmul.f32 %v2687, %v3508
        %v3524 = vmul.f32 %v2690, %v3512
        %v3525 = vmul.f32 %v2693, %v3512
        %v3526 = vmul.f32 %v2696, %v3508
        %v3527 = vmul.f32 %v2699, %v3508
        %v3528 = vmul.f32 %v2702, %v3512
        %v3529 = vmul.f32 %v2705, %v3512
        %v3530 = vmul.f32 %v2708, %v3508
        %v3531 = vmul.f32 %v2711, %v3508
        %v3532 = vmul.f32 %v2714, %v3512
        %v3533 = vmul.f32 %v2717, %v3512
        %v3534 = vmul.f32 %v2720, %v3508
        %v3535 = vmul.f32 %v2723, %v3508
        %v3536 = vmul.f32 %v2726, %v3512
        %v3537 = vmul.f32 %v2729, %v3512
        %v3538 = vmul.f32 %v2732, %v3508
        %v3539 = vmul.f32 %v2735, %v3508
        %v3540 = vmul.f32 %v2738, %v3512
        %v3541 = vmul.f32 %v2741, %v3512
        %v3542 = vmul.f32 %v2744, %v3508
        %v3543 = vmul.f32 %v2747, %v3508
        %v3544 = vmul.f32 %v2750, %v3512
        %v3545 = vmul.f32 %v2753, %v3512
        %v3546 = vmul.f32 %v2756, %v3508
        %v3547 = vmul.f32 %v2759, %v3508
        %v3548 = vmul.f32 %v2762, %v3512
        %v3549 = vmul.f32 %v2765, %v3512
        %v3550 = vmul.f32 %v2768, %v3508
        %v3551 = vmul.f32 %v2771, %v3508
        %v3552 = vmul.f32 %v2774, %v3512
        %v3553 = vmul.f32 %v2777, %v3512
        %v3554 = vmul.f32 %v2780, %v3508
        %v3555 = vmul.f32 %v2783, %v3508
        %v3556 = vmul.f32 %v2786, %v3512
        %v3557 = vmul.f32 %v2789, %v3512
        %v3558 = vmul.f32 %v2792, %v3508
        %v3559 = vmul.f32 %v2795, %v3508
        %v3560 = vmul.f32 %v2798, %v3512
        %v3561 = vmul.f32 %v2801, %v3512
        %v3562 = vmul.f32 %v2804, %v3508
        %v3563 = vmul.f32 %v2807, %v3508
        %v3564 = vmul.f32 %v2810, %v3512
        %v3565 = vmul.f32 %v2813, %v3512
        %v3566 = vmul.f32 %v2816, %v3508
        %v3567 = vmul.f32 %v2819, %v3508
        %v3568 = vmul.f32 %v2822, %v3512
        %v3569 = vmul.f32 %v2825, %v3512
        %v3570 = vmul.f32 %v2828, %v3508
        %v3571 = vmul.f32 %v2831, %v3508
        %v3572 = vmul.f32 %v2834, %v3512
        %v3573 = vmul.f32 %v2837, %v3512
        %v3574 = vmul.f32 %v2840, %v3508
        %v3575 = vmul.f32 %v2843, %v3508
        %v3576 = vmul.f32 %v2846, %v3512
        %v3577 = vmul.f32 %v2849, %v3512
        %v3580 = vlaneseq
        %v3581 = vshrl.u32 %v3580, 7
        %v3582 = vsub.s32 0, %v3581
        %v3583 = vrot.slane %v3492, %v3582
        %v3584 = vlaneseq
        %v3585 = vshrl.u32 %v3584, 7
        %v3586 = vsub.s32 0, %v3585
        %v3587 = vrot.slane %v3493, %v3586
        %3588 = vset.pattern.permute.xlu0 0
        %3589 = vperm.xlu0 %3588, %v3583
        %v3590 = vpop.permute.xlu0 %3589
        %3592 = vset.pattern.permute.xlu0 0
        %3593 = vperm.xlu0 %3592, %v3587
        %v3594 = vpop.permute.xlu0 %3593
        %v3596 = vmul.f32 %v2980, %v3590
        %v3597 = vmul.f32 %v2983, %v3590
        %v3598 = vmul.f32 %v2986, %v3594
        %v3599 = vmul.f32 %v2989, %v3594
        %v3600 = vmul.f32 %v2992, %v3590
        %v3601 = vmul.f32 %v2995, %v3590
        %v3602 = vmul.f32 %v2998, %v3594
        %v3603 = vmul.f32 %v3001, %v3594
        %v3604 = vmul.f32 %v3004, %v3590
        %v3605 = vmul.f32 %v3007, %v3590
        %v3606 = vmul.f32 %v3010, %v3594
        %v3607 = vmul.f32 %v3013, %v3594
        %v3608 = vmul.f32 %v3016, %v3590
        %v3609 = vmul.f32 %v3019, %v3590
        %v3610 = vmul.f32 %v3022, %v3594
        %v3611 = vmul.f32 %v3025, %v3594
        %v3612 = vmul.f32 %v3028, %v3590
        %v3613 = vmul.f32 %v3031, %v3590
        %v3614 = vmul.f32 %v3034, %v3594
        %v3615 = vmul.f32 %v3037, %v3594
        %v3616 = vmul.f32 %v3040, %v3590
        %v3617 = vmul.f32 %v3043, %v3590
        %v3618 = vmul.f32 %v3046, %v3594
        %v3619 = vmul.f32 %v3049, %v3594
        %v3620 = vmul.f32 %v3052, %v3590
        %v3621 = vmul.f32 %v3055, %v3590
        %v3622 = vmul.f32 %v3058, %v3594
        %v3623 = vmul.f32 %v3061, %v3594
        %v3624 = vmul.f32 %v3064, %v3590
        %v3625 = vmul.f32 %v3067, %v3590
        %v3626 = vmul.f32 %v3070, %v3594
        %v3627 = vmul.f32 %v3073, %v3594
        %v3628 = vmul.f32 %v3076, %v3590
        %v3629 = vmul.f32 %v3079, %v3590
        %v3630 = vmul.f32 %v3082, %v3594
        %v3631 = vmul.f32 %v3085, %v3594
        %v3632 = vmul.f32 %v3088, %v3590
        %v3633 = vmul.f32 %v3091, %v3590
        %v3634 = vmul.f32 %v3094, %v3594
        %v3635 = vmul.f32 %v3097, %v3594
        %v3636 = vmul.f32 %v3100, %v3590
        %v3637 = vmul.f32 %v3103, %v3590
        %v3638 = vmul.f32 %v3106, %v3594
        %v3639 = vmul.f32 %v3109, %v3594
        %v3640 = vmul.f32 %v3112, %v3590
        %v3641 = vmul.f32 %v3115, %v3590
        %v3642 = vmul.f32 %v3118, %v3594
        %v3643 = vmul.f32 %v3121, %v3594
        %v3644 = vmul.f32 %v3124, %v3590
        %v3645 = vmul.f32 %v3127, %v3590
        %v3646 = vmul.f32 %v3130, %v3594
        %v3647 = vmul.f32 %v3133, %v3594
        %v3648 = vmul.f32 %v3136, %v3590
        %v3649 = vmul.f32 %v3139, %v3590
        %v3650 = vmul.f32 %v3142, %v3594
        %v3651 = vmul.f32 %v3145, %v3594
        %v3652 = vmul.f32 %v3148, %v3590
        %v3653 = vmul.f32 %v3151, %v3590
        %v3654 = vmul.f32 %v3154, %v3594
        %v3655 = vmul.f32 %v3157, %v3594
        %v3656 = vmul.f32 %v3160, %v3590
        %v3657 = vmul.f32 %v3163, %v3590
        %v3658 = vmul.f32 %v3166, %v3594
        %v3659 = vmul.f32 %v3169, %v3594
        %v3660 = vadd.f32 %v3514, %v3596
        %v3661 = vadd.f32 %v3515, %v3597
        %v3662 = vadd.f32 %v3516, %v3598
        %v3663 = vadd.f32 %v3517, %v3599
        %v3664 = vadd.f32 %v3518, %v3600
        %v3665 = vadd.f32 %v3519, %v3601
        %v3666 = vadd.f32 %v3520, %v3602
        %v3667 = vadd.f32 %v3521, %v3603
        %v3668 = vadd.f32 %v3522, %v3604
        %v3669 = vadd.f32 %v3523, %v3605
        %v3670 = vadd.f32 %v3524, %v3606
        %v3671 = vadd.f32 %v3525, %v3607
        %v3672 = vadd.f32 %v3526, %v3608
        %v3673 = vadd.f32 %v3527, %v3609
        %v3674 = vadd.f32 %v3528, %v3610
        %v3675 = vadd.f32 %v3529, %v3611
        %v3676 = vadd.f32 %v3530, %v3612
        %v3677 = vadd.f32 %v3531, %v3613
        %v3678 = vadd.f32 %v3532, %v3614
        %v3679 = vadd.f32 %v3533, %v3615
        %v3680 = vadd.f32 %v3534, %v3616
        %v3681 = vadd.f32 %v3535, %v3617
        %v3682 = vadd.f32 %v3536, %v3618
        %v3683 = vadd.f32 %v3537, %v3619
        %v3684 = vadd.f32 %v3538, %v3620
        %v3685 = vadd.f32 %v3539, %v3621
        %v3686 = vadd.f32 %v3540, %v3622
        %v3687 = vadd.f32 %v3541, %v3623
        %v3688 = vadd.f32 %v3542, %v3624
        %v3689 = vadd.f32 %v3543, %v3625
        %v3690 = vadd.f32 %v3544, %v3626
        %v3691 = vadd.f32 %v3545, %v3627
        %v3692 = vadd.f32 %v3546, %v3628
        %v3693 = vadd.f32 %v3547, %v3629
        %v3694 = vadd.f32 %v3548, %v3630
        %v3695 = vadd.f32 %v3549, %v3631
        %v3696 = vadd.f32 %v3550, %v3632
        %v3697 = vadd.f32 %v3551, %v3633
        %v3698 = vadd.f32 %v3552, %v3634
        %v3699 = vadd.f32 %v3553, %v3635
        %v3700 = vadd.f32 %v3554, %v3636
        %v3701 = vadd.f32 %v3555, %v3637
        %v3702 = vadd.f32 %v3556, %v3638
        %v3703 = vadd.f32 %v3557, %v3639
        %v3704 = vadd.f32 %v3558, %v3640
        %v3705 = vadd.f32 %v3559, %v3641
        %v3706 = vadd.f32 %v3560, %v3642
        %v3707 = vadd.f32 %v3561, %v3643
        %v3708 = vadd.f32 %v3562, %v3644
        %v3709 = vadd.f32 %v3563, %v3645
        %v3710 = vadd.f32 %v3564, %v3646
        %v3711 = vadd.f32 %v3565, %v3647
        %v3712 = vadd.f32 %v3566, %v3648
        %v3713 = vadd.f32 %v3567, %v3649
        %v3714 = vadd.f32 %v3568, %v3650
        %v3715 = vadd.f32 %v3569, %v3651
        %v3716 = vadd.f32 %v3570, %v3652
        %v3717 = vadd.f32 %v3571, %v3653
        %v3718 = vadd.f32 %v3572, %v3654
        %v3719 = vadd.f32 %v3573, %v3655
        %v3720 = vadd.f32 %v3574, %v3656
        %v3721 = vadd.f32 %v3575, %v3657
        %v3722 = vadd.f32 %v3576, %v3658
        %v3723 = vadd.f32 %v3577, %v3659
        %v3726 = vlaneseq
        %v3727 = vshrl.u32 %v3726, 7
        %v3728 = vsub.s32 0, %v3727
        %v3729 = vrot.slane %v3494, %v3728
        %v3730 = vlaneseq
        %v3731 = vshrl.u32 %v3730, 7
        %v3732 = vsub.s32 0, %v3731
        %v3733 = vrot.slane %v3495, %v3732
        %3734 = vset.pattern.permute.xlu0 0
        %3735 = vperm.xlu0 %3734, %v3729
        %v3736 = vpop.permute.xlu0 %3735
        %3738 = vset.pattern.permute.xlu0 0
        %3739 = vperm.xlu0 %3738, %v3733
        %v3740 = vpop.permute.xlu0 %3739
        %v3742 = vmul.f32 %v3300, %v3736
        %v3743 = vmul.f32 %v3303, %v3736
        %v3744 = vmul.f32 %v3306, %v3740
        %v3745 = vmul.f32 %v3309, %v3740
        %v3746 = vmul.f32 %v3312, %v3736
        %v3747 = vmul.f32 %v3315, %v3736
        %v3748 = vmul.f32 %v3318, %v3740
        %v3749 = vmul.f32 %v3321, %v3740
        %v3750 = vmul.f32 %v3324, %v3736
        %v3751 = vmul.f32 %v3327, %v3736
        %v3752 = vmul.f32 %v3330, %v3740
        %v3753 = vmul.f32 %v3333, %v3740
        %v3754 = vmul.f32 %v3336, %v3736
        %v3755 = vmul.f32 %v3339, %v3736
        %v3756 = vmul.f32 %v3342, %v3740
        %v3757 = vmul.f32 %v3345, %v3740
        %v3758 = vmul.f32 %v3348, %v3736
        %v3759 = vmul.f32 %v3351, %v3736
        %v3760 = vmul.f32 %v3354, %v3740
        %v3761 = vmul.f32 %v3357, %v3740
        %v3762 = vmul.f32 %v3360, %v3736
        %v3763 = vmul.f32 %v3363, %v3736
        %v3764 = vmul.f32 %v3366, %v3740
        %v3765 = vmul.f32 %v3369, %v3740
        %v3766 = vmul.f32 %v3372, %v3736
        %v3767 = vmul.f32 %v3375, %v3736
        %v3768 = vmul.f32 %v3378, %v3740
        %v3769 = vmul.f32 %v3381, %v3740
        %v3770 = vmul.f32 %v3384, %v3736
        %v3771 = vmul.f32 %v3387, %v3736
        %v3772 = vmul.f32 %v3390, %v3740
        %v3773 = vmul.f32 %v3393, %v3740
        %v3774 = vmul.f32 %v3396, %v3736
        %v3775 = vmul.f32 %v3399, %v3736
        %v3776 = vmul.f32 %v3402, %v3740
        %v3777 = vmul.f32 %v3405, %v3740
        %v3778 = vmul.f32 %v3408, %v3736
        %v3779 = vmul.f32 %v3411, %v3736
        %v3780 = vmul.f32 %v3414, %v3740
        %v3781 = vmul.f32 %v3417, %v3740
        %v3782 = vmul.f32 %v3420, %v3736
        %v3783 = vmul.f32 %v3423, %v3736
        %v3784 = vmul.f32 %v3426, %v3740
        %v3785 = vmul.f32 %v3429, %v3740
        %v3786 = vmul.f32 %v3432, %v3736
        %v3787 = vmul.f32 %v3435, %v3736
        %v3788 = vmul.f32 %v3438, %v3740
        %v3789 = vmul.f32 %v3441, %v3740
        %v3790 = vmul.f32 %v3444, %v3736
        %v3791 = vmul.f32 %v3447, %v3736
        %v3792 = vmul.f32 %v3450, %v3740
        %v3793 = vmul.f32 %v3453, %v3740
        %v3794 = vmul.f32 %v3456, %v3736
        %v3795 = vmul.f32 %v3459, %v3736
        %v3796 = vmul.f32 %v3462, %v3740
        %v3797 = vmul.f32 %v3465, %v3740
        %v3798 = vmul.f32 %v3468, %v3736
        %v3799 = vmul.f32 %v3471, %v3736
        %v3800 = vmul.f32 %v3474, %v3740
        %v3801 = vmul.f32 %v3477, %v3740
        %v3802 = vmul.f32 %v3480, %v3736
        %v3803 = vmul.f32 %v3483, %v3736
        %v3804 = vmul.f32 %v3486, %v3740
        %v3805 = vmul.f32 %v3489, %v3740
        %v3806 = vadd.f32 %v3660, %v3742
        %v3807 = vadd.f32 %v3661, %v3743
        %v3808 = vadd.f32 %v3662, %v3744
        %v3809 = vadd.f32 %v3663, %v3745
        %v3810 = vadd.f32 %v3664, %v3746
        %v3811 = vadd.f32 %v3665, %v3747
        %v3812 = vadd.f32 %v3666, %v3748
        %v3813 = vadd.f32 %v3667, %v3749
        %v3814 = vadd.f32 %v3668, %v3750
        %v3815 = vadd.f32 %v3669, %v3751
        %v3816 = vadd.f32 %v3670, %v3752
        %v3817 = vadd.f32 %v3671, %v3753
        %v3818 = vadd.f32 %v3672, %v3754
        %v3819 = vadd.f32 %v3673, %v3755
        %v3820 = vadd.f32 %v3674, %v3756
        %v3821 = vadd.f32 %v3675, %v3757
        %v3822 = vadd.f32 %v3676, %v3758
        %v3823 = vadd.f32 %v3677, %v3759
        %v3824 = vadd.f32 %v3678, %v3760
        %v3825 = vadd.f32 %v3679, %v3761
        %v3826 = vadd.f32 %v3680, %v3762
        %v3827 = vadd.f32 %v3681, %v3763
        %v3828 = vadd.f32 %v3682, %v3764
        %v3829 = vadd.f32 %v3683, %v3765
        %v3830 = vadd.f32 %v3684, %v3766
        %v3831 = vadd.f32 %v3685, %v3767
        %v3832 = vadd.f32 %v3686, %v3768
        %v3833 = vadd.f32 %v3687, %v3769
        %v3834 = vadd.f32 %v3688, %v3770
        %v3835 = vadd.f32 %v3689, %v3771
        %v3836 = vadd.f32 %v3690, %v3772
        %v3837 = vadd.f32 %v3691, %v3773
        %v3838 = vadd.f32 %v3692, %v3774
        %v3839 = vadd.f32 %v3693, %v3775
        %v3840 = vadd.f32 %v3694, %v3776
        %v3841 = vadd.f32 %v3695, %v3777
        %v3842 = vadd.f32 %v3696, %v3778
        %v3843 = vadd.f32 %v3697, %v3779
        %v3844 = vadd.f32 %v3698, %v3780
        %v3845 = vadd.f32 %v3699, %v3781
        %v3846 = vadd.f32 %v3700, %v3782
        %v3847 = vadd.f32 %v3701, %v3783
        %v3848 = vadd.f32 %v3702, %v3784
        %v3849 = vadd.f32 %v3703, %v3785
        %v3850 = vadd.f32 %v3704, %v3786
        %v3851 = vadd.f32 %v3705, %v3787
        %v3852 = vadd.f32 %v3706, %v3788
        %v3853 = vadd.f32 %v3707, %v3789
        %v3854 = vadd.f32 %v3708, %v3790
        %v3855 = vadd.f32 %v3709, %v3791
        %v3856 = vadd.f32 %v3710, %v3792
        %v3857 = vadd.f32 %v3711, %v3793
        %v3858 = vadd.f32 %v3712, %v3794
        %v3859 = vadd.f32 %v3713, %v3795
        %v3860 = vadd.f32 %v3714, %v3796
        %v3861 = vadd.f32 %v3715, %v3797
        %v3862 = vadd.f32 %v3716, %v3798
        %v3863 = vadd.f32 %v3717, %v3799
        %v3864 = vadd.f32 %v3718, %v3800
        %v3865 = vadd.f32 %v3719, %v3801
        %v3866 = vadd.f32 %v3720, %v3802
        %v3867 = vadd.f32 %v3721, %v3803
        %v3868 = vadd.f32 %v3722, %v3804
        %v3869 = vadd.f32 %v3723, %v3805
        %v3870 = vsel %vm890, %v3806, -inf
        %3871 = vmax.xlane.f32.xlu0 %v3870
        %v3872 = vpop.xlane.xlu0 %3871
        %v3873 = vsel %vm890, %v3807, -inf
        %3874 = vmax.xlane.f32.xlu0 %v3873
        %v3875 = vpop.xlane.xlu0 %3874
        %v3876 = vsel %vm890, %v3808, -inf
        %3877 = vmax.xlane.f32.xlu0 %v3876
        %v3878 = vpop.xlane.xlu0 %3877
        %v3879 = vsel %vm890, %v3809, -inf
        %3880 = vmax.xlane.f32.xlu0 %v3879
        %v3881 = vpop.xlane.xlu0 %3880
        %v3882 = vsel %vm890, %v3810, -inf
        %3883 = vmax.xlane.f32.xlu0 %v3882
        %v3884 = vpop.xlane.xlu0 %3883
        %v3885 = vsel %vm890, %v3811, -inf
        %3886 = vmax.xlane.f32.xlu0 %v3885
        %v3887 = vpop.xlane.xlu0 %3886
        %v3888 = vsel %vm890, %v3812, -inf
        %3889 = vmax.xlane.f32.xlu0 %v3888
        %v3890 = vpop.xlane.xlu0 %3889
        %v3891 = vsel %vm890, %v3813, -inf
        %3892 = vmax.xlane.f32.xlu0 %v3891
        %v3893 = vpop.xlane.xlu0 %3892
        %v3894 = vsel %vm890, %v3814, -inf
        %3895 = vmax.xlane.f32.xlu0 %v3894
        %v3896 = vpop.xlane.xlu0 %3895
        %v3897 = vsel %vm890, %v3815, -inf
        %3898 = vmax.xlane.f32.xlu0 %v3897
        %v3899 = vpop.xlane.xlu0 %3898
        %v3900 = vsel %vm890, %v3816, -inf
        %3901 = vmax.xlane.f32.xlu0 %v3900
        %v3902 = vpop.xlane.xlu0 %3901
        %v3903 = vsel %vm890, %v3817, -inf
        %3904 = vmax.xlane.f32.xlu0 %v3903
        %v3905 = vpop.xlane.xlu0 %3904
        %v3906 = vsel %vm890, %v3818, -inf
        %3907 = vmax.xlane.f32.xlu0 %v3906
        %v3908 = vpop.xlane.xlu0 %3907
        %v3909 = vsel %vm890, %v3819, -inf
        %3910 = vmax.xlane.f32.xlu0 %v3909
        %v3911 = vpop.xlane.xlu0 %3910
        %v3912 = vsel %vm890, %v3820, -inf
        %3913 = vmax.xlane.f32.xlu0 %v3912
        %v3914 = vpop.xlane.xlu0 %3913
        %v3915 = vsel %vm890, %v3821, -inf
        %3916 = vmax.xlane.f32.xlu0 %v3915
        %v3917 = vpop.xlane.xlu0 %3916
        %v3918 = vsel %vm890, %v3822, -inf
        %3919 = vmax.xlane.f32.xlu0 %v3918
        %v3920 = vpop.xlane.xlu0 %3919
        %v3921 = vsel %vm890, %v3823, -inf
        %3922 = vmax.xlane.f32.xlu0 %v3921
        %v3923 = vpop.xlane.xlu0 %3922
        %v3924 = vsel %vm890, %v3824, -inf
        %3925 = vmax.xlane.f32.xlu0 %v3924
        %v3926 = vpop.xlane.xlu0 %3925
        %v3927 = vsel %vm890, %v3825, -inf
        %3928 = vmax.xlane.f32.xlu0 %v3927
        %v3929 = vpop.xlane.xlu0 %3928
        %v3930 = vsel %vm890, %v3826, -inf
        %3931 = vmax.xlane.f32.xlu0 %v3930
        %v3932 = vpop.xlane.xlu0 %3931
        %v3933 = vsel %vm890, %v3827, -inf
        %3934 = vmax.xlane.f32.xlu0 %v3933
        %v3935 = vpop.xlane.xlu0 %3934
        %v3936 = vsel %vm890, %v3828, -inf
        %3937 = vmax.xlane.f32.xlu0 %v3936
        %v3938 = vpop.xlane.xlu0 %3937
        %v3939 = vsel %vm890, %v3829, -inf
        %3940 = vmax.xlane.f32.xlu0 %v3939
        %v3941 = vpop.xlane.xlu0 %3940
        %v3942 = vsel %vm890, %v3830, -inf
        %3943 = vmax.xlane.f32.xlu0 %v3942
        %v3944 = vpop.xlane.xlu0 %3943
        %v3945 = vsel %vm890, %v3831, -inf
        %3946 = vmax.xlane.f32.xlu0 %v3945
        %v3947 = vpop.xlane.xlu0 %3946
        %v3948 = vsel %vm890, %v3832, -inf
        %3949 = vmax.xlane.f32.xlu0 %v3948
        %v3950 = vpop.xlane.xlu0 %3949
        %v3951 = vsel %vm890, %v3833, -inf
        %3952 = vmax.xlane.f32.xlu0 %v3951
        %v3953 = vpop.xlane.xlu0 %3952
        %v3954 = vsel %vm890, %v3834, -inf
        %3955 = vmax.xlane.f32.xlu0 %v3954
        %v3956 = vpop.xlane.xlu0 %3955
        %v3957 = vsel %vm890, %v3835, -inf
        %3958 = vmax.xlane.f32.xlu0 %v3957
        %v3959 = vpop.xlane.xlu0 %3958
        %v3960 = vsel %vm890, %v3836, -inf
        %3961 = vmax.xlane.f32.xlu0 %v3960
        %v3962 = vpop.xlane.xlu0 %3961
        %v3963 = vsel %vm890, %v3837, -inf
        %3964 = vmax.xlane.f32.xlu0 %v3963
        %v3965 = vpop.xlane.xlu0 %3964
        %v3966 = vsel %vm890, %v3838, -inf
        %3967 = vmax.xlane.f32.xlu0 %v3966
        %v3968 = vpop.xlane.xlu0 %3967
        %v3969 = vsel %vm890, %v3839, -inf
        %3970 = vmax.xlane.f32.xlu0 %v3969
        %v3971 = vpop.xlane.xlu0 %3970
        %v3972 = vsel %vm890, %v3840, -inf
        %3973 = vmax.xlane.f32.xlu0 %v3972
        %v3974 = vpop.xlane.xlu0 %3973
        %v3975 = vsel %vm890, %v3841, -inf
        %3976 = vmax.xlane.f32.xlu0 %v3975
        %v3977 = vpop.xlane.xlu0 %3976
        %v3978 = vsel %vm890, %v3842, -inf
        %3979 = vmax.xlane.f32.xlu0 %v3978
        %v3980 = vpop.xlane.xlu0 %3979
        %v3981 = vsel %vm890, %v3843, -inf
        %3982 = vmax.xlane.f32.xlu0 %v3981
        %v3983 = vpop.xlane.xlu0 %3982
        %v3984 = vsel %vm890, %v3844, -inf
        %3985 = vmax.xlane.f32.xlu0 %v3984
        %v3986 = vpop.xlane.xlu0 %3985
        %v3987 = vsel %vm890, %v3845, -inf
        %3988 = vmax.xlane.f32.xlu0 %v3987
        %v3989 = vpop.xlane.xlu0 %3988
        %v3990 = vsel %vm890, %v3846, -inf
        %3991 = vmax.xlane.f32.xlu0 %v3990
        %v3992 = vpop.xlane.xlu0 %3991
        %v3993 = vsel %vm890, %v3847, -inf
        %3994 = vmax.xlane.f32.xlu0 %v3993
        %v3995 = vpop.xlane.xlu0 %3994
        %v3996 = vsel %vm890, %v3848, -inf
        %3997 = vmax.xlane.f32.xlu0 %v3996
        %v3998 = vpop.xlane.xlu0 %3997
        %v3999 = vsel %vm890, %v3849, -inf
        %4000 = vmax.xlane.f32.xlu0 %v3999
        %v4001 = vpop.xlane.xlu0 %4000
        %v4002 = vsel %vm890, %v3850, -inf
        %4003 = vmax.xlane.f32.xlu0 %v4002
        %v4004 = vpop.xlane.xlu0 %4003
        %v4005 = vsel %vm890, %v3851, -inf
        %4006 = vmax.xlane.f32.xlu0 %v4005
        %v4007 = vpop.xlane.xlu0 %4006
        %v4008 = vsel %vm890, %v3852, -inf
        %4009 = vmax.xlane.f32.xlu0 %v4008
        %v4010 = vpop.xlane.xlu0 %4009
        %v4011 = vsel %vm890, %v3853, -inf
        %4012 = vmax.xlane.f32.xlu0 %v4011
        %v4013 = vpop.xlane.xlu0 %4012
        %v4014 = vsel %vm890, %v3854, -inf
        %4015 = vmax.xlane.f32.xlu0 %v4014
        %v4016 = vpop.xlane.xlu0 %4015
        %v4017 = vsel %vm890, %v3855, -inf
        %4018 = vmax.xlane.f32.xlu0 %v4017
        %v4019 = vpop.xlane.xlu0 %4018
        %v4020 = vsel %vm890, %v3856, -inf
        %4021 = vmax.xlane.f32.xlu0 %v4020
        %v4022 = vpop.xlane.xlu0 %4021
        %v4023 = vsel %vm890, %v3857, -inf
        %4024 = vmax.xlane.f32.xlu0 %v4023
        %v4025 = vpop.xlane.xlu0 %4024
        %v4026 = vsel %vm890, %v3858, -inf
        %4027 = vmax.xlane.f32.xlu0 %v4026
        %v4028 = vpop.xlane.xlu0 %4027
        %v4029 = vsel %vm890, %v3859, -inf
        %4030 = vmax.xlane.f32.xlu0 %v4029
        %v4031 = vpop.xlane.xlu0 %4030
        %v4032 = vsel %vm890, %v3860, -inf
        %4033 = vmax.xlane.f32.xlu0 %v4032
        %v4034 = vpop.xlane.xlu0 %4033
        %v4035 = vsel %vm890, %v3861, -inf
        %4036 = vmax.xlane.f32.xlu0 %v4035
        %v4037 = vpop.xlane.xlu0 %4036
        %v4038 = vsel %vm890, %v3862, -inf
        %4039 = vmax.xlane.f32.xlu0 %v4038
        %v4040 = vpop.xlane.xlu0 %4039
        %v4041 = vsel %vm890, %v3863, -inf
        %4042 = vmax.xlane.f32.xlu0 %v4041
        %v4043 = vpop.xlane.xlu0 %4042
        %v4044 = vsel %vm890, %v3864, -inf
        %4045 = vmax.xlane.f32.xlu0 %v4044
        %v4046 = vpop.xlane.xlu0 %4045
        %v4047 = vsel %vm890, %v3865, -inf
        %4048 = vmax.xlane.f32.xlu0 %v4047
        %v4049 = vpop.xlane.xlu0 %4048
        %v4050 = vsel %vm890, %v3866, -inf
        %4051 = vmax.xlane.f32.xlu0 %v4050
        %v4052 = vpop.xlane.xlu0 %4051
        %v4053 = vsel %vm890, %v3867, -inf
        %4054 = vmax.xlane.f32.xlu0 %v4053
        %v4055 = vpop.xlane.xlu0 %4054
        %v4056 = vsel %vm890, %v3868, -inf
        %4057 = vmax.xlane.f32.xlu0 %v4056
        %v4058 = vpop.xlane.xlu0 %4057
        %v4059 = vsel %vm890, %v3869, -inf
        %4060 = vmax.xlane.f32.xlu0 %v4059
        %v4061 = vpop.xlane.xlu0 %4060
        %v4062 = vsub.f32 %v3806, %v3872
        %v4063 = vsub.f32 %v3807, %v3875
        %v4064 = vsub.f32 %v3808, %v3878
        %v4065 = vsub.f32 %v3809, %v3881
        %v4066 = vsub.f32 %v3810, %v3884
        %v4067 = vsub.f32 %v3811, %v3887
        %v4068 = vsub.f32 %v3812, %v3890
        %v4069 = vsub.f32 %v3813, %v3893
        %v4070 = vsub.f32 %v3814, %v3896
        %v4071 = vsub.f32 %v3815, %v3899
        %v4072 = vsub.f32 %v3816, %v3902
        %v4073 = vsub.f32 %v3817, %v3905
        %v4074 = vsub.f32 %v3818, %v3908
        %v4075 = vsub.f32 %v3819, %v3911
        %v4076 = vsub.f32 %v3820, %v3914
        %v4077 = vsub.f32 %v3821, %v3917
        %v4078 = vsub.f32 %v3822, %v3920
        %v4079 = vsub.f32 %v3823, %v3923
        %v4080 = vsub.f32 %v3824, %v3926
        %v4081 = vsub.f32 %v3825, %v3929
        %v4082 = vsub.f32 %v3826, %v3932
        %v4083 = vsub.f32 %v3827, %v3935
        %v4084 = vsub.f32 %v3828, %v3938
        %v4085 = vsub.f32 %v3829, %v3941
        %v4086 = vsub.f32 %v3830, %v3944
        %v4087 = vsub.f32 %v3831, %v3947
        %v4088 = vsub.f32 %v3832, %v3950
        %v4089 = vsub.f32 %v3833, %v3953
        %v4090 = vsub.f32 %v3834, %v3956
        %v4091 = vsub.f32 %v3835, %v3959
        %v4092 = vsub.f32 %v3836, %v3962
        %v4093 = vsub.f32 %v3837, %v3965
        %v4094 = vsub.f32 %v3838, %v3968
        %v4095 = vsub.f32 %v3839, %v3971
        %v4096 = vsub.f32 %v3840, %v3974
        %v4097 = vsub.f32 %v3841, %v3977
        %v4098 = vsub.f32 %v3842, %v3980
        %v4099 = vsub.f32 %v3843, %v3983
        %v4100 = vsub.f32 %v3844, %v3986
        %v4101 = vsub.f32 %v3845, %v3989
        %v4102 = vsub.f32 %v3846, %v3992
        %v4103 = vsub.f32 %v3847, %v3995
        %v4104 = vsub.f32 %v3848, %v3998
        %v4105 = vsub.f32 %v3849, %v4001
        %v4106 = vsub.f32 %v3850, %v4004
        %v4107 = vsub.f32 %v3851, %v4007
        %v4108 = vsub.f32 %v3852, %v4010
        %v4109 = vsub.f32 %v3853, %v4013
        %v4110 = vsub.f32 %v3854, %v4016
        %v4111 = vsub.f32 %v3855, %v4019
        %v4112 = vsub.f32 %v3856, %v4022
        %v4113 = vsub.f32 %v3857, %v4025
        %v4114 = vsub.f32 %v3858, %v4028
        %v4115 = vsub.f32 %v3859, %v4031
        %v4116 = vsub.f32 %v3860, %v4034
        %v4117 = vsub.f32 %v3861, %v4037
        %v4118 = vsub.f32 %v3862, %v4040
        %v4119 = vsub.f32 %v3863, %v4043
        %v4120 = vsub.f32 %v3864, %v4046
        %v4121 = vsub.f32 %v3865, %v4049
        %v4122 = vsub.f32 %v3866, %v4052
        %v4123 = vsub.f32 %v3867, %v4055
        %v4124 = vsub.f32 %v3868, %v4058
        %v4125 = vsub.f32 %v3869, %v4061
        %v4126 = vmul.f32 %v4062, 1.442695
        %v4127 = vpow.pop %v4126
        %v4128 = vmul.f32 %v4063, 1.442695
        %v4129 = vpow.pop %v4128
        %v4130 = vmul.f32 %v4064, 1.442695
        %v4131 = vpow.pop %v4130
        %v4132 = vmul.f32 %v4065, 1.442695
        %v4133 = vpow.pop %v4132
        %v4134 = vmul.f32 %v4066, 1.442695
        %v4135 = vpow.pop %v4134
        %v4136 = vmul.f32 %v4067, 1.442695
        %v4137 = vpow.pop %v4136
        %v4138 = vmul.f32 %v4068, 1.442695
        %v4139 = vpow.pop %v4138
        %v4140 = vmul.f32 %v4069, 1.442695
        %v4141 = vpow.pop %v4140
        %v4142 = vmul.f32 %v4070, 1.442695
        %v4143 = vpow.pop %v4142
        %v4144 = vmul.f32 %v4071, 1.442695
        %v4145 = vpow.pop %v4144
        %v4146 = vmul.f32 %v4072, 1.442695
        %v4147 = vpow.pop %v4146
        %v4148 = vmul.f32 %v4073, 1.442695
        %v4149 = vpow.pop %v4148
        %v4150 = vmul.f32 %v4074, 1.442695
        %v4151 = vpow.pop %v4150
        %v4152 = vmul.f32 %v4075, 1.442695
        %v4153 = vpow.pop %v4152
        %v4154 = vmul.f32 %v4076, 1.442695
        %v4155 = vpow.pop %v4154
        %v4156 = vmul.f32 %v4077, 1.442695
        %v4157 = vpow.pop %v4156
        %v4158 = vmul.f32 %v4078, 1.442695
        %v4159 = vpow.pop %v4158
        %v4160 = vmul.f32 %v4079, 1.442695
        %v4161 = vpow.pop %v4160
        %v4162 = vmul.f32 %v4080, 1.442695
        %v4163 = vpow.pop %v4162
        %v4164 = vmul.f32 %v4081, 1.442695
        %v4165 = vpow.pop %v4164
        %v4166 = vmul.f32 %v4082, 1.442695
        %v4167 = vpow.pop %v4166
        %v4168 = vmul.f32 %v4083, 1.442695
        %v4169 = vpow.pop %v4168
        %v4170 = vmul.f32 %v4084, 1.442695
        %v4171 = vpow.pop %v4170
        %v4172 = vmul.f32 %v4085, 1.442695
        %v4173 = vpow.pop %v4172
        %v4174 = vmul.f32 %v4086, 1.442695
        %v4175 = vpow.pop %v4174
        %v4176 = vmul.f32 %v4087, 1.442695
        %v4177 = vpow.pop %v4176
        %v4178 = vmul.f32 %v4088, 1.442695
        %v4179 = vpow.pop %v4178
        %v4180 = vmul.f32 %v4089, 1.442695
        %v4181 = vpow.pop %v4180
        %v4182 = vmul.f32 %v4090, 1.442695
        %v4183 = vpow.pop %v4182
        %v4184 = vmul.f32 %v4091, 1.442695
        %v4185 = vpow.pop %v4184
        %v4186 = vmul.f32 %v4092, 1.442695
        %v4187 = vpow.pop %v4186
        %v4188 = vmul.f32 %v4093, 1.442695
        %v4189 = vpow.pop %v4188
        %v4190 = vmul.f32 %v4094, 1.442695
        %v4191 = vpow.pop %v4190
        %v4192 = vmul.f32 %v4095, 1.442695
        %v4193 = vpow.pop %v4192
        %v4194 = vmul.f32 %v4096, 1.442695
        %v4195 = vpow.pop %v4194
        %v4196 = vmul.f32 %v4097, 1.442695
        %v4197 = vpow.pop %v4196
        %v4198 = vmul.f32 %v4098, 1.442695
        %v4199 = vpow.pop %v4198
        %v4200 = vmul.f32 %v4099, 1.442695
        %v4201 = vpow.pop %v4200
        %v4202 = vmul.f32 %v4100, 1.442695
        %v4203 = vpow.pop %v4202
        %v4204 = vmul.f32 %v4101, 1.442695
        %v4205 = vpow.pop %v4204
        %v4206 = vmul.f32 %v4102, 1.442695
        %v4207 = vpow.pop %v4206
        %v4208 = vmul.f32 %v4103, 1.442695
        %v4209 = vpow.pop %v4208
        %v4210 = vmul.f32 %v4104, 1.442695
        %v4211 = vpow.pop %v4210
        %v4212 = vmul.f32 %v4105, 1.442695
        %v4213 = vpow.pop %v4212
        %v4214 = vmul.f32 %v4106, 1.442695
        %v4215 = vpow.pop %v4214
        %v4216 = vmul.f32 %v4107, 1.442695
        %v4217 = vpow.pop %v4216
        %v4218 = vmul.f32 %v4108, 1.442695
        %v4219 = vpow.pop %v4218
        %v4220 = vmul.f32 %v4109, 1.442695
        %v4221 = vpow.pop %v4220
        %v4222 = vmul.f32 %v4110, 1.442695
        %v4223 = vpow.pop %v4222
        %v4224 = vmul.f32 %v4111, 1.442695
        %v4225 = vpow.pop %v4224
        %v4226 = vmul.f32 %v4112, 1.442695
        %v4227 = vpow.pop %v4226
        %v4228 = vmul.f32 %v4113, 1.442695
        %v4229 = vpow.pop %v4228
        %v4230 = vmul.f32 %v4114, 1.442695
        %v4231 = vpow.pop %v4230
        %v4232 = vmul.f32 %v4115, 1.442695
        %v4233 = vpow.pop %v4232
        %v4234 = vmul.f32 %v4116, 1.442695
        %v4235 = vpow.pop %v4234
        %v4236 = vmul.f32 %v4117, 1.442695
        %v4237 = vpow.pop %v4236
        %v4238 = vmul.f32 %v4118, 1.442695
        %v4239 = vpow.pop %v4238
        %v4240 = vmul.f32 %v4119, 1.442695
        %v4241 = vpow.pop %v4240
        %v4242 = vmul.f32 %v4120, 1.442695
        %v4243 = vpow.pop %v4242
        %v4244 = vmul.f32 %v4121, 1.442695
        %v4245 = vpow.pop %v4244
        %v4246 = vmul.f32 %v4122, 1.442695
        %v4247 = vpow.pop %v4246
        %v4248 = vmul.f32 %v4123, 1.442695
        %v4249 = vpow.pop %v4248
        %v4250 = vmul.f32 %v4124, 1.442695
        %v4251 = vpow.pop %v4250
        %v4252 = vmul.f32 %v4125, 1.442695
        %v4253 = vpow.pop %v4252
        %v4254 = vsel %vm890, %v4127, 0.0
        %4255 = vadd.xlane.f32.xlu0 %v4254
        %v4256 = vpop.xlane.xlu0 %4255
        %v4257 = vsel %vm890, %v4129, 0.0
        %4258 = vadd.xlane.f32.xlu0 %v4257
        %v4259 = vpop.xlane.xlu0 %4258
        %v4260 = vsel %vm890, %v4131, 0.0
        %4261 = vadd.xlane.f32.xlu0 %v4260
        %v4262 = vpop.xlane.xlu0 %4261
        %v4263 = vsel %vm890, %v4133, 0.0
        %4264 = vadd.xlane.f32.xlu0 %v4263
        %v4265 = vpop.xlane.xlu0 %4264
        %v4266 = vsel %vm890, %v4135, 0.0
        %4267 = vadd.xlane.f32.xlu0 %v4266
        %v4268 = vpop.xlane.xlu0 %4267
        %v4269 = vsel %vm890, %v4137, 0.0
        %4270 = vadd.xlane.f32.xlu0 %v4269
        %v4271 = vpop.xlane.xlu0 %4270
        %v4272 = vsel %vm890, %v4139, 0.0
        %4273 = vadd.xlane.f32.xlu0 %v4272
        %v4274 = vpop.xlane.xlu0 %4273
        %v4275 = vsel %vm890, %v4141, 0.0
        %4276 = vadd.xlane.f32.xlu0 %v4275
        %v4277 = vpop.xlane.xlu0 %4276
        %v4278 = vsel %vm890, %v4143, 0.0
        %4279 = vadd.xlane.f32.xlu0 %v4278
        %v4280 = vpop.xlane.xlu0 %4279
        %v4281 = vsel %vm890, %v4145, 0.0
        %4282 = vadd.xlane.f32.xlu0 %v4281
        %v4283 = vpop.xlane.xlu0 %4282
        %v4284 = vsel %vm890, %v4147, 0.0
        %4285 = vadd.xlane.f32.xlu0 %v4284
        %v4286 = vpop.xlane.xlu0 %4285
        %v4287 = vsel %vm890, %v4149, 0.0
        %4288 = vadd.xlane.f32.xlu0 %v4287
        %v4289 = vpop.xlane.xlu0 %4288
        %v4290 = vsel %vm890, %v4151, 0.0
        %4291 = vadd.xlane.f32.xlu0 %v4290
        %v4292 = vpop.xlane.xlu0 %4291
        %v4293 = vsel %vm890, %v4153, 0.0
        %4294 = vadd.xlane.f32.xlu0 %v4293
        %v4295 = vpop.xlane.xlu0 %4294
        %v4296 = vsel %vm890, %v4155, 0.0
        %4297 = vadd.xlane.f32.xlu0 %v4296
        %v4298 = vpop.xlane.xlu0 %4297
        %v4299 = vsel %vm890, %v4157, 0.0
        %4300 = vadd.xlane.f32.xlu0 %v4299
        %v4301 = vpop.xlane.xlu0 %4300
        %v4302 = vsel %vm890, %v4159, 0.0
        %4303 = vadd.xlane.f32.xlu0 %v4302
        %v4304 = vpop.xlane.xlu0 %4303
        %v4305 = vsel %vm890, %v4161, 0.0
        %4306 = vadd.xlane.f32.xlu0 %v4305
        %v4307 = vpop.xlane.xlu0 %4306
        %v4308 = vsel %vm890, %v4163, 0.0
        %4309 = vadd.xlane.f32.xlu0 %v4308
        %v4310 = vpop.xlane.xlu0 %4309
        %v4311 = vsel %vm890, %v4165, 0.0
        %4312 = vadd.xlane.f32.xlu0 %v4311
        %v4313 = vpop.xlane.xlu0 %4312
        %v4314 = vsel %vm890, %v4167, 0.0
        %4315 = vadd.xlane.f32.xlu0 %v4314
        %v4316 = vpop.xlane.xlu0 %4315
        %v4317 = vsel %vm890, %v4169, 0.0
        %4318 = vadd.xlane.f32.xlu0 %v4317
        %v4319 = vpop.xlane.xlu0 %4318
        %v4320 = vsel %vm890, %v4171, 0.0
        %4321 = vadd.xlane.f32.xlu0 %v4320
        %v4322 = vpop.xlane.xlu0 %4321
        %v4323 = vsel %vm890, %v4173, 0.0
        %4324 = vadd.xlane.f32.xlu0 %v4323
        %v4325 = vpop.xlane.xlu0 %4324
        %v4326 = vsel %vm890, %v4175, 0.0
        %4327 = vadd.xlane.f32.xlu0 %v4326
        %v4328 = vpop.xlane.xlu0 %4327
        %v4329 = vsel %vm890, %v4177, 0.0
        %4330 = vadd.xlane.f32.xlu0 %v4329
        %v4331 = vpop.xlane.xlu0 %4330
        %v4332 = vsel %vm890, %v4179, 0.0
        %4333 = vadd.xlane.f32.xlu0 %v4332
        %v4334 = vpop.xlane.xlu0 %4333
        %v4335 = vsel %vm890, %v4181, 0.0
        %4336 = vadd.xlane.f32.xlu0 %v4335
        %v4337 = vpop.xlane.xlu0 %4336
        %v4338 = vsel %vm890, %v4183, 0.0
        %4339 = vadd.xlane.f32.xlu0 %v4338
        %v4340 = vpop.xlane.xlu0 %4339
        %v4341 = vsel %vm890, %v4185, 0.0
        %4342 = vadd.xlane.f32.xlu0 %v4341
        %v4343 = vpop.xlane.xlu0 %4342
        %v4344 = vsel %vm890, %v4187, 0.0
        %4345 = vadd.xlane.f32.xlu0 %v4344
        %v4346 = vpop.xlane.xlu0 %4345
        %v4347 = vsel %vm890, %v4189, 0.0
        %4348 = vadd.xlane.f32.xlu0 %v4347
        %v4349 = vpop.xlane.xlu0 %4348
        %v4350 = vsel %vm890, %v4191, 0.0
        %4351 = vadd.xlane.f32.xlu0 %v4350
        %v4352 = vpop.xlane.xlu0 %4351
        %v4353 = vsel %vm890, %v4193, 0.0
        %4354 = vadd.xlane.f32.xlu0 %v4353
        %v4355 = vpop.xlane.xlu0 %4354
        %v4356 = vsel %vm890, %v4195, 0.0
        %4357 = vadd.xlane.f32.xlu0 %v4356
        %v4358 = vpop.xlane.xlu0 %4357
        %v4359 = vsel %vm890, %v4197, 0.0
        %4360 = vadd.xlane.f32.xlu0 %v4359
        %v4361 = vpop.xlane.xlu0 %4360
        %v4362 = vsel %vm890, %v4199, 0.0
        %4363 = vadd.xlane.f32.xlu0 %v4362
        %v4364 = vpop.xlane.xlu0 %4363
        %v4365 = vsel %vm890, %v4201, 0.0
        %4366 = vadd.xlane.f32.xlu0 %v4365
        %v4367 = vpop.xlane.xlu0 %4366
        %v4368 = vsel %vm890, %v4203, 0.0
        %4369 = vadd.xlane.f32.xlu0 %v4368
        %v4370 = vpop.xlane.xlu0 %4369
        %v4371 = vsel %vm890, %v4205, 0.0
        %4372 = vadd.xlane.f32.xlu0 %v4371
        %v4373 = vpop.xlane.xlu0 %4372
        %v4374 = vsel %vm890, %v4207, 0.0
        %4375 = vadd.xlane.f32.xlu0 %v4374
        %v4376 = vpop.xlane.xlu0 %4375
        %v4377 = vsel %vm890, %v4209, 0.0
        %4378 = vadd.xlane.f32.xlu0 %v4377
        %v4379 = vpop.xlane.xlu0 %4378
        %v4380 = vsel %vm890, %v4211, 0.0
        %4381 = vadd.xlane.f32.xlu0 %v4380
        %v4382 = vpop.xlane.xlu0 %4381
        %v4383 = vsel %vm890, %v4213, 0.0
        %4384 = vadd.xlane.f32.xlu0 %v4383
        %v4385 = vpop.xlane.xlu0 %4384
        %v4386 = vsel %vm890, %v4215, 0.0
        %4387 = vadd.xlane.f32.xlu0 %v4386
        %v4388 = vpop.xlane.xlu0 %4387
        %v4389 = vsel %vm890, %v4217, 0.0
        %4390 = vadd.xlane.f32.xlu0 %v4389
        %v4391 = vpop.xlane.xlu0 %4390
        %v4392 = vsel %vm890, %v4219, 0.0
        %4393 = vadd.xlane.f32.xlu0 %v4392
        %v4394 = vpop.xlane.xlu0 %4393
        %v4395 = vsel %vm890, %v4221, 0.0
        %4396 = vadd.xlane.f32.xlu0 %v4395
        %v4397 = vpop.xlane.xlu0 %4396
        %v4398 = vsel %vm890, %v4223, 0.0
        %4399 = vadd.xlane.f32.xlu0 %v4398
        %v4400 = vpop.xlane.xlu0 %4399
        %v4401 = vsel %vm890, %v4225, 0.0
        %4402 = vadd.xlane.f32.xlu0 %v4401
        %v4403 = vpop.xlane.xlu0 %4402
        %v4404 = vsel %vm890, %v4227, 0.0
        %4405 = vadd.xlane.f32.xlu0 %v4404
        %v4406 = vpop.xlane.xlu0 %4405
        %v4407 = vsel %vm890, %v4229, 0.0
        %4408 = vadd.xlane.f32.xlu0 %v4407
        %v4409 = vpop.xlane.xlu0 %4408
        %v4410 = vsel %vm890, %v4231, 0.0
        %4411 = vadd.xlane.f32.xlu0 %v4410
        %v4412 = vpop.xlane.xlu0 %4411
        %v4413 = vsel %vm890, %v4233, 0.0
        %4414 = vadd.xlane.f32.xlu0 %v4413
        %v4415 = vpop.xlane.xlu0 %4414
        %v4416 = vsel %vm890, %v4235, 0.0
        %4417 = vadd.xlane.f32.xlu0 %v4416
        %v4418 = vpop.xlane.xlu0 %4417
        %v4419 = vsel %vm890, %v4237, 0.0
        %4420 = vadd.xlane.f32.xlu0 %v4419
        %v4421 = vpop.xlane.xlu0 %4420
        %v4422 = vsel %vm890, %v4239, 0.0
        %4423 = vadd.xlane.f32.xlu0 %v4422
        %v4424 = vpop.xlane.xlu0 %4423
        %v4425 = vsel %vm890, %v4241, 0.0
        %4426 = vadd.xlane.f32.xlu0 %v4425
        %v4427 = vpop.xlane.xlu0 %4426
        %v4428 = vsel %vm890, %v4243, 0.0
        %4429 = vadd.xlane.f32.xlu0 %v4428
        %v4430 = vpop.xlane.xlu0 %4429
        %v4431 = vsel %vm890, %v4245, 0.0
        %4432 = vadd.xlane.f32.xlu0 %v4431
        %v4433 = vpop.xlane.xlu0 %4432
        %v4434 = vsel %vm890, %v4247, 0.0
        %4435 = vadd.xlane.f32.xlu0 %v4434
        %v4436 = vpop.xlane.xlu0 %4435
        %v4437 = vsel %vm890, %v4249, 0.0
        %4438 = vadd.xlane.f32.xlu0 %v4437
        %v4439 = vpop.xlane.xlu0 %4438
        %v4440 = vsel %vm890, %v4251, 0.0
        %4441 = vadd.xlane.f32.xlu0 %v4440
        %v4442 = vpop.xlane.xlu0 %4441
        %v4443 = vsel %vm890, %v4253, 0.0
        %4444 = vadd.xlane.f32.xlu0 %v4443
        %v4445 = vpop.xlane.xlu0 %4444
        %v4446 = vrcp.pop %v4256
        %v4447 = vrcp.pop %v4259
        %v4448 = vrcp.pop %v4262
        %v4449 = vrcp.pop %v4265
        %v4450 = vrcp.pop %v4268
        %v4451 = vrcp.pop %v4271
        %v4452 = vrcp.pop %v4274
        %v4453 = vrcp.pop %v4277
        %v4454 = vrcp.pop %v4280
        %v4455 = vrcp.pop %v4283
        %v4456 = vrcp.pop %v4286
        %v4457 = vrcp.pop %v4289
        %v4458 = vrcp.pop %v4292
        %v4459 = vrcp.pop %v4295
        %v4460 = vrcp.pop %v4298
        %v4461 = vrcp.pop %v4301
        %v4462 = vrcp.pop %v4304
        %v4463 = vrcp.pop %v4307
        %v4464 = vrcp.pop %v4310
        %v4465 = vrcp.pop %v4313
        %v4466 = vrcp.pop %v4316
        %v4467 = vrcp.pop %v4319
        %v4468 = vrcp.pop %v4322
        %v4469 = vrcp.pop %v4325
        %v4470 = vrcp.pop %v4328
        %v4471 = vrcp.pop %v4331
        %v4472 = vrcp.pop %v4334
        %v4473 = vrcp.pop %v4337
        %v4474 = vrcp.pop %v4340
        %v4475 = vrcp.pop %v4343
        %v4476 = vrcp.pop %v4346
        %v4477 = vrcp.pop %v4349
        %v4478 = vrcp.pop %v4352
        %v4479 = vrcp.pop %v4355
        %v4480 = vrcp.pop %v4358
        %v4481 = vrcp.pop %v4361
        %v4482 = vrcp.pop %v4364
        %v4483 = vrcp.pop %v4367
        %v4484 = vrcp.pop %v4370
        %v4485 = vrcp.pop %v4373
        %v4486 = vrcp.pop %v4376
        %v4487 = vrcp.pop %v4379
        %v4488 = vrcp.pop %v4382
        %v4489 = vrcp.pop %v4385
        %v4490 = vrcp.pop %v4388
        %v4491 = vrcp.pop %v4391
        %v4492 = vrcp.pop %v4394
        %v4493 = vrcp.pop %v4397
        %v4494 = vrcp.pop %v4400
        %v4495 = vrcp.pop %v4403
        %v4496 = vrcp.pop %v4406
        %v4497 = vrcp.pop %v4409
        %v4498 = vrcp.pop %v4412
        %v4499 = vrcp.pop %v4415
        %v4500 = vrcp.pop %v4418
        %v4501 = vrcp.pop %v4421
        %v4502 = vrcp.pop %v4424
        %v4503 = vrcp.pop %v4427
        %v4504 = vrcp.pop %v4430
        %v4505 = vrcp.pop %v4433
        %v4506 = vrcp.pop %v4436
        %v4507 = vrcp.pop %v4439
        %v4508 = vrcp.pop %v4442
        %v4509 = vrcp.pop %v4445
        %v4510 = vmul.f32 %v4127, %v4446
        %v4511 = vmul.f32 %v4129, %v4447
        %v4512 = vmul.f32 %v4131, %v4448
        %v4513 = vmul.f32 %v4133, %v4449
        %v4514 = vmul.f32 %v4135, %v4450
        %v4515 = vmul.f32 %v4137, %v4451
        %v4516 = vmul.f32 %v4139, %v4452
        %v4517 = vmul.f32 %v4141, %v4453
        %v4518 = vmul.f32 %v4143, %v4454
        %v4519 = vmul.f32 %v4145, %v4455
        %v4520 = vmul.f32 %v4147, %v4456
        %v4521 = vmul.f32 %v4149, %v4457
        %v4522 = vmul.f32 %v4151, %v4458
        %v4523 = vmul.f32 %v4153, %v4459
        %v4524 = vmul.f32 %v4155, %v4460
        %v4525 = vmul.f32 %v4157, %v4461
        %v4526 = vmul.f32 %v4159, %v4462
        %v4527 = vmul.f32 %v4161, %v4463
        %v4528 = vmul.f32 %v4163, %v4464
        %v4529 = vmul.f32 %v4165, %v4465
        %v4530 = vmul.f32 %v4167, %v4466
        %v4531 = vmul.f32 %v4169, %v4467
        %v4532 = vmul.f32 %v4171, %v4468
        %v4533 = vmul.f32 %v4173, %v4469
        %v4534 = vmul.f32 %v4175, %v4470
        %v4535 = vmul.f32 %v4177, %v4471
        %v4536 = vmul.f32 %v4179, %v4472
        %v4537 = vmul.f32 %v4181, %v4473
        %v4538 = vmul.f32 %v4183, %v4474
        %v4539 = vmul.f32 %v4185, %v4475
        %v4540 = vmul.f32 %v4187, %v4476
        %v4541 = vmul.f32 %v4189, %v4477
        %v4542 = vmul.f32 %v4191, %v4478
        %v4543 = vmul.f32 %v4193, %v4479
        %v4544 = vmul.f32 %v4195, %v4480
        %v4545 = vmul.f32 %v4197, %v4481
        %v4546 = vmul.f32 %v4199, %v4482
        %v4547 = vmul.f32 %v4201, %v4483
        %v4548 = vmul.f32 %v4203, %v4484
        %v4549 = vmul.f32 %v4205, %v4485
        %v4550 = vmul.f32 %v4207, %v4486
        %v4551 = vmul.f32 %v4209, %v4487
        %v4552 = vmul.f32 %v4211, %v4488
        %v4553 = vmul.f32 %v4213, %v4489
        %v4554 = vmul.f32 %v4215, %v4490
        %v4555 = vmul.f32 %v4217, %v4491
        %v4556 = vmul.f32 %v4219, %v4492
        %v4557 = vmul.f32 %v4221, %v4493
        %v4558 = vmul.f32 %v4223, %v4494
        %v4559 = vmul.f32 %v4225, %v4495
        %v4560 = vmul.f32 %v4227, %v4496
        %v4561 = vmul.f32 %v4229, %v4497
        %v4562 = vmul.f32 %v4231, %v4498
        %v4563 = vmul.f32 %v4233, %v4499
        %v4564 = vmul.f32 %v4235, %v4500
        %v4565 = vmul.f32 %v4237, %v4501
        %v4566 = vmul.f32 %v4239, %v4502
        %v4567 = vmul.f32 %v4241, %v4503
        %v4568 = vmul.f32 %v4243, %v4504
        %v4569 = vmul.f32 %v4245, %v4505
        %v4570 = vmul.f32 %v4247, %v4506
        %v4571 = vmul.f32 %v4249, %v4507
        %v4572 = vmul.f32 %v4251, %v4508
        %v4573 = vmul.f32 %v4253, %v4509
        %v4590 = vcombine.high %v1027, %v1027
        %v4592 = vunpack.c.l.s4 1966171168
        %v4593 = vunpack.c.0.s8 %v4592
        %v4594 = vlaneseq
        %v4595 = vshrl.u32 %v4594, 7
        %v4596 = vsub.s32 %v4593, %v4595
        %v4597 = vrot.slane %v1027, %v4596
        %v4599 = vunpack.c.l.s4 1966171168
        %v4600 = vunpack.c.0.s8 %v4599
        %v4601 = vlaneseq
        %v4602 = vshrl.u32 %v4601, 7
        %v4603 = vsub.s32 %v4600, %v4602
        %v4604 = vrot.slane %v4590, %v4603
        %v4605 = vcombine.high %v4597, %v4597
        %v4606 = vcombine.high %v4604, %v4604
        %v4608 = vunpack.c.l.s4 1966171168
        %v4609 = vunpack.c.0.s8 %v4608
        %v4610 = vlaneseq
        %v4611 = vshrl.u32 %v4610, 7
        %v4612 = vsub.s32 %v4609, %v4611
        %v4613 = vrot.slane %v4597, %v4612
        %v4615 = vunpack.c.l.s4 1966171168
        %v4616 = vunpack.c.0.s8 %v4615
        %v4617 = vlaneseq
        %v4618 = vshrl.u32 %v4617, 7
        %v4619 = vsub.s32 %v4616, %v4618
        %v4620 = vrot.slane %v4604, %v4619
        %v4622 = vunpack.c.l.s4 1966171168
        %v4623 = vunpack.c.0.s8 %v4622
        %v4624 = vlaneseq
        %v4625 = vshrl.u32 %v4624, 7
        %v4626 = vsub.s32 %v4623, %v4625
        %v4627 = vrot.slane %v4605, %v4626
        %v4629 = vunpack.c.l.s4 1966171168
        %v4630 = vunpack.c.0.s8 %v4629
        %v4631 = vlaneseq
        %v4632 = vshrl.u32 %v4631, 7
        %v4633 = vsub.s32 %v4630, %v4632
        %v4634 = vrot.slane %v4606, %v4633
        %v4635 = vcombine.high %v4613, %v4613
        %v4636 = vcombine.high %v4620, %v4620
        %v4637 = vcombine.high %v4627, %v4627
        %v4638 = vcombine.high %v4634, %v4634
        %v4639 = vcombine.high %v1029, %v1029
        %v4641 = vunpack.c.l.s4 1966171168
        %v4642 = vunpack.c.0.s8 %v4641
        %v4643 = vlaneseq
        %v4644 = vshrl.u32 %v4643, 7
        %v4645 = vsub.s32 %v4642, %v4644
        %v4646 = vrot.slane %v1029, %v4645
        %v4648 = vunpack.c.l.s4 1966171168
        %v4649 = vunpack.c.0.s8 %v4648
        %v4650 = vlaneseq
        %v4651 = vshrl.u32 %v4650, 7
        %v4652 = vsub.s32 %v4649, %v4651
        %v4653 = vrot.slane %v4639, %v4652
        %v4654 = vcombine.high %v4646, %v4646
        %v4655 = vcombine.high %v4653, %v4653
        %v4657 = vunpack.c.l.s4 1966171168
        %v4658 = vunpack.c.0.s8 %v4657
        %v4659 = vlaneseq
        %v4660 = vshrl.u32 %v4659, 7
        %v4661 = vsub.s32 %v4658, %v4660
        %v4662 = vrot.slane %v4646, %v4661
        %v4664 = vunpack.c.l.s4 1966171168
        %v4665 = vunpack.c.0.s8 %v4664
        %v4666 = vlaneseq
        %v4667 = vshrl.u32 %v4666, 7
        %v4668 = vsub.s32 %v4665, %v4667
        %v4669 = vrot.slane %v4653, %v4668
        %v4671 = vunpack.c.l.s4 1966171168
        %v4672 = vunpack.c.0.s8 %v4671
        %v4673 = vlaneseq
        %v4674 = vshrl.u32 %v4673, 7
        %v4675 = vsub.s32 %v4672, %v4674
        %v4676 = vrot.slane %v4654, %v4675
        %v4678 = vunpack.c.l.s4 1966171168
        %v4679 = vunpack.c.0.s8 %v4678
        %v4680 = vlaneseq
        %v4681 = vshrl.u32 %v4680, 7
        %v4682 = vsub.s32 %v4679, %v4681
        %v4683 = vrot.slane %v4655, %v4682
        %v4684 = vcombine.high %v4662, %v4662
        %v4685 = vcombine.high %v4669, %v4669
        %v4686 = vcombine.high %v4676, %v4676
        %v4687 = vcombine.high %v4683, %v4683
        %v4688 = vcombine.high %v1031, %v1031
        %v4690 = vunpack.c.l.s4 1966171168
        %v4691 = vunpack.c.0.s8 %v4690
        %v4692 = vlaneseq
        %v4693 = vshrl.u32 %v4692, 7
        %v4694 = vsub.s32 %v4691, %v4693
        %v4695 = vrot.slane %v1031, %v4694
        %v4697 = vunpack.c.l.s4 1966171168
        %v4698 = vunpack.c.0.s8 %v4697
        %v4699 = vlaneseq
        %v4700 = vshrl.u32 %v4699, 7
        %v4701 = vsub.s32 %v4698, %v4700
        %v4702 = vrot.slane %v4688, %v4701
        %v4703 = vcombine.high %v4695, %v4695
        %v4704 = vcombine.high %v4702, %v4702
        %v4706 = vunpack.c.l.s4 1966171168
        %v4707 = vunpack.c.0.s8 %v4706
        %v4708 = vlaneseq
        %v4709 = vshrl.u32 %v4708, 7
        %v4710 = vsub.s32 %v4707, %v4709
        %v4711 = vrot.slane %v4695, %v4710
        %v4713 = vunpack.c.l.s4 1966171168
        %v4714 = vunpack.c.0.s8 %v4713
        %v4715 = vlaneseq
        %v4716 = vshrl.u32 %v4715, 7
        %v4717 = vsub.s32 %v4714, %v4716
        %v4718 = vrot.slane %v4702, %v4717
        %v4720 = vunpack.c.l.s4 1966171168
        %v4721 = vunpack.c.0.s8 %v4720
        %v4722 = vlaneseq
        %v4723 = vshrl.u32 %v4722, 7
        %v4724 = vsub.s32 %v4721, %v4723
        %v4725 = vrot.slane %v4703, %v4724
        %v4727 = vunpack.c.l.s4 1966171168
        %v4728 = vunpack.c.0.s8 %v4727
        %v4729 = vlaneseq
        %v4730 = vshrl.u32 %v4729, 7
        %v4731 = vsub.s32 %v4728, %v4730
        %v4732 = vrot.slane %v4704, %v4731
        %v4733 = vcombine.high %v4711, %v4711
        %v4734 = vcombine.high %v4718, %v4718
        %v4735 = vcombine.high %v4725, %v4725
        %v4736 = vcombine.high %v4732, %v4732
        %v4737 = vcombine.high %v1033, %v1033
        %v4739 = vunpack.c.l.s4 1966171168
        %v4740 = vunpack.c.0.s8 %v4739
        %v4741 = vlaneseq
        %v4742 = vshrl.u32 %v4741, 7
        %v4743 = vsub.s32 %v4740, %v4742
        %v4744 = vrot.slane %v1033, %v4743
        %v4746 = vunpack.c.l.s4 1966171168
        %v4747 = vunpack.c.0.s8 %v4746
        %v4748 = vlaneseq
        %v4749 = vshrl.u32 %v4748, 7
        %v4750 = vsub.s32 %v4747, %v4749
        %v4751 = vrot.slane %v4737, %v4750
        %v4752 = vcombine.high %v4744, %v4744
        %v4753 = vcombine.high %v4751, %v4751
        %v4755 = vunpack.c.l.s4 1966171168
        %v4756 = vunpack.c.0.s8 %v4755
        %v4757 = vlaneseq
        %v4758 = vshrl.u32 %v4757, 7
        %v4759 = vsub.s32 %v4756, %v4758
        %v4760 = vrot.slane %v4744, %v4759
        %v4762 = vunpack.c.l.s4 1966171168
        %v4763 = vunpack.c.0.s8 %v4762
        %v4764 = vlaneseq
        %v4765 = vshrl.u32 %v4764, 7
        %v4766 = vsub.s32 %v4763, %v4765
        %v4767 = vrot.slane %v4751, %v4766
        %v4769 = vunpack.c.l.s4 1966171168
        %v4770 = vunpack.c.0.s8 %v4769
        %v4771 = vlaneseq
        %v4772 = vshrl.u32 %v4771, 7
        %v4773 = vsub.s32 %v4770, %v4772
        %v4774 = vrot.slane %v4752, %v4773
        %v4776 = vunpack.c.l.s4 1966171168
        %v4777 = vunpack.c.0.s8 %v4776
        %v4778 = vlaneseq
        %v4779 = vshrl.u32 %v4778, 7
        %v4780 = vsub.s32 %v4777, %v4779
        %v4781 = vrot.slane %v4753, %v4780
        %v4782 = vcombine.high %v4760, %v4760
        %v4783 = vcombine.high %v4767, %v4767
        %v4784 = vcombine.high %v4774, %v4774
        %v4785 = vcombine.high %v4781, %v4781
        %v4786 = vcombine.high %v1035, %v1035
        %v4788 = vunpack.c.l.s4 1966171168
        %v4789 = vunpack.c.0.s8 %v4788
        %v4790 = vlaneseq
        %v4791 = vshrl.u32 %v4790, 7
        %v4792 = vsub.s32 %v4789, %v4791
        %v4793 = vrot.slane %v1035, %v4792
        %v4795 = vunpack.c.l.s4 1966171168
        %v4796 = vunpack.c.0.s8 %v4795
        %v4797 = vlaneseq
        %v4798 = vshrl.u32 %v4797, 7
        %v4799 = vsub.s32 %v4796, %v4798
        %v4800 = vrot.slane %v4786, %v4799
        %v4801 = vcombine.high %v4793, %v4793
        %v4802 = vcombine.high %v4800, %v4800
        %v4804 = vunpack.c.l.s4 1966171168
        %v4805 = vunpack.c.0.s8 %v4804
        %v4806 = vlaneseq
        %v4807 = vshrl.u32 %v4806, 7
        %v4808 = vsub.s32 %v4805, %v4807
        %v4809 = vrot.slane %v4793, %v4808
        %v4811 = vunpack.c.l.s4 1966171168
        %v4812 = vunpack.c.0.s8 %v4811
        %v4813 = vlaneseq
        %v4814 = vshrl.u32 %v4813, 7
        %v4815 = vsub.s32 %v4812, %v4814
        %v4816 = vrot.slane %v4800, %v4815
        %v4818 = vunpack.c.l.s4 1966171168
        %v4819 = vunpack.c.0.s8 %v4818
        %v4820 = vlaneseq
        %v4821 = vshrl.u32 %v4820, 7
        %v4822 = vsub.s32 %v4819, %v4821
        %v4823 = vrot.slane %v4801, %v4822
        %v4825 = vunpack.c.l.s4 1966171168
        %v4826 = vunpack.c.0.s8 %v4825
        %v4827 = vlaneseq
        %v4828 = vshrl.u32 %v4827, 7
        %v4829 = vsub.s32 %v4826, %v4828
        %v4830 = vrot.slane %v4802, %v4829
        %v4831 = vcombine.high %v4809, %v4809
        %v4832 = vcombine.high %v4816, %v4816
        %v4833 = vcombine.high %v4823, %v4823
        %v4834 = vcombine.high %v4830, %v4830
        %v4835 = vcombine.high %v1037, %v1037
        %v4837 = vunpack.c.l.s4 1966171168
        %v4838 = vunpack.c.0.s8 %v4837
        %v4839 = vlaneseq
        %v4840 = vshrl.u32 %v4839, 7
        %v4841 = vsub.s32 %v4838, %v4840
        %v4842 = vrot.slane %v1037, %v4841
        %v4844 = vunpack.c.l.s4 1966171168
        %v4845 = vunpack.c.0.s8 %v4844
        %v4846 = vlaneseq
        %v4847 = vshrl.u32 %v4846, 7
        %v4848 = vsub.s32 %v4845, %v4847
        %v4849 = vrot.slane %v4835, %v4848
        %v4850 = vcombine.high %v4842, %v4842
        %v4851 = vcombine.high %v4849, %v4849
        %v4853 = vunpack.c.l.s4 1966171168
        %v4854 = vunpack.c.0.s8 %v4853
        %v4855 = vlaneseq
        %v4856 = vshrl.u32 %v4855, 7
        %v4857 = vsub.s32 %v4854, %v4856
        %v4858 = vrot.slane %v4842, %v4857
        %v4860 = vunpack.c.l.s4 1966171168
        %v4861 = vunpack.c.0.s8 %v4860
        %v4862 = vlaneseq
        %v4863 = vshrl.u32 %v4862, 7
        %v4864 = vsub.s32 %v4861, %v4863
        %v4865 = vrot.slane %v4849, %v4864
        %v4867 = vunpack.c.l.s4 1966171168
        %v4868 = vunpack.c.0.s8 %v4867
        %v4869 = vlaneseq
        %v4870 = vshrl.u32 %v4869, 7
        %v4871 = vsub.s32 %v4868, %v4870
        %v4872 = vrot.slane %v4850, %v4871
        %v4874 = vunpack.c.l.s4 1966171168
        %v4875 = vunpack.c.0.s8 %v4874
        %v4876 = vlaneseq
        %v4877 = vshrl.u32 %v4876, 7
        %v4878 = vsub.s32 %v4875, %v4877
        %v4879 = vrot.slane %v4851, %v4878
        %v4880 = vcombine.high %v4858, %v4858
        %v4881 = vcombine.high %v4865, %v4865
        %v4882 = vcombine.high %v4872, %v4872
        %v4883 = vcombine.high %v4879, %v4879
        %v4884 = vcombine.high %v1039, %v1039
        %v4886 = vunpack.c.l.s4 1966171168
        %v4887 = vunpack.c.0.s8 %v4886
        %v4888 = vlaneseq
        %v4889 = vshrl.u32 %v4888, 7
        %v4890 = vsub.s32 %v4887, %v4889
        %v4891 = vrot.slane %v1039, %v4890
        %v4893 = vunpack.c.l.s4 1966171168
        %v4894 = vunpack.c.0.s8 %v4893
        %v4895 = vlaneseq
        %v4896 = vshrl.u32 %v4895, 7
        %v4897 = vsub.s32 %v4894, %v4896
        %v4898 = vrot.slane %v4884, %v4897
        %v4899 = vcombine.high %v4891, %v4891
        %v4900 = vcombine.high %v4898, %v4898
        %v4902 = vunpack.c.l.s4 1966171168
        %v4903 = vunpack.c.0.s8 %v4902
        %v4904 = vlaneseq
        %v4905 = vshrl.u32 %v4904, 7
        %v4906 = vsub.s32 %v4903, %v4905
        %v4907 = vrot.slane %v4891, %v4906
        %v4909 = vunpack.c.l.s4 1966171168
        %v4910 = vunpack.c.0.s8 %v4909
        %v4911 = vlaneseq
        %v4912 = vshrl.u32 %v4911, 7
        %v4913 = vsub.s32 %v4910, %v4912
        %v4914 = vrot.slane %v4898, %v4913
        %v4916 = vunpack.c.l.s4 1966171168
        %v4917 = vunpack.c.0.s8 %v4916
        %v4918 = vlaneseq
        %v4919 = vshrl.u32 %v4918, 7
        %v4920 = vsub.s32 %v4917, %v4919
        %v4921 = vrot.slane %v4899, %v4920
        %v4923 = vunpack.c.l.s4 1966171168
        %v4924 = vunpack.c.0.s8 %v4923
        %v4925 = vlaneseq
        %v4926 = vshrl.u32 %v4925, 7
        %v4927 = vsub.s32 %v4924, %v4926
        %v4928 = vrot.slane %v4900, %v4927
        %v4929 = vcombine.high %v4907, %v4907
        %v4930 = vcombine.high %v4914, %v4914
        %v4931 = vcombine.high %v4921, %v4921
        %v4932 = vcombine.high %v4928, %v4928
        %v4933 = vcombine.high %v1041, %v1041
        %v4935 = vunpack.c.l.s4 1966171168
        %v4936 = vunpack.c.0.s8 %v4935
        %v4937 = vlaneseq
        %v4938 = vshrl.u32 %v4937, 7
        %v4939 = vsub.s32 %v4936, %v4938
        %v4940 = vrot.slane %v1041, %v4939
        %v4942 = vunpack.c.l.s4 1966171168
        %v4943 = vunpack.c.0.s8 %v4942
        %v4944 = vlaneseq
        %v4945 = vshrl.u32 %v4944, 7
        %v4946 = vsub.s32 %v4943, %v4945
        %v4947 = vrot.slane %v4933, %v4946
        %v4948 = vcombine.high %v4940, %v4940
        %v4949 = vcombine.high %v4947, %v4947
        %v4951 = vunpack.c.l.s4 1966171168
        %v4952 = vunpack.c.0.s8 %v4951
        %v4953 = vlaneseq
        %v4954 = vshrl.u32 %v4953, 7
        %v4955 = vsub.s32 %v4952, %v4954
        %v4956 = vrot.slane %v4940, %v4955
        %v4958 = vunpack.c.l.s4 1966171168
        %v4959 = vunpack.c.0.s8 %v4958
        %v4960 = vlaneseq
        %v4961 = vshrl.u32 %v4960, 7
        %v4962 = vsub.s32 %v4959, %v4961
        %v4963 = vrot.slane %v4947, %v4962
        %v4965 = vunpack.c.l.s4 1966171168
        %v4966 = vunpack.c.0.s8 %v4965
        %v4967 = vlaneseq
        %v4968 = vshrl.u32 %v4967, 7
        %v4969 = vsub.s32 %v4966, %v4968
        %v4970 = vrot.slane %v4948, %v4969
        %v4972 = vunpack.c.l.s4 1966171168
        %v4973 = vunpack.c.0.s8 %v4972
        %v4974 = vlaneseq
        %v4975 = vshrl.u32 %v4974, 7
        %v4976 = vsub.s32 %v4973, %v4975
        %v4977 = vrot.slane %v4949, %v4976
        %v4978 = vcombine.high %v4956, %v4956
        %v4979 = vcombine.high %v4963, %v4963
        %v4980 = vcombine.high %v4970, %v4970
        %v4981 = vcombine.high %v4977, %v4977
        %v4982 = vcombine.high %v1043, %v1043
        %v4984 = vunpack.c.l.s4 1966171168
        %v4985 = vunpack.c.0.s8 %v4984
        %v4986 = vlaneseq
        %v4987 = vshrl.u32 %v4986, 7
        %v4988 = vsub.s32 %v4985, %v4987
        %v4989 = vrot.slane %v1043, %v4988
        %v4991 = vunpack.c.l.s4 1966171168
        %v4992 = vunpack.c.0.s8 %v4991
        %v4993 = vlaneseq
        %v4994 = vshrl.u32 %v4993, 7
        %v4995 = vsub.s32 %v4992, %v4994
        %v4996 = vrot.slane %v4982, %v4995
        %v4997 = vcombine.high %v4989, %v4989
        %v4998 = vcombine.high %v4996, %v4996
        %v5000 = vunpack.c.l.s4 1966171168
        %v5001 = vunpack.c.0.s8 %v5000
        %v5002 = vlaneseq
        %v5003 = vshrl.u32 %v5002, 7
        %v5004 = vsub.s32 %v5001, %v5003
        %v5005 = vrot.slane %v4989, %v5004
        %v5007 = vunpack.c.l.s4 1966171168
        %v5008 = vunpack.c.0.s8 %v5007
        %v5009 = vlaneseq
        %v5010 = vshrl.u32 %v5009, 7
        %v5011 = vsub.s32 %v5008, %v5010
        %v5012 = vrot.slane %v4996, %v5011
        %v5014 = vunpack.c.l.s4 1966171168
        %v5015 = vunpack.c.0.s8 %v5014
        %v5016 = vlaneseq
        %v5017 = vshrl.u32 %v5016, 7
        %v5018 = vsub.s32 %v5015, %v5017
        %v5019 = vrot.slane %v4997, %v5018
        %v5021 = vunpack.c.l.s4 1966171168
        %v5022 = vunpack.c.0.s8 %v5021
        %v5023 = vlaneseq
        %v5024 = vshrl.u32 %v5023, 7
        %v5025 = vsub.s32 %v5022, %v5024
        %v5026 = vrot.slane %v4998, %v5025
        %v5027 = vcombine.high %v5005, %v5005
        %v5028 = vcombine.high %v5012, %v5012
        %v5029 = vcombine.high %v5019, %v5019
        %v5030 = vcombine.high %v5026, %v5026
        %v5031 = vcombine.high %v1045, %v1045
        %v5033 = vunpack.c.l.s4 1966171168
        %v5034 = vunpack.c.0.s8 %v5033
        %v5035 = vlaneseq
        %v5036 = vshrl.u32 %v5035, 7
        %v5037 = vsub.s32 %v5034, %v5036
        %v5038 = vrot.slane %v1045, %v5037
        %v5040 = vunpack.c.l.s4 1966171168
        %v5041 = vunpack.c.0.s8 %v5040
        %v5042 = vlaneseq
        %v5043 = vshrl.u32 %v5042, 7
        %v5044 = vsub.s32 %v5041, %v5043
        %v5045 = vrot.slane %v5031, %v5044
        %v5046 = vcombine.high %v5038, %v5038
        %v5047 = vcombine.high %v5045, %v5045
        %v5049 = vunpack.c.l.s4 1966171168
        %v5050 = vunpack.c.0.s8 %v5049
        %v5051 = vlaneseq
        %v5052 = vshrl.u32 %v5051, 7
        %v5053 = vsub.s32 %v5050, %v5052
        %v5054 = vrot.slane %v5038, %v5053
        %v5056 = vunpack.c.l.s4 1966171168
        %v5057 = vunpack.c.0.s8 %v5056
        %v5058 = vlaneseq
        %v5059 = vshrl.u32 %v5058, 7
        %v5060 = vsub.s32 %v5057, %v5059
        %v5061 = vrot.slane %v5045, %v5060
        %v5063 = vunpack.c.l.s4 1966171168
        %v5064 = vunpack.c.0.s8 %v5063
        %v5065 = vlaneseq
        %v5066 = vshrl.u32 %v5065, 7
        %v5067 = vsub.s32 %v5064, %v5066
        %v5068 = vrot.slane %v5046, %v5067
        %v5070 = vunpack.c.l.s4 1966171168
        %v5071 = vunpack.c.0.s8 %v5070
        %v5072 = vlaneseq
        %v5073 = vshrl.u32 %v5072, 7
        %v5074 = vsub.s32 %v5071, %v5073
        %v5075 = vrot.slane %v5047, %v5074
        %v5076 = vcombine.high %v5054, %v5054
        %v5077 = vcombine.high %v5061, %v5061
        %v5078 = vcombine.high %v5068, %v5068
        %v5079 = vcombine.high %v5075, %v5075
        %v5080 = vcombine.high %v1047, %v1047
        %v5082 = vunpack.c.l.s4 1966171168
        %v5083 = vunpack.c.0.s8 %v5082
        %v5084 = vlaneseq
        %v5085 = vshrl.u32 %v5084, 7
        %v5086 = vsub.s32 %v5083, %v5085
        %v5087 = vrot.slane %v1047, %v5086
        %v5089 = vunpack.c.l.s4 1966171168
        %v5090 = vunpack.c.0.s8 %v5089
        %v5091 = vlaneseq
        %v5092 = vshrl.u32 %v5091, 7
        %v5093 = vsub.s32 %v5090, %v5092
        %v5094 = vrot.slane %v5080, %v5093
        %v5095 = vcombine.high %v5087, %v5087
        %v5096 = vcombine.high %v5094, %v5094
        %v5098 = vunpack.c.l.s4 1966171168
        %v5099 = vunpack.c.0.s8 %v5098
        %v5100 = vlaneseq
        %v5101 = vshrl.u32 %v5100, 7
        %v5102 = vsub.s32 %v5099, %v5101
        %v5103 = vrot.slane %v5087, %v5102
        %v5105 = vunpack.c.l.s4 1966171168
        %v5106 = vunpack.c.0.s8 %v5105
        %v5107 = vlaneseq
        %v5108 = vshrl.u32 %v5107, 7
        %v5109 = vsub.s32 %v5106, %v5108
        %v5110 = vrot.slane %v5094, %v5109
        %v5112 = vunpack.c.l.s4 1966171168
        %v5113 = vunpack.c.0.s8 %v5112
        %v5114 = vlaneseq
        %v5115 = vshrl.u32 %v5114, 7
        %v5116 = vsub.s32 %v5113, %v5115
        %v5117 = vrot.slane %v5095, %v5116
        %v5119 = vunpack.c.l.s4 1966171168
        %v5120 = vunpack.c.0.s8 %v5119
        %v5121 = vlaneseq
        %v5122 = vshrl.u32 %v5121, 7
        %v5123 = vsub.s32 %v5120, %v5122
        %v5124 = vrot.slane %v5096, %v5123
        %v5125 = vcombine.high %v5103, %v5103
        %v5126 = vcombine.high %v5110, %v5110
        %v5127 = vcombine.high %v5117, %v5117
        %v5128 = vcombine.high %v5124, %v5124
        %v5129 = vcombine.high %v1049, %v1049
        %v5131 = vunpack.c.l.s4 1966171168
        %v5132 = vunpack.c.0.s8 %v5131
        %v5133 = vlaneseq
        %v5134 = vshrl.u32 %v5133, 7
        %v5135 = vsub.s32 %v5132, %v5134
        %v5136 = vrot.slane %v1049, %v5135
        %v5138 = vunpack.c.l.s4 1966171168
        %v5139 = vunpack.c.0.s8 %v5138
        %v5140 = vlaneseq
        %v5141 = vshrl.u32 %v5140, 7
        %v5142 = vsub.s32 %v5139, %v5141
        %v5143 = vrot.slane %v5129, %v5142
        %v5144 = vcombine.high %v5136, %v5136
        %v5145 = vcombine.high %v5143, %v5143
        %v5147 = vunpack.c.l.s4 1966171168
        %v5148 = vunpack.c.0.s8 %v5147
        %v5149 = vlaneseq
        %v5150 = vshrl.u32 %v5149, 7
        %v5151 = vsub.s32 %v5148, %v5150
        %v5152 = vrot.slane %v5136, %v5151
        %v5154 = vunpack.c.l.s4 1966171168
        %v5155 = vunpack.c.0.s8 %v5154
        %v5156 = vlaneseq
        %v5157 = vshrl.u32 %v5156, 7
        %v5158 = vsub.s32 %v5155, %v5157
        %v5159 = vrot.slane %v5143, %v5158
        %v5161 = vunpack.c.l.s4 1966171168
        %v5162 = vunpack.c.0.s8 %v5161
        %v5163 = vlaneseq
        %v5164 = vshrl.u32 %v5163, 7
        %v5165 = vsub.s32 %v5162, %v5164
        %v5166 = vrot.slane %v5144, %v5165
        %v5168 = vunpack.c.l.s4 1966171168
        %v5169 = vunpack.c.0.s8 %v5168
        %v5170 = vlaneseq
        %v5171 = vshrl.u32 %v5170, 7
        %v5172 = vsub.s32 %v5169, %v5171
        %v5173 = vrot.slane %v5145, %v5172
        %v5174 = vcombine.high %v5152, %v5152
        %v5175 = vcombine.high %v5159, %v5159
        %v5176 = vcombine.high %v5166, %v5166
        %v5177 = vcombine.high %v5173, %v5173
        %v5178 = vcombine.high %v1051, %v1051
        %v5180 = vunpack.c.l.s4 1966171168
        %v5181 = vunpack.c.0.s8 %v5180
        %v5182 = vlaneseq
        %v5183 = vshrl.u32 %v5182, 7
        %v5184 = vsub.s32 %v5181, %v5183
        %v5185 = vrot.slane %v1051, %v5184
        %v5187 = vunpack.c.l.s4 1966171168
        %v5188 = vunpack.c.0.s8 %v5187
        %v5189 = vlaneseq
        %v5190 = vshrl.u32 %v5189, 7
        %v5191 = vsub.s32 %v5188, %v5190
        %v5192 = vrot.slane %v5178, %v5191
        %v5193 = vcombine.high %v5185, %v5185
        %v5194 = vcombine.high %v5192, %v5192
        %v5196 = vunpack.c.l.s4 1966171168
        %v5197 = vunpack.c.0.s8 %v5196
        %v5198 = vlaneseq
        %v5199 = vshrl.u32 %v5198, 7
        %v5200 = vsub.s32 %v5197, %v5199
        %v5201 = vrot.slane %v5185, %v5200
        %v5203 = vunpack.c.l.s4 1966171168
        %v5204 = vunpack.c.0.s8 %v5203
        %v5205 = vlaneseq
        %v5206 = vshrl.u32 %v5205, 7
        %v5207 = vsub.s32 %v5204, %v5206
        %v5208 = vrot.slane %v5192, %v5207
        %v5210 = vunpack.c.l.s4 1966171168
        %v5211 = vunpack.c.0.s8 %v5210
        %v5212 = vlaneseq
        %v5213 = vshrl.u32 %v5212, 7
        %v5214 = vsub.s32 %v5211, %v5213
        %v5215 = vrot.slane %v5193, %v5214
        %v5217 = vunpack.c.l.s4 1966171168
        %v5218 = vunpack.c.0.s8 %v5217
        %v5219 = vlaneseq
        %v5220 = vshrl.u32 %v5219, 7
        %v5221 = vsub.s32 %v5218, %v5220
        %v5222 = vrot.slane %v5194, %v5221
        %v5223 = vcombine.high %v5201, %v5201
        %v5224 = vcombine.high %v5208, %v5208
        %v5225 = vcombine.high %v5215, %v5215
        %v5226 = vcombine.high %v5222, %v5222
        %v5227 = vcombine.high %v1053, %v1053
        %v5229 = vunpack.c.l.s4 1966171168
        %v5230 = vunpack.c.0.s8 %v5229
        %v5231 = vlaneseq
        %v5232 = vshrl.u32 %v5231, 7
        %v5233 = vsub.s32 %v5230, %v5232
        %v5234 = vrot.slane %v1053, %v5233
        %v5236 = vunpack.c.l.s4 1966171168
        %v5237 = vunpack.c.0.s8 %v5236
        %v5238 = vlaneseq
        %v5239 = vshrl.u32 %v5238, 7
        %v5240 = vsub.s32 %v5237, %v5239
        %v5241 = vrot.slane %v5227, %v5240
        %v5242 = vcombine.high %v5234, %v5234
        %v5243 = vcombine.high %v5241, %v5241
        %v5245 = vunpack.c.l.s4 1966171168
        %v5246 = vunpack.c.0.s8 %v5245
        %v5247 = vlaneseq
        %v5248 = vshrl.u32 %v5247, 7
        %v5249 = vsub.s32 %v5246, %v5248
        %v5250 = vrot.slane %v5234, %v5249
        %v5252 = vunpack.c.l.s4 1966171168
        %v5253 = vunpack.c.0.s8 %v5252
        %v5254 = vlaneseq
        %v5255 = vshrl.u32 %v5254, 7
        %v5256 = vsub.s32 %v5253, %v5255
        %v5257 = vrot.slane %v5241, %v5256
        %v5259 = vunpack.c.l.s4 1966171168
        %v5260 = vunpack.c.0.s8 %v5259
        %v5261 = vlaneseq
        %v5262 = vshrl.u32 %v5261, 7
        %v5263 = vsub.s32 %v5260, %v5262
        %v5264 = vrot.slane %v5242, %v5263
        %v5266 = vunpack.c.l.s4 1966171168
        %v5267 = vunpack.c.0.s8 %v5266
        %v5268 = vlaneseq
        %v5269 = vshrl.u32 %v5268, 7
        %v5270 = vsub.s32 %v5267, %v5269
        %v5271 = vrot.slane %v5243, %v5270
        %v5272 = vcombine.high %v5250, %v5250
        %v5273 = vcombine.high %v5257, %v5257
        %v5274 = vcombine.high %v5264, %v5264
        %v5275 = vcombine.high %v5271, %v5271
        %v5276 = vcombine.high %v1055, %v1055
        %v5278 = vunpack.c.l.s4 1966171168
        %v5279 = vunpack.c.0.s8 %v5278
        %v5280 = vlaneseq
        %v5281 = vshrl.u32 %v5280, 7
        %v5282 = vsub.s32 %v5279, %v5281
        %v5283 = vrot.slane %v1055, %v5282
        %v5285 = vunpack.c.l.s4 1966171168
        %v5286 = vunpack.c.0.s8 %v5285
        %v5287 = vlaneseq
        %v5288 = vshrl.u32 %v5287, 7
        %v5289 = vsub.s32 %v5286, %v5288
        %v5290 = vrot.slane %v5276, %v5289
        %v5291 = vcombine.high %v5283, %v5283
        %v5292 = vcombine.high %v5290, %v5290
        %v5294 = vunpack.c.l.s4 1966171168
        %v5295 = vunpack.c.0.s8 %v5294
        %v5296 = vlaneseq
        %v5297 = vshrl.u32 %v5296, 7
        %v5298 = vsub.s32 %v5295, %v5297
        %v5299 = vrot.slane %v5283, %v5298
        %v5301 = vunpack.c.l.s4 1966171168
        %v5302 = vunpack.c.0.s8 %v5301
        %v5303 = vlaneseq
        %v5304 = vshrl.u32 %v5303, 7
        %v5305 = vsub.s32 %v5302, %v5304
        %v5306 = vrot.slane %v5290, %v5305
        %v5308 = vunpack.c.l.s4 1966171168
        %v5309 = vunpack.c.0.s8 %v5308
        %v5310 = vlaneseq
        %v5311 = vshrl.u32 %v5310, 7
        %v5312 = vsub.s32 %v5309, %v5311
        %v5313 = vrot.slane %v5291, %v5312
        %v5315 = vunpack.c.l.s4 1966171168
        %v5316 = vunpack.c.0.s8 %v5315
        %v5317 = vlaneseq
        %v5318 = vshrl.u32 %v5317, 7
        %v5319 = vsub.s32 %v5316, %v5318
        %v5320 = vrot.slane %v5292, %v5319
        %v5321 = vcombine.high %v5299, %v5299
        %v5322 = vcombine.high %v5306, %v5306
        %v5323 = vcombine.high %v5313, %v5313
        %v5324 = vcombine.high %v5320, %v5320
        %v5325 = vcombine.high %v1057, %v1057
        %v5327 = vunpack.c.l.s4 1966171168
        %v5328 = vunpack.c.0.s8 %v5327
        %v5329 = vlaneseq
        %v5330 = vshrl.u32 %v5329, 7
        %v5331 = vsub.s32 %v5328, %v5330
        %v5332 = vrot.slane %v1057, %v5331
        %v5334 = vunpack.c.l.s4 1966171168
        %v5335 = vunpack.c.0.s8 %v5334
        %v5336 = vlaneseq
        %v5337 = vshrl.u32 %v5336, 7
        %v5338 = vsub.s32 %v5335, %v5337
        %v5339 = vrot.slane %v5325, %v5338
        %v5340 = vcombine.high %v5332, %v5332
        %v5341 = vcombine.high %v5339, %v5339
        %v5343 = vunpack.c.l.s4 1966171168
        %v5344 = vunpack.c.0.s8 %v5343
        %v5345 = vlaneseq
        %v5346 = vshrl.u32 %v5345, 7
        %v5347 = vsub.s32 %v5344, %v5346
        %v5348 = vrot.slane %v5332, %v5347
        %v5350 = vunpack.c.l.s4 1966171168
        %v5351 = vunpack.c.0.s8 %v5350
        %v5352 = vlaneseq
        %v5353 = vshrl.u32 %v5352, 7
        %v5354 = vsub.s32 %v5351, %v5353
        %v5355 = vrot.slane %v5339, %v5354
        %v5357 = vunpack.c.l.s4 1966171168
        %v5358 = vunpack.c.0.s8 %v5357
        %v5359 = vlaneseq
        %v5360 = vshrl.u32 %v5359, 7
        %v5361 = vsub.s32 %v5358, %v5360
        %v5362 = vrot.slane %v5340, %v5361
        %v5364 = vunpack.c.l.s4 1966171168
        %v5365 = vunpack.c.0.s8 %v5364
        %v5366 = vlaneseq
        %v5367 = vshrl.u32 %v5366, 7
        %v5368 = vsub.s32 %v5365, %v5367
        %v5369 = vrot.slane %v5341, %v5368
        %v5370 = vcombine.high %v5348, %v5348
        %v5371 = vcombine.high %v5355, %v5355
        %v5372 = vcombine.high %v5362, %v5362
        %v5373 = vcombine.high %v5369, %v5369
        %v5374 = vlaneseq
        %v5375 = vshrl.u32 %v5374, 7
        %v5376 = vsub.s32 0, %v5375
        %v5377 = vrot.slane %v4613, %v5376
        %v5378 = vlaneseq
        %v5379 = vshrl.u32 %v5378, 7
        %v5380 = vsub.s32 0, %v5379
        %v5381 = vrot.slane %v4627, %v5380
        %v5382 = vlaneseq
        %v5383 = vshrl.u32 %v5382, 7
        %v5384 = vsub.s32 0, %v5383
        %v5385 = vrot.slane %v4635, %v5384
        %v5386 = vlaneseq
        %v5387 = vshrl.u32 %v5386, 7
        %v5388 = vsub.s32 0, %v5387
        %v5389 = vrot.slane %v4637, %v5388
        %v5390 = vlaneseq
        %v5391 = vshrl.u32 %v5390, 7
        %v5392 = vsub.s32 0, %v5391
        %v5393 = vrot.slane %v4620, %v5392
        %v5394 = vlaneseq
        %v5395 = vshrl.u32 %v5394, 7
        %v5396 = vsub.s32 0, %v5395
        %v5397 = vrot.slane %v4634, %v5396
        %v5398 = vlaneseq
        %v5399 = vshrl.u32 %v5398, 7
        %v5400 = vsub.s32 0, %v5399
        %v5401 = vrot.slane %v4636, %v5400
        %v5402 = vlaneseq
        %v5403 = vshrl.u32 %v5402, 7
        %v5404 = vsub.s32 0, %v5403
        %v5405 = vrot.slane %v4638, %v5404
        %v5406 = vlaneseq
        %v5407 = vshrl.u32 %v5406, 7
        %v5408 = vsub.s32 0, %v5407
        %v5409 = vrot.slane %v4662, %v5408
        %v5410 = vlaneseq
        %v5411 = vshrl.u32 %v5410, 7
        %v5412 = vsub.s32 0, %v5411
        %v5413 = vrot.slane %v4676, %v5412
        %v5414 = vlaneseq
        %v5415 = vshrl.u32 %v5414, 7
        %v5416 = vsub.s32 0, %v5415
        %v5417 = vrot.slane %v4684, %v5416
        %v5418 = vlaneseq
        %v5419 = vshrl.u32 %v5418, 7
        %v5420 = vsub.s32 0, %v5419
        %v5421 = vrot.slane %v4686, %v5420
        %v5422 = vlaneseq
        %v5423 = vshrl.u32 %v5422, 7
        %v5424 = vsub.s32 0, %v5423
        %v5425 = vrot.slane %v4669, %v5424
        %v5426 = vlaneseq
        %v5427 = vshrl.u32 %v5426, 7
        %v5428 = vsub.s32 0, %v5427
        %v5429 = vrot.slane %v4683, %v5428
        %v5430 = vlaneseq
        %v5431 = vshrl.u32 %v5430, 7
        %v5432 = vsub.s32 0, %v5431
        %v5433 = vrot.slane %v4685, %v5432
        %v5434 = vlaneseq
        %v5435 = vshrl.u32 %v5434, 7
        %v5436 = vsub.s32 0, %v5435
        %v5437 = vrot.slane %v4687, %v5436
        %v5438 = vlaneseq
        %v5439 = vshrl.u32 %v5438, 7
        %v5440 = vsub.s32 0, %v5439
        %v5441 = vrot.slane %v4711, %v5440
        %v5442 = vlaneseq
        %v5443 = vshrl.u32 %v5442, 7
        %v5444 = vsub.s32 0, %v5443
        %v5445 = vrot.slane %v4725, %v5444
        %v5446 = vlaneseq
        %v5447 = vshrl.u32 %v5446, 7
        %v5448 = vsub.s32 0, %v5447
        %v5449 = vrot.slane %v4733, %v5448
        %v5450 = vlaneseq
        %v5451 = vshrl.u32 %v5450, 7
        %v5452 = vsub.s32 0, %v5451
        %v5453 = vrot.slane %v4735, %v5452
        %v5454 = vlaneseq
        %v5455 = vshrl.u32 %v5454, 7
        %v5456 = vsub.s32 0, %v5455
        %v5457 = vrot.slane %v4718, %v5456
        %v5458 = vlaneseq
        %v5459 = vshrl.u32 %v5458, 7
        %v5460 = vsub.s32 0, %v5459
        %v5461 = vrot.slane %v4732, %v5460
        %v5462 = vlaneseq
        %v5463 = vshrl.u32 %v5462, 7
        %v5464 = vsub.s32 0, %v5463
        %v5465 = vrot.slane %v4734, %v5464
        %v5466 = vlaneseq
        %v5467 = vshrl.u32 %v5466, 7
        %v5468 = vsub.s32 0, %v5467
        %v5469 = vrot.slane %v4736, %v5468
        %v5470 = vlaneseq
        %v5471 = vshrl.u32 %v5470, 7
        %v5472 = vsub.s32 0, %v5471
        %v5473 = vrot.slane %v4760, %v5472
        %v5474 = vlaneseq
        %v5475 = vshrl.u32 %v5474, 7
        %v5476 = vsub.s32 0, %v5475
        %v5477 = vrot.slane %v4774, %v5476
        %v5478 = vlaneseq
        %v5479 = vshrl.u32 %v5478, 7
        %v5480 = vsub.s32 0, %v5479
        %v5481 = vrot.slane %v4782, %v5480
        %v5482 = vlaneseq
        %v5483 = vshrl.u32 %v5482, 7
        %v5484 = vsub.s32 0, %v5483
        %v5485 = vrot.slane %v4784, %v5484
        %v5486 = vlaneseq
        %v5487 = vshrl.u32 %v5486, 7
        %v5488 = vsub.s32 0, %v5487
        %v5489 = vrot.slane %v4767, %v5488
        %v5490 = vlaneseq
        %v5491 = vshrl.u32 %v5490, 7
        %v5492 = vsub.s32 0, %v5491
        %v5493 = vrot.slane %v4781, %v5492
        %v5494 = vlaneseq
        %v5495 = vshrl.u32 %v5494, 7
        %v5496 = vsub.s32 0, %v5495
        %v5497 = vrot.slane %v4783, %v5496
        %v5498 = vlaneseq
        %v5499 = vshrl.u32 %v5498, 7
        %v5500 = vsub.s32 0, %v5499
        %v5501 = vrot.slane %v4785, %v5500
        %v5502 = vlaneseq
        %v5503 = vshrl.u32 %v5502, 7
        %v5504 = vsub.s32 0, %v5503
        %v5505 = vrot.slane %v4809, %v5504
        %v5506 = vlaneseq
        %v5507 = vshrl.u32 %v5506, 7
        %v5508 = vsub.s32 0, %v5507
        %v5509 = vrot.slane %v4823, %v5508
        %v5510 = vlaneseq
        %v5511 = vshrl.u32 %v5510, 7
        %v5512 = vsub.s32 0, %v5511
        %v5513 = vrot.slane %v4831, %v5512
        %v5514 = vlaneseq
        %v5515 = vshrl.u32 %v5514, 7
        %v5516 = vsub.s32 0, %v5515
        %v5517 = vrot.slane %v4833, %v5516
        %v5518 = vlaneseq
        %v5519 = vshrl.u32 %v5518, 7
        %v5520 = vsub.s32 0, %v5519
        %v5521 = vrot.slane %v4816, %v5520
        %v5522 = vlaneseq
        %v5523 = vshrl.u32 %v5522, 7
        %v5524 = vsub.s32 0, %v5523
        %v5525 = vrot.slane %v4830, %v5524
        %v5526 = vlaneseq
        %v5527 = vshrl.u32 %v5526, 7
        %v5528 = vsub.s32 0, %v5527
        %v5529 = vrot.slane %v4832, %v5528
        %v5530 = vlaneseq
        %v5531 = vshrl.u32 %v5530, 7
        %v5532 = vsub.s32 0, %v5531
        %v5533 = vrot.slane %v4834, %v5532
        %v5534 = vlaneseq
        %v5535 = vshrl.u32 %v5534, 7
        %v5536 = vsub.s32 0, %v5535
        %v5537 = vrot.slane %v4858, %v5536
        %v5538 = vlaneseq
        %v5539 = vshrl.u32 %v5538, 7
        %v5540 = vsub.s32 0, %v5539
        %v5541 = vrot.slane %v4872, %v5540
        %v5542 = vlaneseq
        %v5543 = vshrl.u32 %v5542, 7
        %v5544 = vsub.s32 0, %v5543
        %v5545 = vrot.slane %v4880, %v5544
        %v5546 = vlaneseq
        %v5547 = vshrl.u32 %v5546, 7
        %v5548 = vsub.s32 0, %v5547
        %v5549 = vrot.slane %v4882, %v5548
        %v5550 = vlaneseq
        %v5551 = vshrl.u32 %v5550, 7
        %v5552 = vsub.s32 0, %v5551
        %v5553 = vrot.slane %v4865, %v5552
        %v5554 = vlaneseq
        %v5555 = vshrl.u32 %v5554, 7
        %v5556 = vsub.s32 0, %v5555
        %v5557 = vrot.slane %v4879, %v5556
        %v5558 = vlaneseq
        %v5559 = vshrl.u32 %v5558, 7
        %v5560 = vsub.s32 0, %v5559
        %v5561 = vrot.slane %v4881, %v5560
        %v5562 = vlaneseq
        %v5563 = vshrl.u32 %v5562, 7
        %v5564 = vsub.s32 0, %v5563
        %v5565 = vrot.slane %v4883, %v5564
        %v5566 = vlaneseq
        %v5567 = vshrl.u32 %v5566, 7
        %v5568 = vsub.s32 0, %v5567
        %v5569 = vrot.slane %v4907, %v5568
        %v5570 = vlaneseq
        %v5571 = vshrl.u32 %v5570, 7
        %v5572 = vsub.s32 0, %v5571
        %v5573 = vrot.slane %v4921, %v5572
        %v5574 = vlaneseq
        %v5575 = vshrl.u32 %v5574, 7
        %v5576 = vsub.s32 0, %v5575
        %v5577 = vrot.slane %v4929, %v5576
        %v5578 = vlaneseq
        %v5579 = vshrl.u32 %v5578, 7
        %v5580 = vsub.s32 0, %v5579
        %v5581 = vrot.slane %v4931, %v5580
        %v5582 = vlaneseq
        %v5583 = vshrl.u32 %v5582, 7
        %v5584 = vsub.s32 0, %v5583
        %v5585 = vrot.slane %v4914, %v5584
        %v5586 = vlaneseq
        %v5587 = vshrl.u32 %v5586, 7
        %v5588 = vsub.s32 0, %v5587
        %v5589 = vrot.slane %v4928, %v5588
        %v5590 = vlaneseq
        %v5591 = vshrl.u32 %v5590, 7
        %v5592 = vsub.s32 0, %v5591
        %v5593 = vrot.slane %v4930, %v5592
        %v5594 = vlaneseq
        %v5595 = vshrl.u32 %v5594, 7
        %v5596 = vsub.s32 0, %v5595
        %v5597 = vrot.slane %v4932, %v5596
        %v5598 = vlaneseq
        %v5599 = vshrl.u32 %v5598, 7
        %v5600 = vsub.s32 0, %v5599
        %v5601 = vrot.slane %v4956, %v5600
        %v5602 = vlaneseq
        %v5603 = vshrl.u32 %v5602, 7
        %v5604 = vsub.s32 0, %v5603
        %v5605 = vrot.slane %v4970, %v5604
        %v5606 = vlaneseq
        %v5607 = vshrl.u32 %v5606, 7
        %v5608 = vsub.s32 0, %v5607
        %v5609 = vrot.slane %v4978, %v5608
        %v5610 = vlaneseq
        %v5611 = vshrl.u32 %v5610, 7
        %v5612 = vsub.s32 0, %v5611
        %v5613 = vrot.slane %v4980, %v5612
        %v5614 = vlaneseq
        %v5615 = vshrl.u32 %v5614, 7
        %v5616 = vsub.s32 0, %v5615
        %v5617 = vrot.slane %v4963, %v5616
        %v5618 = vlaneseq
        %v5619 = vshrl.u32 %v5618, 7
        %v5620 = vsub.s32 0, %v5619
        %v5621 = vrot.slane %v4977, %v5620
        %v5622 = vlaneseq
        %v5623 = vshrl.u32 %v5622, 7
        %v5624 = vsub.s32 0, %v5623
        %v5625 = vrot.slane %v4979, %v5624
        %v5626 = vlaneseq
        %v5627 = vshrl.u32 %v5626, 7
        %v5628 = vsub.s32 0, %v5627
        %v5629 = vrot.slane %v4981, %v5628
        %v5630 = vlaneseq
        %v5631 = vshrl.u32 %v5630, 7
        %v5632 = vsub.s32 0, %v5631
        %v5633 = vrot.slane %v5005, %v5632
        %v5634 = vlaneseq
        %v5635 = vshrl.u32 %v5634, 7
        %v5636 = vsub.s32 0, %v5635
        %v5637 = vrot.slane %v5019, %v5636
        %v5638 = vlaneseq
        %v5639 = vshrl.u32 %v5638, 7
        %v5640 = vsub.s32 0, %v5639
        %v5641 = vrot.slane %v5027, %v5640
        %v5642 = vlaneseq
        %v5643 = vshrl.u32 %v5642, 7
        %v5644 = vsub.s32 0, %v5643
        %v5645 = vrot.slane %v5029, %v5644
        %v5646 = vlaneseq
        %v5647 = vshrl.u32 %v5646, 7
        %v5648 = vsub.s32 0, %v5647
        %v5649 = vrot.slane %v5012, %v5648
        %v5650 = vlaneseq
        %v5651 = vshrl.u32 %v5650, 7
        %v5652 = vsub.s32 0, %v5651
        %v5653 = vrot.slane %v5026, %v5652
        %v5654 = vlaneseq
        %v5655 = vshrl.u32 %v5654, 7
        %v5656 = vsub.s32 0, %v5655
        %v5657 = vrot.slane %v5028, %v5656
        %v5658 = vlaneseq
        %v5659 = vshrl.u32 %v5658, 7
        %v5660 = vsub.s32 0, %v5659
        %v5661 = vrot.slane %v5030, %v5660
        %v5662 = vlaneseq
        %v5663 = vshrl.u32 %v5662, 7
        %v5664 = vsub.s32 0, %v5663
        %v5665 = vrot.slane %v5054, %v5664
        %v5666 = vlaneseq
        %v5667 = vshrl.u32 %v5666, 7
        %v5668 = vsub.s32 0, %v5667
        %v5669 = vrot.slane %v5068, %v5668
        %v5670 = vlaneseq
        %v5671 = vshrl.u32 %v5670, 7
        %v5672 = vsub.s32 0, %v5671
        %v5673 = vrot.slane %v5076, %v5672
        %v5674 = vlaneseq
        %v5675 = vshrl.u32 %v5674, 7
        %v5676 = vsub.s32 0, %v5675
        %v5677 = vrot.slane %v5078, %v5676
        %v5678 = vlaneseq
        %v5679 = vshrl.u32 %v5678, 7
        %v5680 = vsub.s32 0, %v5679
        %v5681 = vrot.slane %v5061, %v5680
        %v5682 = vlaneseq
        %v5683 = vshrl.u32 %v5682, 7
        %v5684 = vsub.s32 0, %v5683
        %v5685 = vrot.slane %v5075, %v5684
        %v5686 = vlaneseq
        %v5687 = vshrl.u32 %v5686, 7
        %v5688 = vsub.s32 0, %v5687
        %v5689 = vrot.slane %v5077, %v5688
        %v5690 = vlaneseq
        %v5691 = vshrl.u32 %v5690, 7
        %v5692 = vsub.s32 0, %v5691
        %v5693 = vrot.slane %v5079, %v5692
        %v5694 = vlaneseq
        %v5695 = vshrl.u32 %v5694, 7
        %v5696 = vsub.s32 0, %v5695
        %v5697 = vrot.slane %v5103, %v5696
        %v5698 = vlaneseq
        %v5699 = vshrl.u32 %v5698, 7
        %v5700 = vsub.s32 0, %v5699
        %v5701 = vrot.slane %v5117, %v5700
        %v5702 = vlaneseq
        %v5703 = vshrl.u32 %v5702, 7
        %v5704 = vsub.s32 0, %v5703
        %v5705 = vrot.slane %v5125, %v5704
        %v5706 = vlaneseq
        %v5707 = vshrl.u32 %v5706, 7
        %v5708 = vsub.s32 0, %v5707
        %v5709 = vrot.slane %v5127, %v5708
        %v5710 = vlaneseq
        %v5711 = vshrl.u32 %v5710, 7
        %v5712 = vsub.s32 0, %v5711
        %v5713 = vrot.slane %v5110, %v5712
        %v5714 = vlaneseq
        %v5715 = vshrl.u32 %v5714, 7
        %v5716 = vsub.s32 0, %v5715
        %v5717 = vrot.slane %v5124, %v5716
        %v5718 = vlaneseq
        %v5719 = vshrl.u32 %v5718, 7
        %v5720 = vsub.s32 0, %v5719
        %v5721 = vrot.slane %v5126, %v5720
        %v5722 = vlaneseq
        %v5723 = vshrl.u32 %v5722, 7
        %v5724 = vsub.s32 0, %v5723
        %v5725 = vrot.slane %v5128, %v5724
        %v5726 = vlaneseq
        %v5727 = vshrl.u32 %v5726, 7
        %v5728 = vsub.s32 0, %v5727
        %v5729 = vrot.slane %v5152, %v5728
        %v5730 = vlaneseq
        %v5731 = vshrl.u32 %v5730, 7
        %v5732 = vsub.s32 0, %v5731
        %v5733 = vrot.slane %v5166, %v5732
        %v5734 = vlaneseq
        %v5735 = vshrl.u32 %v5734, 7
        %v5736 = vsub.s32 0, %v5735
        %v5737 = vrot.slane %v5174, %v5736
        %v5738 = vlaneseq
        %v5739 = vshrl.u32 %v5738, 7
        %v5740 = vsub.s32 0, %v5739
        %v5741 = vrot.slane %v5176, %v5740
        %v5742 = vlaneseq
        %v5743 = vshrl.u32 %v5742, 7
        %v5744 = vsub.s32 0, %v5743
        %v5745 = vrot.slane %v5159, %v5744
        %v5746 = vlaneseq
        %v5747 = vshrl.u32 %v5746, 7
        %v5748 = vsub.s32 0, %v5747
        %v5749 = vrot.slane %v5173, %v5748
        %v5750 = vlaneseq
        %v5751 = vshrl.u32 %v5750, 7
        %v5752 = vsub.s32 0, %v5751
        %v5753 = vrot.slane %v5175, %v5752
        %v5754 = vlaneseq
        %v5755 = vshrl.u32 %v5754, 7
        %v5756 = vsub.s32 0, %v5755
        %v5757 = vrot.slane %v5177, %v5756
        %v5758 = vlaneseq
        %v5759 = vshrl.u32 %v5758, 7
        %v5760 = vsub.s32 0, %v5759
        %v5761 = vrot.slane %v5201, %v5760
        %v5762 = vlaneseq
        %v5763 = vshrl.u32 %v5762, 7
        %v5764 = vsub.s32 0, %v5763
        %v5765 = vrot.slane %v5215, %v5764
        %v5766 = vlaneseq
        %v5767 = vshrl.u32 %v5766, 7
        %v5768 = vsub.s32 0, %v5767
        %v5769 = vrot.slane %v5223, %v5768
        %v5770 = vlaneseq
        %v5771 = vshrl.u32 %v5770, 7
        %v5772 = vsub.s32 0, %v5771
        %v5773 = vrot.slane %v5225, %v5772
        %v5774 = vlaneseq
        %v5775 = vshrl.u32 %v5774, 7
        %v5776 = vsub.s32 0, %v5775
        %v5777 = vrot.slane %v5208, %v5776
        %v5778 = vlaneseq
        %v5779 = vshrl.u32 %v5778, 7
        %v5780 = vsub.s32 0, %v5779
        %v5781 = vrot.slane %v5222, %v5780
        %v5782 = vlaneseq
        %v5783 = vshrl.u32 %v5782, 7
        %v5784 = vsub.s32 0, %v5783
        %v5785 = vrot.slane %v5224, %v5784
        %v5786 = vlaneseq
        %v5787 = vshrl.u32 %v5786, 7
        %v5788 = vsub.s32 0, %v5787
        %v5789 = vrot.slane %v5226, %v5788
        %v5790 = vlaneseq
        %v5791 = vshrl.u32 %v5790, 7
        %v5792 = vsub.s32 0, %v5791
        %v5793 = vrot.slane %v5250, %v5792
        %v5794 = vlaneseq
        %v5795 = vshrl.u32 %v5794, 7
        %v5796 = vsub.s32 0, %v5795
        %v5797 = vrot.slane %v5264, %v5796
        %v5798 = vlaneseq
        %v5799 = vshrl.u32 %v5798, 7
        %v5800 = vsub.s32 0, %v5799
        %v5801 = vrot.slane %v5272, %v5800
        %v5802 = vlaneseq
        %v5803 = vshrl.u32 %v5802, 7
        %v5804 = vsub.s32 0, %v5803
        %v5805 = vrot.slane %v5274, %v5804
        %v5806 = vlaneseq
        %v5807 = vshrl.u32 %v5806, 7
        %v5808 = vsub.s32 0, %v5807
        %v5809 = vrot.slane %v5257, %v5808
        %v5810 = vlaneseq
        %v5811 = vshrl.u32 %v5810, 7
        %v5812 = vsub.s32 0, %v5811
        %v5813 = vrot.slane %v5271, %v5812
        %v5814 = vlaneseq
        %v5815 = vshrl.u32 %v5814, 7
        %v5816 = vsub.s32 0, %v5815
        %v5817 = vrot.slane %v5273, %v5816
        %v5818 = vlaneseq
        %v5819 = vshrl.u32 %v5818, 7
        %v5820 = vsub.s32 0, %v5819
        %v5821 = vrot.slane %v5275, %v5820
        %v5822 = vlaneseq
        %v5823 = vshrl.u32 %v5822, 7
        %v5824 = vsub.s32 0, %v5823
        %v5825 = vrot.slane %v5299, %v5824
        %v5826 = vlaneseq
        %v5827 = vshrl.u32 %v5826, 7
        %v5828 = vsub.s32 0, %v5827
        %v5829 = vrot.slane %v5313, %v5828
        %v5830 = vlaneseq
        %v5831 = vshrl.u32 %v5830, 7
        %v5832 = vsub.s32 0, %v5831
        %v5833 = vrot.slane %v5321, %v5832
        %v5834 = vlaneseq
        %v5835 = vshrl.u32 %v5834, 7
        %v5836 = vsub.s32 0, %v5835
        %v5837 = vrot.slane %v5323, %v5836
        %v5838 = vlaneseq
        %v5839 = vshrl.u32 %v5838, 7
        %v5840 = vsub.s32 0, %v5839
        %v5841 = vrot.slane %v5306, %v5840
        %v5842 = vlaneseq
        %v5843 = vshrl.u32 %v5842, 7
        %v5844 = vsub.s32 0, %v5843
        %v5845 = vrot.slane %v5320, %v5844
        %v5846 = vlaneseq
        %v5847 = vshrl.u32 %v5846, 7
        %v5848 = vsub.s32 0, %v5847
        %v5849 = vrot.slane %v5322, %v5848
        %v5850 = vlaneseq
        %v5851 = vshrl.u32 %v5850, 7
        %v5852 = vsub.s32 0, %v5851
        %v5853 = vrot.slane %v5324, %v5852
        %v5854 = vlaneseq
        %v5855 = vshrl.u32 %v5854, 7
        %v5856 = vsub.s32 0, %v5855
        %v5857 = vrot.slane %v5348, %v5856
        %v5858 = vlaneseq
        %v5859 = vshrl.u32 %v5858, 7
        %v5860 = vsub.s32 0, %v5859
        %v5861 = vrot.slane %v5362, %v5860
        %v5862 = vlaneseq
        %v5863 = vshrl.u32 %v5862, 7
        %v5864 = vsub.s32 0, %v5863
        %v5865 = vrot.slane %v5370, %v5864
        %v5866 = vlaneseq
        %v5867 = vshrl.u32 %v5866, 7
        %v5868 = vsub.s32 0, %v5867
        %v5869 = vrot.slane %v5372, %v5868
        %v5870 = vlaneseq
        %v5871 = vshrl.u32 %v5870, 7
        %v5872 = vsub.s32 0, %v5871
        %v5873 = vrot.slane %v5355, %v5872
        %v5874 = vlaneseq
        %v5875 = vshrl.u32 %v5874, 7
        %v5876 = vsub.s32 0, %v5875
        %v5877 = vrot.slane %v5369, %v5876
        %v5878 = vlaneseq
        %v5879 = vshrl.u32 %v5878, 7
        %v5880 = vsub.s32 0, %v5879
        %v5881 = vrot.slane %v5371, %v5880
        %v5882 = vlaneseq
        %v5883 = vshrl.u32 %v5882, 7
        %v5884 = vsub.s32 0, %v5883
        %v5885 = vrot.slane %v5373, %v5884
        %v6014 = vmul.f32 %v4510, %v5377
        %v6015 = vmul.f32 %v4511, %v5377
        %v6016 = vmul.f32 %v4510, %v5381
        %v6017 = vmul.f32 %v4511, %v5381
        %v6018 = vmul.f32 %v4510, %v5385
        %v6019 = vmul.f32 %v4511, %v5385
        %v6020 = vmul.f32 %v4510, %v5389
        %v6021 = vmul.f32 %v4511, %v5389
        %v6022 = vmul.f32 %v4512, %v5393
        %v6023 = vmul.f32 %v4513, %v5393
        %v6024 = vmul.f32 %v4512, %v5397
        %v6025 = vmul.f32 %v4513, %v5397
        %v6026 = vmul.f32 %v4512, %v5401
        %v6027 = vmul.f32 %v4513, %v5401
        %v6028 = vmul.f32 %v4512, %v5405
        %v6029 = vmul.f32 %v4513, %v5405
        %v6030 = vmul.f32 %v4514, %v5409
        %v6031 = vmul.f32 %v4515, %v5409
        %v6032 = vmul.f32 %v4514, %v5413
        %v6033 = vmul.f32 %v4515, %v5413
        %v6034 = vmul.f32 %v4514, %v5417
        %v6035 = vmul.f32 %v4515, %v5417
        %v6036 = vmul.f32 %v4514, %v5421
        %v6037 = vmul.f32 %v4515, %v5421
        %v6038 = vmul.f32 %v4516, %v5425
        %v6039 = vmul.f32 %v4517, %v5425
        %v6040 = vmul.f32 %v4516, %v5429
        %v6041 = vmul.f32 %v4517, %v5429
        %v6042 = vmul.f32 %v4516, %v5433
        %v6043 = vmul.f32 %v4517, %v5433
        %v6044 = vmul.f32 %v4516, %v5437
        %v6045 = vmul.f32 %v4517, %v5437
        %v6046 = vmul.f32 %v4518, %v5441
        %v6047 = vmul.f32 %v4519, %v5441
        %v6048 = vmul.f32 %v4518, %v5445
        %v6049 = vmul.f32 %v4519, %v5445
        %v6050 = vmul.f32 %v4518, %v5449
        %v6051 = vmul.f32 %v4519, %v5449
        %v6052 = vmul.f32 %v4518, %v5453
        %v6053 = vmul.f32 %v4519, %v5453
        %v6054 = vmul.f32 %v4520, %v5457
        %v6055 = vmul.f32 %v4521, %v5457
        %v6056 = vmul.f32 %v4520, %v5461
        %v6057 = vmul.f32 %v4521, %v5461
        %v6058 = vmul.f32 %v4520, %v5465
        %v6059 = vmul.f32 %v4521, %v5465
        %v6060 = vmul.f32 %v4520, %v5469
        %v6061 = vmul.f32 %v4521, %v5469
        %v6062 = vmul.f32 %v4522, %v5473
        %v6063 = vmul.f32 %v4523, %v5473
        %v6064 = vmul.f32 %v4522, %v5477
        %v6065 = vmul.f32 %v4523, %v5477
        %v6066 = vmul.f32 %v4522, %v5481
        %v6067 = vmul.f32 %v4523, %v5481
        %v6068 = vmul.f32 %v4522, %v5485
        %v6069 = vmul.f32 %v4523, %v5485
        %v6070 = vmul.f32 %v4524, %v5489
        %v6071 = vmul.f32 %v4525, %v5489
        %v6072 = vmul.f32 %v4524, %v5493
        %v6073 = vmul.f32 %v4525, %v5493
        %v6074 = vmul.f32 %v4524, %v5497
        %v6075 = vmul.f32 %v4525, %v5497
        %v6076 = vmul.f32 %v4524, %v5501
        %v6077 = vmul.f32 %v4525, %v5501
        %v6078 = vmul.f32 %v4526, %v5505
        %v6079 = vmul.f32 %v4527, %v5505
        %v6080 = vmul.f32 %v4526, %v5509
        %v6081 = vmul.f32 %v4527, %v5509
        %v6082 = vmul.f32 %v4526, %v5513
        %v6083 = vmul.f32 %v4527, %v5513
        %v6084 = vmul.f32 %v4526, %v5517
        %v6085 = vmul.f32 %v4527, %v5517
        %v6086 = vmul.f32 %v4528, %v5521
        %v6087 = vmul.f32 %v4529, %v5521
        %v6088 = vmul.f32 %v4528, %v5525
        %v6089 = vmul.f32 %v4529, %v5525
        %v6090 = vmul.f32 %v4528, %v5529
        %v6091 = vmul.f32 %v4529, %v5529
        %v6092 = vmul.f32 %v4528, %v5533
        %v6093 = vmul.f32 %v4529, %v5533
        %v6094 = vmul.f32 %v4530, %v5537
        %v6095 = vmul.f32 %v4531, %v5537
        %v6096 = vmul.f32 %v4530, %v5541
        %v6097 = vmul.f32 %v4531, %v5541
        %v6098 = vmul.f32 %v4530, %v5545
        %v6099 = vmul.f32 %v4531, %v5545
        %v6100 = vmul.f32 %v4530, %v5549
        %v6101 = vmul.f32 %v4531, %v5549
        %v6102 = vmul.f32 %v4532, %v5553
        %v6103 = vmul.f32 %v4533, %v5553
        %v6104 = vmul.f32 %v4532, %v5557
        %v6105 = vmul.f32 %v4533, %v5557
        %v6106 = vmul.f32 %v4532, %v5561
        %v6107 = vmul.f32 %v4533, %v5561
        %v6108 = vmul.f32 %v4532, %v5565
        %v6109 = vmul.f32 %v4533, %v5565
        %v6110 = vmul.f32 %v4534, %v5569
        %v6111 = vmul.f32 %v4535, %v5569
        %v6112 = vmul.f32 %v4534, %v5573
        %v6113 = vmul.f32 %v4535, %v5573
        %v6114 = vmul.f32 %v4534, %v5577
        %v6115 = vmul.f32 %v4535, %v5577
        %v6116 = vmul.f32 %v4534, %v5581
        %v6117 = vmul.f32 %v4535, %v5581
        %v6118 = vmul.f32 %v4536, %v5585
        %v6119 = vmul.f32 %v4537, %v5585
        %v6120 = vmul.f32 %v4536, %v5589
        %v6121 = vmul.f32 %v4537, %v5589
        %v6122 = vmul.f32 %v4536, %v5593
        %v6123 = vmul.f32 %v4537, %v5593
        %v6124 = vmul.f32 %v4536, %v5597
        %v6125 = vmul.f32 %v4537, %v5597
        %v6126 = vmul.f32 %v4538, %v5601
        %v6127 = vmul.f32 %v4539, %v5601
        %v6128 = vmul.f32 %v4538, %v5605
        %v6129 = vmul.f32 %v4539, %v5605
        %v6130 = vmul.f32 %v4538, %v5609
        %v6131 = vmul.f32 %v4539, %v5609
        %v6132 = vmul.f32 %v4538, %v5613
        %v6133 = vmul.f32 %v4539, %v5613
        %v6134 = vmul.f32 %v4540, %v5617
        %v6135 = vmul.f32 %v4541, %v5617
        %v6136 = vmul.f32 %v4540, %v5621
        %v6137 = vmul.f32 %v4541, %v5621
        %v6138 = vmul.f32 %v4540, %v5625
        %v6139 = vmul.f32 %v4541, %v5625
        %v6140 = vmul.f32 %v4540, %v5629
        %v6141 = vmul.f32 %v4541, %v5629
        %v6142 = vmul.f32 %v4542, %v5633
        %v6143 = vmul.f32 %v4543, %v5633
        %v6144 = vmul.f32 %v4542, %v5637
        %v6145 = vmul.f32 %v4543, %v5637
        %v6146 = vmul.f32 %v4542, %v5641
        %v6147 = vmul.f32 %v4543, %v5641
        %v6148 = vmul.f32 %v4542, %v5645
        %v6149 = vmul.f32 %v4543, %v5645
        %v6150 = vmul.f32 %v4544, %v5649
        %v6151 = vmul.f32 %v4545, %v5649
        %v6152 = vmul.f32 %v4544, %v5653
        %v6153 = vmul.f32 %v4545, %v5653
        %v6154 = vmul.f32 %v4544, %v5657
        %v6155 = vmul.f32 %v4545, %v5657
        %v6156 = vmul.f32 %v4544, %v5661
        %v6157 = vmul.f32 %v4545, %v5661
        %v6158 = vmul.f32 %v4546, %v5665
        %v6159 = vmul.f32 %v4547, %v5665
        %v6160 = vmul.f32 %v4546, %v5669
        %v6161 = vmul.f32 %v4547, %v5669
        %v6162 = vmul.f32 %v4546, %v5673
        %v6163 = vmul.f32 %v4547, %v5673
        %v6164 = vmul.f32 %v4546, %v5677
        %v6165 = vmul.f32 %v4547, %v5677
        %v6166 = vmul.f32 %v4548, %v5681
        %v6167 = vmul.f32 %v4549, %v5681
        %v6168 = vmul.f32 %v4548, %v5685
        %v6169 = vmul.f32 %v4549, %v5685
        %v6170 = vmul.f32 %v4548, %v5689
        %v6171 = vmul.f32 %v4549, %v5689
        %v6172 = vmul.f32 %v4548, %v5693
        %v6173 = vmul.f32 %v4549, %v5693
        %v6174 = vmul.f32 %v4550, %v5697
        %v6175 = vmul.f32 %v4551, %v5697
        %v6176 = vmul.f32 %v4550, %v5701
        %v6177 = vmul.f32 %v4551, %v5701
        %v6178 = vmul.f32 %v4550, %v5705
        %v6179 = vmul.f32 %v4551, %v5705
        %v6180 = vmul.f32 %v4550, %v5709
        %v6181 = vmul.f32 %v4551, %v5709
        %v6182 = vmul.f32 %v4552, %v5713
        %v6183 = vmul.f32 %v4553, %v5713
        %v6184 = vmul.f32 %v4552, %v5717
        %v6185 = vmul.f32 %v4553, %v5717
        %v6186 = vmul.f32 %v4552, %v5721
        %v6187 = vmul.f32 %v4553, %v5721
        %v6188 = vmul.f32 %v4552, %v5725
        %v6189 = vmul.f32 %v4553, %v5725
        %v6190 = vmul.f32 %v4554, %v5729
        %v6191 = vmul.f32 %v4555, %v5729
        %v6192 = vmul.f32 %v4554, %v5733
        %v6193 = vmul.f32 %v4555, %v5733
        %v6194 = vmul.f32 %v4554, %v5737
        %v6195 = vmul.f32 %v4555, %v5737
        %v6196 = vmul.f32 %v4554, %v5741
        %v6197 = vmul.f32 %v4555, %v5741
        %v6198 = vmul.f32 %v4556, %v5745
        %v6199 = vmul.f32 %v4557, %v5745
        %v6200 = vmul.f32 %v4556, %v5749
        %v6201 = vmul.f32 %v4557, %v5749
        %v6202 = vmul.f32 %v4556, %v5753
        %v6203 = vmul.f32 %v4557, %v5753
        %v6204 = vmul.f32 %v4556, %v5757
        %v6205 = vmul.f32 %v4557, %v5757
        %v6206 = vmul.f32 %v4558, %v5761
        %v6207 = vmul.f32 %v4559, %v5761
        %v6208 = vmul.f32 %v4558, %v5765
        %v6209 = vmul.f32 %v4559, %v5765
        %v6210 = vmul.f32 %v4558, %v5769
        %v6211 = vmul.f32 %v4559, %v5769
        %v6212 = vmul.f32 %v4558, %v5773
        %v6213 = vmul.f32 %v4559, %v5773
        %v6214 = vmul.f32 %v4560, %v5777
        %v6215 = vmul.f32 %v4561, %v5777
        %v6216 = vmul.f32 %v4560, %v5781
        %v6217 = vmul.f32 %v4561, %v5781
        %v6218 = vmul.f32 %v4560, %v5785
        %v6219 = vmul.f32 %v4561, %v5785
        %v6220 = vmul.f32 %v4560, %v5789
        %v6221 = vmul.f32 %v4561, %v5789
        %v6222 = vmul.f32 %v4562, %v5793
        %v6223 = vmul.f32 %v4563, %v5793
        %v6224 = vmul.f32 %v4562, %v5797
        %v6225 = vmul.f32 %v4563, %v5797
        %v6226 = vmul.f32 %v4562, %v5801
        %v6227 = vmul.f32 %v4563, %v5801
        %v6228 = vmul.f32 %v4562, %v5805
        %v6229 = vmul.f32 %v4563, %v5805
        %v6230 = vmul.f32 %v4564, %v5809
        %v6231 = vmul.f32 %v4565, %v5809
        %v6232 = vmul.f32 %v4564, %v5813
        %v6233 = vmul.f32 %v4565, %v5813
        %v6234 = vmul.f32 %v4564, %v5817
        %v6235 = vmul.f32 %v4565, %v5817
        %v6236 = vmul.f32 %v4564, %v5821
        %v6237 = vmul.f32 %v4565, %v5821
        %v6238 = vmul.f32 %v4566, %v5825
        %v6239 = vmul.f32 %v4567, %v5825
        %v6240 = vmul.f32 %v4566, %v5829
        %v6241 = vmul.f32 %v4567, %v5829
        %v6242 = vmul.f32 %v4566, %v5833
        %v6243 = vmul.f32 %v4567, %v5833
        %v6244 = vmul.f32 %v4566, %v5837
        %v6245 = vmul.f32 %v4567, %v5837
        %v6246 = vmul.f32 %v4568, %v5841
        %v6247 = vmul.f32 %v4569, %v5841
        %v6248 = vmul.f32 %v4568, %v5845
        %v6249 = vmul.f32 %v4569, %v5845
        %v6250 = vmul.f32 %v4568, %v5849
        %v6251 = vmul.f32 %v4569, %v5849
        %v6252 = vmul.f32 %v4568, %v5853
        %v6253 = vmul.f32 %v4569, %v5853
        %v6254 = vmul.f32 %v4570, %v5857
        %v6255 = vmul.f32 %v4571, %v5857
        %v6256 = vmul.f32 %v4570, %v5861
        %v6257 = vmul.f32 %v4571, %v5861
        %v6258 = vmul.f32 %v4570, %v5865
        %v6259 = vmul.f32 %v4571, %v5865
        %v6260 = vmul.f32 %v4570, %v5869
        %v6261 = vmul.f32 %v4571, %v5869
        %v6262 = vmul.f32 %v4572, %v5873
        %v6263 = vmul.f32 %v4573, %v5873
        %v6264 = vmul.f32 %v4572, %v5877
        %v6265 = vmul.f32 %v4573, %v5877
        %v6266 = vmul.f32 %v4572, %v5881
        %v6267 = vmul.f32 %v4573, %v5881
        %v6268 = vmul.f32 %v4572, %v5885
        %v6269 = vmul.f32 %v4573, %v5885
        %v6270 = vsel %vm890, %v6014, 0.0
        %6271 = vadd.xlane.f32.xlu0 %v6270
        %v6272 = vpop.xlane.xlu0 %6271
        %v6273 = vsel %vm890, %v6015, 0.0
        %6274 = vadd.xlane.f32.xlu0 %v6273
        %v6275 = vpop.xlane.xlu0 %6274
        %v6276 = vsel %vm890, %v6016, 0.0
        %6277 = vadd.xlane.f32.xlu0 %v6276
        %v6278 = vpop.xlane.xlu0 %6277
        %v6279 = vsel %vm890, %v6017, 0.0
        %6280 = vadd.xlane.f32.xlu0 %v6279
        %v6281 = vpop.xlane.xlu0 %6280
        %v6282 = vsel %vm890, %v6018, 0.0
        %6283 = vadd.xlane.f32.xlu0 %v6282
        %v6284 = vpop.xlane.xlu0 %6283
        %v6285 = vsel %vm890, %v6019, 0.0
        %6286 = vadd.xlane.f32.xlu0 %v6285
        %v6287 = vpop.xlane.xlu0 %6286
        %v6288 = vsel %vm890, %v6020, 0.0
        %6289 = vadd.xlane.f32.xlu0 %v6288
        %v6290 = vpop.xlane.xlu0 %6289
        %v6291 = vsel %vm890, %v6021, 0.0
        %6292 = vadd.xlane.f32.xlu0 %v6291
        %v6293 = vpop.xlane.xlu0 %6292
        %v6294 = vsel %vm890, %v6022, 0.0
        %6295 = vadd.xlane.f32.xlu0 %v6294
        %v6296 = vpop.xlane.xlu0 %6295
        %v6297 = vsel %vm890, %v6023, 0.0
        %6298 = vadd.xlane.f32.xlu0 %v6297
        %v6299 = vpop.xlane.xlu0 %6298
        %v6300 = vsel %vm890, %v6024, 0.0
        %6301 = vadd.xlane.f32.xlu0 %v6300
        %v6302 = vpop.xlane.xlu0 %6301
        %v6303 = vsel %vm890, %v6025, 0.0
        %6304 = vadd.xlane.f32.xlu0 %v6303
        %v6305 = vpop.xlane.xlu0 %6304
        %v6306 = vsel %vm890, %v6026, 0.0
        %6307 = vadd.xlane.f32.xlu0 %v6306
        %v6308 = vpop.xlane.xlu0 %6307
        %v6309 = vsel %vm890, %v6027, 0.0
        %6310 = vadd.xlane.f32.xlu0 %v6309
        %v6311 = vpop.xlane.xlu0 %6310
        %v6312 = vsel %vm890, %v6028, 0.0
        %6313 = vadd.xlane.f32.xlu0 %v6312
        %v6314 = vpop.xlane.xlu0 %6313
        %v6315 = vsel %vm890, %v6029, 0.0
        %6316 = vadd.xlane.f32.xlu0 %v6315
        %v6317 = vpop.xlane.xlu0 %6316
        %v6318 = vsel %vm890, %v6030, 0.0
        %6319 = vadd.xlane.f32.xlu0 %v6318
        %v6320 = vpop.xlane.xlu0 %6319
        %v6321 = vsel %vm890, %v6031, 0.0
        %6322 = vadd.xlane.f32.xlu0 %v6321
        %v6323 = vpop.xlane.xlu0 %6322
        %v6324 = vsel %vm890, %v6032, 0.0
        %6325 = vadd.xlane.f32.xlu0 %v6324
        %v6326 = vpop.xlane.xlu0 %6325
        %v6327 = vsel %vm890, %v6033, 0.0
        %6328 = vadd.xlane.f32.xlu0 %v6327
        %v6329 = vpop.xlane.xlu0 %6328
        %v6330 = vsel %vm890, %v6034, 0.0
        %6331 = vadd.xlane.f32.xlu0 %v6330
        %v6332 = vpop.xlane.xlu0 %6331
        %v6333 = vsel %vm890, %v6035, 0.0
        %6334 = vadd.xlane.f32.xlu0 %v6333
        %v6335 = vpop.xlane.xlu0 %6334
        %v6336 = vsel %vm890, %v6036, 0.0
        %6337 = vadd.xlane.f32.xlu0 %v6336
        %v6338 = vpop.xlane.xlu0 %6337
        %v6339 = vsel %vm890, %v6037, 0.0
        %6340 = vadd.xlane.f32.xlu0 %v6339
        %v6341 = vpop.xlane.xlu0 %6340
        %v6342 = vsel %vm890, %v6038, 0.0
        %6343 = vadd.xlane.f32.xlu0 %v6342
        %v6344 = vpop.xlane.xlu0 %6343
        %v6345 = vsel %vm890, %v6039, 0.0
        %6346 = vadd.xlane.f32.xlu0 %v6345
        %v6347 = vpop.xlane.xlu0 %6346
        %v6348 = vsel %vm890, %v6040, 0.0
        %6349 = vadd.xlane.f32.xlu0 %v6348
        %v6350 = vpop.xlane.xlu0 %6349
        %v6351 = vsel %vm890, %v6041, 0.0
        %6352 = vadd.xlane.f32.xlu0 %v6351
        %v6353 = vpop.xlane.xlu0 %6352
        %v6354 = vsel %vm890, %v6042, 0.0
        %6355 = vadd.xlane.f32.xlu0 %v6354
        %v6356 = vpop.xlane.xlu0 %6355
        %v6357 = vsel %vm890, %v6043, 0.0
        %6358 = vadd.xlane.f32.xlu0 %v6357
        %v6359 = vpop.xlane.xlu0 %6358
        %v6360 = vsel %vm890, %v6044, 0.0
        %6361 = vadd.xlane.f32.xlu0 %v6360
        %v6362 = vpop.xlane.xlu0 %6361
        %v6363 = vsel %vm890, %v6045, 0.0
        %6364 = vadd.xlane.f32.xlu0 %v6363
        %v6365 = vpop.xlane.xlu0 %6364
        %v6366 = vsel %vm890, %v6046, 0.0
        %6367 = vadd.xlane.f32.xlu0 %v6366
        %v6368 = vpop.xlane.xlu0 %6367
        %v6369 = vsel %vm890, %v6047, 0.0
        %6370 = vadd.xlane.f32.xlu0 %v6369
        %v6371 = vpop.xlane.xlu0 %6370
        %v6372 = vsel %vm890, %v6048, 0.0
        %6373 = vadd.xlane.f32.xlu0 %v6372
        %v6374 = vpop.xlane.xlu0 %6373
        %v6375 = vsel %vm890, %v6049, 0.0
        %6376 = vadd.xlane.f32.xlu0 %v6375
        %v6377 = vpop.xlane.xlu0 %6376
        %v6378 = vsel %vm890, %v6050, 0.0
        %6379 = vadd.xlane.f32.xlu0 %v6378
        %v6380 = vpop.xlane.xlu0 %6379
        %v6381 = vsel %vm890, %v6051, 0.0
        %6382 = vadd.xlane.f32.xlu0 %v6381
        %v6383 = vpop.xlane.xlu0 %6382
        %v6384 = vsel %vm890, %v6052, 0.0
        %6385 = vadd.xlane.f32.xlu0 %v6384
        %v6386 = vpop.xlane.xlu0 %6385
        %v6387 = vsel %vm890, %v6053, 0.0
        %6388 = vadd.xlane.f32.xlu0 %v6387
        %v6389 = vpop.xlane.xlu0 %6388
        %v6390 = vsel %vm890, %v6054, 0.0
        %6391 = vadd.xlane.f32.xlu0 %v6390
        %v6392 = vpop.xlane.xlu0 %6391
        %v6393 = vsel %vm890, %v6055, 0.0
        %6394 = vadd.xlane.f32.xlu0 %v6393
        %v6395 = vpop.xlane.xlu0 %6394
        %v6396 = vsel %vm890, %v6056, 0.0
        %6397 = vadd.xlane.f32.xlu0 %v6396
        %v6398 = vpop.xlane.xlu0 %6397
        %v6399 = vsel %vm890, %v6057, 0.0
        %6400 = vadd.xlane.f32.xlu0 %v6399
        %v6401 = vpop.xlane.xlu0 %6400
        %v6402 = vsel %vm890, %v6058, 0.0
        %6403 = vadd.xlane.f32.xlu0 %v6402
        %v6404 = vpop.xlane.xlu0 %6403
        %v6405 = vsel %vm890, %v6059, 0.0
        %6406 = vadd.xlane.f32.xlu0 %v6405
        %v6407 = vpop.xlane.xlu0 %6406
        %v6408 = vsel %vm890, %v6060, 0.0
        %6409 = vadd.xlane.f32.xlu0 %v6408
        %v6410 = vpop.xlane.xlu0 %6409
        %v6411 = vsel %vm890, %v6061, 0.0
        %6412 = vadd.xlane.f32.xlu0 %v6411
        %v6413 = vpop.xlane.xlu0 %6412
        %v6414 = vsel %vm890, %v6062, 0.0
        %6415 = vadd.xlane.f32.xlu0 %v6414
        %v6416 = vpop.xlane.xlu0 %6415
        %v6417 = vsel %vm890, %v6063, 0.0
        %6418 = vadd.xlane.f32.xlu0 %v6417
        %v6419 = vpop.xlane.xlu0 %6418
        %v6420 = vsel %vm890, %v6064, 0.0
        %6421 = vadd.xlane.f32.xlu0 %v6420
        %v6422 = vpop.xlane.xlu0 %6421
        %v6423 = vsel %vm890, %v6065, 0.0
        %6424 = vadd.xlane.f32.xlu0 %v6423
        %v6425 = vpop.xlane.xlu0 %6424
        %v6426 = vsel %vm890, %v6066, 0.0
        %6427 = vadd.xlane.f32.xlu0 %v6426
        %v6428 = vpop.xlane.xlu0 %6427
        %v6429 = vsel %vm890, %v6067, 0.0
        %6430 = vadd.xlane.f32.xlu0 %v6429
        %v6431 = vpop.xlane.xlu0 %6430
        %v6432 = vsel %vm890, %v6068, 0.0
        %6433 = vadd.xlane.f32.xlu0 %v6432
        %v6434 = vpop.xlane.xlu0 %6433
        %v6435 = vsel %vm890, %v6069, 0.0
        %6436 = vadd.xlane.f32.xlu0 %v6435
        %v6437 = vpop.xlane.xlu0 %6436
        %v6438 = vsel %vm890, %v6070, 0.0
        %6439 = vadd.xlane.f32.xlu0 %v6438
        %v6440 = vpop.xlane.xlu0 %6439
        %v6441 = vsel %vm890, %v6071, 0.0
        %6442 = vadd.xlane.f32.xlu0 %v6441
        %v6443 = vpop.xlane.xlu0 %6442
        %v6444 = vsel %vm890, %v6072, 0.0
        %6445 = vadd.xlane.f32.xlu0 %v6444
        %v6446 = vpop.xlane.xlu0 %6445
        %v6447 = vsel %vm890, %v6073, 0.0
        %6448 = vadd.xlane.f32.xlu0 %v6447
        %v6449 = vpop.xlane.xlu0 %6448
        %v6450 = vsel %vm890, %v6074, 0.0
        %6451 = vadd.xlane.f32.xlu0 %v6450
        %v6452 = vpop.xlane.xlu0 %6451
        %v6453 = vsel %vm890, %v6075, 0.0
        %6454 = vadd.xlane.f32.xlu0 %v6453
        %v6455 = vpop.xlane.xlu0 %6454
        %v6456 = vsel %vm890, %v6076, 0.0
        %6457 = vadd.xlane.f32.xlu0 %v6456
        %v6458 = vpop.xlane.xlu0 %6457
        %v6459 = vsel %vm890, %v6077, 0.0
        %6460 = vadd.xlane.f32.xlu0 %v6459
        %v6461 = vpop.xlane.xlu0 %6460
        %v6462 = vsel %vm890, %v6078, 0.0
        %6463 = vadd.xlane.f32.xlu0 %v6462
        %v6464 = vpop.xlane.xlu0 %6463
        %v6465 = vsel %vm890, %v6079, 0.0
        %6466 = vadd.xlane.f32.xlu0 %v6465
        %v6467 = vpop.xlane.xlu0 %6466
        %v6468 = vsel %vm890, %v6080, 0.0
        %6469 = vadd.xlane.f32.xlu0 %v6468
        %v6470 = vpop.xlane.xlu0 %6469
        %v6471 = vsel %vm890, %v6081, 0.0
        %6472 = vadd.xlane.f32.xlu0 %v6471
        %v6473 = vpop.xlane.xlu0 %6472
        %v6474 = vsel %vm890, %v6082, 0.0
        %6475 = vadd.xlane.f32.xlu0 %v6474
        %v6476 = vpop.xlane.xlu0 %6475
        %v6477 = vsel %vm890, %v6083, 0.0
        %6478 = vadd.xlane.f32.xlu0 %v6477
        %v6479 = vpop.xlane.xlu0 %6478
        %v6480 = vsel %vm890, %v6084, 0.0
        %6481 = vadd.xlane.f32.xlu0 %v6480
        %v6482 = vpop.xlane.xlu0 %6481
        %v6483 = vsel %vm890, %v6085, 0.0
        %6484 = vadd.xlane.f32.xlu0 %v6483
        %v6485 = vpop.xlane.xlu0 %6484
        %v6486 = vsel %vm890, %v6086, 0.0
        %6487 = vadd.xlane.f32.xlu0 %v6486
        %v6488 = vpop.xlane.xlu0 %6487
        %v6489 = vsel %vm890, %v6087, 0.0
        %6490 = vadd.xlane.f32.xlu0 %v6489
        %v6491 = vpop.xlane.xlu0 %6490
        %v6492 = vsel %vm890, %v6088, 0.0
        %6493 = vadd.xlane.f32.xlu0 %v6492
        %v6494 = vpop.xlane.xlu0 %6493
        %v6495 = vsel %vm890, %v6089, 0.0
        %6496 = vadd.xlane.f32.xlu0 %v6495
        %v6497 = vpop.xlane.xlu0 %6496
        %v6498 = vsel %vm890, %v6090, 0.0
        %6499 = vadd.xlane.f32.xlu0 %v6498
        %v6500 = vpop.xlane.xlu0 %6499
        %v6501 = vsel %vm890, %v6091, 0.0
        %6502 = vadd.xlane.f32.xlu0 %v6501
        %v6503 = vpop.xlane.xlu0 %6502
        %v6504 = vsel %vm890, %v6092, 0.0
        %6505 = vadd.xlane.f32.xlu0 %v6504
        %v6506 = vpop.xlane.xlu0 %6505
        %v6507 = vsel %vm890, %v6093, 0.0
        %6508 = vadd.xlane.f32.xlu0 %v6507
        %v6509 = vpop.xlane.xlu0 %6508
        %v6510 = vsel %vm890, %v6094, 0.0
        %6511 = vadd.xlane.f32.xlu0 %v6510
        %v6512 = vpop.xlane.xlu0 %6511
        %v6513 = vsel %vm890, %v6095, 0.0
        %6514 = vadd.xlane.f32.xlu0 %v6513
        %v6515 = vpop.xlane.xlu0 %6514
        %v6516 = vsel %vm890, %v6096, 0.0
        %6517 = vadd.xlane.f32.xlu0 %v6516
        %v6518 = vpop.xlane.xlu0 %6517
        %v6519 = vsel %vm890, %v6097, 0.0
        %6520 = vadd.xlane.f32.xlu0 %v6519
        %v6521 = vpop.xlane.xlu0 %6520
        %v6522 = vsel %vm890, %v6098, 0.0
        %6523 = vadd.xlane.f32.xlu0 %v6522
        %v6524 = vpop.xlane.xlu0 %6523
        %v6525 = vsel %vm890, %v6099, 0.0
        %6526 = vadd.xlane.f32.xlu0 %v6525
        %v6527 = vpop.xlane.xlu0 %6526
        %v6528 = vsel %vm890, %v6100, 0.0
        %6529 = vadd.xlane.f32.xlu0 %v6528
        %v6530 = vpop.xlane.xlu0 %6529
        %v6531 = vsel %vm890, %v6101, 0.0
        %6532 = vadd.xlane.f32.xlu0 %v6531
        %v6533 = vpop.xlane.xlu0 %6532
        %v6534 = vsel %vm890, %v6102, 0.0
        %6535 = vadd.xlane.f32.xlu0 %v6534
        %v6536 = vpop.xlane.xlu0 %6535
        %v6537 = vsel %vm890, %v6103, 0.0
        %6538 = vadd.xlane.f32.xlu0 %v6537
        %v6539 = vpop.xlane.xlu0 %6538
        %v6540 = vsel %vm890, %v6104, 0.0
        %6541 = vadd.xlane.f32.xlu0 %v6540
        %v6542 = vpop.xlane.xlu0 %6541
        %v6543 = vsel %vm890, %v6105, 0.0
        %6544 = vadd.xlane.f32.xlu0 %v6543
        %v6545 = vpop.xlane.xlu0 %6544
        %v6546 = vsel %vm890, %v6106, 0.0
        %6547 = vadd.xlane.f32.xlu0 %v6546
        %v6548 = vpop.xlane.xlu0 %6547
        %v6549 = vsel %vm890, %v6107, 0.0
        %6550 = vadd.xlane.f32.xlu0 %v6549
        %v6551 = vpop.xlane.xlu0 %6550
        %v6552 = vsel %vm890, %v6108, 0.0
        %6553 = vadd.xlane.f32.xlu0 %v6552
        %v6554 = vpop.xlane.xlu0 %6553
        %v6555 = vsel %vm890, %v6109, 0.0
        %6556 = vadd.xlane.f32.xlu0 %v6555
        %v6557 = vpop.xlane.xlu0 %6556
        %v6558 = vsel %vm890, %v6110, 0.0
        %6559 = vadd.xlane.f32.xlu0 %v6558
        %v6560 = vpop.xlane.xlu0 %6559
        %v6561 = vsel %vm890, %v6111, 0.0
        %6562 = vadd.xlane.f32.xlu0 %v6561
        %v6563 = vpop.xlane.xlu0 %6562
        %v6564 = vsel %vm890, %v6112, 0.0
        %6565 = vadd.xlane.f32.xlu0 %v6564
        %v6566 = vpop.xlane.xlu0 %6565
        %v6567 = vsel %vm890, %v6113, 0.0
        %6568 = vadd.xlane.f32.xlu0 %v6567
        %v6569 = vpop.xlane.xlu0 %6568
        %v6570 = vsel %vm890, %v6114, 0.0
        %6571 = vadd.xlane.f32.xlu0 %v6570
        %v6572 = vpop.xlane.xlu0 %6571
        %v6573 = vsel %vm890, %v6115, 0.0
        %6574 = vadd.xlane.f32.xlu0 %v6573
        %v6575 = vpop.xlane.xlu0 %6574
        %v6576 = vsel %vm890, %v6116, 0.0
        %6577 = vadd.xlane.f32.xlu0 %v6576
        %v6578 = vpop.xlane.xlu0 %6577
        %v6579 = vsel %vm890, %v6117, 0.0
        %6580 = vadd.xlane.f32.xlu0 %v6579
        %v6581 = vpop.xlane.xlu0 %6580
        %v6582 = vsel %vm890, %v6118, 0.0
        %6583 = vadd.xlane.f32.xlu0 %v6582
        %v6584 = vpop.xlane.xlu0 %6583
        %v6585 = vsel %vm890, %v6119, 0.0
        %6586 = vadd.xlane.f32.xlu0 %v6585
        %v6587 = vpop.xlane.xlu0 %6586
        %v6588 = vsel %vm890, %v6120, 0.0
        %6589 = vadd.xlane.f32.xlu0 %v6588
        %v6590 = vpop.xlane.xlu0 %6589
        %v6591 = vsel %vm890, %v6121, 0.0
        %6592 = vadd.xlane.f32.xlu0 %v6591
        %v6593 = vpop.xlane.xlu0 %6592
        %v6594 = vsel %vm890, %v6122, 0.0
        %6595 = vadd.xlane.f32.xlu0 %v6594
        %v6596 = vpop.xlane.xlu0 %6595
        %v6597 = vsel %vm890, %v6123, 0.0
        %6598 = vadd.xlane.f32.xlu0 %v6597
        %v6599 = vpop.xlane.xlu0 %6598
        %v6600 = vsel %vm890, %v6124, 0.0
        %6601 = vadd.xlane.f32.xlu0 %v6600
        %v6602 = vpop.xlane.xlu0 %6601
        %v6603 = vsel %vm890, %v6125, 0.0
        %6604 = vadd.xlane.f32.xlu0 %v6603
        %v6605 = vpop.xlane.xlu0 %6604
        %v6606 = vsel %vm890, %v6126, 0.0
        %6607 = vadd.xlane.f32.xlu0 %v6606
        %v6608 = vpop.xlane.xlu0 %6607
        %v6609 = vsel %vm890, %v6127, 0.0
        %6610 = vadd.xlane.f32.xlu0 %v6609
        %v6611 = vpop.xlane.xlu0 %6610
        %v6612 = vsel %vm890, %v6128, 0.0
        %6613 = vadd.xlane.f32.xlu0 %v6612
        %v6614 = vpop.xlane.xlu0 %6613
        %v6615 = vsel %vm890, %v6129, 0.0
        %6616 = vadd.xlane.f32.xlu0 %v6615
        %v6617 = vpop.xlane.xlu0 %6616
        %v6618 = vsel %vm890, %v6130, 0.0
        %6619 = vadd.xlane.f32.xlu0 %v6618
        %v6620 = vpop.xlane.xlu0 %6619
        %v6621 = vsel %vm890, %v6131, 0.0
        %6622 = vadd.xlane.f32.xlu0 %v6621
        %v6623 = vpop.xlane.xlu0 %6622
        %v6624 = vsel %vm890, %v6132, 0.0
        %6625 = vadd.xlane.f32.xlu0 %v6624
        %v6626 = vpop.xlane.xlu0 %6625
        %v6627 = vsel %vm890, %v6133, 0.0
        %6628 = vadd.xlane.f32.xlu0 %v6627
        %v6629 = vpop.xlane.xlu0 %6628
        %v6630 = vsel %vm890, %v6134, 0.0
        %6631 = vadd.xlane.f32.xlu0 %v6630
        %v6632 = vpop.xlane.xlu0 %6631
        %v6633 = vsel %vm890, %v6135, 0.0
        %6634 = vadd.xlane.f32.xlu0 %v6633
        %v6635 = vpop.xlane.xlu0 %6634
        %v6636 = vsel %vm890, %v6136, 0.0
        %6637 = vadd.xlane.f32.xlu0 %v6636
        %v6638 = vpop.xlane.xlu0 %6637
        %v6639 = vsel %vm890, %v6137, 0.0
        %6640 = vadd.xlane.f32.xlu0 %v6639
        %v6641 = vpop.xlane.xlu0 %6640
        %v6642 = vsel %vm890, %v6138, 0.0
        %6643 = vadd.xlane.f32.xlu0 %v6642
        %v6644 = vpop.xlane.xlu0 %6643
        %v6645 = vsel %vm890, %v6139, 0.0
        %6646 = vadd.xlane.f32.xlu0 %v6645
        %v6647 = vpop.xlane.xlu0 %6646
        %v6648 = vsel %vm890, %v6140, 0.0
        %6649 = vadd.xlane.f32.xlu0 %v6648
        %v6650 = vpop.xlane.xlu0 %6649
        %v6651 = vsel %vm890, %v6141, 0.0
        %6652 = vadd.xlane.f32.xlu0 %v6651
        %v6653 = vpop.xlane.xlu0 %6652
        %v6654 = vsel %vm890, %v6142, 0.0
        %6655 = vadd.xlane.f32.xlu0 %v6654
        %v6656 = vpop.xlane.xlu0 %6655
        %v6657 = vsel %vm890, %v6143, 0.0
        %6658 = vadd.xlane.f32.xlu0 %v6657
        %v6659 = vpop.xlane.xlu0 %6658
        %v6660 = vsel %vm890, %v6144, 0.0
        %6661 = vadd.xlane.f32.xlu0 %v6660
        %v6662 = vpop.xlane.xlu0 %6661
        %v6663 = vsel %vm890, %v6145, 0.0
        %6664 = vadd.xlane.f32.xlu0 %v6663
        %v6665 = vpop.xlane.xlu0 %6664
        %v6666 = vsel %vm890, %v6146, 0.0
        %6667 = vadd.xlane.f32.xlu0 %v6666
        %v6668 = vpop.xlane.xlu0 %6667
        %v6669 = vsel %vm890, %v6147, 0.0
        %6670 = vadd.xlane.f32.xlu0 %v6669
        %v6671 = vpop.xlane.xlu0 %6670
        %v6672 = vsel %vm890, %v6148, 0.0
        %6673 = vadd.xlane.f32.xlu0 %v6672
        %v6674 = vpop.xlane.xlu0 %6673
        %v6675 = vsel %vm890, %v6149, 0.0
        %6676 = vadd.xlane.f32.xlu0 %v6675
        %v6677 = vpop.xlane.xlu0 %6676
        %v6678 = vsel %vm890, %v6150, 0.0
        %6679 = vadd.xlane.f32.xlu0 %v6678
        %v6680 = vpop.xlane.xlu0 %6679
        %v6681 = vsel %vm890, %v6151, 0.0
        %6682 = vadd.xlane.f32.xlu0 %v6681
        %v6683 = vpop.xlane.xlu0 %6682
        %v6684 = vsel %vm890, %v6152, 0.0
        %6685 = vadd.xlane.f32.xlu0 %v6684
        %v6686 = vpop.xlane.xlu0 %6685
        %v6687 = vsel %vm890, %v6153, 0.0
        %6688 = vadd.xlane.f32.xlu0 %v6687
        %v6689 = vpop.xlane.xlu0 %6688
        %v6690 = vsel %vm890, %v6154, 0.0
        %6691 = vadd.xlane.f32.xlu0 %v6690
        %v6692 = vpop.xlane.xlu0 %6691
        %v6693 = vsel %vm890, %v6155, 0.0
        %6694 = vadd.xlane.f32.xlu0 %v6693
        %v6695 = vpop.xlane.xlu0 %6694
        %v6696 = vsel %vm890, %v6156, 0.0
        %6697 = vadd.xlane.f32.xlu0 %v6696
        %v6698 = vpop.xlane.xlu0 %6697
        %v6699 = vsel %vm890, %v6157, 0.0
        %6700 = vadd.xlane.f32.xlu0 %v6699
        %v6701 = vpop.xlane.xlu0 %6700
        %v6702 = vsel %vm890, %v6158, 0.0
        %6703 = vadd.xlane.f32.xlu0 %v6702
        %v6704 = vpop.xlane.xlu0 %6703
        %v6705 = vsel %vm890, %v6159, 0.0
        %6706 = vadd.xlane.f32.xlu0 %v6705
        %v6707 = vpop.xlane.xlu0 %6706
        %v6708 = vsel %vm890, %v6160, 0.0
        %6709 = vadd.xlane.f32.xlu0 %v6708
        %v6710 = vpop.xlane.xlu0 %6709
        %v6711 = vsel %vm890, %v6161, 0.0
        %6712 = vadd.xlane.f32.xlu0 %v6711
        %v6713 = vpop.xlane.xlu0 %6712
        %v6714 = vsel %vm890, %v6162, 0.0
        %6715 = vadd.xlane.f32.xlu0 %v6714
        %v6716 = vpop.xlane.xlu0 %6715
        %v6717 = vsel %vm890, %v6163, 0.0
        %6718 = vadd.xlane.f32.xlu0 %v6717
        %v6719 = vpop.xlane.xlu0 %6718
        %v6720 = vsel %vm890, %v6164, 0.0
        %6721 = vadd.xlane.f32.xlu0 %v6720
        %v6722 = vpop.xlane.xlu0 %6721
        %v6723 = vsel %vm890, %v6165, 0.0
        %6724 = vadd.xlane.f32.xlu0 %v6723
        %v6725 = vpop.xlane.xlu0 %6724
        %v6726 = vsel %vm890, %v6166, 0.0
        %6727 = vadd.xlane.f32.xlu0 %v6726
        %v6728 = vpop.xlane.xlu0 %6727
        %v6729 = vsel %vm890, %v6167, 0.0
        %6730 = vadd.xlane.f32.xlu0 %v6729
        %v6731 = vpop.xlane.xlu0 %6730
        %v6732 = vsel %vm890, %v6168, 0.0
        %6733 = vadd.xlane.f32.xlu0 %v6732
        %v6734 = vpop.xlane.xlu0 %6733
        %v6735 = vsel %vm890, %v6169, 0.0
        %6736 = vadd.xlane.f32.xlu0 %v6735
        %v6737 = vpop.xlane.xlu0 %6736
        %v6738 = vsel %vm890, %v6170, 0.0
        %6739 = vadd.xlane.f32.xlu0 %v6738
        %v6740 = vpop.xlane.xlu0 %6739
        %v6741 = vsel %vm890, %v6171, 0.0
        %6742 = vadd.xlane.f32.xlu0 %v6741
        %v6743 = vpop.xlane.xlu0 %6742
        %v6744 = vsel %vm890, %v6172, 0.0
        %6745 = vadd.xlane.f32.xlu0 %v6744
        %v6746 = vpop.xlane.xlu0 %6745
        %v6747 = vsel %vm890, %v6173, 0.0
        %6748 = vadd.xlane.f32.xlu0 %v6747
        %v6749 = vpop.xlane.xlu0 %6748
        %v6750 = vsel %vm890, %v6174, 0.0
        %6751 = vadd.xlane.f32.xlu0 %v6750
        %v6752 = vpop.xlane.xlu0 %6751
        %v6753 = vsel %vm890, %v6175, 0.0
        %6754 = vadd.xlane.f32.xlu0 %v6753
        %v6755 = vpop.xlane.xlu0 %6754
        %v6756 = vsel %vm890, %v6176, 0.0
        %6757 = vadd.xlane.f32.xlu0 %v6756
        %v6758 = vpop.xlane.xlu0 %6757
        %v6759 = vsel %vm890, %v6177, 0.0
        %6760 = vadd.xlane.f32.xlu0 %v6759
        %v6761 = vpop.xlane.xlu0 %6760
        %v6762 = vsel %vm890, %v6178, 0.0
        %6763 = vadd.xlane.f32.xlu0 %v6762
        %v6764 = vpop.xlane.xlu0 %6763
        %v6765 = vsel %vm890, %v6179, 0.0
        %6766 = vadd.xlane.f32.xlu0 %v6765
        %v6767 = vpop.xlane.xlu0 %6766
        %v6768 = vsel %vm890, %v6180, 0.0
        %6769 = vadd.xlane.f32.xlu0 %v6768
        %v6770 = vpop.xlane.xlu0 %6769
        %v6771 = vsel %vm890, %v6181, 0.0
        %6772 = vadd.xlane.f32.xlu0 %v6771
        %v6773 = vpop.xlane.xlu0 %6772
        %v6774 = vsel %vm890, %v6182, 0.0
        %6775 = vadd.xlane.f32.xlu0 %v6774
        %v6776 = vpop.xlane.xlu0 %6775
        %v6777 = vsel %vm890, %v6183, 0.0
        %6778 = vadd.xlane.f32.xlu0 %v6777
        %v6779 = vpop.xlane.xlu0 %6778
        %v6780 = vsel %vm890, %v6184, 0.0
        %6781 = vadd.xlane.f32.xlu0 %v6780
        %v6782 = vpop.xlane.xlu0 %6781
        %v6783 = vsel %vm890, %v6185, 0.0
        %6784 = vadd.xlane.f32.xlu0 %v6783
        %v6785 = vpop.xlane.xlu0 %6784
        %v6786 = vsel %vm890, %v6186, 0.0
        %6787 = vadd.xlane.f32.xlu0 %v6786
        %v6788 = vpop.xlane.xlu0 %6787
        %v6789 = vsel %vm890, %v6187, 0.0
        %6790 = vadd.xlane.f32.xlu0 %v6789
        %v6791 = vpop.xlane.xlu0 %6790
        %v6792 = vsel %vm890, %v6188, 0.0
        %6793 = vadd.xlane.f32.xlu0 %v6792
        %v6794 = vpop.xlane.xlu0 %6793
        %v6795 = vsel %vm890, %v6189, 0.0
        %6796 = vadd.xlane.f32.xlu0 %v6795
        %v6797 = vpop.xlane.xlu0 %6796
        %v6798 = vsel %vm890, %v6190, 0.0
        %6799 = vadd.xlane.f32.xlu0 %v6798
        %v6800 = vpop.xlane.xlu0 %6799
        %v6801 = vsel %vm890, %v6191, 0.0
        %6802 = vadd.xlane.f32.xlu0 %v6801
        %v6803 = vpop.xlane.xlu0 %6802
        %v6804 = vsel %vm890, %v6192, 0.0
        %6805 = vadd.xlane.f32.xlu0 %v6804
        %v6806 = vpop.xlane.xlu0 %6805
        %v6807 = vsel %vm890, %v6193, 0.0
        %6808 = vadd.xlane.f32.xlu0 %v6807
        %v6809 = vpop.xlane.xlu0 %6808
        %v6810 = vsel %vm890, %v6194, 0.0
        %6811 = vadd.xlane.f32.xlu0 %v6810
        %v6812 = vpop.xlane.xlu0 %6811
        %v6813 = vsel %vm890, %v6195, 0.0
        %6814 = vadd.xlane.f32.xlu0 %v6813
        %v6815 = vpop.xlane.xlu0 %6814
        %v6816 = vsel %vm890, %v6196, 0.0
        %6817 = vadd.xlane.f32.xlu0 %v6816
        %v6818 = vpop.xlane.xlu0 %6817
        %v6819 = vsel %vm890, %v6197, 0.0
        %6820 = vadd.xlane.f32.xlu0 %v6819
        %v6821 = vpop.xlane.xlu0 %6820
        %v6822 = vsel %vm890, %v6198, 0.0
        %6823 = vadd.xlane.f32.xlu0 %v6822
        %v6824 = vpop.xlane.xlu0 %6823
        %v6825 = vsel %vm890, %v6199, 0.0
        %6826 = vadd.xlane.f32.xlu0 %v6825
        %v6827 = vpop.xlane.xlu0 %6826
        %v6828 = vsel %vm890, %v6200, 0.0
        %6829 = vadd.xlane.f32.xlu0 %v6828
        %v6830 = vpop.xlane.xlu0 %6829
        %v6831 = vsel %vm890, %v6201, 0.0
        %6832 = vadd.xlane.f32.xlu0 %v6831
        %v6833 = vpop.xlane.xlu0 %6832
        %v6834 = vsel %vm890, %v6202, 0.0
        %6835 = vadd.xlane.f32.xlu0 %v6834
        %v6836 = vpop.xlane.xlu0 %6835
        %v6837 = vsel %vm890, %v6203, 0.0
        %6838 = vadd.xlane.f32.xlu0 %v6837
        %v6839 = vpop.xlane.xlu0 %6838
        %v6840 = vsel %vm890, %v6204, 0.0
        %6841 = vadd.xlane.f32.xlu0 %v6840
        %v6842 = vpop.xlane.xlu0 %6841
        %v6843 = vsel %vm890, %v6205, 0.0
        %6844 = vadd.xlane.f32.xlu0 %v6843
        %v6845 = vpop.xlane.xlu0 %6844
        %v6846 = vsel %vm890, %v6206, 0.0
        %6847 = vadd.xlane.f32.xlu0 %v6846
        %v6848 = vpop.xlane.xlu0 %6847
        %v6849 = vsel %vm890, %v6207, 0.0
        %6850 = vadd.xlane.f32.xlu0 %v6849
        %v6851 = vpop.xlane.xlu0 %6850
        %v6852 = vsel %vm890, %v6208, 0.0
        %6853 = vadd.xlane.f32.xlu0 %v6852
        %v6854 = vpop.xlane.xlu0 %6853
        %v6855 = vsel %vm890, %v6209, 0.0
        %6856 = vadd.xlane.f32.xlu0 %v6855
        %v6857 = vpop.xlane.xlu0 %6856
        %v6858 = vsel %vm890, %v6210, 0.0
        %6859 = vadd.xlane.f32.xlu0 %v6858
        %v6860 = vpop.xlane.xlu0 %6859
        %v6861 = vsel %vm890, %v6211, 0.0
        %6862 = vadd.xlane.f32.xlu0 %v6861
        %v6863 = vpop.xlane.xlu0 %6862
        %v6864 = vsel %vm890, %v6212, 0.0
        %6865 = vadd.xlane.f32.xlu0 %v6864
        %v6866 = vpop.xlane.xlu0 %6865
        %v6867 = vsel %vm890, %v6213, 0.0
        %6868 = vadd.xlane.f32.xlu0 %v6867
        %v6869 = vpop.xlane.xlu0 %6868
        %v6870 = vsel %vm890, %v6214, 0.0
        %6871 = vadd.xlane.f32.xlu0 %v6870
        %v6872 = vpop.xlane.xlu0 %6871
        %v6873 = vsel %vm890, %v6215, 0.0
        %6874 = vadd.xlane.f32.xlu0 %v6873
        %v6875 = vpop.xlane.xlu0 %6874
        %v6876 = vsel %vm890, %v6216, 0.0
        %6877 = vadd.xlane.f32.xlu0 %v6876
        %v6878 = vpop.xlane.xlu0 %6877
        %v6879 = vsel %vm890, %v6217, 0.0
        %6880 = vadd.xlane.f32.xlu0 %v6879
        %v6881 = vpop.xlane.xlu0 %6880
        %v6882 = vsel %vm890, %v6218, 0.0
        %6883 = vadd.xlane.f32.xlu0 %v6882
        %v6884 = vpop.xlane.xlu0 %6883
        %v6885 = vsel %vm890, %v6219, 0.0
        %6886 = vadd.xlane.f32.xlu0 %v6885
        %v6887 = vpop.xlane.xlu0 %6886
        %v6888 = vsel %vm890, %v6220, 0.0
        %6889 = vadd.xlane.f32.xlu0 %v6888
        %v6890 = vpop.xlane.xlu0 %6889
        %v6891 = vsel %vm890, %v6221, 0.0
        %6892 = vadd.xlane.f32.xlu0 %v6891
        %v6893 = vpop.xlane.xlu0 %6892
        %v6894 = vsel %vm890, %v6222, 0.0
        %6895 = vadd.xlane.f32.xlu0 %v6894
        %v6896 = vpop.xlane.xlu0 %6895
        %v6897 = vsel %vm890, %v6223, 0.0
        %6898 = vadd.xlane.f32.xlu0 %v6897
        %v6899 = vpop.xlane.xlu0 %6898
        %v6900 = vsel %vm890, %v6224, 0.0
        %6901 = vadd.xlane.f32.xlu0 %v6900
        %v6902 = vpop.xlane.xlu0 %6901
        %v6903 = vsel %vm890, %v6225, 0.0
        %6904 = vadd.xlane.f32.xlu0 %v6903
        %v6905 = vpop.xlane.xlu0 %6904
        %v6906 = vsel %vm890, %v6226, 0.0
        %6907 = vadd.xlane.f32.xlu0 %v6906
        %v6908 = vpop.xlane.xlu0 %6907
        %v6909 = vsel %vm890, %v6227, 0.0
        %6910 = vadd.xlane.f32.xlu0 %v6909
        %v6911 = vpop.xlane.xlu0 %6910
        %v6912 = vsel %vm890, %v6228, 0.0
        %6913 = vadd.xlane.f32.xlu0 %v6912
        %v6914 = vpop.xlane.xlu0 %6913
        %v6915 = vsel %vm890, %v6229, 0.0
        %6916 = vadd.xlane.f32.xlu0 %v6915
        %v6917 = vpop.xlane.xlu0 %6916
        %v6918 = vsel %vm890, %v6230, 0.0
        %6919 = vadd.xlane.f32.xlu0 %v6918
        %v6920 = vpop.xlane.xlu0 %6919
        %v6921 = vsel %vm890, %v6231, 0.0
        %6922 = vadd.xlane.f32.xlu0 %v6921
        %v6923 = vpop.xlane.xlu0 %6922
        %v6924 = vsel %vm890, %v6232, 0.0
        %6925 = vadd.xlane.f32.xlu0 %v6924
        %v6926 = vpop.xlane.xlu0 %6925
        %v6927 = vsel %vm890, %v6233, 0.0
        %6928 = vadd.xlane.f32.xlu0 %v6927
        %v6929 = vpop.xlane.xlu0 %6928
        %v6930 = vsel %vm890, %v6234, 0.0
        %6931 = vadd.xlane.f32.xlu0 %v6930
        %v6932 = vpop.xlane.xlu0 %6931
        %v6933 = vsel %vm890, %v6235, 0.0
        %6934 = vadd.xlane.f32.xlu0 %v6933
        %v6935 = vpop.xlane.xlu0 %6934
        %v6936 = vsel %vm890, %v6236, 0.0
        %6937 = vadd.xlane.f32.xlu0 %v6936
        %v6938 = vpop.xlane.xlu0 %6937
        %v6939 = vsel %vm890, %v6237, 0.0
        %6940 = vadd.xlane.f32.xlu0 %v6939
        %v6941 = vpop.xlane.xlu0 %6940
        %v6942 = vsel %vm890, %v6238, 0.0
        %6943 = vadd.xlane.f32.xlu0 %v6942
        %v6944 = vpop.xlane.xlu0 %6943
        %v6945 = vsel %vm890, %v6239, 0.0
        %6946 = vadd.xlane.f32.xlu0 %v6945
        %v6947 = vpop.xlane.xlu0 %6946
        %v6948 = vsel %vm890, %v6240, 0.0
        %6949 = vadd.xlane.f32.xlu0 %v6948
        %v6950 = vpop.xlane.xlu0 %6949
        %v6951 = vsel %vm890, %v6241, 0.0
        %6952 = vadd.xlane.f32.xlu0 %v6951
        %v6953 = vpop.xlane.xlu0 %6952
        %v6954 = vsel %vm890, %v6242, 0.0
        %6955 = vadd.xlane.f32.xlu0 %v6954
        %v6956 = vpop.xlane.xlu0 %6955
        %v6957 = vsel %vm890, %v6243, 0.0
        %6958 = vadd.xlane.f32.xlu0 %v6957
        %v6959 = vpop.xlane.xlu0 %6958
        %v6960 = vsel %vm890, %v6244, 0.0
        %6961 = vadd.xlane.f32.xlu0 %v6960
        %v6962 = vpop.xlane.xlu0 %6961
        %v6963 = vsel %vm890, %v6245, 0.0
        %6964 = vadd.xlane.f32.xlu0 %v6963
        %v6965 = vpop.xlane.xlu0 %6964
        %v6966 = vsel %vm890, %v6246, 0.0
        %6967 = vadd.xlane.f32.xlu0 %v6966
        %v6968 = vpop.xlane.xlu0 %6967
        %v6969 = vsel %vm890, %v6247, 0.0
        %6970 = vadd.xlane.f32.xlu0 %v6969
        %v6971 = vpop.xlane.xlu0 %6970
        %v6972 = vsel %vm890, %v6248, 0.0
        %6973 = vadd.xlane.f32.xlu0 %v6972
        %v6974 = vpop.xlane.xlu0 %6973
        %v6975 = vsel %vm890, %v6249, 0.0
        %6976 = vadd.xlane.f32.xlu0 %v6975
        %v6977 = vpop.xlane.xlu0 %6976
        %v6978 = vsel %vm890, %v6250, 0.0
        %6979 = vadd.xlane.f32.xlu0 %v6978
        %v6980 = vpop.xlane.xlu0 %6979
        %v6981 = vsel %vm890, %v6251, 0.0
        %6982 = vadd.xlane.f32.xlu0 %v6981
        %v6983 = vpop.xlane.xlu0 %6982
        %v6984 = vsel %vm890, %v6252, 0.0
        %6985 = vadd.xlane.f32.xlu0 %v6984
        %v6986 = vpop.xlane.xlu0 %6985
        %v6987 = vsel %vm890, %v6253, 0.0
        %6988 = vadd.xlane.f32.xlu0 %v6987
        %v6989 = vpop.xlane.xlu0 %6988
        %v6990 = vsel %vm890, %v6254, 0.0
        %6991 = vadd.xlane.f32.xlu0 %v6990
        %v6992 = vpop.xlane.xlu0 %6991
        %v6993 = vsel %vm890, %v6255, 0.0
        %6994 = vadd.xlane.f32.xlu0 %v6993
        %v6995 = vpop.xlane.xlu0 %6994
        %v6996 = vsel %vm890, %v6256, 0.0
        %6997 = vadd.xlane.f32.xlu0 %v6996
        %v6998 = vpop.xlane.xlu0 %6997
        %v6999 = vsel %vm890, %v6257, 0.0
        %7000 = vadd.xlane.f32.xlu0 %v6999
        %v7001 = vpop.xlane.xlu0 %7000
        %v7002 = vsel %vm890, %v6258, 0.0
        %7003 = vadd.xlane.f32.xlu0 %v7002
        %v7004 = vpop.xlane.xlu0 %7003
        %v7005 = vsel %vm890, %v6259, 0.0
        %7006 = vadd.xlane.f32.xlu0 %v7005
        %v7007 = vpop.xlane.xlu0 %7006
        %v7008 = vsel %vm890, %v6260, 0.0
        %7009 = vadd.xlane.f32.xlu0 %v7008
        %v7010 = vpop.xlane.xlu0 %7009
        %v7011 = vsel %vm890, %v6261, 0.0
        %7012 = vadd.xlane.f32.xlu0 %v7011
        %v7013 = vpop.xlane.xlu0 %7012
        %v7014 = vsel %vm890, %v6262, 0.0
        %7015 = vadd.xlane.f32.xlu0 %v7014
        %v7016 = vpop.xlane.xlu0 %7015
        %v7017 = vsel %vm890, %v6263, 0.0
        %7018 = vadd.xlane.f32.xlu0 %v7017
        %v7019 = vpop.xlane.xlu0 %7018
        %v7020 = vsel %vm890, %v6264, 0.0
        %7021 = vadd.xlane.f32.xlu0 %v7020
        %v7022 = vpop.xlane.xlu0 %7021
        %v7023 = vsel %vm890, %v6265, 0.0
        %7024 = vadd.xlane.f32.xlu0 %v7023
        %v7025 = vpop.xlane.xlu0 %7024
        %v7026 = vsel %vm890, %v6266, 0.0
        %7027 = vadd.xlane.f32.xlu0 %v7026
        %v7028 = vpop.xlane.xlu0 %7027
        %v7029 = vsel %vm890, %v6267, 0.0
        %7030 = vadd.xlane.f32.xlu0 %v7029
        %v7031 = vpop.xlane.xlu0 %7030
        %v7032 = vsel %vm890, %v6268, 0.0
        %7033 = vadd.xlane.f32.xlu0 %v7032
        %v7034 = vpop.xlane.xlu0 %7033
        %v7035 = vsel %vm890, %v6269, 0.0
        %7036 = vadd.xlane.f32.xlu0 %v7035
        %v7037 = vpop.xlane.xlu0 %7036
        %v7038 = vmul.f32 %v4510, %v1074
        %v7039 = vmul.f32 %v4511, %v1075
        %v7040 = vmul.f32 %v4510, %v1076
        %v7041 = vmul.f32 %v4511, %v1077
        %v7042 = vmul.f32 %v4510, %v1078
        %v7043 = vmul.f32 %v4511, %v1079
        %v7044 = vmul.f32 %v4510, %v1080
        %v7045 = vmul.f32 %v4511, %v1081
        %v7046 = vmul.f32 %v4512, %v1082
        %v7047 = vmul.f32 %v4513, %v1083
        %v7048 = vmul.f32 %v4512, %v1084
        %v7049 = vmul.f32 %v4513, %v1085
        %v7050 = vmul.f32 %v4512, %v1086
        %v7051 = vmul.f32 %v4513, %v1087
        %v7052 = vmul.f32 %v4512, %v1088
        %v7053 = vmul.f32 %v4513, %v1089
        %v7054 = vmul.f32 %v4514, %v1074
        %v7055 = vmul.f32 %v4515, %v1075
        %v7056 = vmul.f32 %v4514, %v1076
        %v7057 = vmul.f32 %v4515, %v1077
        %v7058 = vmul.f32 %v4514, %v1078
        %v7059 = vmul.f32 %v4515, %v1079
        %v7060 = vmul.f32 %v4514, %v1080
        %v7061 = vmul.f32 %v4515, %v1081
        %v7062 = vmul.f32 %v4516, %v1082
        %v7063 = vmul.f32 %v4517, %v1083
        %v7064 = vmul.f32 %v4516, %v1084
        %v7065 = vmul.f32 %v4517, %v1085
        %v7066 = vmul.f32 %v4516, %v1086
        %v7067 = vmul.f32 %v4517, %v1087
        %v7068 = vmul.f32 %v4516, %v1088
        %v7069 = vmul.f32 %v4517, %v1089
        %v7070 = vmul.f32 %v4518, %v1074
        %v7071 = vmul.f32 %v4519, %v1075
        %v7072 = vmul.f32 %v4518, %v1076
        %v7073 = vmul.f32 %v4519, %v1077
        %v7074 = vmul.f32 %v4518, %v1078
        %v7075 = vmul.f32 %v4519, %v1079
        %v7076 = vmul.f32 %v4518, %v1080
        %v7077 = vmul.f32 %v4519, %v1081
        %v7078 = vmul.f32 %v4520, %v1082
        %v7079 = vmul.f32 %v4521, %v1083
        %v7080 = vmul.f32 %v4520, %v1084
        %v7081 = vmul.f32 %v4521, %v1085
        %v7082 = vmul.f32 %v4520, %v1086
        %v7083 = vmul.f32 %v4521, %v1087
        %v7084 = vmul.f32 %v4520, %v1088
        %v7085 = vmul.f32 %v4521, %v1089
        %v7086 = vmul.f32 %v4522, %v1074
        %v7087 = vmul.f32 %v4523, %v1075
        %v7088 = vmul.f32 %v4522, %v1076
        %v7089 = vmul.f32 %v4523, %v1077
        %v7090 = vmul.f32 %v4522, %v1078
        %v7091 = vmul.f32 %v4523, %v1079
        %v7092 = vmul.f32 %v4522, %v1080
        %v7093 = vmul.f32 %v4523, %v1081
        %v7094 = vmul.f32 %v4524, %v1082
        %v7095 = vmul.f32 %v4525, %v1083
        %v7096 = vmul.f32 %v4524, %v1084
        %v7097 = vmul.f32 %v4525, %v1085
        %v7098 = vmul.f32 %v4524, %v1086
        %v7099 = vmul.f32 %v4525, %v1087
        %v7100 = vmul.f32 %v4524, %v1088
        %v7101 = vmul.f32 %v4525, %v1089
        %v7102 = vmul.f32 %v4526, %v1074
        %v7103 = vmul.f32 %v4527, %v1075
        %v7104 = vmul.f32 %v4526, %v1076
        %v7105 = vmul.f32 %v4527, %v1077
        %v7106 = vmul.f32 %v4526, %v1078
        %v7107 = vmul.f32 %v4527, %v1079
        %v7108 = vmul.f32 %v4526, %v1080
        %v7109 = vmul.f32 %v4527, %v1081
        %v7110 = vmul.f32 %v4528, %v1082
        %v7111 = vmul.f32 %v4529, %v1083
        %v7112 = vmul.f32 %v4528, %v1084
        %v7113 = vmul.f32 %v4529, %v1085
        %v7114 = vmul.f32 %v4528, %v1086
        %v7115 = vmul.f32 %v4529, %v1087
        %v7116 = vmul.f32 %v4528, %v1088
        %v7117 = vmul.f32 %v4529, %v1089
        %v7118 = vmul.f32 %v4530, %v1074
        %v7119 = vmul.f32 %v4531, %v1075
        %v7120 = vmul.f32 %v4530, %v1076
        %v7121 = vmul.f32 %v4531, %v1077
        %v7122 = vmul.f32 %v4530, %v1078
        %v7123 = vmul.f32 %v4531, %v1079
        %v7124 = vmul.f32 %v4530, %v1080
        %v7125 = vmul.f32 %v4531, %v1081
        %v7126 = vmul.f32 %v4532, %v1082
        %v7127 = vmul.f32 %v4533, %v1083
        %v7128 = vmul.f32 %v4532, %v1084
        %v7129 = vmul.f32 %v4533, %v1085
        %v7130 = vmul.f32 %v4532, %v1086
        %v7131 = vmul.f32 %v4533, %v1087
        %v7132 = vmul.f32 %v4532, %v1088
        %v7133 = vmul.f32 %v4533, %v1089
        %v7134 = vmul.f32 %v4534, %v1074
        %v7135 = vmul.f32 %v4535, %v1075
        %v7136 = vmul.f32 %v4534, %v1076
        %v7137 = vmul.f32 %v4535, %v1077
        %v7138 = vmul.f32 %v4534, %v1078
        %v7139 = vmul.f32 %v4535, %v1079
        %v7140 = vmul.f32 %v4534, %v1080
        %v7141 = vmul.f32 %v4535, %v1081
        %v7142 = vmul.f32 %v4536, %v1082
        %v7143 = vmul.f32 %v4537, %v1083
        %v7144 = vmul.f32 %v4536, %v1084
        %v7145 = vmul.f32 %v4537, %v1085
        %v7146 = vmul.f32 %v4536, %v1086
        %v7147 = vmul.f32 %v4537, %v1087
        %v7148 = vmul.f32 %v4536, %v1088
        %v7149 = vmul.f32 %v4537, %v1089
        %v7150 = vmul.f32 %v4538, %v1074
        %v7151 = vmul.f32 %v4539, %v1075
        %v7152 = vmul.f32 %v4538, %v1076
        %v7153 = vmul.f32 %v4539, %v1077
        %v7154 = vmul.f32 %v4538, %v1078
        %v7155 = vmul.f32 %v4539, %v1079
        %v7156 = vmul.f32 %v4538, %v1080
        %v7157 = vmul.f32 %v4539, %v1081
        %v7158 = vmul.f32 %v4540, %v1082
        %v7159 = vmul.f32 %v4541, %v1083
        %v7160 = vmul.f32 %v4540, %v1084
        %v7161 = vmul.f32 %v4541, %v1085
        %v7162 = vmul.f32 %v4540, %v1086
        %v7163 = vmul.f32 %v4541, %v1087
        %v7164 = vmul.f32 %v4540, %v1088
        %v7165 = vmul.f32 %v4541, %v1089
        %v7166 = vmul.f32 %v4542, %v1074
        %v7167 = vmul.f32 %v4543, %v1075
        %v7168 = vmul.f32 %v4542, %v1076
        %v7169 = vmul.f32 %v4543, %v1077
        %v7170 = vmul.f32 %v4542, %v1078
        %v7171 = vmul.f32 %v4543, %v1079
        %v7172 = vmul.f32 %v4542, %v1080
        %v7173 = vmul.f32 %v4543, %v1081
        %v7174 = vmul.f32 %v4544, %v1082
        %v7175 = vmul.f32 %v4545, %v1083
        %v7176 = vmul.f32 %v4544, %v1084
        %v7177 = vmul.f32 %v4545, %v1085
        %v7178 = vmul.f32 %v4544, %v1086
        %v7179 = vmul.f32 %v4545, %v1087
        %v7180 = vmul.f32 %v4544, %v1088
        %v7181 = vmul.f32 %v4545, %v1089
        %v7182 = vmul.f32 %v4546, %v1074
        %v7183 = vmul.f32 %v4547, %v1075
        %v7184 = vmul.f32 %v4546, %v1076
        %v7185 = vmul.f32 %v4547, %v1077
        %v7186 = vmul.f32 %v4546, %v1078
        %v7187 = vmul.f32 %v4547, %v1079
        %v7188 = vmul.f32 %v4546, %v1080
        %v7189 = vmul.f32 %v4547, %v1081
        %v7190 = vmul.f32 %v4548, %v1082
        %v7191 = vmul.f32 %v4549, %v1083
        %v7192 = vmul.f32 %v4548, %v1084
        %v7193 = vmul.f32 %v4549, %v1085
        %v7194 = vmul.f32 %v4548, %v1086
        %v7195 = vmul.f32 %v4549, %v1087
        %v7196 = vmul.f32 %v4548, %v1088
        %v7197 = vmul.f32 %v4549, %v1089
        %v7198 = vmul.f32 %v4550, %v1074
        %v7199 = vmul.f32 %v4551, %v1075
        %v7200 = vmul.f32 %v4550, %v1076
        %v7201 = vmul.f32 %v4551, %v1077
        %v7202 = vmul.f32 %v4550, %v1078
        %v7203 = vmul.f32 %v4551, %v1079
        %v7204 = vmul.f32 %v4550, %v1080
        %v7205 = vmul.f32 %v4551, %v1081
        %v7206 = vmul.f32 %v4552, %v1082
        %v7207 = vmul.f32 %v4553, %v1083
        %v7208 = vmul.f32 %v4552, %v1084
        %v7209 = vmul.f32 %v4553, %v1085
        %v7210 = vmul.f32 %v4552, %v1086
        %v7211 = vmul.f32 %v4553, %v1087
        %v7212 = vmul.f32 %v4552, %v1088
        %v7213 = vmul.f32 %v4553, %v1089
        %v7214 = vmul.f32 %v4554, %v1074
        %v7215 = vmul.f32 %v4555, %v1075
        %v7216 = vmul.f32 %v4554, %v1076
        %v7217 = vmul.f32 %v4555, %v1077
        %v7218 = vmul.f32 %v4554, %v1078
        %v7219 = vmul.f32 %v4555, %v1079
        %v7220 = vmul.f32 %v4554, %v1080
        %v7221 = vmul.f32 %v4555, %v1081
        %v7222 = vmul.f32 %v4556, %v1082
        %v7223 = vmul.f32 %v4557, %v1083
        %v7224 = vmul.f32 %v4556, %v1084
        %v7225 = vmul.f32 %v4557, %v1085
        %v7226 = vmul.f32 %v4556, %v1086
        %v7227 = vmul.f32 %v4557, %v1087
        %v7228 = vmul.f32 %v4556, %v1088
        %v7229 = vmul.f32 %v4557, %v1089
        %v7230 = vmul.f32 %v4558, %v1074
        %v7231 = vmul.f32 %v4559, %v1075
        %v7232 = vmul.f32 %v4558, %v1076
        %v7233 = vmul.f32 %v4559, %v1077
        %v7234 = vmul.f32 %v4558, %v1078
        %v7235 = vmul.f32 %v4559, %v1079
        %v7236 = vmul.f32 %v4558, %v1080
        %v7237 = vmul.f32 %v4559, %v1081
        %v7238 = vmul.f32 %v4560, %v1082
        %v7239 = vmul.f32 %v4561, %v1083
        %v7240 = vmul.f32 %v4560, %v1084
        %v7241 = vmul.f32 %v4561, %v1085
        %v7242 = vmul.f32 %v4560, %v1086
        %v7243 = vmul.f32 %v4561, %v1087
        %v7244 = vmul.f32 %v4560, %v1088
        %v7245 = vmul.f32 %v4561, %v1089
        %v7246 = vmul.f32 %v4562, %v1074
        %v7247 = vmul.f32 %v4563, %v1075
        %v7248 = vmul.f32 %v4562, %v1076
        %v7249 = vmul.f32 %v4563, %v1077
        %v7250 = vmul.f32 %v4562, %v1078
        %v7251 = vmul.f32 %v4563, %v1079
        %v7252 = vmul.f32 %v4562, %v1080
        %v7253 = vmul.f32 %v4563, %v1081
        %v7254 = vmul.f32 %v4564, %v1082
        %v7255 = vmul.f32 %v4565, %v1083
        %v7256 = vmul.f32 %v4564, %v1084
        %v7257 = vmul.f32 %v4565, %v1085
        %v7258 = vmul.f32 %v4564, %v1086
        %v7259 = vmul.f32 %v4565, %v1087
        %v7260 = vmul.f32 %v4564, %v1088
        %v7261 = vmul.f32 %v4565, %v1089
        %v7262 = vmul.f32 %v4566, %v1074
        %v7263 = vmul.f32 %v4567, %v1075
        %v7264 = vmul.f32 %v4566, %v1076
        %v7265 = vmul.f32 %v4567, %v1077
        %v7266 = vmul.f32 %v4566, %v1078
        %v7267 = vmul.f32 %v4567, %v1079
        %v7268 = vmul.f32 %v4566, %v1080
        %v7269 = vmul.f32 %v4567, %v1081
        %v7270 = vmul.f32 %v4568, %v1082
        %v7271 = vmul.f32 %v4569, %v1083
        %v7272 = vmul.f32 %v4568, %v1084
        %v7273 = vmul.f32 %v4569, %v1085
        %v7274 = vmul.f32 %v4568, %v1086
        %v7275 = vmul.f32 %v4569, %v1087
        %v7276 = vmul.f32 %v4568, %v1088
        %v7277 = vmul.f32 %v4569, %v1089
        %v7278 = vmul.f32 %v4570, %v1074
        %v7279 = vmul.f32 %v4571, %v1075
        %v7280 = vmul.f32 %v4570, %v1076
        %v7281 = vmul.f32 %v4571, %v1077
        %v7282 = vmul.f32 %v4570, %v1078
        %v7283 = vmul.f32 %v4571, %v1079
        %v7284 = vmul.f32 %v4570, %v1080
        %v7285 = vmul.f32 %v4571, %v1081
        %v7286 = vmul.f32 %v4572, %v1082
        %v7287 = vmul.f32 %v4573, %v1083
        %v7288 = vmul.f32 %v4572, %v1084
        %v7289 = vmul.f32 %v4573, %v1085
        %v7290 = vmul.f32 %v4572, %v1086
        %v7291 = vmul.f32 %v4573, %v1087
        %v7292 = vmul.f32 %v4572, %v1088
        %v7293 = vmul.f32 %v4573, %v1089
        %v7294 = vsel %vm890, %v7038, 0.0
        %7295 = vadd.xlane.f32.xlu0 %v7294
        %v7296 = vpop.xlane.xlu0 %7295
        %v7297 = vsel %vm890, %v7039, 0.0
        %7298 = vadd.xlane.f32.xlu0 %v7297
        %v7299 = vpop.xlane.xlu0 %7298
        %v7300 = vsel %vm890, %v7040, 0.0
        %7301 = vadd.xlane.f32.xlu0 %v7300
        %v7302 = vpop.xlane.xlu0 %7301
        %v7303 = vsel %vm890, %v7041, 0.0
        %7304 = vadd.xlane.f32.xlu0 %v7303
        %v7305 = vpop.xlane.xlu0 %7304
        %v7306 = vsel %vm890, %v7042, 0.0
        %7307 = vadd.xlane.f32.xlu0 %v7306
        %v7308 = vpop.xlane.xlu0 %7307
        %v7309 = vsel %vm890, %v7043, 0.0
        %7310 = vadd.xlane.f32.xlu0 %v7309
        %v7311 = vpop.xlane.xlu0 %7310
        %v7312 = vsel %vm890, %v7044, 0.0
        %7313 = vadd.xlane.f32.xlu0 %v7312
        %v7314 = vpop.xlane.xlu0 %7313
        %v7315 = vsel %vm890, %v7045, 0.0
        %7316 = vadd.xlane.f32.xlu0 %v7315
        %v7317 = vpop.xlane.xlu0 %7316
        %v7318 = vsel %vm890, %v7046, 0.0
        %7319 = vadd.xlane.f32.xlu0 %v7318
        %v7320 = vpop.xlane.xlu0 %7319
        %v7321 = vsel %vm890, %v7047, 0.0
        %7322 = vadd.xlane.f32.xlu0 %v7321
        %v7323 = vpop.xlane.xlu0 %7322
        %v7324 = vsel %vm890, %v7048, 0.0
        %7325 = vadd.xlane.f32.xlu0 %v7324
        %v7326 = vpop.xlane.xlu0 %7325
        %v7327 = vsel %vm890, %v7049, 0.0
        %7328 = vadd.xlane.f32.xlu0 %v7327
        %v7329 = vpop.xlane.xlu0 %7328
        %v7330 = vsel %vm890, %v7050, 0.0
        %7331 = vadd.xlane.f32.xlu0 %v7330
        %v7332 = vpop.xlane.xlu0 %7331
        %v7333 = vsel %vm890, %v7051, 0.0
        %7334 = vadd.xlane.f32.xlu0 %v7333
        %v7335 = vpop.xlane.xlu0 %7334
        %v7336 = vsel %vm890, %v7052, 0.0
        %7337 = vadd.xlane.f32.xlu0 %v7336
        %v7338 = vpop.xlane.xlu0 %7337
        %v7339 = vsel %vm890, %v7053, 0.0
        %7340 = vadd.xlane.f32.xlu0 %v7339
        %v7341 = vpop.xlane.xlu0 %7340
        %v7342 = vsel %vm890, %v7054, 0.0
        %7343 = vadd.xlane.f32.xlu0 %v7342
        %v7344 = vpop.xlane.xlu0 %7343
        %v7345 = vsel %vm890, %v7055, 0.0
        %7346 = vadd.xlane.f32.xlu0 %v7345
        %v7347 = vpop.xlane.xlu0 %7346
        %v7348 = vsel %vm890, %v7056, 0.0
        %7349 = vadd.xlane.f32.xlu0 %v7348
        %v7350 = vpop.xlane.xlu0 %7349
        %v7351 = vsel %vm890, %v7057, 0.0
        %7352 = vadd.xlane.f32.xlu0 %v7351
        %v7353 = vpop.xlane.xlu0 %7352
        %v7354 = vsel %vm890, %v7058, 0.0
        %7355 = vadd.xlane.f32.xlu0 %v7354
        %v7356 = vpop.xlane.xlu0 %7355
        %v7357 = vsel %vm890, %v7059, 0.0
        %7358 = vadd.xlane.f32.xlu0 %v7357
        %v7359 = vpop.xlane.xlu0 %7358
        %v7360 = vsel %vm890, %v7060, 0.0
        %7361 = vadd.xlane.f32.xlu0 %v7360
        %v7362 = vpop.xlane.xlu0 %7361
        %v7363 = vsel %vm890, %v7061, 0.0
        %7364 = vadd.xlane.f32.xlu0 %v7363
        %v7365 = vpop.xlane.xlu0 %7364
        %v7366 = vsel %vm890, %v7062, 0.0
        %7367 = vadd.xlane.f32.xlu0 %v7366
        %v7368 = vpop.xlane.xlu0 %7367
        %v7369 = vsel %vm890, %v7063, 0.0
        %7370 = vadd.xlane.f32.xlu0 %v7369
        %v7371 = vpop.xlane.xlu0 %7370
        %v7372 = vsel %vm890, %v7064, 0.0
        %7373 = vadd.xlane.f32.xlu0 %v7372
        %v7374 = vpop.xlane.xlu0 %7373
        %v7375 = vsel %vm890, %v7065, 0.0
        %7376 = vadd.xlane.f32.xlu0 %v7375
        %v7377 = vpop.xlane.xlu0 %7376
        %v7378 = vsel %vm890, %v7066, 0.0
        %7379 = vadd.xlane.f32.xlu0 %v7378
        %v7380 = vpop.xlane.xlu0 %7379
        %v7381 = vsel %vm890, %v7067, 0.0
        %7382 = vadd.xlane.f32.xlu0 %v7381
        %v7383 = vpop.xlane.xlu0 %7382
        %v7384 = vsel %vm890, %v7068, 0.0
        %7385 = vadd.xlane.f32.xlu0 %v7384
        %v7386 = vpop.xlane.xlu0 %7385
        %v7387 = vsel %vm890, %v7069, 0.0
        %7388 = vadd.xlane.f32.xlu0 %v7387
        %v7389 = vpop.xlane.xlu0 %7388
        %v7390 = vsel %vm890, %v7070, 0.0
        %7391 = vadd.xlane.f32.xlu0 %v7390
        %v7392 = vpop.xlane.xlu0 %7391
        %v7393 = vsel %vm890, %v7071, 0.0
        %7394 = vadd.xlane.f32.xlu0 %v7393
        %v7395 = vpop.xlane.xlu0 %7394
        %v7396 = vsel %vm890, %v7072, 0.0
        %7397 = vadd.xlane.f32.xlu0 %v7396
        %v7398 = vpop.xlane.xlu0 %7397
        %v7399 = vsel %vm890, %v7073, 0.0
        %7400 = vadd.xlane.f32.xlu0 %v7399
        %v7401 = vpop.xlane.xlu0 %7400
        %v7402 = vsel %vm890, %v7074, 0.0
        %7403 = vadd.xlane.f32.xlu0 %v7402
        %v7404 = vpop.xlane.xlu0 %7403
        %v7405 = vsel %vm890, %v7075, 0.0
        %7406 = vadd.xlane.f32.xlu0 %v7405
        %v7407 = vpop.xlane.xlu0 %7406
        %v7408 = vsel %vm890, %v7076, 0.0
        %7409 = vadd.xlane.f32.xlu0 %v7408
        %v7410 = vpop.xlane.xlu0 %7409
        %v7411 = vsel %vm890, %v7077, 0.0
        %7412 = vadd.xlane.f32.xlu0 %v7411
        %v7413 = vpop.xlane.xlu0 %7412
        %v7414 = vsel %vm890, %v7078, 0.0
        %7415 = vadd.xlane.f32.xlu0 %v7414
        %v7416 = vpop.xlane.xlu0 %7415
        %v7417 = vsel %vm890, %v7079, 0.0
        %7418 = vadd.xlane.f32.xlu0 %v7417
        %v7419 = vpop.xlane.xlu0 %7418
        %v7420 = vsel %vm890, %v7080, 0.0
        %7421 = vadd.xlane.f32.xlu0 %v7420
        %v7422 = vpop.xlane.xlu0 %7421
        %v7423 = vsel %vm890, %v7081, 0.0
        %7424 = vadd.xlane.f32.xlu0 %v7423
        %v7425 = vpop.xlane.xlu0 %7424
        %v7426 = vsel %vm890, %v7082, 0.0
        %7427 = vadd.xlane.f32.xlu0 %v7426
        %v7428 = vpop.xlane.xlu0 %7427
        %v7429 = vsel %vm890, %v7083, 0.0
        %7430 = vadd.xlane.f32.xlu0 %v7429
        %v7431 = vpop.xlane.xlu0 %7430
        %v7432 = vsel %vm890, %v7084, 0.0
        %7433 = vadd.xlane.f32.xlu0 %v7432
        %v7434 = vpop.xlane.xlu0 %7433
        %v7435 = vsel %vm890, %v7085, 0.0
        %7436 = vadd.xlane.f32.xlu0 %v7435
        %v7437 = vpop.xlane.xlu0 %7436
        %v7438 = vsel %vm890, %v7086, 0.0
        %7439 = vadd.xlane.f32.xlu0 %v7438
        %v7440 = vpop.xlane.xlu0 %7439
        %v7441 = vsel %vm890, %v7087, 0.0
        %7442 = vadd.xlane.f32.xlu0 %v7441
        %v7443 = vpop.xlane.xlu0 %7442
        %v7444 = vsel %vm890, %v7088, 0.0
        %7445 = vadd.xlane.f32.xlu0 %v7444
        %v7446 = vpop.xlane.xlu0 %7445
        %v7447 = vsel %vm890, %v7089, 0.0
        %7448 = vadd.xlane.f32.xlu0 %v7447
        %v7449 = vpop.xlane.xlu0 %7448
        %v7450 = vsel %vm890, %v7090, 0.0
        %7451 = vadd.xlane.f32.xlu0 %v7450
        %v7452 = vpop.xlane.xlu0 %7451
        %v7453 = vsel %vm890, %v7091, 0.0
        %7454 = vadd.xlane.f32.xlu0 %v7453
        %v7455 = vpop.xlane.xlu0 %7454
        %v7456 = vsel %vm890, %v7092, 0.0
        %7457 = vadd.xlane.f32.xlu0 %v7456
        %v7458 = vpop.xlane.xlu0 %7457
        %v7459 = vsel %vm890, %v7093, 0.0
        %7460 = vadd.xlane.f32.xlu0 %v7459
        %v7461 = vpop.xlane.xlu0 %7460
        %v7462 = vsel %vm890, %v7094, 0.0
        %7463 = vadd.xlane.f32.xlu0 %v7462
        %v7464 = vpop.xlane.xlu0 %7463
        %v7465 = vsel %vm890, %v7095, 0.0
        %7466 = vadd.xlane.f32.xlu0 %v7465
        %v7467 = vpop.xlane.xlu0 %7466
        %v7468 = vsel %vm890, %v7096, 0.0
        %7469 = vadd.xlane.f32.xlu0 %v7468
        %v7470 = vpop.xlane.xlu0 %7469
        %v7471 = vsel %vm890, %v7097, 0.0
        %7472 = vadd.xlane.f32.xlu0 %v7471
        %v7473 = vpop.xlane.xlu0 %7472
        %v7474 = vsel %vm890, %v7098, 0.0
        %7475 = vadd.xlane.f32.xlu0 %v7474
        %v7476 = vpop.xlane.xlu0 %7475
        %v7477 = vsel %vm890, %v7099, 0.0
        %7478 = vadd.xlane.f32.xlu0 %v7477
        %v7479 = vpop.xlane.xlu0 %7478
        %v7480 = vsel %vm890, %v7100, 0.0
        %7481 = vadd.xlane.f32.xlu0 %v7480
        %v7482 = vpop.xlane.xlu0 %7481
        %v7483 = vsel %vm890, %v7101, 0.0
        %7484 = vadd.xlane.f32.xlu0 %v7483
        %v7485 = vpop.xlane.xlu0 %7484
        %v7486 = vsel %vm890, %v7102, 0.0
        %7487 = vadd.xlane.f32.xlu0 %v7486
        %v7488 = vpop.xlane.xlu0 %7487
        %v7489 = vsel %vm890, %v7103, 0.0
        %7490 = vadd.xlane.f32.xlu0 %v7489
        %v7491 = vpop.xlane.xlu0 %7490
        %v7492 = vsel %vm890, %v7104, 0.0
        %7493 = vadd.xlane.f32.xlu0 %v7492
        %v7494 = vpop.xlane.xlu0 %7493
        %v7495 = vsel %vm890, %v7105, 0.0
        %7496 = vadd.xlane.f32.xlu0 %v7495
        %v7497 = vpop.xlane.xlu0 %7496
        %v7498 = vsel %vm890, %v7106, 0.0
        %7499 = vadd.xlane.f32.xlu0 %v7498
        %v7500 = vpop.xlane.xlu0 %7499
        %v7501 = vsel %vm890, %v7107, 0.0
        %7502 = vadd.xlane.f32.xlu0 %v7501
        %v7503 = vpop.xlane.xlu0 %7502
        %v7504 = vsel %vm890, %v7108, 0.0
        %7505 = vadd.xlane.f32.xlu0 %v7504
        %v7506 = vpop.xlane.xlu0 %7505
        %v7507 = vsel %vm890, %v7109, 0.0
        %7508 = vadd.xlane.f32.xlu0 %v7507
        %v7509 = vpop.xlane.xlu0 %7508
        %v7510 = vsel %vm890, %v7110, 0.0
        %7511 = vadd.xlane.f32.xlu0 %v7510
        %v7512 = vpop.xlane.xlu0 %7511
        %v7513 = vsel %vm890, %v7111, 0.0
        %7514 = vadd.xlane.f32.xlu0 %v7513
        %v7515 = vpop.xlane.xlu0 %7514
        %v7516 = vsel %vm890, %v7112, 0.0
        %7517 = vadd.xlane.f32.xlu0 %v7516
        %v7518 = vpop.xlane.xlu0 %7517
        %v7519 = vsel %vm890, %v7113, 0.0
        %7520 = vadd.xlane.f32.xlu0 %v7519
        %v7521 = vpop.xlane.xlu0 %7520
        %v7522 = vsel %vm890, %v7114, 0.0
        %7523 = vadd.xlane.f32.xlu0 %v7522
        %v7524 = vpop.xlane.xlu0 %7523
        %v7525 = vsel %vm890, %v7115, 0.0
        %7526 = vadd.xlane.f32.xlu0 %v7525
        %v7527 = vpop.xlane.xlu0 %7526
        %v7528 = vsel %vm890, %v7116, 0.0
        %7529 = vadd.xlane.f32.xlu0 %v7528
        %v7530 = vpop.xlane.xlu0 %7529
        %v7531 = vsel %vm890, %v7117, 0.0
        %7532 = vadd.xlane.f32.xlu0 %v7531
        %v7533 = vpop.xlane.xlu0 %7532
        %v7534 = vsel %vm890, %v7118, 0.0
        %7535 = vadd.xlane.f32.xlu0 %v7534
        %v7536 = vpop.xlane.xlu0 %7535
        %v7537 = vsel %vm890, %v7119, 0.0
        %7538 = vadd.xlane.f32.xlu0 %v7537
        %v7539 = vpop.xlane.xlu0 %7538
        %v7540 = vsel %vm890, %v7120, 0.0
        %7541 = vadd.xlane.f32.xlu0 %v7540
        %v7542 = vpop.xlane.xlu0 %7541
        %v7543 = vsel %vm890, %v7121, 0.0
        %7544 = vadd.xlane.f32.xlu0 %v7543
        %v7545 = vpop.xlane.xlu0 %7544
        %v7546 = vsel %vm890, %v7122, 0.0
        %7547 = vadd.xlane.f32.xlu0 %v7546
        %v7548 = vpop.xlane.xlu0 %7547
        %v7549 = vsel %vm890, %v7123, 0.0
        %7550 = vadd.xlane.f32.xlu0 %v7549
        %v7551 = vpop.xlane.xlu0 %7550
        %v7552 = vsel %vm890, %v7124, 0.0
        %7553 = vadd.xlane.f32.xlu0 %v7552
        %v7554 = vpop.xlane.xlu0 %7553
        %v7555 = vsel %vm890, %v7125, 0.0
        %7556 = vadd.xlane.f32.xlu0 %v7555
        %v7557 = vpop.xlane.xlu0 %7556
        %v7558 = vsel %vm890, %v7126, 0.0
        %7559 = vadd.xlane.f32.xlu0 %v7558
        %v7560 = vpop.xlane.xlu0 %7559
        %v7561 = vsel %vm890, %v7127, 0.0
        %7562 = vadd.xlane.f32.xlu0 %v7561
        %v7563 = vpop.xlane.xlu0 %7562
        %v7564 = vsel %vm890, %v7128, 0.0
        %7565 = vadd.xlane.f32.xlu0 %v7564
        %v7566 = vpop.xlane.xlu0 %7565
        %v7567 = vsel %vm890, %v7129, 0.0
        %7568 = vadd.xlane.f32.xlu0 %v7567
        %v7569 = vpop.xlane.xlu0 %7568
        %v7570 = vsel %vm890, %v7130, 0.0
        %7571 = vadd.xlane.f32.xlu0 %v7570
        %v7572 = vpop.xlane.xlu0 %7571
        %v7573 = vsel %vm890, %v7131, 0.0
        %7574 = vadd.xlane.f32.xlu0 %v7573
        %v7575 = vpop.xlane.xlu0 %7574
        %v7576 = vsel %vm890, %v7132, 0.0
        %7577 = vadd.xlane.f32.xlu0 %v7576
        %v7578 = vpop.xlane.xlu0 %7577
        %v7579 = vsel %vm890, %v7133, 0.0
        %7580 = vadd.xlane.f32.xlu0 %v7579
        %v7581 = vpop.xlane.xlu0 %7580
        %v7582 = vsel %vm890, %v7134, 0.0
        %7583 = vadd.xlane.f32.xlu0 %v7582
        %v7584 = vpop.xlane.xlu0 %7583
        %v7585 = vsel %vm890, %v7135, 0.0
        %7586 = vadd.xlane.f32.xlu0 %v7585
        %v7587 = vpop.xlane.xlu0 %7586
        %v7588 = vsel %vm890, %v7136, 0.0
        %7589 = vadd.xlane.f32.xlu0 %v7588
        %v7590 = vpop.xlane.xlu0 %7589
        %v7591 = vsel %vm890, %v7137, 0.0
        %7592 = vadd.xlane.f32.xlu0 %v7591
        %v7593 = vpop.xlane.xlu0 %7592
        %v7594 = vsel %vm890, %v7138, 0.0
        %7595 = vadd.xlane.f32.xlu0 %v7594
        %v7596 = vpop.xlane.xlu0 %7595
        %v7597 = vsel %vm890, %v7139, 0.0
        %7598 = vadd.xlane.f32.xlu0 %v7597
        %v7599 = vpop.xlane.xlu0 %7598
        %v7600 = vsel %vm890, %v7140, 0.0
        %7601 = vadd.xlane.f32.xlu0 %v7600
        %v7602 = vpop.xlane.xlu0 %7601
        %v7603 = vsel %vm890, %v7141, 0.0
        %7604 = vadd.xlane.f32.xlu0 %v7603
        %v7605 = vpop.xlane.xlu0 %7604
        %v7606 = vsel %vm890, %v7142, 0.0
        %7607 = vadd.xlane.f32.xlu0 %v7606
        %v7608 = vpop.xlane.xlu0 %7607
        %v7609 = vsel %vm890, %v7143, 0.0
        %7610 = vadd.xlane.f32.xlu0 %v7609
        %v7611 = vpop.xlane.xlu0 %7610
        %v7612 = vsel %vm890, %v7144, 0.0
        %7613 = vadd.xlane.f32.xlu0 %v7612
        %v7614 = vpop.xlane.xlu0 %7613
        %v7615 = vsel %vm890, %v7145, 0.0
        %7616 = vadd.xlane.f32.xlu0 %v7615
        %v7617 = vpop.xlane.xlu0 %7616
        %v7618 = vsel %vm890, %v7146, 0.0
        %7619 = vadd.xlane.f32.xlu0 %v7618
        %v7620 = vpop.xlane.xlu0 %7619
        %v7621 = vsel %vm890, %v7147, 0.0
        %7622 = vadd.xlane.f32.xlu0 %v7621
        %v7623 = vpop.xlane.xlu0 %7622
        %v7624 = vsel %vm890, %v7148, 0.0
        %7625 = vadd.xlane.f32.xlu0 %v7624
        %v7626 = vpop.xlane.xlu0 %7625
        %v7627 = vsel %vm890, %v7149, 0.0
        %7628 = vadd.xlane.f32.xlu0 %v7627
        %v7629 = vpop.xlane.xlu0 %7628
        %v7630 = vsel %vm890, %v7150, 0.0
        %7631 = vadd.xlane.f32.xlu0 %v7630
        %v7632 = vpop.xlane.xlu0 %7631
        %v7633 = vsel %vm890, %v7151, 0.0
        %7634 = vadd.xlane.f32.xlu0 %v7633
        %v7635 = vpop.xlane.xlu0 %7634
        %v7636 = vsel %vm890, %v7152, 0.0
        %7637 = vadd.xlane.f32.xlu0 %v7636
        %v7638 = vpop.xlane.xlu0 %7637
        %v7639 = vsel %vm890, %v7153, 0.0
        %7640 = vadd.xlane.f32.xlu0 %v7639
        %v7641 = vpop.xlane.xlu0 %7640
        %v7642 = vsel %vm890, %v7154, 0.0
        %7643 = vadd.xlane.f32.xlu0 %v7642
        %v7644 = vpop.xlane.xlu0 %7643
        %v7645 = vsel %vm890, %v7155, 0.0
        %7646 = vadd.xlane.f32.xlu0 %v7645
        %v7647 = vpop.xlane.xlu0 %7646
        %v7648 = vsel %vm890, %v7156, 0.0
        %7649 = vadd.xlane.f32.xlu0 %v7648
        %v7650 = vpop.xlane.xlu0 %7649
        %v7651 = vsel %vm890, %v7157, 0.0
        %7652 = vadd.xlane.f32.xlu0 %v7651
        %v7653 = vpop.xlane.xlu0 %7652
        %v7654 = vsel %vm890, %v7158, 0.0
        %7655 = vadd.xlane.f32.xlu0 %v7654
        %v7656 = vpop.xlane.xlu0 %7655
        %v7657 = vsel %vm890, %v7159, 0.0
        %7658 = vadd.xlane.f32.xlu0 %v7657
        %v7659 = vpop.xlane.xlu0 %7658
        %v7660 = vsel %vm890, %v7160, 0.0
        %7661 = vadd.xlane.f32.xlu0 %v7660
        %v7662 = vpop.xlane.xlu0 %7661
        %v7663 = vsel %vm890, %v7161, 0.0
        %7664 = vadd.xlane.f32.xlu0 %v7663
        %v7665 = vpop.xlane.xlu0 %7664
        %v7666 = vsel %vm890, %v7162, 0.0
        %7667 = vadd.xlane.f32.xlu0 %v7666
        %v7668 = vpop.xlane.xlu0 %7667
        %v7669 = vsel %vm890, %v7163, 0.0
        %7670 = vadd.xlane.f32.xlu0 %v7669
        %v7671 = vpop.xlane.xlu0 %7670
        %v7672 = vsel %vm890, %v7164, 0.0
        %7673 = vadd.xlane.f32.xlu0 %v7672
        %v7674 = vpop.xlane.xlu0 %7673
        %v7675 = vsel %vm890, %v7165, 0.0
        %7676 = vadd.xlane.f32.xlu0 %v7675
        %v7677 = vpop.xlane.xlu0 %7676
        %v7678 = vsel %vm890, %v7166, 0.0
        %7679 = vadd.xlane.f32.xlu0 %v7678
        %v7680 = vpop.xlane.xlu0 %7679
        %v7681 = vsel %vm890, %v7167, 0.0
        %7682 = vadd.xlane.f32.xlu0 %v7681
        %v7683 = vpop.xlane.xlu0 %7682
        %v7684 = vsel %vm890, %v7168, 0.0
        %7685 = vadd.xlane.f32.xlu0 %v7684
        %v7686 = vpop.xlane.xlu0 %7685
        %v7687 = vsel %vm890, %v7169, 0.0
        %7688 = vadd.xlane.f32.xlu0 %v7687
        %v7689 = vpop.xlane.xlu0 %7688
        %v7690 = vsel %vm890, %v7170, 0.0
        %7691 = vadd.xlane.f32.xlu0 %v7690
        %v7692 = vpop.xlane.xlu0 %7691
        %v7693 = vsel %vm890, %v7171, 0.0
        %7694 = vadd.xlane.f32.xlu0 %v7693
        %v7695 = vpop.xlane.xlu0 %7694
        %v7696 = vsel %vm890, %v7172, 0.0
        %7697 = vadd.xlane.f32.xlu0 %v7696
        %v7698 = vpop.xlane.xlu0 %7697
        %v7699 = vsel %vm890, %v7173, 0.0
        %7700 = vadd.xlane.f32.xlu0 %v7699
        %v7701 = vpop.xlane.xlu0 %7700
        %v7702 = vsel %vm890, %v7174, 0.0
        %7703 = vadd.xlane.f32.xlu0 %v7702
        %v7704 = vpop.xlane.xlu0 %7703
        %v7705 = vsel %vm890, %v7175, 0.0
        %7706 = vadd.xlane.f32.xlu0 %v7705
        %v7707 = vpop.xlane.xlu0 %7706
        %v7708 = vsel %vm890, %v7176, 0.0
        %7709 = vadd.xlane.f32.xlu0 %v7708
        %v7710 = vpop.xlane.xlu0 %7709
        %v7711 = vsel %vm890, %v7177, 0.0
        %7712 = vadd.xlane.f32.xlu0 %v7711
        %v7713 = vpop.xlane.xlu0 %7712
        %v7714 = vsel %vm890, %v7178, 0.0
        %7715 = vadd.xlane.f32.xlu0 %v7714
        %v7716 = vpop.xlane.xlu0 %7715
        %v7717 = vsel %vm890, %v7179, 0.0
        %7718 = vadd.xlane.f32.xlu0 %v7717
        %v7719 = vpop.xlane.xlu0 %7718
        %v7720 = vsel %vm890, %v7180, 0.0
        %7721 = vadd.xlane.f32.xlu0 %v7720
        %v7722 = vpop.xlane.xlu0 %7721
        %v7723 = vsel %vm890, %v7181, 0.0
        %7724 = vadd.xlane.f32.xlu0 %v7723
        %v7725 = vpop.xlane.xlu0 %7724
        %v7726 = vsel %vm890, %v7182, 0.0
        %7727 = vadd.xlane.f32.xlu0 %v7726
        %v7728 = vpop.xlane.xlu0 %7727
        %v7729 = vsel %vm890, %v7183, 0.0
        %7730 = vadd.xlane.f32.xlu0 %v7729
        %v7731 = vpop.xlane.xlu0 %7730
        %v7732 = vsel %vm890, %v7184, 0.0
        %7733 = vadd.xlane.f32.xlu0 %v7732
        %v7734 = vpop.xlane.xlu0 %7733
        %v7735 = vsel %vm890, %v7185, 0.0
        %7736 = vadd.xlane.f32.xlu0 %v7735
        %v7737 = vpop.xlane.xlu0 %7736
        %v7738 = vsel %vm890, %v7186, 0.0
        %7739 = vadd.xlane.f32.xlu0 %v7738
        %v7740 = vpop.xlane.xlu0 %7739
        %v7741 = vsel %vm890, %v7187, 0.0
        %7742 = vadd.xlane.f32.xlu0 %v7741
        %v7743 = vpop.xlane.xlu0 %7742
        %v7744 = vsel %vm890, %v7188, 0.0
        %7745 = vadd.xlane.f32.xlu0 %v7744
        %v7746 = vpop.xlane.xlu0 %7745
        %v7747 = vsel %vm890, %v7189, 0.0
        %7748 = vadd.xlane.f32.xlu0 %v7747
        %v7749 = vpop.xlane.xlu0 %7748
        %v7750 = vsel %vm890, %v7190, 0.0
        %7751 = vadd.xlane.f32.xlu0 %v7750
        %v7752 = vpop.xlane.xlu0 %7751
        %v7753 = vsel %vm890, %v7191, 0.0
        %7754 = vadd.xlane.f32.xlu0 %v7753
        %v7755 = vpop.xlane.xlu0 %7754
        %v7756 = vsel %vm890, %v7192, 0.0
        %7757 = vadd.xlane.f32.xlu0 %v7756
        %v7758 = vpop.xlane.xlu0 %7757
        %v7759 = vsel %vm890, %v7193, 0.0
        %7760 = vadd.xlane.f32.xlu0 %v7759
        %v7761 = vpop.xlane.xlu0 %7760
        %v7762 = vsel %vm890, %v7194, 0.0
        %7763 = vadd.xlane.f32.xlu0 %v7762
        %v7764 = vpop.xlane.xlu0 %7763
        %v7765 = vsel %vm890, %v7195, 0.0
        %7766 = vadd.xlane.f32.xlu0 %v7765
        %v7767 = vpop.xlane.xlu0 %7766
        %v7768 = vsel %vm890, %v7196, 0.0
        %7769 = vadd.xlane.f32.xlu0 %v7768
        %v7770 = vpop.xlane.xlu0 %7769
        %v7771 = vsel %vm890, %v7197, 0.0
        %7772 = vadd.xlane.f32.xlu0 %v7771
        %v7773 = vpop.xlane.xlu0 %7772
        %v7774 = vsel %vm890, %v7198, 0.0
        %7775 = vadd.xlane.f32.xlu0 %v7774
        %v7776 = vpop.xlane.xlu0 %7775
        %v7777 = vsel %vm890, %v7199, 0.0
        %7778 = vadd.xlane.f32.xlu0 %v7777
        %v7779 = vpop.xlane.xlu0 %7778
        %v7780 = vsel %vm890, %v7200, 0.0
        %7781 = vadd.xlane.f32.xlu0 %v7780
        %v7782 = vpop.xlane.xlu0 %7781
        %v7783 = vsel %vm890, %v7201, 0.0
        %7784 = vadd.xlane.f32.xlu0 %v7783
        %v7785 = vpop.xlane.xlu0 %7784
        %v7786 = vsel %vm890, %v7202, 0.0
        %7787 = vadd.xlane.f32.xlu0 %v7786
        %v7788 = vpop.xlane.xlu0 %7787
        %v7789 = vsel %vm890, %v7203, 0.0
        %7790 = vadd.xlane.f32.xlu0 %v7789
        %v7791 = vpop.xlane.xlu0 %7790
        %v7792 = vsel %vm890, %v7204, 0.0
        %7793 = vadd.xlane.f32.xlu0 %v7792
        %v7794 = vpop.xlane.xlu0 %7793
        %v7795 = vsel %vm890, %v7205, 0.0
        %7796 = vadd.xlane.f32.xlu0 %v7795
        %v7797 = vpop.xlane.xlu0 %7796
        %v7798 = vsel %vm890, %v7206, 0.0
        %7799 = vadd.xlane.f32.xlu0 %v7798
        %v7800 = vpop.xlane.xlu0 %7799
        %v7801 = vsel %vm890, %v7207, 0.0
        %7802 = vadd.xlane.f32.xlu0 %v7801
        %v7803 = vpop.xlane.xlu0 %7802
        %v7804 = vsel %vm890, %v7208, 0.0
        %7805 = vadd.xlane.f32.xlu0 %v7804
        %v7806 = vpop.xlane.xlu0 %7805
        %v7807 = vsel %vm890, %v7209, 0.0
        %7808 = vadd.xlane.f32.xlu0 %v7807
        %v7809 = vpop.xlane.xlu0 %7808
        %v7810 = vsel %vm890, %v7210, 0.0
        %7811 = vadd.xlane.f32.xlu0 %v7810
        %v7812 = vpop.xlane.xlu0 %7811
        %v7813 = vsel %vm890, %v7211, 0.0
        %7814 = vadd.xlane.f32.xlu0 %v7813
        %v7815 = vpop.xlane.xlu0 %7814
        %v7816 = vsel %vm890, %v7212, 0.0
        %7817 = vadd.xlane.f32.xlu0 %v7816
        %v7818 = vpop.xlane.xlu0 %7817
        %v7819 = vsel %vm890, %v7213, 0.0
        %7820 = vadd.xlane.f32.xlu0 %v7819
        %v7821 = vpop.xlane.xlu0 %7820
        %v7822 = vsel %vm890, %v7214, 0.0
        %7823 = vadd.xlane.f32.xlu0 %v7822
        %v7824 = vpop.xlane.xlu0 %7823
        %v7825 = vsel %vm890, %v7215, 0.0
        %7826 = vadd.xlane.f32.xlu0 %v7825
        %v7827 = vpop.xlane.xlu0 %7826
        %v7828 = vsel %vm890, %v7216, 0.0
        %7829 = vadd.xlane.f32.xlu0 %v7828
        %v7830 = vpop.xlane.xlu0 %7829
        %v7831 = vsel %vm890, %v7217, 0.0
        %7832 = vadd.xlane.f32.xlu0 %v7831
        %v7833 = vpop.xlane.xlu0 %7832
        %v7834 = vsel %vm890, %v7218, 0.0
        %7835 = vadd.xlane.f32.xlu0 %v7834
        %v7836 = vpop.xlane.xlu0 %7835
        %v7837 = vsel %vm890, %v7219, 0.0
        %7838 = vadd.xlane.f32.xlu0 %v7837
        %v7839 = vpop.xlane.xlu0 %7838
        %v7840 = vsel %vm890, %v7220, 0.0
        %7841 = vadd.xlane.f32.xlu0 %v7840
        %v7842 = vpop.xlane.xlu0 %7841
        %v7843 = vsel %vm890, %v7221, 0.0
        %7844 = vadd.xlane.f32.xlu0 %v7843
        %v7845 = vpop.xlane.xlu0 %7844
        %v7846 = vsel %vm890, %v7222, 0.0
        %7847 = vadd.xlane.f32.xlu0 %v7846
        %v7848 = vpop.xlane.xlu0 %7847
        %v7849 = vsel %vm890, %v7223, 0.0
        %7850 = vadd.xlane.f32.xlu0 %v7849
        %v7851 = vpop.xlane.xlu0 %7850
        %v7852 = vsel %vm890, %v7224, 0.0
        %7853 = vadd.xlane.f32.xlu0 %v7852
        %v7854 = vpop.xlane.xlu0 %7853
        %v7855 = vsel %vm890, %v7225, 0.0
        %7856 = vadd.xlane.f32.xlu0 %v7855
        %v7857 = vpop.xlane.xlu0 %7856
        %v7858 = vsel %vm890, %v7226, 0.0
        %7859 = vadd.xlane.f32.xlu0 %v7858
        %v7860 = vpop.xlane.xlu0 %7859
        %v7861 = vsel %vm890, %v7227, 0.0
        %7862 = vadd.xlane.f32.xlu0 %v7861
        %v7863 = vpop.xlane.xlu0 %7862
        %v7864 = vsel %vm890, %v7228, 0.0
        %7865 = vadd.xlane.f32.xlu0 %v7864
        %v7866 = vpop.xlane.xlu0 %7865
        %v7867 = vsel %vm890, %v7229, 0.0
        %7868 = vadd.xlane.f32.xlu0 %v7867
        %v7869 = vpop.xlane.xlu0 %7868
        %v7870 = vsel %vm890, %v7230, 0.0
        %7871 = vadd.xlane.f32.xlu0 %v7870
        %v7872 = vpop.xlane.xlu0 %7871
        %v7873 = vsel %vm890, %v7231, 0.0
        %7874 = vadd.xlane.f32.xlu0 %v7873
        %v7875 = vpop.xlane.xlu0 %7874
        %v7876 = vsel %vm890, %v7232, 0.0
        %7877 = vadd.xlane.f32.xlu0 %v7876
        %v7878 = vpop.xlane.xlu0 %7877
        %v7879 = vsel %vm890, %v7233, 0.0
        %7880 = vadd.xlane.f32.xlu0 %v7879
        %v7881 = vpop.xlane.xlu0 %7880
        %v7882 = vsel %vm890, %v7234, 0.0
        %7883 = vadd.xlane.f32.xlu0 %v7882
        %v7884 = vpop.xlane.xlu0 %7883
        %v7885 = vsel %vm890, %v7235, 0.0
        %7886 = vadd.xlane.f32.xlu0 %v7885
        %v7887 = vpop.xlane.xlu0 %7886
        %v7888 = vsel %vm890, %v7236, 0.0
        %7889 = vadd.xlane.f32.xlu0 %v7888
        %v7890 = vpop.xlane.xlu0 %7889
        %v7891 = vsel %vm890, %v7237, 0.0
        %7892 = vadd.xlane.f32.xlu0 %v7891
        %v7893 = vpop.xlane.xlu0 %7892
        %v7894 = vsel %vm890, %v7238, 0.0
        %7895 = vadd.xlane.f32.xlu0 %v7894
        %v7896 = vpop.xlane.xlu0 %7895
        %v7897 = vsel %vm890, %v7239, 0.0
        %7898 = vadd.xlane.f32.xlu0 %v7897
        %v7899 = vpop.xlane.xlu0 %7898
        %v7900 = vsel %vm890, %v7240, 0.0
        %7901 = vadd.xlane.f32.xlu0 %v7900
        %v7902 = vpop.xlane.xlu0 %7901
        %v7903 = vsel %vm890, %v7241, 0.0
        %7904 = vadd.xlane.f32.xlu0 %v7903
        %v7905 = vpop.xlane.xlu0 %7904
        %v7906 = vsel %vm890, %v7242, 0.0
        %7907 = vadd.xlane.f32.xlu0 %v7906
        %v7908 = vpop.xlane.xlu0 %7907
        %v7909 = vsel %vm890, %v7243, 0.0
        %7910 = vadd.xlane.f32.xlu0 %v7909
        %v7911 = vpop.xlane.xlu0 %7910
        %v7912 = vsel %vm890, %v7244, 0.0
        %7913 = vadd.xlane.f32.xlu0 %v7912
        %v7914 = vpop.xlane.xlu0 %7913
        %v7915 = vsel %vm890, %v7245, 0.0
        %7916 = vadd.xlane.f32.xlu0 %v7915
        %v7917 = vpop.xlane.xlu0 %7916
        %v7918 = vsel %vm890, %v7246, 0.0
        %7919 = vadd.xlane.f32.xlu0 %v7918
        %v7920 = vpop.xlane.xlu0 %7919
        %v7921 = vsel %vm890, %v7247, 0.0
        %7922 = vadd.xlane.f32.xlu0 %v7921
        %v7923 = vpop.xlane.xlu0 %7922
        %v7924 = vsel %vm890, %v7248, 0.0
        %7925 = vadd.xlane.f32.xlu0 %v7924
        %v7926 = vpop.xlane.xlu0 %7925
        %v7927 = vsel %vm890, %v7249, 0.0
        %7928 = vadd.xlane.f32.xlu0 %v7927
        %v7929 = vpop.xlane.xlu0 %7928
        %v7930 = vsel %vm890, %v7250, 0.0
        %7931 = vadd.xlane.f32.xlu0 %v7930
        %v7932 = vpop.xlane.xlu0 %7931
        %v7933 = vsel %vm890, %v7251, 0.0
        %7934 = vadd.xlane.f32.xlu0 %v7933
        %v7935 = vpop.xlane.xlu0 %7934
        %v7936 = vsel %vm890, %v7252, 0.0
        %7937 = vadd.xlane.f32.xlu0 %v7936
        %v7938 = vpop.xlane.xlu0 %7937
        %v7939 = vsel %vm890, %v7253, 0.0
        %7940 = vadd.xlane.f32.xlu0 %v7939
        %v7941 = vpop.xlane.xlu0 %7940
        %v7942 = vsel %vm890, %v7254, 0.0
        %7943 = vadd.xlane.f32.xlu0 %v7942
        %v7944 = vpop.xlane.xlu0 %7943
        %v7945 = vsel %vm890, %v7255, 0.0
        %7946 = vadd.xlane.f32.xlu0 %v7945
        %v7947 = vpop.xlane.xlu0 %7946
        %v7948 = vsel %vm890, %v7256, 0.0
        %7949 = vadd.xlane.f32.xlu0 %v7948
        %v7950 = vpop.xlane.xlu0 %7949
        %v7951 = vsel %vm890, %v7257, 0.0
        %7952 = vadd.xlane.f32.xlu0 %v7951
        %v7953 = vpop.xlane.xlu0 %7952
        %v7954 = vsel %vm890, %v7258, 0.0
        %7955 = vadd.xlane.f32.xlu0 %v7954
        %v7956 = vpop.xlane.xlu0 %7955
        %v7957 = vsel %vm890, %v7259, 0.0
        %7958 = vadd.xlane.f32.xlu0 %v7957
        %v7959 = vpop.xlane.xlu0 %7958
        %v7960 = vsel %vm890, %v7260, 0.0
        %7961 = vadd.xlane.f32.xlu0 %v7960
        %v7962 = vpop.xlane.xlu0 %7961
        %v7963 = vsel %vm890, %v7261, 0.0
        %7964 = vadd.xlane.f32.xlu0 %v7963
        %v7965 = vpop.xlane.xlu0 %7964
        %v7966 = vsel %vm890, %v7262, 0.0
        %7967 = vadd.xlane.f32.xlu0 %v7966
        %v7968 = vpop.xlane.xlu0 %7967
        %v7969 = vsel %vm890, %v7263, 0.0
        %7970 = vadd.xlane.f32.xlu0 %v7969
        %v7971 = vpop.xlane.xlu0 %7970
        %v7972 = vsel %vm890, %v7264, 0.0
        %7973 = vadd.xlane.f32.xlu0 %v7972
        %v7974 = vpop.xlane.xlu0 %7973
        %v7975 = vsel %vm890, %v7265, 0.0
        %7976 = vadd.xlane.f32.xlu0 %v7975
        %v7977 = vpop.xlane.xlu0 %7976
        %v7978 = vsel %vm890, %v7266, 0.0
        %7979 = vadd.xlane.f32.xlu0 %v7978
        %v7980 = vpop.xlane.xlu0 %7979
        %v7981 = vsel %vm890, %v7267, 0.0
        %7982 = vadd.xlane.f32.xlu0 %v7981
        %v7983 = vpop.xlane.xlu0 %7982
        %v7984 = vsel %vm890, %v7268, 0.0
        %7985 = vadd.xlane.f32.xlu0 %v7984
        %v7986 = vpop.xlane.xlu0 %7985
        %v7987 = vsel %vm890, %v7269, 0.0
        %7988 = vadd.xlane.f32.xlu0 %v7987
        %v7989 = vpop.xlane.xlu0 %7988
        %v7990 = vsel %vm890, %v7270, 0.0
        %7991 = vadd.xlane.f32.xlu0 %v7990
        %v7992 = vpop.xlane.xlu0 %7991
        %v7993 = vsel %vm890, %v7271, 0.0
        %7994 = vadd.xlane.f32.xlu0 %v7993
        %v7995 = vpop.xlane.xlu0 %7994
        %v7996 = vsel %vm890, %v7272, 0.0
        %7997 = vadd.xlane.f32.xlu0 %v7996
        %v7998 = vpop.xlane.xlu0 %7997
        %v7999 = vsel %vm890, %v7273, 0.0
        %8000 = vadd.xlane.f32.xlu0 %v7999
        %v8001 = vpop.xlane.xlu0 %8000
        %v8002 = vsel %vm890, %v7274, 0.0
        %8003 = vadd.xlane.f32.xlu0 %v8002
        %v8004 = vpop.xlane.xlu0 %8003
        %v8005 = vsel %vm890, %v7275, 0.0
        %8006 = vadd.xlane.f32.xlu0 %v8005
        %v8007 = vpop.xlane.xlu0 %8006
        %v8008 = vsel %vm890, %v7276, 0.0
        %8009 = vadd.xlane.f32.xlu0 %v8008
        %v8010 = vpop.xlane.xlu0 %8009
        %v8011 = vsel %vm890, %v7277, 0.0
        %8012 = vadd.xlane.f32.xlu0 %v8011
        %v8013 = vpop.xlane.xlu0 %8012
        %v8014 = vsel %vm890, %v7278, 0.0
        %8015 = vadd.xlane.f32.xlu0 %v8014
        %v8016 = vpop.xlane.xlu0 %8015
        %v8017 = vsel %vm890, %v7279, 0.0
        %8018 = vadd.xlane.f32.xlu0 %v8017
        %v8019 = vpop.xlane.xlu0 %8018
        %v8020 = vsel %vm890, %v7280, 0.0
        %8021 = vadd.xlane.f32.xlu0 %v8020
        %v8022 = vpop.xlane.xlu0 %8021
        %v8023 = vsel %vm890, %v7281, 0.0
        %8024 = vadd.xlane.f32.xlu0 %v8023
        %v8025 = vpop.xlane.xlu0 %8024
        %v8026 = vsel %vm890, %v7282, 0.0
        %8027 = vadd.xlane.f32.xlu0 %v8026
        %v8028 = vpop.xlane.xlu0 %8027
        %v8029 = vsel %vm890, %v7283, 0.0
        %8030 = vadd.xlane.f32.xlu0 %v8029
        %v8031 = vpop.xlane.xlu0 %8030
        %v8032 = vsel %vm890, %v7284, 0.0
        %8033 = vadd.xlane.f32.xlu0 %v8032
        %v8034 = vpop.xlane.xlu0 %8033
        %v8035 = vsel %vm890, %v7285, 0.0
        %8036 = vadd.xlane.f32.xlu0 %v8035
        %v8037 = vpop.xlane.xlu0 %8036
        %v8038 = vsel %vm890, %v7286, 0.0
        %8039 = vadd.xlane.f32.xlu0 %v8038
        %v8040 = vpop.xlane.xlu0 %8039
        %v8041 = vsel %vm890, %v7287, 0.0
        %8042 = vadd.xlane.f32.xlu0 %v8041
        %v8043 = vpop.xlane.xlu0 %8042
        %v8044 = vsel %vm890, %v7288, 0.0
        %8045 = vadd.xlane.f32.xlu0 %v8044
        %v8046 = vpop.xlane.xlu0 %8045
        %v8047 = vsel %vm890, %v7289, 0.0
        %8048 = vadd.xlane.f32.xlu0 %v8047
        %v8049 = vpop.xlane.xlu0 %8048
        %v8050 = vsel %vm890, %v7290, 0.0
        %8051 = vadd.xlane.f32.xlu0 %v8050
        %v8052 = vpop.xlane.xlu0 %8051
        %v8053 = vsel %vm890, %v7291, 0.0
        %8054 = vadd.xlane.f32.xlu0 %v8053
        %v8055 = vpop.xlane.xlu0 %8054
        %v8056 = vsel %vm890, %v7292, 0.0
        %8057 = vadd.xlane.f32.xlu0 %v8056
        %v8058 = vpop.xlane.xlu0 %8057
        %v8059 = vsel %vm890, %v7293, 0.0
        %8060 = vadd.xlane.f32.xlu0 %v8059
        %v8061 = vpop.xlane.xlu0 %8060
        %v8062 = vadd.f32 %v6272, %v7296
        %v8063 = vadd.f32 %v6275, %v7299
        %v8064 = vadd.f32 %v6278, %v7302
        %v8065 = vadd.f32 %v6281, %v7305
        %v8066 = vadd.f32 %v6284, %v7308
        %v8067 = vadd.f32 %v6287, %v7311
        %v8068 = vadd.f32 %v6290, %v7314
        %v8069 = vadd.f32 %v6293, %v7317
        %v8070 = vadd.f32 %v6296, %v7320
        %v8071 = vadd.f32 %v6299, %v7323
        %v8072 = vadd.f32 %v6302, %v7326
        %v8073 = vadd.f32 %v6305, %v7329
        %v8074 = vadd.f32 %v6308, %v7332
        %v8075 = vadd.f32 %v6311, %v7335
        %v8076 = vadd.f32 %v6314, %v7338
        %v8077 = vadd.f32 %v6317, %v7341
        %v8078 = vadd.f32 %v6320, %v7344
        %v8079 = vadd.f32 %v6323, %v7347
        %v8080 = vadd.f32 %v6326, %v7350
        %v8081 = vadd.f32 %v6329, %v7353
        %v8082 = vadd.f32 %v6332, %v7356
        %v8083 = vadd.f32 %v6335, %v7359
        %v8084 = vadd.f32 %v6338, %v7362
        %v8085 = vadd.f32 %v6341, %v7365
        %v8086 = vadd.f32 %v6344, %v7368
        %v8087 = vadd.f32 %v6347, %v7371
        %v8088 = vadd.f32 %v6350, %v7374
        %v8089 = vadd.f32 %v6353, %v7377
        %v8090 = vadd.f32 %v6356, %v7380
        %v8091 = vadd.f32 %v6359, %v7383
        %v8092 = vadd.f32 %v6362, %v7386
        %v8093 = vadd.f32 %v6365, %v7389
        %v8094 = vadd.f32 %v6368, %v7392
        %v8095 = vadd.f32 %v6371, %v7395
        %v8096 = vadd.f32 %v6374, %v7398
        %v8097 = vadd.f32 %v6377, %v7401
        %v8098 = vadd.f32 %v6380, %v7404
        %v8099 = vadd.f32 %v6383, %v7407
        %v8100 = vadd.f32 %v6386, %v7410
        %v8101 = vadd.f32 %v6389, %v7413
        %v8102 = vadd.f32 %v6392, %v7416
        %v8103 = vadd.f32 %v6395, %v7419
        %v8104 = vadd.f32 %v6398, %v7422
        %v8105 = vadd.f32 %v6401, %v7425
        %v8106 = vadd.f32 %v6404, %v7428
        %v8107 = vadd.f32 %v6407, %v7431
        %v8108 = vadd.f32 %v6410, %v7434
        %v8109 = vadd.f32 %v6413, %v7437
        %v8110 = vadd.f32 %v6416, %v7440
        %v8111 = vadd.f32 %v6419, %v7443
        %v8112 = vadd.f32 %v6422, %v7446
        %v8113 = vadd.f32 %v6425, %v7449
        %v8114 = vadd.f32 %v6428, %v7452
        %v8115 = vadd.f32 %v6431, %v7455
        %v8116 = vadd.f32 %v6434, %v7458
        %v8117 = vadd.f32 %v6437, %v7461
        %v8118 = vadd.f32 %v6440, %v7464
        %v8119 = vadd.f32 %v6443, %v7467
        %v8120 = vadd.f32 %v6446, %v7470
        %v8121 = vadd.f32 %v6449, %v7473
        %v8122 = vadd.f32 %v6452, %v7476
        %v8123 = vadd.f32 %v6455, %v7479
        %v8124 = vadd.f32 %v6458, %v7482
        %v8125 = vadd.f32 %v6461, %v7485
        %v8126 = vadd.f32 %v6464, %v7488
        %v8127 = vadd.f32 %v6467, %v7491
        %v8128 = vadd.f32 %v6470, %v7494
        %v8129 = vadd.f32 %v6473, %v7497
        %v8130 = vadd.f32 %v6476, %v7500
        %v8131 = vadd.f32 %v6479, %v7503
        %v8132 = vadd.f32 %v6482, %v7506
        %v8133 = vadd.f32 %v6485, %v7509
        %v8134 = vadd.f32 %v6488, %v7512
        %v8135 = vadd.f32 %v6491, %v7515
        %v8136 = vadd.f32 %v6494, %v7518
        %v8137 = vadd.f32 %v6497, %v7521
        %v8138 = vadd.f32 %v6500, %v7524
        %v8139 = vadd.f32 %v6503, %v7527
        %v8140 = vadd.f32 %v6506, %v7530
        %v8141 = vadd.f32 %v6509, %v7533
        %v8142 = vadd.f32 %v6512, %v7536
        %v8143 = vadd.f32 %v6515, %v7539
        %v8144 = vadd.f32 %v6518, %v7542
        %v8145 = vadd.f32 %v6521, %v7545
        %v8146 = vadd.f32 %v6524, %v7548
        %v8147 = vadd.f32 %v6527, %v7551
        %v8148 = vadd.f32 %v6530, %v7554
        %v8149 = vadd.f32 %v6533, %v7557
        %v8150 = vadd.f32 %v6536, %v7560
        %v8151 = vadd.f32 %v6539, %v7563
        %v8152 = vadd.f32 %v6542, %v7566
        %v8153 = vadd.f32 %v6545, %v7569
        %v8154 = vadd.f32 %v6548, %v7572
        %v8155 = vadd.f32 %v6551, %v7575
        %v8156 = vadd.f32 %v6554, %v7578
        %v8157 = vadd.f32 %v6557, %v7581
        %v8158 = vadd.f32 %v6560, %v7584
        %v8159 = vadd.f32 %v6563, %v7587
        %v8160 = vadd.f32 %v6566, %v7590
        %v8161 = vadd.f32 %v6569, %v7593
        %v8162 = vadd.f32 %v6572, %v7596
        %v8163 = vadd.f32 %v6575, %v7599
        %v8164 = vadd.f32 %v6578, %v7602
        %v8165 = vadd.f32 %v6581, %v7605
        %v8166 = vadd.f32 %v6584, %v7608
        %v8167 = vadd.f32 %v6587, %v7611
        %v8168 = vadd.f32 %v6590, %v7614
        %v8169 = vadd.f32 %v6593, %v7617
        %v8170 = vadd.f32 %v6596, %v7620
        %v8171 = vadd.f32 %v6599, %v7623
        %v8172 = vadd.f32 %v6602, %v7626
        %v8173 = vadd.f32 %v6605, %v7629
        %v8174 = vadd.f32 %v6608, %v7632
        %v8175 = vadd.f32 %v6611, %v7635
        %v8176 = vadd.f32 %v6614, %v7638
        %v8177 = vadd.f32 %v6617, %v7641
        %v8178 = vadd.f32 %v6620, %v7644
        %v8179 = vadd.f32 %v6623, %v7647
        %v8180 = vadd.f32 %v6626, %v7650
        %v8181 = vadd.f32 %v6629, %v7653
        %v8182 = vadd.f32 %v6632, %v7656
        %v8183 = vadd.f32 %v6635, %v7659
        %v8184 = vadd.f32 %v6638, %v7662
        %v8185 = vadd.f32 %v6641, %v7665
        %v8186 = vadd.f32 %v6644, %v7668
        %v8187 = vadd.f32 %v6647, %v7671
        %v8188 = vadd.f32 %v6650, %v7674
        %v8189 = vadd.f32 %v6653, %v7677
        %v8190 = vadd.f32 %v6656, %v7680
        %v8191 = vadd.f32 %v6659, %v7683
        %v8192 = vadd.f32 %v6662, %v7686
        %v8193 = vadd.f32 %v6665, %v7689
        %v8194 = vadd.f32 %v6668, %v7692
        %v8195 = vadd.f32 %v6671, %v7695
        %v8196 = vadd.f32 %v6674, %v7698
        %v8197 = vadd.f32 %v6677, %v7701
        %v8198 = vadd.f32 %v6680, %v7704
        %v8199 = vadd.f32 %v6683, %v7707
        %v8200 = vadd.f32 %v6686, %v7710
        %v8201 = vadd.f32 %v6689, %v7713
        %v8202 = vadd.f32 %v6692, %v7716
        %v8203 = vadd.f32 %v6695, %v7719
        %v8204 = vadd.f32 %v6698, %v7722
        %v8205 = vadd.f32 %v6701, %v7725
        %v8206 = vadd.f32 %v6704, %v7728
        %v8207 = vadd.f32 %v6707, %v7731
        %v8208 = vadd.f32 %v6710, %v7734
        %v8209 = vadd.f32 %v6713, %v7737
        %v8210 = vadd.f32 %v6716, %v7740
        %v8211 = vadd.f32 %v6719, %v7743
        %v8212 = vadd.f32 %v6722, %v7746
        %v8213 = vadd.f32 %v6725, %v7749
        %v8214 = vadd.f32 %v6728, %v7752
        %v8215 = vadd.f32 %v6731, %v7755
        %v8216 = vadd.f32 %v6734, %v7758
        %v8217 = vadd.f32 %v6737, %v7761
        %v8218 = vadd.f32 %v6740, %v7764
        %v8219 = vadd.f32 %v6743, %v7767
        %v8220 = vadd.f32 %v6746, %v7770
        %v8221 = vadd.f32 %v6749, %v7773
        %v8222 = vadd.f32 %v6752, %v7776
        %v8223 = vadd.f32 %v6755, %v7779
        %v8224 = vadd.f32 %v6758, %v7782
        %v8225 = vadd.f32 %v6761, %v7785
        %v8226 = vadd.f32 %v6764, %v7788
        %v8227 = vadd.f32 %v6767, %v7791
        %v8228 = vadd.f32 %v6770, %v7794
        %v8229 = vadd.f32 %v6773, %v7797
        %v8230 = vadd.f32 %v6776, %v7800
        %v8231 = vadd.f32 %v6779, %v7803
        %v8232 = vadd.f32 %v6782, %v7806
        %v8233 = vadd.f32 %v6785, %v7809
        %v8234 = vadd.f32 %v6788, %v7812
        %v8235 = vadd.f32 %v6791, %v7815
        %v8236 = vadd.f32 %v6794, %v7818
        %v8237 = vadd.f32 %v6797, %v7821
        %v8238 = vadd.f32 %v6800, %v7824
        %v8239 = vadd.f32 %v6803, %v7827
        %v8240 = vadd.f32 %v6806, %v7830
        %v8241 = vadd.f32 %v6809, %v7833
        %v8242 = vadd.f32 %v6812, %v7836
        %v8243 = vadd.f32 %v6815, %v7839
        %v8244 = vadd.f32 %v6818, %v7842
        %v8245 = vadd.f32 %v6821, %v7845
        %v8246 = vadd.f32 %v6824, %v7848
        %v8247 = vadd.f32 %v6827, %v7851
        %v8248 = vadd.f32 %v6830, %v7854
        %v8249 = vadd.f32 %v6833, %v7857
        %v8250 = vadd.f32 %v6836, %v7860
        %v8251 = vadd.f32 %v6839, %v7863
        %v8252 = vadd.f32 %v6842, %v7866
        %v8253 = vadd.f32 %v6845, %v7869
        %v8254 = vadd.f32 %v6848, %v7872
        %v8255 = vadd.f32 %v6851, %v7875
        %v8256 = vadd.f32 %v6854, %v7878
        %v8257 = vadd.f32 %v6857, %v7881
        %v8258 = vadd.f32 %v6860, %v7884
        %v8259 = vadd.f32 %v6863, %v7887
        %v8260 = vadd.f32 %v6866, %v7890
        %v8261 = vadd.f32 %v6869, %v7893
        %v8262 = vadd.f32 %v6872, %v7896
        %v8263 = vadd.f32 %v6875, %v7899
        %v8264 = vadd.f32 %v6878, %v7902
        %v8265 = vadd.f32 %v6881, %v7905
        %v8266 = vadd.f32 %v6884, %v7908
        %v8267 = vadd.f32 %v6887, %v7911
        %v8268 = vadd.f32 %v6890, %v7914
        %v8269 = vadd.f32 %v6893, %v7917
        %v8270 = vadd.f32 %v6896, %v7920
        %v8271 = vadd.f32 %v6899, %v7923
        %v8272 = vadd.f32 %v6902, %v7926
        %v8273 = vadd.f32 %v6905, %v7929
        %v8274 = vadd.f32 %v6908, %v7932
        %v8275 = vadd.f32 %v6911, %v7935
        %v8276 = vadd.f32 %v6914, %v7938
        %v8277 = vadd.f32 %v6917, %v7941
        %v8278 = vadd.f32 %v6920, %v7944
        %v8279 = vadd.f32 %v6923, %v7947
        %v8280 = vadd.f32 %v6926, %v7950
        %v8281 = vadd.f32 %v6929, %v7953
        %v8282 = vadd.f32 %v6932, %v7956
        %v8283 = vadd.f32 %v6935, %v7959
        %v8284 = vadd.f32 %v6938, %v7962
        %v8285 = vadd.f32 %v6941, %v7965
        %v8286 = vadd.f32 %v6944, %v7968
        %v8287 = vadd.f32 %v6947, %v7971
        %v8288 = vadd.f32 %v6950, %v7974
        %v8289 = vadd.f32 %v6953, %v7977
        %v8290 = vadd.f32 %v6956, %v7980
        %v8291 = vadd.f32 %v6959, %v7983
        %v8292 = vadd.f32 %v6962, %v7986
        %v8293 = vadd.f32 %v6965, %v7989
        %v8294 = vadd.f32 %v6968, %v7992
        %v8295 = vadd.f32 %v6971, %v7995
        %v8296 = vadd.f32 %v6974, %v7998
        %v8297 = vadd.f32 %v6977, %v8001
        %v8298 = vadd.f32 %v6980, %v8004
        %v8299 = vadd.f32 %v6983, %v8007
        %v8300 = vadd.f32 %v6986, %v8010
        %v8301 = vadd.f32 %v6989, %v8013
        %v8302 = vadd.f32 %v6992, %v8016
        %v8303 = vadd.f32 %v6995, %v8019
        %v8304 = vadd.f32 %v6998, %v8022
        %v8305 = vadd.f32 %v7001, %v8025
        %v8306 = vadd.f32 %v7004, %v8028
        %v8307 = vadd.f32 %v7007, %v8031
        %v8308 = vadd.f32 %v7010, %v8034
        %v8309 = vadd.f32 %v7013, %v8037
        %v8310 = vadd.f32 %v7016, %v8040
        %v8311 = vadd.f32 %v7019, %v8043
        %v8312 = vadd.f32 %v7022, %v8046
        %v8313 = vadd.f32 %v7025, %v8049
        %v8314 = vadd.f32 %v7028, %v8052
        %v8315 = vadd.f32 %v7031, %v8055
        %v8316 = vadd.f32 %v7034, %v8058
        %v8317 = vadd.f32 %v7037, %v8061
        %v8318 = vld [vmem:[%s7] sm:$0xff]
        %8320 = vset.pattern.permute.xlu0 0
        %8321 = vperm.xlu0 %8320, %v8318
        %v8322 = vpop.permute.xlu0 %8321
        %v8323 = vlaneseq
        %v8324 = vshrl.u32 %v8323, 7
        %v8325 = vsub.s32 0, %v8324
        %v8326 = vrot.slane %v8322, %v8325
        %v8327 = vlaneseq
        %v8328 = vshrl.u32 %v8327, 7
        %v8329 = vsub.s32 1, %v8328
        %v8330 = vrot.slane %v8322, %v8329
        %v8331 = vlaneseq
        %v8332 = vshrl.u32 %v8331, 7
        %v8333 = vsub.s32 2, %v8332
        %v8334 = vrot.slane %v8322, %v8333
        %v8335 = vlaneseq
        %v8336 = vshrl.u32 %v8335, 7
        %v8337 = vsub.s32 3, %v8336
        %v8338 = vrot.slane %v8322, %v8337
        %v8339 = vlaneseq
        %v8340 = vshrl.u32 %v8339, 7
        %v8341 = vsub.s32 4, %v8340
        %v8342 = vrot.slane %v8322, %v8341
        %v8343 = vlaneseq
        %v8344 = vshrl.u32 %v8343, 7
        %v8345 = vsub.s32 5, %v8344
        %v8346 = vrot.slane %v8322, %v8345
        %v8347 = vlaneseq
        %v8348 = vshrl.u32 %v8347, 7
        %v8349 = vsub.s32 6, %v8348
        %v8350 = vrot.slane %v8322, %v8349
        %v8351 = vlaneseq
        %v8352 = vshrl.u32 %v8351, 7
        %v8353 = vsub.s32 7, %v8352
        %v8354 = vrot.slane %v8322, %v8353
        %v8363 = vadd.f32 %v8062, %v8326
        %v8364 = vadd.f32 %v8063, %v8326
        %v8365 = vadd.f32 %v8064, %v8330
        %v8366 = vadd.f32 %v8065, %v8330
        %v8367 = vadd.f32 %v8066, %v8334
        %v8368 = vadd.f32 %v8067, %v8334
        %v8369 = vadd.f32 %v8068, %v8338
        %v8370 = vadd.f32 %v8069, %v8338
        %v8371 = vadd.f32 %v8070, %v8342
        %v8372 = vadd.f32 %v8071, %v8342
        %v8373 = vadd.f32 %v8072, %v8346
        %v8374 = vadd.f32 %v8073, %v8346
        %v8375 = vadd.f32 %v8074, %v8350
        %v8376 = vadd.f32 %v8075, %v8350
        %v8377 = vadd.f32 %v8076, %v8354
        %v8378 = vadd.f32 %v8077, %v8354
        %v8379 = vadd.f32 %v8078, %v8326
        %v8380 = vadd.f32 %v8079, %v8326
        %v8381 = vadd.f32 %v8080, %v8330
        %v8382 = vadd.f32 %v8081, %v8330
        %v8383 = vadd.f32 %v8082, %v8334
        %v8384 = vadd.f32 %v8083, %v8334
        %v8385 = vadd.f32 %v8084, %v8338
        %v8386 = vadd.f32 %v8085, %v8338
        %v8387 = vadd.f32 %v8086, %v8342
        %v8388 = vadd.f32 %v8087, %v8342
        %v8389 = vadd.f32 %v8088, %v8346
        %v8390 = vadd.f32 %v8089, %v8346
        %v8391 = vadd.f32 %v8090, %v8350
        %v8392 = vadd.f32 %v8091, %v8350
        %v8393 = vadd.f32 %v8092, %v8354
        %v8394 = vadd.f32 %v8093, %v8354
        %v8395 = vadd.f32 %v8094, %v8326
        %v8396 = vadd.f32 %v8095, %v8326
        %v8397 = vadd.f32 %v8096, %v8330
        %v8398 = vadd.f32 %v8097, %v8330
        %v8399 = vadd.f32 %v8098, %v8334
        %v8400 = vadd.f32 %v8099, %v8334
        %v8401 = vadd.f32 %v8100, %v8338
        %v8402 = vadd.f32 %v8101, %v8338
        %v8403 = vadd.f32 %v8102, %v8342
        %v8404 = vadd.f32 %v8103, %v8342
        %v8405 = vadd.f32 %v8104, %v8346
        %v8406 = vadd.f32 %v8105, %v8346
        %v8407 = vadd.f32 %v8106, %v8350
        %v8408 = vadd.f32 %v8107, %v8350
        %v8409 = vadd.f32 %v8108, %v8354
        %v8410 = vadd.f32 %v8109, %v8354
        %v8411 = vadd.f32 %v8110, %v8326
        %v8412 = vadd.f32 %v8111, %v8326
        %v8413 = vadd.f32 %v8112, %v8330
        %v8414 = vadd.f32 %v8113, %v8330
        %v8415 = vadd.f32 %v8114, %v8334
        %v8416 = vadd.f32 %v8115, %v8334
        %v8417 = vadd.f32 %v8116, %v8338
        %v8418 = vadd.f32 %v8117, %v8338
        %v8419 = vadd.f32 %v8118, %v8342
        %v8420 = vadd.f32 %v8119, %v8342
        %v8421 = vadd.f32 %v8120, %v8346
        %v8422 = vadd.f32 %v8121, %v8346
        %v8423 = vadd.f32 %v8122, %v8350
        %v8424 = vadd.f32 %v8123, %v8350
        %v8425 = vadd.f32 %v8124, %v8354
        %v8426 = vadd.f32 %v8125, %v8354
        %v8427 = vadd.f32 %v8126, %v8326
        %v8428 = vadd.f32 %v8127, %v8326
        %v8429 = vadd.f32 %v8128, %v8330
        %v8430 = vadd.f32 %v8129, %v8330
        %v8431 = vadd.f32 %v8130, %v8334
        %v8432 = vadd.f32 %v8131, %v8334
        %v8433 = vadd.f32 %v8132, %v8338
        %v8434 = vadd.f32 %v8133, %v8338
        %v8435 = vadd.f32 %v8134, %v8342
        %v8436 = vadd.f32 %v8135, %v8342
        %v8437 = vadd.f32 %v8136, %v8346
        %v8438 = vadd.f32 %v8137, %v8346
        %v8439 = vadd.f32 %v8138, %v8350
        %v8440 = vadd.f32 %v8139, %v8350
        %v8441 = vadd.f32 %v8140, %v8354
        %v8442 = vadd.f32 %v8141, %v8354
        %v8443 = vadd.f32 %v8142, %v8326
        %v8444 = vadd.f32 %v8143, %v8326
        %v8445 = vadd.f32 %v8144, %v8330
        %v8446 = vadd.f32 %v8145, %v8330
        %v8447 = vadd.f32 %v8146, %v8334
        %v8448 = vadd.f32 %v8147, %v8334
        %v8449 = vadd.f32 %v8148, %v8338
        %v8450 = vadd.f32 %v8149, %v8338
        %v8451 = vadd.f32 %v8150, %v8342
        %v8452 = vadd.f32 %v8151, %v8342
        %v8453 = vadd.f32 %v8152, %v8346
        %v8454 = vadd.f32 %v8153, %v8346
        %v8455 = vadd.f32 %v8154, %v8350
        %v8456 = vadd.f32 %v8155, %v8350
        %v8457 = vadd.f32 %v8156, %v8354
        %v8458 = vadd.f32 %v8157, %v8354
        %v8459 = vadd.f32 %v8158, %v8326
        %v8460 = vadd.f32 %v8159, %v8326
        %v8461 = vadd.f32 %v8160, %v8330
        %v8462 = vadd.f32 %v8161, %v8330
        %v8463 = vadd.f32 %v8162, %v8334
        %v8464 = vadd.f32 %v8163, %v8334
        %v8465 = vadd.f32 %v8164, %v8338
        %v8466 = vadd.f32 %v8165, %v8338
        %v8467 = vadd.f32 %v8166, %v8342
        %v8468 = vadd.f32 %v8167, %v8342
        %v8469 = vadd.f32 %v8168, %v8346
        %v8470 = vadd.f32 %v8169, %v8346
        %v8471 = vadd.f32 %v8170, %v8350
        %v8472 = vadd.f32 %v8171, %v8350
        %v8473 = vadd.f32 %v8172, %v8354
        %v8474 = vadd.f32 %v8173, %v8354
        %v8475 = vadd.f32 %v8174, %v8326
        %v8476 = vadd.f32 %v8175, %v8326
        %v8477 = vadd.f32 %v8176, %v8330
        %v8478 = vadd.f32 %v8177, %v8330
        %v8479 = vadd.f32 %v8178, %v8334
        %v8480 = vadd.f32 %v8179, %v8334
        %v8481 = vadd.f32 %v8180, %v8338
        %v8482 = vadd.f32 %v8181, %v8338
        %v8483 = vadd.f32 %v8182, %v8342
        %v8484 = vadd.f32 %v8183, %v8342
        %v8485 = vadd.f32 %v8184, %v8346
        %v8486 = vadd.f32 %v8185, %v8346
        %v8487 = vadd.f32 %v8186, %v8350
        %v8488 = vadd.f32 %v8187, %v8350
        %v8489 = vadd.f32 %v8188, %v8354
        %v8490 = vadd.f32 %v8189, %v8354
        %v8491 = vadd.f32 %v8190, %v8326
        %v8492 = vadd.f32 %v8191, %v8326
        %v8493 = vadd.f32 %v8192, %v8330
        %v8494 = vadd.f32 %v8193, %v8330
        %v8495 = vadd.f32 %v8194, %v8334
        %v8496 = vadd.f32 %v8195, %v8334
        %v8497 = vadd.f32 %v8196, %v8338
        %v8498 = vadd.f32 %v8197, %v8338
        %v8499 = vadd.f32 %v8198, %v8342
        %v8500 = vadd.f32 %v8199, %v8342
        %v8501 = vadd.f32 %v8200, %v8346
        %v8502 = vadd.f32 %v8201, %v8346
        %v8503 = vadd.f32 %v8202, %v8350
        %v8504 = vadd.f32 %v8203, %v8350
        %v8505 = vadd.f32 %v8204, %v8354
        %v8506 = vadd.f32 %v8205, %v8354
        %v8507 = vadd.f32 %v8206, %v8326
        %v8508 = vadd.f32 %v8207, %v8326
        %v8509 = vadd.f32 %v8208, %v8330
        %v8510 = vadd.f32 %v8209, %v8330
        %v8511 = vadd.f32 %v8210, %v8334
        %v8512 = vadd.f32 %v8211, %v8334
        %v8513 = vadd.f32 %v8212, %v8338
        %v8514 = vadd.f32 %v8213, %v8338
        %v8515 = vadd.f32 %v8214, %v8342
        %v8516 = vadd.f32 %v8215, %v8342
        %v8517 = vadd.f32 %v8216, %v8346
        %v8518 = vadd.f32 %v8217, %v8346
        %v8519 = vadd.f32 %v8218, %v8350
        %v8520 = vadd.f32 %v8219, %v8350
        %v8521 = vadd.f32 %v8220, %v8354
        %v8522 = vadd.f32 %v8221, %v8354
        %v8523 = vadd.f32 %v8222, %v8326
        %v8524 = vadd.f32 %v8223, %v8326
        %v8525 = vadd.f32 %v8224, %v8330
        %v8526 = vadd.f32 %v8225, %v8330
        %v8527 = vadd.f32 %v8226, %v8334
        %v8528 = vadd.f32 %v8227, %v8334
        %v8529 = vadd.f32 %v8228, %v8338
        %v8530 = vadd.f32 %v8229, %v8338
        %v8531 = vadd.f32 %v8230, %v8342
        %v8532 = vadd.f32 %v8231, %v8342
        %v8533 = vadd.f32 %v8232, %v8346
        %v8534 = vadd.f32 %v8233, %v8346
        %v8535 = vadd.f32 %v8234, %v8350
        %v8536 = vadd.f32 %v8235, %v8350
        %v8537 = vadd.f32 %v8236, %v8354
        %v8538 = vadd.f32 %v8237, %v8354
        %v8539 = vadd.f32 %v8238, %v8326
        %v8540 = vadd.f32 %v8239, %v8326
        %v8541 = vadd.f32 %v8240, %v8330
        %v8542 = vadd.f32 %v8241, %v8330
        %v8543 = vadd.f32 %v8242, %v8334
        %v8544 = vadd.f32 %v8243, %v8334
        %v8545 = vadd.f32 %v8244, %v8338
        %v8546 = vadd.f32 %v8245, %v8338
        %v8547 = vadd.f32 %v8246, %v8342
        %v8548 = vadd.f32 %v8247, %v8342
        %v8549 = vadd.f32 %v8248, %v8346
        %v8550 = vadd.f32 %v8249, %v8346
        %v8551 = vadd.f32 %v8250, %v8350
        %v8552 = vadd.f32 %v8251, %v8350
        %v8553 = vadd.f32 %v8252, %v8354
        %v8554 = vadd.f32 %v8253, %v8354
        %v8555 = vadd.f32 %v8254, %v8326
        %v8556 = vadd.f32 %v8255, %v8326
        %v8557 = vadd.f32 %v8256, %v8330
        %v8558 = vadd.f32 %v8257, %v8330
        %v8559 = vadd.f32 %v8258, %v8334
        %v8560 = vadd.f32 %v8259, %v8334
        %v8561 = vadd.f32 %v8260, %v8338
        %v8562 = vadd.f32 %v8261, %v8338
        %v8563 = vadd.f32 %v8262, %v8342
        %v8564 = vadd.f32 %v8263, %v8342
        %v8565 = vadd.f32 %v8264, %v8346
        %v8566 = vadd.f32 %v8265, %v8346
        %v8567 = vadd.f32 %v8266, %v8350
        %v8568 = vadd.f32 %v8267, %v8350
        %v8569 = vadd.f32 %v8268, %v8354
        %v8570 = vadd.f32 %v8269, %v8354
        %v8571 = vadd.f32 %v8270, %v8326
        %v8572 = vadd.f32 %v8271, %v8326
        %v8573 = vadd.f32 %v8272, %v8330
        %v8574 = vadd.f32 %v8273, %v8330
        %v8575 = vadd.f32 %v8274, %v8334
        %v8576 = vadd.f32 %v8275, %v8334
        %v8577 = vadd.f32 %v8276, %v8338
        %v8578 = vadd.f32 %v8277, %v8338
        %v8579 = vadd.f32 %v8278, %v8342
        %v8580 = vadd.f32 %v8279, %v8342
        %v8581 = vadd.f32 %v8280, %v8346
        %v8582 = vadd.f32 %v8281, %v8346
        %v8583 = vadd.f32 %v8282, %v8350
        %v8584 = vadd.f32 %v8283, %v8350
        %v8585 = vadd.f32 %v8284, %v8354
        %v8586 = vadd.f32 %v8285, %v8354
        %v8587 = vadd.f32 %v8286, %v8326
        %v8588 = vadd.f32 %v8287, %v8326
        %v8589 = vadd.f32 %v8288, %v8330
        %v8590 = vadd.f32 %v8289, %v8330
        %v8591 = vadd.f32 %v8290, %v8334
        %v8592 = vadd.f32 %v8291, %v8334
        %v8593 = vadd.f32 %v8292, %v8338
        %v8594 = vadd.f32 %v8293, %v8338
        %v8595 = vadd.f32 %v8294, %v8342
        %v8596 = vadd.f32 %v8295, %v8342
        %v8597 = vadd.f32 %v8296, %v8346
        %v8598 = vadd.f32 %v8297, %v8346
        %v8599 = vadd.f32 %v8298, %v8350
        %v8600 = vadd.f32 %v8299, %v8350
        %v8601 = vadd.f32 %v8300, %v8354
        %v8602 = vadd.f32 %v8301, %v8354
        %v8603 = vadd.f32 %v8302, %v8326
        %v8604 = vadd.f32 %v8303, %v8326
        %v8605 = vadd.f32 %v8304, %v8330
        %v8606 = vadd.f32 %v8305, %v8330
        %v8607 = vadd.f32 %v8306, %v8334
        %v8608 = vadd.f32 %v8307, %v8334
        %v8609 = vadd.f32 %v8308, %v8338
        %v8610 = vadd.f32 %v8309, %v8338
        %v8611 = vadd.f32 %v8310, %v8342
        %v8612 = vadd.f32 %v8311, %v8342
        %v8613 = vadd.f32 %v8312, %v8346
        %v8614 = vadd.f32 %v8313, %v8346
        %v8615 = vadd.f32 %v8314, %v8350
        %v8616 = vadd.f32 %v8315, %v8350
        %v8617 = vadd.f32 %v8316, %v8354
        %v8618 = vadd.f32 %v8317, %v8354
        %8635 = vset.pattern.permute.xlu0 0
        %8636 = vperm.xlu0 %8635, %v8363
        %v8637 = vpop.permute.xlu0 %8636
        %8638 = vset.pattern.permute.xlu0 0
        %8639 = vperm.xlu0 %8638, %v8364
        %v8640 = vpop.permute.xlu0 %8639
        %8641 = vset.pattern.permute.xlu0 0
        %8642 = vperm.xlu0 %8641, %v8365
        %v8643 = vpop.permute.xlu0 %8642
        %8644 = vset.pattern.permute.xlu0 0
        %8645 = vperm.xlu0 %8644, %v8366
        %v8646 = vpop.permute.xlu0 %8645
        %8647 = vset.pattern.permute.xlu0 0
        %8648 = vperm.xlu0 %8647, %v8367
        %v8649 = vpop.permute.xlu0 %8648
        %8650 = vset.pattern.permute.xlu0 0
        %8651 = vperm.xlu0 %8650, %v8368
        %v8652 = vpop.permute.xlu0 %8651
        %8653 = vset.pattern.permute.xlu0 0
        %8654 = vperm.xlu0 %8653, %v8369
        %v8655 = vpop.permute.xlu0 %8654
        %8656 = vset.pattern.permute.xlu0 0
        %8657 = vperm.xlu0 %8656, %v8370
        %v8658 = vpop.permute.xlu0 %8657
        %8659 = vset.pattern.permute.xlu0 0
        %8660 = vperm.xlu0 %8659, %v8371
        %v8661 = vpop.permute.xlu0 %8660
        %8662 = vset.pattern.permute.xlu0 0
        %8663 = vperm.xlu0 %8662, %v8372
        %v8664 = vpop.permute.xlu0 %8663
        %8665 = vset.pattern.permute.xlu0 0
        %8666 = vperm.xlu0 %8665, %v8373
        %v8667 = vpop.permute.xlu0 %8666
        %8668 = vset.pattern.permute.xlu0 0
        %8669 = vperm.xlu0 %8668, %v8374
        %v8670 = vpop.permute.xlu0 %8669
        %8671 = vset.pattern.permute.xlu0 0
        %8672 = vperm.xlu0 %8671, %v8375
        %v8673 = vpop.permute.xlu0 %8672
        %8674 = vset.pattern.permute.xlu0 0
        %8675 = vperm.xlu0 %8674, %v8376
        %v8676 = vpop.permute.xlu0 %8675
        %8677 = vset.pattern.permute.xlu0 0
        %8678 = vperm.xlu0 %8677, %v8377
        %v8679 = vpop.permute.xlu0 %8678
        %8680 = vset.pattern.permute.xlu0 0
        %8681 = vperm.xlu0 %8680, %v8378
        %v8682 = vpop.permute.xlu0 %8681
        %v8683 = vlaneseq
        %v8684 = vand.u32 %v8683, 127
        %v8685 = vlaneseq
        %v8686 = vshrl.u32 %v8685, 7
        %v8687 = vsub.s32 %v8684, %v8686
        %v8688 = vrot.slane %v8637, %v8687
        %v8689 = vadd.s32 %v8684, 4294967288
        %v8690 = vlaneseq
        %v8691 = vshrl.u32 %v8690, 7
        %v8692 = vsub.s32 %v8689, %v8691
        %v8693 = vrot.slane %v8640, %v8692
        %vm8694 = vcmask 130112
        %v8695 = vsel %vm8694, %v8693, %v8688
        %v8696 = vlaneseq
        %v8697 = vshrl.u32 %v8696, 7
        %v8698 = vsub.s32 %v8684, %v8697
        %v8699 = vrot.slane %v8643, %v8698
        %v8700 = vlaneseq
        %v8701 = vshrl.u32 %v8700, 7
        %v8702 = vsub.s32 %v8689, %v8701
        %v8703 = vrot.slane %v8646, %v8702
        %v8704 = vsel %vm8694, %v8703, %v8699
        %v8705 = vlaneseq
        %v8706 = vshrl.u32 %v8705, 7
        %v8707 = vsub.s32 %v8684, %v8706
        %v8708 = vrot.slane %v8649, %v8707
        %v8709 = vlaneseq
        %v8710 = vshrl.u32 %v8709, 7
        %v8711 = vsub.s32 %v8689, %v8710
        %v8712 = vrot.slane %v8652, %v8711
        %v8713 = vsel %vm8694, %v8712, %v8708
        %v8714 = vlaneseq
        %v8715 = vshrl.u32 %v8714, 7
        %v8716 = vsub.s32 %v8684, %v8715
        %v8717 = vrot.slane %v8655, %v8716
        %v8718 = vlaneseq
        %v8719 = vshrl.u32 %v8718, 7
        %v8720 = vsub.s32 %v8689, %v8719
        %v8721 = vrot.slane %v8658, %v8720
        %v8722 = vsel %vm8694, %v8721, %v8717
        %v8723 = vlaneseq
        %v8724 = vshrl.u32 %v8723, 7
        %v8725 = vsub.s32 %v8684, %v8724
        %v8726 = vrot.slane %v8661, %v8725
        %v8727 = vlaneseq
        %v8728 = vshrl.u32 %v8727, 7
        %v8729 = vsub.s32 %v8689, %v8728
        %v8730 = vrot.slane %v8664, %v8729
        %v8731 = vsel %vm8694, %v8730, %v8726
        %v8732 = vlaneseq
        %v8733 = vshrl.u32 %v8732, 7
        %v8734 = vsub.s32 %v8684, %v8733
        %v8735 = vrot.slane %v8667, %v8734
        %v8736 = vlaneseq
        %v8737 = vshrl.u32 %v8736, 7
        %v8738 = vsub.s32 %v8689, %v8737
        %v8739 = vrot.slane %v8670, %v8738
        %v8740 = vsel %vm8694, %v8739, %v8735
        %v8741 = vlaneseq
        %v8742 = vshrl.u32 %v8741, 7
        %v8743 = vsub.s32 %v8684, %v8742
        %v8744 = vrot.slane %v8673, %v8743
        %v8745 = vlaneseq
        %v8746 = vshrl.u32 %v8745, 7
        %v8747 = vsub.s32 %v8689, %v8746
        %v8748 = vrot.slane %v8676, %v8747
        %v8749 = vsel %vm8694, %v8748, %v8744
        %v8750 = vlaneseq
        %v8751 = vshrl.u32 %v8750, 7
        %v8752 = vsub.s32 %v8684, %v8751
        %v8753 = vrot.slane %v8679, %v8752
        %v8754 = vlaneseq
        %v8755 = vshrl.u32 %v8754, 7
        %v8756 = vsub.s32 %v8689, %v8755
        %v8757 = vrot.slane %v8682, %v8756
        %v8758 = vsel %vm8694, %v8757, %v8753
        %vm8759 = vcmask 1041409
        %v8760 = vsel %vm8759, %v8704, %v8695
        %vm8761 = vcmask 1042434
        %v8762 = vsel %vm8761, %v8713, %v8760
        %vm8763 = vcmask 1043459
        %v8764 = vsel %vm8763, %v8722, %v8762
        %vm8765 = vcmask 1044484
        %v8766 = vsel %vm8765, %v8731, %v8764
        %vm8767 = vcmask 1045509
        %v8768 = vsel %vm8767, %v8740, %v8766
        %vm8769 = vcmask 1046534
        %v8770 = vsel %vm8769, %v8749, %v8768
        %vm8771 = vcmask 1047559
        %v8772 = vsel %vm8771, %v8758, %v8770
        %8774 = vst.msk [vmem:[%s350] sm:$0xff] %vm890, %v8772
        %8791 = vset.pattern.permute.xlu0 0
        %8792 = vperm.xlu0 %8791, %v8379
        %v8793 = vpop.permute.xlu0 %8792
        %8794 = vset.pattern.permute.xlu0 0
        %8795 = vperm.xlu0 %8794, %v8380
        %v8796 = vpop.permute.xlu0 %8795
        %8797 = vset.pattern.permute.xlu0 0
        %8798 = vperm.xlu0 %8797, %v8381
        %v8799 = vpop.permute.xlu0 %8798
        %8800 = vset.pattern.permute.xlu0 0
        %8801 = vperm.xlu0 %8800, %v8382
        %v8802 = vpop.permute.xlu0 %8801
        %8803 = vset.pattern.permute.xlu0 0
        %8804 = vperm.xlu0 %8803, %v8383
        %v8805 = vpop.permute.xlu0 %8804
        %8806 = vset.pattern.permute.xlu0 0
        %8807 = vperm.xlu0 %8806, %v8384
        %v8808 = vpop.permute.xlu0 %8807
        %8809 = vset.pattern.permute.xlu0 0
        %8810 = vperm.xlu0 %8809, %v8385
        %v8811 = vpop.permute.xlu0 %8810
        %8812 = vset.pattern.permute.xlu0 0
        %8813 = vperm.xlu0 %8812, %v8386
        %v8814 = vpop.permute.xlu0 %8813
        %8815 = vset.pattern.permute.xlu0 0
        %8816 = vperm.xlu0 %8815, %v8387
        %v8817 = vpop.permute.xlu0 %8816
        %8818 = vset.pattern.permute.xlu0 0
        %8819 = vperm.xlu0 %8818, %v8388
        %v8820 = vpop.permute.xlu0 %8819
        %8821 = vset.pattern.permute.xlu0 0
        %8822 = vperm.xlu0 %8821, %v8389
        %v8823 = vpop.permute.xlu0 %8822
        %8824 = vset.pattern.permute.xlu0 0
        %8825 = vperm.xlu0 %8824, %v8390
        %v8826 = vpop.permute.xlu0 %8825
        %8827 = vset.pattern.permute.xlu0 0
        %8828 = vperm.xlu0 %8827, %v8391
        %v8829 = vpop.permute.xlu0 %8828
        %8830 = vset.pattern.permute.xlu0 0
        %8831 = vperm.xlu0 %8830, %v8392
        %v8832 = vpop.permute.xlu0 %8831
        %8833 = vset.pattern.permute.xlu0 0
        %8834 = vperm.xlu0 %8833, %v8393
        %v8835 = vpop.permute.xlu0 %8834
        %8836 = vset.pattern.permute.xlu0 0
        %8837 = vperm.xlu0 %8836, %v8394
        %v8838 = vpop.permute.xlu0 %8837
        %v8839 = vadd.s32 %v8684, 4294967280
        %v8840 = vlaneseq
        %v8841 = vshrl.u32 %v8840, 7
        %v8842 = vsub.s32 %v8839, %v8841
        %v8843 = vrot.slane %v8793, %v8842
        %v8844 = vadd.s32 %v8684, 4294967272
        %v8845 = vlaneseq
        %v8846 = vshrl.u32 %v8845, 7
        %v8847 = vsub.s32 %v8844, %v8846
        %v8848 = vrot.slane %v8796, %v8847
        %vm8849 = vcmask 261312
        %v8850 = vsel %vm8849, %v8848, %v8843
        %v8851 = vlaneseq
        %v8852 = vshrl.u32 %v8851, 7
        %v8853 = vsub.s32 %v8839, %v8852
        %v8854 = vrot.slane %v8799, %v8853
        %v8855 = vlaneseq
        %v8856 = vshrl.u32 %v8855, 7
        %v8857 = vsub.s32 %v8844, %v8856
        %v8858 = vrot.slane %v8802, %v8857
        %v8859 = vsel %vm8849, %v8858, %v8854
        %v8860 = vlaneseq
        %v8861 = vshrl.u32 %v8860, 7
        %v8862 = vsub.s32 %v8839, %v8861
        %v8863 = vrot.slane %v8805, %v8862
        %v8864 = vlaneseq
        %v8865 = vshrl.u32 %v8864, 7
        %v8866 = vsub.s32 %v8844, %v8865
        %v8867 = vrot.slane %v8808, %v8866
        %v8868 = vsel %vm8849, %v8867, %v8863
        %v8869 = vlaneseq
        %v8870 = vshrl.u32 %v8869, 7
        %v8871 = vsub.s32 %v8839, %v8870
        %v8872 = vrot.slane %v8811, %v8871
        %v8873 = vlaneseq
        %v8874 = vshrl.u32 %v8873, 7
        %v8875 = vsub.s32 %v8844, %v8874
        %v8876 = vrot.slane %v8814, %v8875
        %v8877 = vsel %vm8849, %v8876, %v8872
        %v8878 = vlaneseq
        %v8879 = vshrl.u32 %v8878, 7
        %v8880 = vsub.s32 %v8839, %v8879
        %v8881 = vrot.slane %v8817, %v8880
        %v8882 = vlaneseq
        %v8883 = vshrl.u32 %v8882, 7
        %v8884 = vsub.s32 %v8844, %v8883
        %v8885 = vrot.slane %v8820, %v8884
        %v8886 = vsel %vm8849, %v8885, %v8881
        %v8887 = vlaneseq
        %v8888 = vshrl.u32 %v8887, 7
        %v8889 = vsub.s32 %v8839, %v8888
        %v8890 = vrot.slane %v8823, %v8889
        %v8891 = vlaneseq
        %v8892 = vshrl.u32 %v8891, 7
        %v8893 = vsub.s32 %v8844, %v8892
        %v8894 = vrot.slane %v8826, %v8893
        %v8895 = vsel %vm8849, %v8894, %v8890
        %v8896 = vlaneseq
        %v8897 = vshrl.u32 %v8896, 7
        %v8898 = vsub.s32 %v8839, %v8897
        %v8899 = vrot.slane %v8829, %v8898
        %v8900 = vlaneseq
        %v8901 = vshrl.u32 %v8900, 7
        %v8902 = vsub.s32 %v8844, %v8901
        %v8903 = vrot.slane %v8832, %v8902
        %v8904 = vsel %vm8849, %v8903, %v8899
        %v8905 = vlaneseq
        %v8906 = vshrl.u32 %v8905, 7
        %v8907 = vsub.s32 %v8839, %v8906
        %v8908 = vrot.slane %v8835, %v8907
        %v8909 = vlaneseq
        %v8910 = vshrl.u32 %v8909, 7
        %v8911 = vsub.s32 %v8844, %v8910
        %v8912 = vrot.slane %v8838, %v8911
        %v8913 = vsel %vm8849, %v8912, %v8908
        %v8914 = vsel %vm8759, %v8859, %v8850
        %v8915 = vsel %vm8761, %v8868, %v8914
        %v8916 = vsel %vm8763, %v8877, %v8915
        %v8917 = vsel %vm8765, %v8886, %v8916
        %v8918 = vsel %vm8767, %v8895, %v8917
        %v8919 = vsel %vm8769, %v8904, %v8918
        %v8920 = vsel %vm8771, %v8913, %v8919
        %vm8922 = vcmask 261248
        %8923 = vst.msk [vmem:[%s350] sm:$0xff] %vm8922, %v8920
        %8940 = vset.pattern.permute.xlu0 0
        %8941 = vperm.xlu0 %8940, %v8395
        %v8942 = vpop.permute.xlu0 %8941
        %8943 = vset.pattern.permute.xlu0 0
        %8944 = vperm.xlu0 %8943, %v8396
        %v8945 = vpop.permute.xlu0 %8944
        %8946 = vset.pattern.permute.xlu0 0
        %8947 = vperm.xlu0 %8946, %v8397
        %v8948 = vpop.permute.xlu0 %8947
        %8949 = vset.pattern.permute.xlu0 0
        %8950 = vperm.xlu0 %8949, %v8398
        %v8951 = vpop.permute.xlu0 %8950
        %8952 = vset.pattern.permute.xlu0 0
        %8953 = vperm.xlu0 %8952, %v8399
        %v8954 = vpop.permute.xlu0 %8953
        %8955 = vset.pattern.permute.xlu0 0
        %8956 = vperm.xlu0 %8955, %v8400
        %v8957 = vpop.permute.xlu0 %8956
        %8958 = vset.pattern.permute.xlu0 0
        %8959 = vperm.xlu0 %8958, %v8401
        %v8960 = vpop.permute.xlu0 %8959
        %8961 = vset.pattern.permute.xlu0 0
        %8962 = vperm.xlu0 %8961, %v8402
        %v8963 = vpop.permute.xlu0 %8962
        %8964 = vset.pattern.permute.xlu0 0
        %8965 = vperm.xlu0 %8964, %v8403
        %v8966 = vpop.permute.xlu0 %8965
        %8967 = vset.pattern.permute.xlu0 0
        %8968 = vperm.xlu0 %8967, %v8404
        %v8969 = vpop.permute.xlu0 %8968
        %8970 = vset.pattern.permute.xlu0 0
        %8971 = vperm.xlu0 %8970, %v8405
        %v8972 = vpop.permute.xlu0 %8971
        %8973 = vset.pattern.permute.xlu0 0
        %8974 = vperm.xlu0 %8973, %v8406
        %v8975 = vpop.permute.xlu0 %8974
        %8976 = vset.pattern.permute.xlu0 0
        %8977 = vperm.xlu0 %8976, %v8407
        %v8978 = vpop.permute.xlu0 %8977
        %8979 = vset.pattern.permute.xlu0 0
        %8980 = vperm.xlu0 %8979, %v8408
        %v8981 = vpop.permute.xlu0 %8980
        %8982 = vset.pattern.permute.xlu0 0
        %8983 = vperm.xlu0 %8982, %v8409
        %v8984 = vpop.permute.xlu0 %8983
        %8985 = vset.pattern.permute.xlu0 0
        %8986 = vperm.xlu0 %8985, %v8410
        %v8987 = vpop.permute.xlu0 %8986
        %v8988 = vadd.s32 %v8684, 4294967264
        %v8989 = vlaneseq
        %v8990 = vshrl.u32 %v8989, 7
        %v8991 = vsub.s32 %v8988, %v8990
        %v8992 = vrot.slane %v8942, %v8991
        %v8993 = vadd.s32 %v8684, 4294967256
        %v8994 = vlaneseq
        %v8995 = vshrl.u32 %v8994, 7
        %v8996 = vsub.s32 %v8993, %v8995
        %v8997 = vrot.slane %v8945, %v8996
        %vm8998 = vcmask 392512
        %v8999 = vsel %vm8998, %v8997, %v8992
        %v9000 = vlaneseq
        %v9001 = vshrl.u32 %v9000, 7
        %v9002 = vsub.s32 %v8988, %v9001
        %v9003 = vrot.slane %v8948, %v9002
        %v9004 = vlaneseq
        %v9005 = vshrl.u32 %v9004, 7
        %v9006 = vsub.s32 %v8993, %v9005
        %v9007 = vrot.slane %v8951, %v9006
        %v9008 = vsel %vm8998, %v9007, %v9003
        %v9009 = vlaneseq
        %v9010 = vshrl.u32 %v9009, 7
        %v9011 = vsub.s32 %v8988, %v9010
        %v9012 = vrot.slane %v8954, %v9011
        %v9013 = vlaneseq
        %v9014 = vshrl.u32 %v9013, 7
        %v9015 = vsub.s32 %v8993, %v9014
        %v9016 = vrot.slane %v8957, %v9015
        %v9017 = vsel %vm8998, %v9016, %v9012
        %v9018 = vlaneseq
        %v9019 = vshrl.u32 %v9018, 7
        %v9020 = vsub.s32 %v8988, %v9019
        %v9021 = vrot.slane %v8960, %v9020
        %v9022 = vlaneseq
        %v9023 = vshrl.u32 %v9022, 7
        %v9024 = vsub.s32 %v8993, %v9023
        %v9025 = vrot.slane %v8963, %v9024
        %v9026 = vsel %vm8998, %v9025, %v9021
        %v9027 = vlaneseq
        %v9028 = vshrl.u32 %v9027, 7
        %v9029 = vsub.s32 %v8988, %v9028
        %v9030 = vrot.slane %v8966, %v9029
        %v9031 = vlaneseq
        %v9032 = vshrl.u32 %v9031, 7
        %v9033 = vsub.s32 %v8993, %v9032
        %v9034 = vrot.slane %v8969, %v9033
        %v9035 = vsel %vm8998, %v9034, %v9030
        %v9036 = vlaneseq
        %v9037 = vshrl.u32 %v9036, 7
        %v9038 = vsub.s32 %v8988, %v9037
        %v9039 = vrot.slane %v8972, %v9038
        %v9040 = vlaneseq
        %v9041 = vshrl.u32 %v9040, 7
        %v9042 = vsub.s32 %v8993, %v9041
        %v9043 = vrot.slane %v8975, %v9042
        %v9044 = vsel %vm8998, %v9043, %v9039
        %v9045 = vlaneseq
        %v9046 = vshrl.u32 %v9045, 7
        %v9047 = vsub.s32 %v8988, %v9046
        %v9048 = vrot.slane %v8978, %v9047
        %v9049 = vlaneseq
        %v9050 = vshrl.u32 %v9049, 7
        %v9051 = vsub.s32 %v8993, %v9050
        %v9052 = vrot.slane %v8981, %v9051
        %v9053 = vsel %vm8998, %v9052, %v9048
        %v9054 = vlaneseq
        %v9055 = vshrl.u32 %v9054, 7
        %v9056 = vsub.s32 %v8988, %v9055
        %v9057 = vrot.slane %v8984, %v9056
        %v9058 = vlaneseq
        %v9059 = vshrl.u32 %v9058, 7
        %v9060 = vsub.s32 %v8993, %v9059
        %v9061 = vrot.slane %v8987, %v9060
        %v9062 = vsel %vm8998, %v9061, %v9057
        %v9063 = vsel %vm8759, %v9008, %v8999
        %v9064 = vsel %vm8761, %v9017, %v9063
        %v9065 = vsel %vm8763, %v9026, %v9064
        %v9066 = vsel %vm8765, %v9035, %v9065
        %v9067 = vsel %vm8767, %v9044, %v9066
        %v9068 = vsel %vm8769, %v9053, %v9067
        %v9069 = vsel %vm8771, %v9062, %v9068
        %vm9071 = vcmask 392448
        %9072 = vst.msk [vmem:[%s350] sm:$0xff] %vm9071, %v9069
        %9089 = vset.pattern.permute.xlu0 0
        %9090 = vperm.xlu0 %9089, %v8411
        %v9091 = vpop.permute.xlu0 %9090
        %9092 = vset.pattern.permute.xlu0 0
        %9093 = vperm.xlu0 %9092, %v8412
        %v9094 = vpop.permute.xlu0 %9093
        %9095 = vset.pattern.permute.xlu0 0
        %9096 = vperm.xlu0 %9095, %v8413
        %v9097 = vpop.permute.xlu0 %9096
        %9098 = vset.pattern.permute.xlu0 0
        %9099 = vperm.xlu0 %9098, %v8414
        %v9100 = vpop.permute.xlu0 %9099
        %9101 = vset.pattern.permute.xlu0 0
        %9102 = vperm.xlu0 %9101, %v8415
        %v9103 = vpop.permute.xlu0 %9102
        %9104 = vset.pattern.permute.xlu0 0
        %9105 = vperm.xlu0 %9104, %v8416
        %v9106 = vpop.permute.xlu0 %9105
        %9107 = vset.pattern.permute.xlu0 0
        %9108 = vperm.xlu0 %9107, %v8417
        %v9109 = vpop.permute.xlu0 %9108
        %9110 = vset.pattern.permute.xlu0 0
        %9111 = vperm.xlu0 %9110, %v8418
        %v9112 = vpop.permute.xlu0 %9111
        %9113 = vset.pattern.permute.xlu0 0
        %9114 = vperm.xlu0 %9113, %v8419
        %v9115 = vpop.permute.xlu0 %9114
        %9116 = vset.pattern.permute.xlu0 0
        %9117 = vperm.xlu0 %9116, %v8420
        %v9118 = vpop.permute.xlu0 %9117
        %9119 = vset.pattern.permute.xlu0 0
        %9120 = vperm.xlu0 %9119, %v8421
        %v9121 = vpop.permute.xlu0 %9120
        %9122 = vset.pattern.permute.xlu0 0
        %9123 = vperm.xlu0 %9122, %v8422
        %v9124 = vpop.permute.xlu0 %9123
        %9125 = vset.pattern.permute.xlu0 0
        %9126 = vperm.xlu0 %9125, %v8423
        %v9127 = vpop.permute.xlu0 %9126
        %9128 = vset.pattern.permute.xlu0 0
        %9129 = vperm.xlu0 %9128, %v8424
        %v9130 = vpop.permute.xlu0 %9129
        %9131 = vset.pattern.permute.xlu0 0
        %9132 = vperm.xlu0 %9131, %v8425
        %v9133 = vpop.permute.xlu0 %9132
        %9134 = vset.pattern.permute.xlu0 0
        %9135 = vperm.xlu0 %9134, %v8426
        %v9136 = vpop.permute.xlu0 %9135
        %v9137 = vadd.s32 %v8684, 4294967248
        %v9138 = vlaneseq
        %v9139 = vshrl.u32 %v9138, 7
        %v9140 = vsub.s32 %v9137, %v9139
        %v9141 = vrot.slane %v9091, %v9140
        %v9142 = vadd.s32 %v8684, 4294967240
        %v9143 = vlaneseq
        %v9144 = vshrl.u32 %v9143, 7
        %v9145 = vsub.s32 %v9142, %v9144
        %v9146 = vrot.slane %v9094, %v9145
        %vm9147 = vcmask 523712
        %v9148 = vsel %vm9147, %v9146, %v9141
        %v9149 = vlaneseq
        %v9150 = vshrl.u32 %v9149, 7
        %v9151 = vsub.s32 %v9137, %v9150
        %v9152 = vrot.slane %v9097, %v9151
        %v9153 = vlaneseq
        %v9154 = vshrl.u32 %v9153, 7
        %v9155 = vsub.s32 %v9142, %v9154
        %v9156 = vrot.slane %v9100, %v9155
        %v9157 = vsel %vm9147, %v9156, %v9152
        %v9158 = vlaneseq
        %v9159 = vshrl.u32 %v9158, 7
        %v9160 = vsub.s32 %v9137, %v9159
        %v9161 = vrot.slane %v9103, %v9160
        %v9162 = vlaneseq
        %v9163 = vshrl.u32 %v9162, 7
        %v9164 = vsub.s32 %v9142, %v9163
        %v9165 = vrot.slane %v9106, %v9164
        %v9166 = vsel %vm9147, %v9165, %v9161
        %v9167 = vlaneseq
        %v9168 = vshrl.u32 %v9167, 7
        %v9169 = vsub.s32 %v9137, %v9168
        %v9170 = vrot.slane %v9109, %v9169
        %v9171 = vlaneseq
        %v9172 = vshrl.u32 %v9171, 7
        %v9173 = vsub.s32 %v9142, %v9172
        %v9174 = vrot.slane %v9112, %v9173
        %v9175 = vsel %vm9147, %v9174, %v9170
        %v9176 = vlaneseq
        %v9177 = vshrl.u32 %v9176, 7
        %v9178 = vsub.s32 %v9137, %v9177
        %v9179 = vrot.slane %v9115, %v9178
        %v9180 = vlaneseq
        %v9181 = vshrl.u32 %v9180, 7
        %v9182 = vsub.s32 %v9142, %v9181
        %v9183 = vrot.slane %v9118, %v9182
        %v9184 = vsel %vm9147, %v9183, %v9179
        %v9185 = vlaneseq
        %v9186 = vshrl.u32 %v9185, 7
        %v9187 = vsub.s32 %v9137, %v9186
        %v9188 = vrot.slane %v9121, %v9187
        %v9189 = vlaneseq
        %v9190 = vshrl.u32 %v9189, 7
        %v9191 = vsub.s32 %v9142, %v9190
        %v9192 = vrot.slane %v9124, %v9191
        %v9193 = vsel %vm9147, %v9192, %v9188
        %v9194 = vlaneseq
        %v9195 = vshrl.u32 %v9194, 7
        %v9196 = vsub.s32 %v9137, %v9195
        %v9197 = vrot.slane %v9127, %v9196
        %v9198 = vlaneseq
        %v9199 = vshrl.u32 %v9198, 7
        %v9200 = vsub.s32 %v9142, %v9199
        %v9201 = vrot.slane %v9130, %v9200
        %v9202 = vsel %vm9147, %v9201, %v9197
        %v9203 = vlaneseq
        %v9204 = vshrl.u32 %v9203, 7
        %v9205 = vsub.s32 %v9137, %v9204
        %v9206 = vrot.slane %v9133, %v9205
        %v9207 = vlaneseq
        %v9208 = vshrl.u32 %v9207, 7
        %v9209 = vsub.s32 %v9142, %v9208
        %v9210 = vrot.slane %v9136, %v9209
        %v9211 = vsel %vm9147, %v9210, %v9206
        %v9212 = vsel %vm8759, %v9157, %v9148
        %v9213 = vsel %vm8761, %v9166, %v9212
        %v9214 = vsel %vm8763, %v9175, %v9213
        %v9215 = vsel %vm8765, %v9184, %v9214
        %v9216 = vsel %vm8767, %v9193, %v9215
        %v9217 = vsel %vm8769, %v9202, %v9216
        %v9218 = vsel %vm8771, %v9211, %v9217
        %vm9220 = vcmask 523648
        %9221 = vst.msk [vmem:[%s350] sm:$0xff] %vm9220, %v9218
        %9238 = vset.pattern.permute.xlu0 0
        %9239 = vperm.xlu0 %9238, %v8427
        %v9240 = vpop.permute.xlu0 %9239
        %9241 = vset.pattern.permute.xlu0 0
        %9242 = vperm.xlu0 %9241, %v8428
        %v9243 = vpop.permute.xlu0 %9242
        %9244 = vset.pattern.permute.xlu0 0
        %9245 = vperm.xlu0 %9244, %v8429
        %v9246 = vpop.permute.xlu0 %9245
        %9247 = vset.pattern.permute.xlu0 0
        %9248 = vperm.xlu0 %9247, %v8430
        %v9249 = vpop.permute.xlu0 %9248
        %9250 = vset.pattern.permute.xlu0 0
        %9251 = vperm.xlu0 %9250, %v8431
        %v9252 = vpop.permute.xlu0 %9251
        %9253 = vset.pattern.permute.xlu0 0
        %9254 = vperm.xlu0 %9253, %v8432
        %v9255 = vpop.permute.xlu0 %9254
        %9256 = vset.pattern.permute.xlu0 0
        %9257 = vperm.xlu0 %9256, %v8433
        %v9258 = vpop.permute.xlu0 %9257
        %9259 = vset.pattern.permute.xlu0 0
        %9260 = vperm.xlu0 %9259, %v8434
        %v9261 = vpop.permute.xlu0 %9260
        %9262 = vset.pattern.permute.xlu0 0
        %9263 = vperm.xlu0 %9262, %v8435
        %v9264 = vpop.permute.xlu0 %9263
        %9265 = vset.pattern.permute.xlu0 0
        %9266 = vperm.xlu0 %9265, %v8436
        %v9267 = vpop.permute.xlu0 %9266
        %9268 = vset.pattern.permute.xlu0 0
        %9269 = vperm.xlu0 %9268, %v8437
        %v9270 = vpop.permute.xlu0 %9269
        %9271 = vset.pattern.permute.xlu0 0
        %9272 = vperm.xlu0 %9271, %v8438
        %v9273 = vpop.permute.xlu0 %9272
        %9274 = vset.pattern.permute.xlu0 0
        %9275 = vperm.xlu0 %9274, %v8439
        %v9276 = vpop.permute.xlu0 %9275
        %9277 = vset.pattern.permute.xlu0 0
        %9278 = vperm.xlu0 %9277, %v8440
        %v9279 = vpop.permute.xlu0 %9278
        %9280 = vset.pattern.permute.xlu0 0
        %9281 = vperm.xlu0 %9280, %v8441
        %v9282 = vpop.permute.xlu0 %9281
        %9283 = vset.pattern.permute.xlu0 0
        %9284 = vperm.xlu0 %9283, %v8442
        %v9285 = vpop.permute.xlu0 %9284
        %v9286 = vadd.s32 %v8684, 4294967232
        %v9287 = vlaneseq
        %v9288 = vshrl.u32 %v9287, 7
        %v9289 = vsub.s32 %v9286, %v9288
        %v9290 = vrot.slane %v9240, %v9289
        %v9291 = vadd.s32 %v8684, 4294967224
        %v9292 = vlaneseq
        %v9293 = vshrl.u32 %v9292, 7
        %v9294 = vsub.s32 %v9291, %v9293
        %v9295 = vrot.slane %v9243, %v9294
        %vm9296 = vcmask 654912
        %v9297 = vsel %vm9296, %v9295, %v9290
        %v9298 = vlaneseq
        %v9299 = vshrl.u32 %v9298, 7
        %v9300 = vsub.s32 %v9286, %v9299
        %v9301 = vrot.slane %v9246, %v9300
        %v9302 = vlaneseq
        %v9303 = vshrl.u32 %v9302, 7
        %v9304 = vsub.s32 %v9291, %v9303
        %v9305 = vrot.slane %v9249, %v9304
        %v9306 = vsel %vm9296, %v9305, %v9301
        %v9307 = vlaneseq
        %v9308 = vshrl.u32 %v9307, 7
        %v9309 = vsub.s32 %v9286, %v9308
        %v9310 = vrot.slane %v9252, %v9309
        %v9311 = vlaneseq
        %v9312 = vshrl.u32 %v9311, 7
        %v9313 = vsub.s32 %v9291, %v9312
        %v9314 = vrot.slane %v9255, %v9313
        %v9315 = vsel %vm9296, %v9314, %v9310
        %v9316 = vlaneseq
        %v9317 = vshrl.u32 %v9316, 7
        %v9318 = vsub.s32 %v9286, %v9317
        %v9319 = vrot.slane %v9258, %v9318
        %v9320 = vlaneseq
        %v9321 = vshrl.u32 %v9320, 7
        %v9322 = vsub.s32 %v9291, %v9321
        %v9323 = vrot.slane %v9261, %v9322
        %v9324 = vsel %vm9296, %v9323, %v9319
        %v9325 = vlaneseq
        %v9326 = vshrl.u32 %v9325, 7
        %v9327 = vsub.s32 %v9286, %v9326
        %v9328 = vrot.slane %v9264, %v9327
        %v9329 = vlaneseq
        %v9330 = vshrl.u32 %v9329, 7
        %v9331 = vsub.s32 %v9291, %v9330
        %v9332 = vrot.slane %v9267, %v9331
        %v9333 = vsel %vm9296, %v9332, %v9328
        %v9334 = vlaneseq
        %v9335 = vshrl.u32 %v9334, 7
        %v9336 = vsub.s32 %v9286, %v9335
        %v9337 = vrot.slane %v9270, %v9336
        %v9338 = vlaneseq
        %v9339 = vshrl.u32 %v9338, 7
        %v9340 = vsub.s32 %v9291, %v9339
        %v9341 = vrot.slane %v9273, %v9340
        %v9342 = vsel %vm9296, %v9341, %v9337
        %v9343 = vlaneseq
        %v9344 = vshrl.u32 %v9343, 7
        %v9345 = vsub.s32 %v9286, %v9344
        %v9346 = vrot.slane %v9276, %v9345
        %v9347 = vlaneseq
        %v9348 = vshrl.u32 %v9347, 7
        %v9349 = vsub.s32 %v9291, %v9348
        %v9350 = vrot.slane %v9279, %v9349
        %v9351 = vsel %vm9296, %v9350, %v9346
        %v9352 = vlaneseq
        %v9353 = vshrl.u32 %v9352, 7
        %v9354 = vsub.s32 %v9286, %v9353
        %v9355 = vrot.slane %v9282, %v9354
        %v9356 = vlaneseq
        %v9357 = vshrl.u32 %v9356, 7
        %v9358 = vsub.s32 %v9291, %v9357
        %v9359 = vrot.slane %v9285, %v9358
        %v9360 = vsel %vm9296, %v9359, %v9355
        %v9361 = vsel %vm8759, %v9306, %v9297
        %v9362 = vsel %vm8761, %v9315, %v9361
        %v9363 = vsel %vm8763, %v9324, %v9362
        %v9364 = vsel %vm8765, %v9333, %v9363
        %v9365 = vsel %vm8767, %v9342, %v9364
        %v9366 = vsel %vm8769, %v9351, %v9365
        %v9367 = vsel %vm8771, %v9360, %v9366
        %vm9369 = vcmask 654848
        %9370 = vst.msk [vmem:[%s350] sm:$0xff] %vm9369, %v9367
        %9387 = vset.pattern.permute.xlu0 0
        %9388 = vperm.xlu0 %9387, %v8443
        %v9389 = vpop.permute.xlu0 %9388
        %9390 = vset.pattern.permute.xlu0 0
        %9391 = vperm.xlu0 %9390, %v8444
        %v9392 = vpop.permute.xlu0 %9391
        %9393 = vset.pattern.permute.xlu0 0
        %9394 = vperm.xlu0 %9393, %v8445
        %v9395 = vpop.permute.xlu0 %9394
        %9396 = vset.pattern.permute.xlu0 0
        %9397 = vperm.xlu0 %9396, %v8446
        %v9398 = vpop.permute.xlu0 %9397
        %9399 = vset.pattern.permute.xlu0 0
        %9400 = vperm.xlu0 %9399, %v8447
        %v9401 = vpop.permute.xlu0 %9400
        %9402 = vset.pattern.permute.xlu0 0
        %9403 = vperm.xlu0 %9402, %v8448
        %v9404 = vpop.permute.xlu0 %9403
        %9405 = vset.pattern.permute.xlu0 0
        %9406 = vperm.xlu0 %9405, %v8449
        %v9407 = vpop.permute.xlu0 %9406
        %9408 = vset.pattern.permute.xlu0 0
        %9409 = vperm.xlu0 %9408, %v8450
        %v9410 = vpop.permute.xlu0 %9409
        %9411 = vset.pattern.permute.xlu0 0
        %9412 = vperm.xlu0 %9411, %v8451
        %v9413 = vpop.permute.xlu0 %9412
        %9414 = vset.pattern.permute.xlu0 0
        %9415 = vperm.xlu0 %9414, %v8452
        %v9416 = vpop.permute.xlu0 %9415
        %9417 = vset.pattern.permute.xlu0 0
        %9418 = vperm.xlu0 %9417, %v8453
        %v9419 = vpop.permute.xlu0 %9418
        %9420 = vset.pattern.permute.xlu0 0
        %9421 = vperm.xlu0 %9420, %v8454
        %v9422 = vpop.permute.xlu0 %9421
        %9423 = vset.pattern.permute.xlu0 0
        %9424 = vperm.xlu0 %9423, %v8455
        %v9425 = vpop.permute.xlu0 %9424
        %9426 = vset.pattern.permute.xlu0 0
        %9427 = vperm.xlu0 %9426, %v8456
        %v9428 = vpop.permute.xlu0 %9427
        %9429 = vset.pattern.permute.xlu0 0
        %9430 = vperm.xlu0 %9429, %v8457
        %v9431 = vpop.permute.xlu0 %9430
        %9432 = vset.pattern.permute.xlu0 0
        %9433 = vperm.xlu0 %9432, %v8458
        %v9434 = vpop.permute.xlu0 %9433
        %v9435 = vadd.s32 %v8684, 4294967216
        %v9436 = vlaneseq
        %v9437 = vshrl.u32 %v9436, 7
        %v9438 = vsub.s32 %v9435, %v9437
        %v9439 = vrot.slane %v9389, %v9438
        %v9440 = vadd.s32 %v8684, 4294967208
        %v9441 = vlaneseq
        %v9442 = vshrl.u32 %v9441, 7
        %v9443 = vsub.s32 %v9440, %v9442
        %v9444 = vrot.slane %v9392, %v9443
        %vm9445 = vcmask 786112
        %v9446 = vsel %vm9445, %v9444, %v9439
        %v9447 = vlaneseq
        %v9448 = vshrl.u32 %v9447, 7
        %v9449 = vsub.s32 %v9435, %v9448
        %v9450 = vrot.slane %v9395, %v9449
        %v9451 = vlaneseq
        %v9452 = vshrl.u32 %v9451, 7
        %v9453 = vsub.s32 %v9440, %v9452
        %v9454 = vrot.slane %v9398, %v9453
        %v9455 = vsel %vm9445, %v9454, %v9450
        %v9456 = vlaneseq
        %v9457 = vshrl.u32 %v9456, 7
        %v9458 = vsub.s32 %v9435, %v9457
        %v9459 = vrot.slane %v9401, %v9458
        %v9460 = vlaneseq
        %v9461 = vshrl.u32 %v9460, 7
        %v9462 = vsub.s32 %v9440, %v9461
        %v9463 = vrot.slane %v9404, %v9462
        %v9464 = vsel %vm9445, %v9463, %v9459
        %v9465 = vlaneseq
        %v9466 = vshrl.u32 %v9465, 7
        %v9467 = vsub.s32 %v9435, %v9466
        %v9468 = vrot.slane %v9407, %v9467
        %v9469 = vlaneseq
        %v9470 = vshrl.u32 %v9469, 7
        %v9471 = vsub.s32 %v9440, %v9470
        %v9472 = vrot.slane %v9410, %v9471
        %v9473 = vsel %vm9445, %v9472, %v9468
        %v9474 = vlaneseq
        %v9475 = vshrl.u32 %v9474, 7
        %v9476 = vsub.s32 %v9435, %v9475
        %v9477 = vrot.slane %v9413, %v9476
        %v9478 = vlaneseq
        %v9479 = vshrl.u32 %v9478, 7
        %v9480 = vsub.s32 %v9440, %v9479
        %v9481 = vrot.slane %v9416, %v9480
        %v9482 = vsel %vm9445, %v9481, %v9477
        %v9483 = vlaneseq
        %v9484 = vshrl.u32 %v9483, 7
        %v9485 = vsub.s32 %v9435, %v9484
        %v9486 = vrot.slane %v9419, %v9485
        %v9487 = vlaneseq
        %v9488 = vshrl.u32 %v9487, 7
        %v9489 = vsub.s32 %v9440, %v9488
        %v9490 = vrot.slane %v9422, %v9489
        %v9491 = vsel %vm9445, %v9490, %v9486
        %v9492 = vlaneseq
        %v9493 = vshrl.u32 %v9492, 7
        %v9494 = vsub.s32 %v9435, %v9493
        %v9495 = vrot.slane %v9425, %v9494
        %v9496 = vlaneseq
        %v9497 = vshrl.u32 %v9496, 7
        %v9498 = vsub.s32 %v9440, %v9497
        %v9499 = vrot.slane %v9428, %v9498
        %v9500 = vsel %vm9445, %v9499, %v9495
        %v9501 = vlaneseq
        %v9502 = vshrl.u32 %v9501, 7
        %v9503 = vsub.s32 %v9435, %v9502
        %v9504 = vrot.slane %v9431, %v9503
        %v9505 = vlaneseq
        %v9506 = vshrl.u32 %v9505, 7
        %v9507 = vsub.s32 %v9440, %v9506
        %v9508 = vrot.slane %v9434, %v9507
        %v9509 = vsel %vm9445, %v9508, %v9504
        %v9510 = vsel %vm8759, %v9455, %v9446
        %v9511 = vsel %vm8761, %v9464, %v9510
        %v9512 = vsel %vm8763, %v9473, %v9511
        %v9513 = vsel %vm8765, %v9482, %v9512
        %v9514 = vsel %vm8767, %v9491, %v9513
        %v9515 = vsel %vm8769, %v9500, %v9514
        %v9516 = vsel %vm8771, %v9509, %v9515
        %vm9518 = vcmask 786048
        %9519 = vst.msk [vmem:[%s350] sm:$0xff] %vm9518, %v9516
        %9536 = vset.pattern.permute.xlu0 0
        %9537 = vperm.xlu0 %9536, %v8459
        %v9538 = vpop.permute.xlu0 %9537
        %9539 = vset.pattern.permute.xlu0 0
        %9540 = vperm.xlu0 %9539, %v8460
        %v9541 = vpop.permute.xlu0 %9540
        %9542 = vset.pattern.permute.xlu0 0
        %9543 = vperm.xlu0 %9542, %v8461
        %v9544 = vpop.permute.xlu0 %9543
        %9545 = vset.pattern.permute.xlu0 0
        %9546 = vperm.xlu0 %9545, %v8462
        %v9547 = vpop.permute.xlu0 %9546
        %9548 = vset.pattern.permute.xlu0 0
        %9549 = vperm.xlu0 %9548, %v8463
        %v9550 = vpop.permute.xlu0 %9549
        %9551 = vset.pattern.permute.xlu0 0
        %9552 = vperm.xlu0 %9551, %v8464
        %v9553 = vpop.permute.xlu0 %9552
        %9554 = vset.pattern.permute.xlu0 0
        %9555 = vperm.xlu0 %9554, %v8465
        %v9556 = vpop.permute.xlu0 %9555
        %9557 = vset.pattern.permute.xlu0 0
        %9558 = vperm.xlu0 %9557, %v8466
        %v9559 = vpop.permute.xlu0 %9558
        %9560 = vset.pattern.permute.xlu0 0
        %9561 = vperm.xlu0 %9560, %v8467
        %v9562 = vpop.permute.xlu0 %9561
        %9563 = vset.pattern.permute.xlu0 0
        %9564 = vperm.xlu0 %9563, %v8468
        %v9565 = vpop.permute.xlu0 %9564
        %9566 = vset.pattern.permute.xlu0 0
        %9567 = vperm.xlu0 %9566, %v8469
        %v9568 = vpop.permute.xlu0 %9567
        %9569 = vset.pattern.permute.xlu0 0
        %9570 = vperm.xlu0 %9569, %v8470
        %v9571 = vpop.permute.xlu0 %9570
        %9572 = vset.pattern.permute.xlu0 0
        %9573 = vperm.xlu0 %9572, %v8471
        %v9574 = vpop.permute.xlu0 %9573
        %9575 = vset.pattern.permute.xlu0 0
        %9576 = vperm.xlu0 %9575, %v8472
        %v9577 = vpop.permute.xlu0 %9576
        %9578 = vset.pattern.permute.xlu0 0
        %9579 = vperm.xlu0 %9578, %v8473
        %v9580 = vpop.permute.xlu0 %9579
        %9581 = vset.pattern.permute.xlu0 0
        %9582 = vperm.xlu0 %9581, %v8474
        %v9583 = vpop.permute.xlu0 %9582
        %v9584 = vadd.s32 %v8684, 4294967200
        %v9585 = vlaneseq
        %v9586 = vshrl.u32 %v9585, 7
        %v9587 = vsub.s32 %v9584, %v9586
        %v9588 = vrot.slane %v9538, %v9587
        %v9589 = vadd.s32 %v8684, 4294967192
        %v9590 = vlaneseq
        %v9591 = vshrl.u32 %v9590, 7
        %v9592 = vsub.s32 %v9589, %v9591
        %v9593 = vrot.slane %v9541, %v9592
        %vm9594 = vcmask 917312
        %v9595 = vsel %vm9594, %v9593, %v9588
        %v9596 = vlaneseq
        %v9597 = vshrl.u32 %v9596, 7
        %v9598 = vsub.s32 %v9584, %v9597
        %v9599 = vrot.slane %v9544, %v9598
        %v9600 = vlaneseq
        %v9601 = vshrl.u32 %v9600, 7
        %v9602 = vsub.s32 %v9589, %v9601
        %v9603 = vrot.slane %v9547, %v9602
        %v9604 = vsel %vm9594, %v9603, %v9599
        %v9605 = vlaneseq
        %v9606 = vshrl.u32 %v9605, 7
        %v9607 = vsub.s32 %v9584, %v9606
        %v9608 = vrot.slane %v9550, %v9607
        %v9609 = vlaneseq
        %v9610 = vshrl.u32 %v9609, 7
        %v9611 = vsub.s32 %v9589, %v9610
        %v9612 = vrot.slane %v9553, %v9611
        %v9613 = vsel %vm9594, %v9612, %v9608
        %v9614 = vlaneseq
        %v9615 = vshrl.u32 %v9614, 7
        %v9616 = vsub.s32 %v9584, %v9615
        %v9617 = vrot.slane %v9556, %v9616
        %v9618 = vlaneseq
        %v9619 = vshrl.u32 %v9618, 7
        %v9620 = vsub.s32 %v9589, %v9619
        %v9621 = vrot.slane %v9559, %v9620
        %v9622 = vsel %vm9594, %v9621, %v9617
        %v9623 = vlaneseq
        %v9624 = vshrl.u32 %v9623, 7
        %v9625 = vsub.s32 %v9584, %v9624
        %v9626 = vrot.slane %v9562, %v9625
        %v9627 = vlaneseq
        %v9628 = vshrl.u32 %v9627, 7
        %v9629 = vsub.s32 %v9589, %v9628
        %v9630 = vrot.slane %v9565, %v9629
        %v9631 = vsel %vm9594, %v9630, %v9626
        %v9632 = vlaneseq
        %v9633 = vshrl.u32 %v9632, 7
        %v9634 = vsub.s32 %v9584, %v9633
        %v9635 = vrot.slane %v9568, %v9634
        %v9636 = vlaneseq
        %v9637 = vshrl.u32 %v9636, 7
        %v9638 = vsub.s32 %v9589, %v9637
        %v9639 = vrot.slane %v9571, %v9638
        %v9640 = vsel %vm9594, %v9639, %v9635
        %v9641 = vlaneseq
        %v9642 = vshrl.u32 %v9641, 7
        %v9643 = vsub.s32 %v9584, %v9642
        %v9644 = vrot.slane %v9574, %v9643
        %v9645 = vlaneseq
        %v9646 = vshrl.u32 %v9645, 7
        %v9647 = vsub.s32 %v9589, %v9646
        %v9648 = vrot.slane %v9577, %v9647
        %v9649 = vsel %vm9594, %v9648, %v9644
        %v9650 = vlaneseq
        %v9651 = vshrl.u32 %v9650, 7
        %v9652 = vsub.s32 %v9584, %v9651
        %v9653 = vrot.slane %v9580, %v9652
        %v9654 = vlaneseq
        %v9655 = vshrl.u32 %v9654, 7
        %v9656 = vsub.s32 %v9589, %v9655
        %v9657 = vrot.slane %v9583, %v9656
        %v9658 = vsel %vm9594, %v9657, %v9653
        %v9659 = vsel %vm8759, %v9604, %v9595
        %v9660 = vsel %vm8761, %v9613, %v9659
        %v9661 = vsel %vm8763, %v9622, %v9660
        %v9662 = vsel %vm8765, %v9631, %v9661
        %v9663 = vsel %vm8767, %v9640, %v9662
        %v9664 = vsel %vm8769, %v9649, %v9663
        %v9665 = vsel %vm8771, %v9658, %v9664
        %vm9667 = vcmask 917248
        %9668 = vst.msk [vmem:[%s350] sm:$0xff] %vm9667, %v9665
        %9685 = vset.pattern.permute.xlu0 0
        %9686 = vperm.xlu0 %9685, %v8475
        %v9687 = vpop.permute.xlu0 %9686
        %9688 = vset.pattern.permute.xlu0 0
        %9689 = vperm.xlu0 %9688, %v8476
        %v9690 = vpop.permute.xlu0 %9689
        %9691 = vset.pattern.permute.xlu0 0
        %9692 = vperm.xlu0 %9691, %v8477
        %v9693 = vpop.permute.xlu0 %9692
        %9694 = vset.pattern.permute.xlu0 0
        %9695 = vperm.xlu0 %9694, %v8478
        %v9696 = vpop.permute.xlu0 %9695
        %9697 = vset.pattern.permute.xlu0 0
        %9698 = vperm.xlu0 %9697, %v8479
        %v9699 = vpop.permute.xlu0 %9698
        %9700 = vset.pattern.permute.xlu0 0
        %9701 = vperm.xlu0 %9700, %v8480
        %v9702 = vpop.permute.xlu0 %9701
        %9703 = vset.pattern.permute.xlu0 0
        %9704 = vperm.xlu0 %9703, %v8481
        %v9705 = vpop.permute.xlu0 %9704
        %9706 = vset.pattern.permute.xlu0 0
        %9707 = vperm.xlu0 %9706, %v8482
        %v9708 = vpop.permute.xlu0 %9707
        %9709 = vset.pattern.permute.xlu0 0
        %9710 = vperm.xlu0 %9709, %v8483
        %v9711 = vpop.permute.xlu0 %9710
        %9712 = vset.pattern.permute.xlu0 0
        %9713 = vperm.xlu0 %9712, %v8484
        %v9714 = vpop.permute.xlu0 %9713
        %9715 = vset.pattern.permute.xlu0 0
        %9716 = vperm.xlu0 %9715, %v8485
        %v9717 = vpop.permute.xlu0 %9716
        %9718 = vset.pattern.permute.xlu0 0
        %9719 = vperm.xlu0 %9718, %v8486
        %v9720 = vpop.permute.xlu0 %9719
        %9721 = vset.pattern.permute.xlu0 0
        %9722 = vperm.xlu0 %9721, %v8487
        %v9723 = vpop.permute.xlu0 %9722
        %9724 = vset.pattern.permute.xlu0 0
        %9725 = vperm.xlu0 %9724, %v8488
        %v9726 = vpop.permute.xlu0 %9725
        %9727 = vset.pattern.permute.xlu0 0
        %9728 = vperm.xlu0 %9727, %v8489
        %v9729 = vpop.permute.xlu0 %9728
        %9730 = vset.pattern.permute.xlu0 0
        %9731 = vperm.xlu0 %9730, %v8490
        %v9732 = vpop.permute.xlu0 %9731
        %v9733 = vadd.s32 %v8684, 4294967184
        %v9734 = vlaneseq
        %v9735 = vshrl.u32 %v9734, 7
        %v9736 = vsub.s32 %v9733, %v9735
        %v9737 = vrot.slane %v9687, %v9736
        %v9738 = vadd.s32 %v8684, 4294967176
        %v9739 = vlaneseq
        %v9740 = vshrl.u32 %v9739, 7
        %v9741 = vsub.s32 %v9738, %v9740
        %v9742 = vrot.slane %v9690, %v9741
        %vm9743 = vcmask 1048512
        %v9744 = vsel %vm9743, %v9742, %v9737
        %v9745 = vlaneseq
        %v9746 = vshrl.u32 %v9745, 7
        %v9747 = vsub.s32 %v9733, %v9746
        %v9748 = vrot.slane %v9693, %v9747
        %v9749 = vlaneseq
        %v9750 = vshrl.u32 %v9749, 7
        %v9751 = vsub.s32 %v9738, %v9750
        %v9752 = vrot.slane %v9696, %v9751
        %v9753 = vsel %vm9743, %v9752, %v9748
        %v9754 = vlaneseq
        %v9755 = vshrl.u32 %v9754, 7
        %v9756 = vsub.s32 %v9733, %v9755
        %v9757 = vrot.slane %v9699, %v9756
        %v9758 = vlaneseq
        %v9759 = vshrl.u32 %v9758, 7
        %v9760 = vsub.s32 %v9738, %v9759
        %v9761 = vrot.slane %v9702, %v9760
        %v9762 = vsel %vm9743, %v9761, %v9757
        %v9763 = vlaneseq
        %v9764 = vshrl.u32 %v9763, 7
        %v9765 = vsub.s32 %v9733, %v9764
        %v9766 = vrot.slane %v9705, %v9765
        %v9767 = vlaneseq
        %v9768 = vshrl.u32 %v9767, 7
        %v9769 = vsub.s32 %v9738, %v9768
        %v9770 = vrot.slane %v9708, %v9769
        %v9771 = vsel %vm9743, %v9770, %v9766
        %v9772 = vlaneseq
        %v9773 = vshrl.u32 %v9772, 7
        %v9774 = vsub.s32 %v9733, %v9773
        %v9775 = vrot.slane %v9711, %v9774
        %v9776 = vlaneseq
        %v9777 = vshrl.u32 %v9776, 7
        %v9778 = vsub.s32 %v9738, %v9777
        %v9779 = vrot.slane %v9714, %v9778
        %v9780 = vsel %vm9743, %v9779, %v9775
        %v9781 = vlaneseq
        %v9782 = vshrl.u32 %v9781, 7
        %v9783 = vsub.s32 %v9733, %v9782
        %v9784 = vrot.slane %v9717, %v9783
        %v9785 = vlaneseq
        %v9786 = vshrl.u32 %v9785, 7
        %v9787 = vsub.s32 %v9738, %v9786
        %v9788 = vrot.slane %v9720, %v9787
        %v9789 = vsel %vm9743, %v9788, %v9784
        %v9790 = vlaneseq
        %v9791 = vshrl.u32 %v9790, 7
        %v9792 = vsub.s32 %v9733, %v9791
        %v9793 = vrot.slane %v9723, %v9792
        %v9794 = vlaneseq
        %v9795 = vshrl.u32 %v9794, 7
        %v9796 = vsub.s32 %v9738, %v9795
        %v9797 = vrot.slane %v9726, %v9796
        %v9798 = vsel %vm9743, %v9797, %v9793
        %v9799 = vlaneseq
        %v9800 = vshrl.u32 %v9799, 7
        %v9801 = vsub.s32 %v9733, %v9800
        %v9802 = vrot.slane %v9729, %v9801
        %v9803 = vlaneseq
        %v9804 = vshrl.u32 %v9803, 7
        %v9805 = vsub.s32 %v9738, %v9804
        %v9806 = vrot.slane %v9732, %v9805
        %v9807 = vsel %vm9743, %v9806, %v9802
        %v9808 = vsel %vm8759, %v9753, %v9744
        %v9809 = vsel %vm8761, %v9762, %v9808
        %v9810 = vsel %vm8763, %v9771, %v9809
        %v9811 = vsel %vm8765, %v9780, %v9810
        %v9812 = vsel %vm8767, %v9789, %v9811
        %v9813 = vsel %vm8769, %v9798, %v9812
        %v9814 = vsel %vm8771, %v9807, %v9813
        %vm9816 = vcmask 1048448
        %9817 = vst.msk [vmem:[%s350] sm:$0xff] %vm9816, %v9814
        %9834 = vset.pattern.permute.xlu0 0
        %9835 = vperm.xlu0 %9834, %v8491
        %v9836 = vpop.permute.xlu0 %9835
        %9837 = vset.pattern.permute.xlu0 0
        %9838 = vperm.xlu0 %9837, %v8492
        %v9839 = vpop.permute.xlu0 %9838
        %9840 = vset.pattern.permute.xlu0 0
        %9841 = vperm.xlu0 %9840, %v8493
        %v9842 = vpop.permute.xlu0 %9841
        %9843 = vset.pattern.permute.xlu0 0
        %9844 = vperm.xlu0 %9843, %v8494
        %v9845 = vpop.permute.xlu0 %9844
        %9846 = vset.pattern.permute.xlu0 0
        %9847 = vperm.xlu0 %9846, %v8495
        %v9848 = vpop.permute.xlu0 %9847
        %9849 = vset.pattern.permute.xlu0 0
        %9850 = vperm.xlu0 %9849, %v8496
        %v9851 = vpop.permute.xlu0 %9850
        %9852 = vset.pattern.permute.xlu0 0
        %9853 = vperm.xlu0 %9852, %v8497
        %v9854 = vpop.permute.xlu0 %9853
        %9855 = vset.pattern.permute.xlu0 0
        %9856 = vperm.xlu0 %9855, %v8498
        %v9857 = vpop.permute.xlu0 %9856
        %9858 = vset.pattern.permute.xlu0 0
        %9859 = vperm.xlu0 %9858, %v8499
        %v9860 = vpop.permute.xlu0 %9859
        %9861 = vset.pattern.permute.xlu0 0
        %9862 = vperm.xlu0 %9861, %v8500
        %v9863 = vpop.permute.xlu0 %9862
        %9864 = vset.pattern.permute.xlu0 0
        %9865 = vperm.xlu0 %9864, %v8501
        %v9866 = vpop.permute.xlu0 %9865
        %9867 = vset.pattern.permute.xlu0 0
        %9868 = vperm.xlu0 %9867, %v8502
        %v9869 = vpop.permute.xlu0 %9868
        %9870 = vset.pattern.permute.xlu0 0
        %9871 = vperm.xlu0 %9870, %v8503
        %v9872 = vpop.permute.xlu0 %9871
        %9873 = vset.pattern.permute.xlu0 0
        %9874 = vperm.xlu0 %9873, %v8504
        %v9875 = vpop.permute.xlu0 %9874
        %9876 = vset.pattern.permute.xlu0 0
        %9877 = vperm.xlu0 %9876, %v8505
        %v9878 = vpop.permute.xlu0 %9877
        %9879 = vset.pattern.permute.xlu0 0
        %9880 = vperm.xlu0 %9879, %v8506
        %v9881 = vpop.permute.xlu0 %9880
        %v9882 = vlaneseq
        %v9883 = vshrl.u32 %v9882, 7
        %v9884 = vsub.s32 %v8684, %v9883
        %v9885 = vrot.slane %v9836, %v9884
        %v9886 = vlaneseq
        %v9887 = vshrl.u32 %v9886, 7
        %v9888 = vsub.s32 %v8689, %v9887
        %v9889 = vrot.slane %v9839, %v9888
        %v9890 = vsel %vm8694, %v9889, %v9885
        %v9891 = vlaneseq
        %v9892 = vshrl.u32 %v9891, 7
        %v9893 = vsub.s32 %v8684, %v9892
        %v9894 = vrot.slane %v9842, %v9893
        %v9895 = vlaneseq
        %v9896 = vshrl.u32 %v9895, 7
        %v9897 = vsub.s32 %v8689, %v9896
        %v9898 = vrot.slane %v9845, %v9897
        %v9899 = vsel %vm8694, %v9898, %v9894
        %v9900 = vlaneseq
        %v9901 = vshrl.u32 %v9900, 7
        %v9902 = vsub.s32 %v8684, %v9901
        %v9903 = vrot.slane %v9848, %v9902
        %v9904 = vlaneseq
        %v9905 = vshrl.u32 %v9904, 7
        %v9906 = vsub.s32 %v8689, %v9905
        %v9907 = vrot.slane %v9851, %v9906
        %v9908 = vsel %vm8694, %v9907, %v9903
        %v9909 = vlaneseq
        %v9910 = vshrl.u32 %v9909, 7
        %v9911 = vsub.s32 %v8684, %v9910
        %v9912 = vrot.slane %v9854, %v9911
        %v9913 = vlaneseq
        %v9914 = vshrl.u32 %v9913, 7
        %v9915 = vsub.s32 %v8689, %v9914
        %v9916 = vrot.slane %v9857, %v9915
        %v9917 = vsel %vm8694, %v9916, %v9912
        %v9918 = vlaneseq
        %v9919 = vshrl.u32 %v9918, 7
        %v9920 = vsub.s32 %v8684, %v9919
        %v9921 = vrot.slane %v9860, %v9920
        %v9922 = vlaneseq
        %v9923 = vshrl.u32 %v9922, 7
        %v9924 = vsub.s32 %v8689, %v9923
        %v9925 = vrot.slane %v9863, %v9924
        %v9926 = vsel %vm8694, %v9925, %v9921
        %v9927 = vlaneseq
        %v9928 = vshrl.u32 %v9927, 7
        %v9929 = vsub.s32 %v8684, %v9928
        %v9930 = vrot.slane %v9866, %v9929
        %v9931 = vlaneseq
        %v9932 = vshrl.u32 %v9931, 7
        %v9933 = vsub.s32 %v8689, %v9932
        %v9934 = vrot.slane %v9869, %v9933
        %v9935 = vsel %vm8694, %v9934, %v9930
        %v9936 = vlaneseq
        %v9937 = vshrl.u32 %v9936, 7
        %v9938 = vsub.s32 %v8684, %v9937
        %v9939 = vrot.slane %v9872, %v9938
        %v9940 = vlaneseq
        %v9941 = vshrl.u32 %v9940, 7
        %v9942 = vsub.s32 %v8689, %v9941
        %v9943 = vrot.slane %v9875, %v9942
        %v9944 = vsel %vm8694, %v9943, %v9939
        %v9945 = vlaneseq
        %v9946 = vshrl.u32 %v9945, 7
        %v9947 = vsub.s32 %v8684, %v9946
        %v9948 = vrot.slane %v9878, %v9947
        %v9949 = vlaneseq
        %v9950 = vshrl.u32 %v9949, 7
        %v9951 = vsub.s32 %v8689, %v9950
        %v9952 = vrot.slane %v9881, %v9951
        %v9953 = vsel %vm8694, %v9952, %v9948
        %v9954 = vsel %vm8759, %v9899, %v9890
        %v9955 = vsel %vm8761, %v9908, %v9954
        %v9956 = vsel %vm8763, %v9917, %v9955
        %v9957 = vsel %vm8765, %v9926, %v9956
        %v9958 = vsel %vm8767, %v9935, %v9957
        %v9959 = vsel %vm8769, %v9944, %v9958
        %v9960 = vsel %vm8771, %v9953, %v9959
        %9962 = vst.msk [vmem:[%s350 + $0x8] sm:$0xff] %vm890, %v9960
        %9979 = vset.pattern.permute.xlu0 0
        %9980 = vperm.xlu0 %9979, %v8507
        %v9981 = vpop.permute.xlu0 %9980
        %9982 = vset.pattern.permute.xlu0 0
        %9983 = vperm.xlu0 %9982, %v8508
        %v9984 = vpop.permute.xlu0 %9983
        %9985 = vset.pattern.permute.xlu0 0
        %9986 = vperm.xlu0 %9985, %v8509
        %v9987 = vpop.permute.xlu0 %9986
        %9988 = vset.pattern.permute.xlu0 0
        %9989 = vperm.xlu0 %9988, %v8510
        %v9990 = vpop.permute.xlu0 %9989
        %9991 = vset.pattern.permute.xlu0 0
        %9992 = vperm.xlu0 %9991, %v8511
        %v9993 = vpop.permute.xlu0 %9992
        %9994 = vset.pattern.permute.xlu0 0
        %9995 = vperm.xlu0 %9994, %v8512
        %v9996 = vpop.permute.xlu0 %9995
        %9997 = vset.pattern.permute.xlu0 0
        %9998 = vperm.xlu0 %9997, %v8513
        %v9999 = vpop.permute.xlu0 %9998
        %10000 = vset.pattern.permute.xlu0 0
        %10001 = vperm.xlu0 %10000, %v8514
        %v10002 = vpop.permute.xlu0 %10001
        %10003 = vset.pattern.permute.xlu0 0
        %10004 = vperm.xlu0 %10003, %v8515
        %v10005 = vpop.permute.xlu0 %10004
        %10006 = vset.pattern.permute.xlu0 0
        %10007 = vperm.xlu0 %10006, %v8516
        %v10008 = vpop.permute.xlu0 %10007
        %10009 = vset.pattern.permute.xlu0 0
        %10010 = vperm.xlu0 %10009, %v8517
        %v10011 = vpop.permute.xlu0 %10010
        %10012 = vset.pattern.permute.xlu0 0
        %10013 = vperm.xlu0 %10012, %v8518
        %v10014 = vpop.permute.xlu0 %10013
        %10015 = vset.pattern.permute.xlu0 0
        %10016 = vperm.xlu0 %10015, %v8519
        %v10017 = vpop.permute.xlu0 %10016
        %10018 = vset.pattern.permute.xlu0 0
        %10019 = vperm.xlu0 %10018, %v8520
        %v10020 = vpop.permute.xlu0 %10019
        %10021 = vset.pattern.permute.xlu0 0
        %10022 = vperm.xlu0 %10021, %v8521
        %v10023 = vpop.permute.xlu0 %10022
        %10024 = vset.pattern.permute.xlu0 0
        %10025 = vperm.xlu0 %10024, %v8522
        %v10026 = vpop.permute.xlu0 %10025
        %v10027 = vlaneseq
        %v10028 = vshrl.u32 %v10027, 7
        %v10029 = vsub.s32 %v8839, %v10028
        %v10030 = vrot.slane %v9981, %v10029
        %v10031 = vlaneseq
        %v10032 = vshrl.u32 %v10031, 7
        %v10033 = vsub.s32 %v8844, %v10032
        %v10034 = vrot.slane %v9984, %v10033
        %v10035 = vsel %vm8849, %v10034, %v10030
        %v10036 = vlaneseq
        %v10037 = vshrl.u32 %v10036, 7
        %v10038 = vsub.s32 %v8839, %v10037
        %v10039 = vrot.slane %v9987, %v10038
        %v10040 = vlaneseq
        %v10041 = vshrl.u32 %v10040, 7
        %v10042 = vsub.s32 %v8844, %v10041
        %v10043 = vrot.slane %v9990, %v10042
        %v10044 = vsel %vm8849, %v10043, %v10039
        %v10045 = vlaneseq
        %v10046 = vshrl.u32 %v10045, 7
        %v10047 = vsub.s32 %v8839, %v10046
        %v10048 = vrot.slane %v9993, %v10047
        %v10049 = vlaneseq
        %v10050 = vshrl.u32 %v10049, 7
        %v10051 = vsub.s32 %v8844, %v10050
        %v10052 = vrot.slane %v9996, %v10051
        %v10053 = vsel %vm8849, %v10052, %v10048
        %v10054 = vlaneseq
        %v10055 = vshrl.u32 %v10054, 7
        %v10056 = vsub.s32 %v8839, %v10055
        %v10057 = vrot.slane %v9999, %v10056
        %v10058 = vlaneseq
        %v10059 = vshrl.u32 %v10058, 7
        %v10060 = vsub.s32 %v8844, %v10059
        %v10061 = vrot.slane %v10002, %v10060
        %v10062 = vsel %vm8849, %v10061, %v10057
        %v10063 = vlaneseq
        %v10064 = vshrl.u32 %v10063, 7
        %v10065 = vsub.s32 %v8839, %v10064
        %v10066 = vrot.slane %v10005, %v10065
        %v10067 = vlaneseq
        %v10068 = vshrl.u32 %v10067, 7
        %v10069 = vsub.s32 %v8844, %v10068
        %v10070 = vrot.slane %v10008, %v10069
        %v10071 = vsel %vm8849, %v10070, %v10066
        %v10072 = vlaneseq
        %v10073 = vshrl.u32 %v10072, 7
        %v10074 = vsub.s32 %v8839, %v10073
        %v10075 = vrot.slane %v10011, %v10074
        %v10076 = vlaneseq
        %v10077 = vshrl.u32 %v10076, 7
        %v10078 = vsub.s32 %v8844, %v10077
        %v10079 = vrot.slane %v10014, %v10078
        %v10080 = vsel %vm8849, %v10079, %v10075
        %v10081 = vlaneseq
        %v10082 = vshrl.u32 %v10081, 7
        %v10083 = vsub.s32 %v8839, %v10082
        %v10084 = vrot.slane %v10017, %v10083
        %v10085 = vlaneseq
        %v10086 = vshrl.u32 %v10085, 7
        %v10087 = vsub.s32 %v8844, %v10086
        %v10088 = vrot.slane %v10020, %v10087
        %v10089 = vsel %vm8849, %v10088, %v10084
        %v10090 = vlaneseq
        %v10091 = vshrl.u32 %v10090, 7
        %v10092 = vsub.s32 %v8839, %v10091
        %v10093 = vrot.slane %v10023, %v10092
        %v10094 = vlaneseq
        %v10095 = vshrl.u32 %v10094, 7
        %v10096 = vsub.s32 %v8844, %v10095
        %v10097 = vrot.slane %v10026, %v10096
        %v10098 = vsel %vm8849, %v10097, %v10093
        %v10099 = vsel %vm8759, %v10044, %v10035
        %v10100 = vsel %vm8761, %v10053, %v10099
        %v10101 = vsel %vm8763, %v10062, %v10100
        %v10102 = vsel %vm8765, %v10071, %v10101
        %v10103 = vsel %vm8767, %v10080, %v10102
        %v10104 = vsel %vm8769, %v10089, %v10103
        %v10105 = vsel %vm8771, %v10098, %v10104
        %10107 = vst.msk [vmem:[%s350 + $0x8] sm:$0xff] %vm8922, %v10105
        %10124 = vset.pattern.permute.xlu0 0
        %10125 = vperm.xlu0 %10124, %v8523
        %v10126 = vpop.permute.xlu0 %10125
        %10127 = vset.pattern.permute.xlu0 0
        %10128 = vperm.xlu0 %10127, %v8524
        %v10129 = vpop.permute.xlu0 %10128
        %10130 = vset.pattern.permute.xlu0 0
        %10131 = vperm.xlu0 %10130, %v8525
        %v10132 = vpop.permute.xlu0 %10131
        %10133 = vset.pattern.permute.xlu0 0
        %10134 = vperm.xlu0 %10133, %v8526
        %v10135 = vpop.permute.xlu0 %10134
        %10136 = vset.pattern.permute.xlu0 0
        %10137 = vperm.xlu0 %10136, %v8527
        %v10138 = vpop.permute.xlu0 %10137
        %10139 = vset.pattern.permute.xlu0 0
        %10140 = vperm.xlu0 %10139, %v8528
        %v10141 = vpop.permute.xlu0 %10140
        %10142 = vset.pattern.permute.xlu0 0
        %10143 = vperm.xlu0 %10142, %v8529
        %v10144 = vpop.permute.xlu0 %10143
        %10145 = vset.pattern.permute.xlu0 0
        %10146 = vperm.xlu0 %10145, %v8530
        %v10147 = vpop.permute.xlu0 %10146
        %10148 = vset.pattern.permute.xlu0 0
        %10149 = vperm.xlu0 %10148, %v8531
        %v10150 = vpop.permute.xlu0 %10149
        %10151 = vset.pattern.permute.xlu0 0
        %10152 = vperm.xlu0 %10151, %v8532
        %v10153 = vpop.permute.xlu0 %10152
        %10154 = vset.pattern.permute.xlu0 0
        %10155 = vperm.xlu0 %10154, %v8533
        %v10156 = vpop.permute.xlu0 %10155
        %10157 = vset.pattern.permute.xlu0 0
        %10158 = vperm.xlu0 %10157, %v8534
        %v10159 = vpop.permute.xlu0 %10158
        %10160 = vset.pattern.permute.xlu0 0
        %10161 = vperm.xlu0 %10160, %v8535
        %v10162 = vpop.permute.xlu0 %10161
        %10163 = vset.pattern.permute.xlu0 0
        %10164 = vperm.xlu0 %10163, %v8536
        %v10165 = vpop.permute.xlu0 %10164
        %10166 = vset.pattern.permute.xlu0 0
        %10167 = vperm.xlu0 %10166, %v8537
        %v10168 = vpop.permute.xlu0 %10167
        %10169 = vset.pattern.permute.xlu0 0
        %10170 = vperm.xlu0 %10169, %v8538
        %v10171 = vpop.permute.xlu0 %10170
        %v10172 = vlaneseq
        %v10173 = vshrl.u32 %v10172, 7
        %v10174 = vsub.s32 %v8988, %v10173
        %v10175 = vrot.slane %v10126, %v10174
        %v10176 = vlaneseq
        %v10177 = vshrl.u32 %v10176, 7
        %v10178 = vsub.s32 %v8993, %v10177
        %v10179 = vrot.slane %v10129, %v10178
        %v10180 = vsel %vm8998, %v10179, %v10175
        %v10181 = vlaneseq
        %v10182 = vshrl.u32 %v10181, 7
        %v10183 = vsub.s32 %v8988, %v10182
        %v10184 = vrot.slane %v10132, %v10183
        %v10185 = vlaneseq
        %v10186 = vshrl.u32 %v10185, 7
        %v10187 = vsub.s32 %v8993, %v10186
        %v10188 = vrot.slane %v10135, %v10187
        %v10189 = vsel %vm8998, %v10188, %v10184
        %v10190 = vlaneseq
        %v10191 = vshrl.u32 %v10190, 7
        %v10192 = vsub.s32 %v8988, %v10191
        %v10193 = vrot.slane %v10138, %v10192
        %v10194 = vlaneseq
        %v10195 = vshrl.u32 %v10194, 7
        %v10196 = vsub.s32 %v8993, %v10195
        %v10197 = vrot.slane %v10141, %v10196
        %v10198 = vsel %vm8998, %v10197, %v10193
        %v10199 = vlaneseq
        %v10200 = vshrl.u32 %v10199, 7
        %v10201 = vsub.s32 %v8988, %v10200
        %v10202 = vrot.slane %v10144, %v10201
        %v10203 = vlaneseq
        %v10204 = vshrl.u32 %v10203, 7
        %v10205 = vsub.s32 %v8993, %v10204
        %v10206 = vrot.slane %v10147, %v10205
        %v10207 = vsel %vm8998, %v10206, %v10202
        %v10208 = vlaneseq
        %v10209 = vshrl.u32 %v10208, 7
        %v10210 = vsub.s32 %v8988, %v10209
        %v10211 = vrot.slane %v10150, %v10210
        %v10212 = vlaneseq
        %v10213 = vshrl.u32 %v10212, 7
        %v10214 = vsub.s32 %v8993, %v10213
        %v10215 = vrot.slane %v10153, %v10214
        %v10216 = vsel %vm8998, %v10215, %v10211
        %v10217 = vlaneseq
        %v10218 = vshrl.u32 %v10217, 7
        %v10219 = vsub.s32 %v8988, %v10218
        %v10220 = vrot.slane %v10156, %v10219
        %v10221 = vlaneseq
        %v10222 = vshrl.u32 %v10221, 7
        %v10223 = vsub.s32 %v8993, %v10222
        %v10224 = vrot.slane %v10159, %v10223
        %v10225 = vsel %vm8998, %v10224, %v10220
        %v10226 = vlaneseq
        %v10227 = vshrl.u32 %v10226, 7
        %v10228 = vsub.s32 %v8988, %v10227
        %v10229 = vrot.slane %v10162, %v10228
        %v10230 = vlaneseq
        %v10231 = vshrl.u32 %v10230, 7
        %v10232 = vsub.s32 %v8993, %v10231
        %v10233 = vrot.slane %v10165, %v10232
        %v10234 = vsel %vm8998, %v10233, %v10229
        %v10235 = vlaneseq
        %v10236 = vshrl.u32 %v10235, 7
        %v10237 = vsub.s32 %v8988, %v10236
        %v10238 = vrot.slane %v10168, %v10237
        %v10239 = vlaneseq
        %v10240 = vshrl.u32 %v10239, 7
        %v10241 = vsub.s32 %v8993, %v10240
        %v10242 = vrot.slane %v10171, %v10241
        %v10243 = vsel %vm8998, %v10242, %v10238
        %v10244 = vsel %vm8759, %v10189, %v10180
        %v10245 = vsel %vm8761, %v10198, %v10244
        %v10246 = vsel %vm8763, %v10207, %v10245
        %v10247 = vsel %vm8765, %v10216, %v10246
        %v10248 = vsel %vm8767, %v10225, %v10247
        %v10249 = vsel %vm8769, %v10234, %v10248
        %v10250 = vsel %vm8771, %v10243, %v10249
        %10252 = vst.msk [vmem:[%s350 + $0x8] sm:$0xff] %vm9071, %v10250
        %10269 = vset.pattern.permute.xlu0 0
        %10270 = vperm.xlu0 %10269, %v8539
        %v10271 = vpop.permute.xlu0 %10270
        %10272 = vset.pattern.permute.xlu0 0
        %10273 = vperm.xlu0 %10272, %v8540
        %v10274 = vpop.permute.xlu0 %10273
        %10275 = vset.pattern.permute.xlu0 0
        %10276 = vperm.xlu0 %10275, %v8541
        %v10277 = vpop.permute.xlu0 %10276
        %10278 = vset.pattern.permute.xlu0 0
        %10279 = vperm.xlu0 %10278, %v8542
        %v10280 = vpop.permute.xlu0 %10279
        %10281 = vset.pattern.permute.xlu0 0
        %10282 = vperm.xlu0 %10281, %v8543
        %v10283 = vpop.permute.xlu0 %10282
        %10284 = vset.pattern.permute.xlu0 0
        %10285 = vperm.xlu0 %10284, %v8544
        %v10286 = vpop.permute.xlu0 %10285
        %10287 = vset.pattern.permute.xlu0 0
        %10288 = vperm.xlu0 %10287, %v8545
        %v10289 = vpop.permute.xlu0 %10288
        %10290 = vset.pattern.permute.xlu0 0
        %10291 = vperm.xlu0 %10290, %v8546
        %v10292 = vpop.permute.xlu0 %10291
        %10293 = vset.pattern.permute.xlu0 0
        %10294 = vperm.xlu0 %10293, %v8547
        %v10295 = vpop.permute.xlu0 %10294
        %10296 = vset.pattern.permute.xlu0 0
        %10297 = vperm.xlu0 %10296, %v8548
        %v10298 = vpop.permute.xlu0 %10297
        %10299 = vset.pattern.permute.xlu0 0
        %10300 = vperm.xlu0 %10299, %v8549
        %v10301 = vpop.permute.xlu0 %10300
        %10302 = vset.pattern.permute.xlu0 0
        %10303 = vperm.xlu0 %10302, %v8550
        %v10304 = vpop.permute.xlu0 %10303
        %10305 = vset.pattern.permute.xlu0 0
        %10306 = vperm.xlu0 %10305, %v8551
        %v10307 = vpop.permute.xlu0 %10306
        %10308 = vset.pattern.permute.xlu0 0
        %10309 = vperm.xlu0 %10308, %v8552
        %v10310 = vpop.permute.xlu0 %10309
        %10311 = vset.pattern.permute.xlu0 0
        %10312 = vperm.xlu0 %10311, %v8553
        %v10313 = vpop.permute.xlu0 %10312
        %10314 = vset.pattern.permute.xlu0 0
        %10315 = vperm.xlu0 %10314, %v8554
        %v10316 = vpop.permute.xlu0 %10315
        %v10317 = vlaneseq
        %v10318 = vshrl.u32 %v10317, 7
        %v10319 = vsub.s32 %v9137, %v10318
        %v10320 = vrot.slane %v10271, %v10319
        %v10321 = vlaneseq
        %v10322 = vshrl.u32 %v10321, 7
        %v10323 = vsub.s32 %v9142, %v10322
        %v10324 = vrot.slane %v10274, %v10323
        %v10325 = vsel %vm9147, %v10324, %v10320
        %v10326 = vlaneseq
        %v10327 = vshrl.u32 %v10326, 7
        %v10328 = vsub.s32 %v9137, %v10327
        %v10329 = vrot.slane %v10277, %v10328
        %v10330 = vlaneseq
        %v10331 = vshrl.u32 %v10330, 7
        %v10332 = vsub.s32 %v9142, %v10331
        %v10333 = vrot.slane %v10280, %v10332
        %v10334 = vsel %vm9147, %v10333, %v10329
        %v10335 = vlaneseq
        %v10336 = vshrl.u32 %v10335, 7
        %v10337 = vsub.s32 %v9137, %v10336
        %v10338 = vrot.slane %v10283, %v10337
        %v10339 = vlaneseq
        %v10340 = vshrl.u32 %v10339, 7
        %v10341 = vsub.s32 %v9142, %v10340
        %v10342 = vrot.slane %v10286, %v10341
        %v10343 = vsel %vm9147, %v10342, %v10338
        %v10344 = vlaneseq
        %v10345 = vshrl.u32 %v10344, 7
        %v10346 = vsub.s32 %v9137, %v10345
        %v10347 = vrot.slane %v10289, %v10346
        %v10348 = vlaneseq
        %v10349 = vshrl.u32 %v10348, 7
        %v10350 = vsub.s32 %v9142, %v10349
        %v10351 = vrot.slane %v10292, %v10350
        %v10352 = vsel %vm9147, %v10351, %v10347
        %v10353 = vlaneseq
        %v10354 = vshrl.u32 %v10353, 7
        %v10355 = vsub.s32 %v9137, %v10354
        %v10356 = vrot.slane %v10295, %v10355
        %v10357 = vlaneseq
        %v10358 = vshrl.u32 %v10357, 7
        %v10359 = vsub.s32 %v9142, %v10358
        %v10360 = vrot.slane %v10298, %v10359
        %v10361 = vsel %vm9147, %v10360, %v10356
        %v10362 = vlaneseq
        %v10363 = vshrl.u32 %v10362, 7
        %v10364 = vsub.s32 %v9137, %v10363
        %v10365 = vrot.slane %v10301, %v10364
        %v10366 = vlaneseq
        %v10367 = vshrl.u32 %v10366, 7
        %v10368 = vsub.s32 %v9142, %v10367
        %v10369 = vrot.slane %v10304, %v10368
        %v10370 = vsel %vm9147, %v10369, %v10365
        %v10371 = vlaneseq
        %v10372 = vshrl.u32 %v10371, 7
        %v10373 = vsub.s32 %v9137, %v10372
        %v10374 = vrot.slane %v10307, %v10373
        %v10375 = vlaneseq
        %v10376 = vshrl.u32 %v10375, 7
        %v10377 = vsub.s32 %v9142, %v10376
        %v10378 = vrot.slane %v10310, %v10377
        %v10379 = vsel %vm9147, %v10378, %v10374
        %v10380 = vlaneseq
        %v10381 = vshrl.u32 %v10380, 7
        %v10382 = vsub.s32 %v9137, %v10381
        %v10383 = vrot.slane %v10313, %v10382
        %v10384 = vlaneseq
        %v10385 = vshrl.u32 %v10384, 7
        %v10386 = vsub.s32 %v9142, %v10385
        %v10387 = vrot.slane %v10316, %v10386
        %v10388 = vsel %vm9147, %v10387, %v10383
        %v10389 = vsel %vm8759, %v10334, %v10325
        %v10390 = vsel %vm8761, %v10343, %v10389
        %v10391 = vsel %vm8763, %v10352, %v10390
        %v10392 = vsel %vm8765, %v10361, %v10391
        %v10393 = vsel %vm8767, %v10370, %v10392
        %v10394 = vsel %vm8769, %v10379, %v10393
        %v10395 = vsel %vm8771, %v10388, %v10394
        %10397 = vst.msk [vmem:[%s350 + $0x8] sm:$0xff] %vm9220, %v10395
        %10414 = vset.pattern.permute.xlu0 0
        %10415 = vperm.xlu0 %10414, %v8555
        %v10416 = vpop.permute.xlu0 %10415
        %10417 = vset.pattern.permute.xlu0 0
        %10418 = vperm.xlu0 %10417, %v8556
        %v10419 = vpop.permute.xlu0 %10418
        %10420 = vset.pattern.permute.xlu0 0
        %10421 = vperm.xlu0 %10420, %v8557
        %v10422 = vpop.permute.xlu0 %10421
        %10423 = vset.pattern.permute.xlu0 0
        %10424 = vperm.xlu0 %10423, %v8558
        %v10425 = vpop.permute.xlu0 %10424
        %10426 = vset.pattern.permute.xlu0 0
        %10427 = vperm.xlu0 %10426, %v8559
        %v10428 = vpop.permute.xlu0 %10427
        %10429 = vset.pattern.permute.xlu0 0
        %10430 = vperm.xlu0 %10429, %v8560
        %v10431 = vpop.permute.xlu0 %10430
        %10432 = vset.pattern.permute.xlu0 0
        %10433 = vperm.xlu0 %10432, %v8561
        %v10434 = vpop.permute.xlu0 %10433
        %10435 = vset.pattern.permute.xlu0 0
        %10436 = vperm.xlu0 %10435, %v8562
        %v10437 = vpop.permute.xlu0 %10436
        %10438 = vset.pattern.permute.xlu0 0
        %10439 = vperm.xlu0 %10438, %v8563
        %v10440 = vpop.permute.xlu0 %10439
        %10441 = vset.pattern.permute.xlu0 0
        %10442 = vperm.xlu0 %10441, %v8564
        %v10443 = vpop.permute.xlu0 %10442
        %10444 = vset.pattern.permute.xlu0 0
        %10445 = vperm.xlu0 %10444, %v8565
        %v10446 = vpop.permute.xlu0 %10445
        %10447 = vset.pattern.permute.xlu0 0
        %10448 = vperm.xlu0 %10447, %v8566
        %v10449 = vpop.permute.xlu0 %10448
        %10450 = vset.pattern.permute.xlu0 0
        %10451 = vperm.xlu0 %10450, %v8567
        %v10452 = vpop.permute.xlu0 %10451
        %10453 = vset.pattern.permute.xlu0 0
        %10454 = vperm.xlu0 %10453, %v8568
        %v10455 = vpop.permute.xlu0 %10454
        %10456 = vset.pattern.permute.xlu0 0
        %10457 = vperm.xlu0 %10456, %v8569
        %v10458 = vpop.permute.xlu0 %10457
        %10459 = vset.pattern.permute.xlu0 0
        %10460 = vperm.xlu0 %10459, %v8570
        %v10461 = vpop.permute.xlu0 %10460
        %v10462 = vlaneseq
        %v10463 = vshrl.u32 %v10462, 7
        %v10464 = vsub.s32 %v9286, %v10463
        %v10465 = vrot.slane %v10416, %v10464
        %v10466 = vlaneseq
        %v10467 = vshrl.u32 %v10466, 7
        %v10468 = vsub.s32 %v9291, %v10467
        %v10469 = vrot.slane %v10419, %v10468
        %v10470 = vsel %vm9296, %v10469, %v10465
        %v10471 = vlaneseq
        %v10472 = vshrl.u32 %v10471, 7
        %v10473 = vsub.s32 %v9286, %v10472
        %v10474 = vrot.slane %v10422, %v10473
        %v10475 = vlaneseq
        %v10476 = vshrl.u32 %v10475, 7
        %v10477 = vsub.s32 %v9291, %v10476
        %v10478 = vrot.slane %v10425, %v10477
        %v10479 = vsel %vm9296, %v10478, %v10474
        %v10480 = vlaneseq
        %v10481 = vshrl.u32 %v10480, 7
        %v10482 = vsub.s32 %v9286, %v10481
        %v10483 = vrot.slane %v10428, %v10482
        %v10484 = vlaneseq
        %v10485 = vshrl.u32 %v10484, 7
        %v10486 = vsub.s32 %v9291, %v10485
        %v10487 = vrot.slane %v10431, %v10486
        %v10488 = vsel %vm9296, %v10487, %v10483
        %v10489 = vlaneseq
        %v10490 = vshrl.u32 %v10489, 7
        %v10491 = vsub.s32 %v9286, %v10490
        %v10492 = vrot.slane %v10434, %v10491
        %v10493 = vlaneseq
        %v10494 = vshrl.u32 %v10493, 7
        %v10495 = vsub.s32 %v9291, %v10494
        %v10496 = vrot.slane %v10437, %v10495
        %v10497 = vsel %vm9296, %v10496, %v10492
        %v10498 = vlaneseq
        %v10499 = vshrl.u32 %v10498, 7
        %v10500 = vsub.s32 %v9286, %v10499
        %v10501 = vrot.slane %v10440, %v10500
        %v10502 = vlaneseq
        %v10503 = vshrl.u32 %v10502, 7
        %v10504 = vsub.s32 %v9291, %v10503
        %v10505 = vrot.slane %v10443, %v10504
        %v10506 = vsel %vm9296, %v10505, %v10501
        %v10507 = vlaneseq
        %v10508 = vshrl.u32 %v10507, 7
        %v10509 = vsub.s32 %v9286, %v10508
        %v10510 = vrot.slane %v10446, %v10509
        %v10511 = vlaneseq
        %v10512 = vshrl.u32 %v10511, 7
        %v10513 = vsub.s32 %v9291, %v10512
        %v10514 = vrot.slane %v10449, %v10513
        %v10515 = vsel %vm9296, %v10514, %v10510
        %v10516 = vlaneseq
        %v10517 = vshrl.u32 %v10516, 7
        %v10518 = vsub.s32 %v9286, %v10517
        %v10519 = vrot.slane %v10452, %v10518
        %v10520 = vlaneseq
        %v10521 = vshrl.u32 %v10520, 7
        %v10522 = vsub.s32 %v9291, %v10521
        %v10523 = vrot.slane %v10455, %v10522
        %v10524 = vsel %vm9296, %v10523, %v10519
        %v10525 = vlaneseq
        %v10526 = vshrl.u32 %v10525, 7
        %v10527 = vsub.s32 %v9286, %v10526
        %v10528 = vrot.slane %v10458, %v10527
        %v10529 = vlaneseq
        %v10530 = vshrl.u32 %v10529, 7
        %v10531 = vsub.s32 %v9291, %v10530
        %v10532 = vrot.slane %v10461, %v10531
        %v10533 = vsel %vm9296, %v10532, %v10528
        %v10534 = vsel %vm8759, %v10479, %v10470
        %v10535 = vsel %vm8761, %v10488, %v10534
        %v10536 = vsel %vm8763, %v10497, %v10535
        %v10537 = vsel %vm8765, %v10506, %v10536
        %v10538 = vsel %vm8767, %v10515, %v10537
        %v10539 = vsel %vm8769, %v10524, %v10538
        %v10540 = vsel %vm8771, %v10533, %v10539
        %10542 = vst.msk [vmem:[%s350 + $0x8] sm:$0xff] %vm9369, %v10540
        %10559 = vset.pattern.permute.xlu0 0
        %10560 = vperm.xlu0 %10559, %v8571
        %v10561 = vpop.permute.xlu0 %10560
        %10562 = vset.pattern.permute.xlu0 0
        %10563 = vperm.xlu0 %10562, %v8572
        %v10564 = vpop.permute.xlu0 %10563
        %10565 = vset.pattern.permute.xlu0 0
        %10566 = vperm.xlu0 %10565, %v8573
        %v10567 = vpop.permute.xlu0 %10566
        %10568 = vset.pattern.permute.xlu0 0
        %10569 = vperm.xlu0 %10568, %v8574
        %v10570 = vpop.permute.xlu0 %10569
        %10571 = vset.pattern.permute.xlu0 0
        %10572 = vperm.xlu0 %10571, %v8575
        %v10573 = vpop.permute.xlu0 %10572
        %10574 = vset.pattern.permute.xlu0 0
        %10575 = vperm.xlu0 %10574, %v8576
        %v10576 = vpop.permute.xlu0 %10575
        %10577 = vset.pattern.permute.xlu0 0
        %10578 = vperm.xlu0 %10577, %v8577
        %v10579 = vpop.permute.xlu0 %10578
        %10580 = vset.pattern.permute.xlu0 0
        %10581 = vperm.xlu0 %10580, %v8578
        %v10582 = vpop.permute.xlu0 %10581
        %10583 = vset.pattern.permute.xlu0 0
        %10584 = vperm.xlu0 %10583, %v8579
        %v10585 = vpop.permute.xlu0 %10584
        %10586 = vset.pattern.permute.xlu0 0
        %10587 = vperm.xlu0 %10586, %v8580
        %v10588 = vpop.permute.xlu0 %10587
        %10589 = vset.pattern.permute.xlu0 0
        %10590 = vperm.xlu0 %10589, %v8581
        %v10591 = vpop.permute.xlu0 %10590
        %10592 = vset.pattern.permute.xlu0 0
        %10593 = vperm.xlu0 %10592, %v8582
        %v10594 = vpop.permute.xlu0 %10593
        %10595 = vset.pattern.permute.xlu0 0
        %10596 = vperm.xlu0 %10595, %v8583
        %v10597 = vpop.permute.xlu0 %10596
        %10598 = vset.pattern.permute.xlu0 0
        %10599 = vperm.xlu0 %10598, %v8584
        %v10600 = vpop.permute.xlu0 %10599
        %10601 = vset.pattern.permute.xlu0 0
        %10602 = vperm.xlu0 %10601, %v8585
        %v10603 = vpop.permute.xlu0 %10602
        %10604 = vset.pattern.permute.xlu0 0
        %10605 = vperm.xlu0 %10604, %v8586
        %v10606 = vpop.permute.xlu0 %10605
        %v10607 = vlaneseq
        %v10608 = vshrl.u32 %v10607, 7
        %v10609 = vsub.s32 %v9435, %v10608
        %v10610 = vrot.slane %v10561, %v10609
        %v10611 = vlaneseq
        %v10612 = vshrl.u32 %v10611, 7
        %v10613 = vsub.s32 %v9440, %v10612
        %v10614 = vrot.slane %v10564, %v10613
        %v10615 = vsel %vm9445, %v10614, %v10610
        %v10616 = vlaneseq
        %v10617 = vshrl.u32 %v10616, 7
        %v10618 = vsub.s32 %v9435, %v10617
        %v10619 = vrot.slane %v10567, %v10618
        %v10620 = vlaneseq
        %v10621 = vshrl.u32 %v10620, 7
        %v10622 = vsub.s32 %v9440, %v10621
        %v10623 = vrot.slane %v10570, %v10622
        %v10624 = vsel %vm9445, %v10623, %v10619
        %v10625 = vlaneseq
        %v10626 = vshrl.u32 %v10625, 7
        %v10627 = vsub.s32 %v9435, %v10626
        %v10628 = vrot.slane %v10573, %v10627
        %v10629 = vlaneseq
        %v10630 = vshrl.u32 %v10629, 7
        %v10631 = vsub.s32 %v9440, %v10630
        %v10632 = vrot.slane %v10576, %v10631
        %v10633 = vsel %vm9445, %v10632, %v10628
        %v10634 = vlaneseq
        %v10635 = vshrl.u32 %v10634, 7
        %v10636 = vsub.s32 %v9435, %v10635
        %v10637 = vrot.slane %v10579, %v10636
        %v10638 = vlaneseq
        %v10639 = vshrl.u32 %v10638, 7
        %v10640 = vsub.s32 %v9440, %v10639
        %v10641 = vrot.slane %v10582, %v10640
        %v10642 = vsel %vm9445, %v10641, %v10637
        %v10643 = vlaneseq
        %v10644 = vshrl.u32 %v10643, 7
        %v10645 = vsub.s32 %v9435, %v10644
        %v10646 = vrot.slane %v10585, %v10645
        %v10647 = vlaneseq
        %v10648 = vshrl.u32 %v10647, 7
        %v10649 = vsub.s32 %v9440, %v10648
        %v10650 = vrot.slane %v10588, %v10649
        %v10651 = vsel %vm9445, %v10650, %v10646
        %v10652 = vlaneseq
        %v10653 = vshrl.u32 %v10652, 7
        %v10654 = vsub.s32 %v9435, %v10653
        %v10655 = vrot.slane %v10591, %v10654
        %v10656 = vlaneseq
        %v10657 = vshrl.u32 %v10656, 7
        %v10658 = vsub.s32 %v9440, %v10657
        %v10659 = vrot.slane %v10594, %v10658
        %v10660 = vsel %vm9445, %v10659, %v10655
        %v10661 = vlaneseq
        %v10662 = vshrl.u32 %v10661, 7
        %v10663 = vsub.s32 %v9435, %v10662
        %v10664 = vrot.slane %v10597, %v10663
        %v10665 = vlaneseq
        %v10666 = vshrl.u32 %v10665, 7
        %v10667 = vsub.s32 %v9440, %v10666
        %v10668 = vrot.slane %v10600, %v10667
        %v10669 = vsel %vm9445, %v10668, %v10664
        %v10670 = vlaneseq
        %v10671 = vshrl.u32 %v10670, 7
        %v10672 = vsub.s32 %v9435, %v10671
        %v10673 = vrot.slane %v10603, %v10672
        %v10674 = vlaneseq
        %v10675 = vshrl.u32 %v10674, 7
        %v10676 = vsub.s32 %v9440, %v10675
        %v10677 = vrot.slane %v10606, %v10676
        %v10678 = vsel %vm9445, %v10677, %v10673
        %v10679 = vsel %vm8759, %v10624, %v10615
        %v10680 = vsel %vm8761, %v10633, %v10679
        %v10681 = vsel %vm8763, %v10642, %v10680
        %v10682 = vsel %vm8765, %v10651, %v10681
        %v10683 = vsel %vm8767, %v10660, %v10682
        %v10684 = vsel %vm8769, %v10669, %v10683
        %v10685 = vsel %vm8771, %v10678, %v10684
        %10687 = vst.msk [vmem:[%s350 + $0x8] sm:$0xff] %vm9518, %v10685
        %10704 = vset.pattern.permute.xlu0 0
        %10705 = vperm.xlu0 %10704, %v8587
        %v10706 = vpop.permute.xlu0 %10705
        %10707 = vset.pattern.permute.xlu0 0
        %10708 = vperm.xlu0 %10707, %v8588
        %v10709 = vpop.permute.xlu0 %10708
        %10710 = vset.pattern.permute.xlu0 0
        %10711 = vperm.xlu0 %10710, %v8589
        %v10712 = vpop.permute.xlu0 %10711
        %10713 = vset.pattern.permute.xlu0 0
        %10714 = vperm.xlu0 %10713, %v8590
        %v10715 = vpop.permute.xlu0 %10714
        %10716 = vset.pattern.permute.xlu0 0
        %10717 = vperm.xlu0 %10716, %v8591
        %v10718 = vpop.permute.xlu0 %10717
        %10719 = vset.pattern.permute.xlu0 0
        %10720 = vperm.xlu0 %10719, %v8592
        %v10721 = vpop.permute.xlu0 %10720
        %10722 = vset.pattern.permute.xlu0 0
        %10723 = vperm.xlu0 %10722, %v8593
        %v10724 = vpop.permute.xlu0 %10723
        %10725 = vset.pattern.permute.xlu0 0
        %10726 = vperm.xlu0 %10725, %v8594
        %v10727 = vpop.permute.xlu0 %10726
        %10728 = vset.pattern.permute.xlu0 0
        %10729 = vperm.xlu0 %10728, %v8595
        %v10730 = vpop.permute.xlu0 %10729
        %10731 = vset.pattern.permute.xlu0 0
        %10732 = vperm.xlu0 %10731, %v8596
        %v10733 = vpop.permute.xlu0 %10732
        %10734 = vset.pattern.permute.xlu0 0
        %10735 = vperm.xlu0 %10734, %v8597
        %v10736 = vpop.permute.xlu0 %10735
        %10737 = vset.pattern.permute.xlu0 0
        %10738 = vperm.xlu0 %10737, %v8598
        %v10739 = vpop.permute.xlu0 %10738
        %10740 = vset.pattern.permute.xlu0 0
        %10741 = vperm.xlu0 %10740, %v8599
        %v10742 = vpop.permute.xlu0 %10741
        %10743 = vset.pattern.permute.xlu0 0
        %10744 = vperm.xlu0 %10743, %v8600
        %v10745 = vpop.permute.xlu0 %10744
        %10746 = vset.pattern.permute.xlu0 0
        %10747 = vperm.xlu0 %10746, %v8601
        %v10748 = vpop.permute.xlu0 %10747
        %10749 = vset.pattern.permute.xlu0 0
        %10750 = vperm.xlu0 %10749, %v8602
        %v10751 = vpop.permute.xlu0 %10750
        %v10752 = vlaneseq
        %v10753 = vshrl.u32 %v10752, 7
        %v10754 = vsub.s32 %v9584, %v10753
        %v10755 = vrot.slane %v10706, %v10754
        %v10756 = vlaneseq
        %v10757 = vshrl.u32 %v10756, 7
        %v10758 = vsub.s32 %v9589, %v10757
        %v10759 = vrot.slane %v10709, %v10758
        %v10760 = vsel %vm9594, %v10759, %v10755
        %v10761 = vlaneseq
        %v10762 = vshrl.u32 %v10761, 7
        %v10763 = vsub.s32 %v9584, %v10762
        %v10764 = vrot.slane %v10712, %v10763
        %v10765 = vlaneseq
        %v10766 = vshrl.u32 %v10765, 7
        %v10767 = vsub.s32 %v9589, %v10766
        %v10768 = vrot.slane %v10715, %v10767
        %v10769 = vsel %vm9594, %v10768, %v10764
        %v10770 = vlaneseq
        %v10771 = vshrl.u32 %v10770, 7
        %v10772 = vsub.s32 %v9584, %v10771
        %v10773 = vrot.slane %v10718, %v10772
        %v10774 = vlaneseq
        %v10775 = vshrl.u32 %v10774, 7
        %v10776 = vsub.s32 %v9589, %v10775
        %v10777 = vrot.slane %v10721, %v10776
        %v10778 = vsel %vm9594, %v10777, %v10773
        %v10779 = vlaneseq
        %v10780 = vshrl.u32 %v10779, 7
        %v10781 = vsub.s32 %v9584, %v10780
        %v10782 = vrot.slane %v10724, %v10781
        %v10783 = vlaneseq
        %v10784 = vshrl.u32 %v10783, 7
        %v10785 = vsub.s32 %v9589, %v10784
        %v10786 = vrot.slane %v10727, %v10785
        %v10787 = vsel %vm9594, %v10786, %v10782
        %v10788 = vlaneseq
        %v10789 = vshrl.u32 %v10788, 7
        %v10790 = vsub.s32 %v9584, %v10789
        %v10791 = vrot.slane %v10730, %v10790
        %v10792 = vlaneseq
        %v10793 = vshrl.u32 %v10792, 7
        %v10794 = vsub.s32 %v9589, %v10793
        %v10795 = vrot.slane %v10733, %v10794
        %v10796 = vsel %vm9594, %v10795, %v10791
        %v10797 = vlaneseq
        %v10798 = vshrl.u32 %v10797, 7
        %v10799 = vsub.s32 %v9584, %v10798
        %v10800 = vrot.slane %v10736, %v10799
        %v10801 = vlaneseq
        %v10802 = vshrl.u32 %v10801, 7
        %v10803 = vsub.s32 %v9589, %v10802
        %v10804 = vrot.slane %v10739, %v10803
        %v10805 = vsel %vm9594, %v10804, %v10800
        %v10806 = vlaneseq
        %v10807 = vshrl.u32 %v10806, 7
        %v10808 = vsub.s32 %v9584, %v10807
        %v10809 = vrot.slane %v10742, %v10808
        %v10810 = vlaneseq
        %v10811 = vshrl.u32 %v10810, 7
        %v10812 = vsub.s32 %v9589, %v10811
        %v10813 = vrot.slane %v10745, %v10812
        %v10814 = vsel %vm9594, %v10813, %v10809
        %v10815 = vlaneseq
        %v10816 = vshrl.u32 %v10815, 7
        %v10817 = vsub.s32 %v9584, %v10816
        %v10818 = vrot.slane %v10748, %v10817
        %v10819 = vlaneseq
        %v10820 = vshrl.u32 %v10819, 7
        %v10821 = vsub.s32 %v9589, %v10820
        %v10822 = vrot.slane %v10751, %v10821
        %v10823 = vsel %vm9594, %v10822, %v10818
        %v10824 = vsel %vm8759, %v10769, %v10760
        %v10825 = vsel %vm8761, %v10778, %v10824
        %v10826 = vsel %vm8763, %v10787, %v10825
        %v10827 = vsel %vm8765, %v10796, %v10826
        %v10828 = vsel %vm8767, %v10805, %v10827
        %v10829 = vsel %vm8769, %v10814, %v10828
        %v10830 = vsel %vm8771, %v10823, %v10829
        %10832 = vst.msk [vmem:[%s350 + $0x8] sm:$0xff] %vm9667, %v10830
        %10849 = vset.pattern.permute.xlu0 0
        %10850 = vperm.xlu0 %10849, %v8603
        %v10851 = vpop.permute.xlu0 %10850
        %10852 = vset.pattern.permute.xlu0 0
        %10853 = vperm.xlu0 %10852, %v8604
        %v10854 = vpop.permute.xlu0 %10853
        %10855 = vset.pattern.permute.xlu0 0
        %10856 = vperm.xlu0 %10855, %v8605
        %v10857 = vpop.permute.xlu0 %10856
        %10858 = vset.pattern.permute.xlu0 0
        %10859 = vperm.xlu0 %10858, %v8606
        %v10860 = vpop.permute.xlu0 %10859
        %10861 = vset.pattern.permute.xlu0 0
        %10862 = vperm.xlu0 %10861, %v8607
        %v10863 = vpop.permute.xlu0 %10862
        %10864 = vset.pattern.permute.xlu0 0
        %10865 = vperm.xlu0 %10864, %v8608
        %v10866 = vpop.permute.xlu0 %10865
        %10867 = vset.pattern.permute.xlu0 0
        %10868 = vperm.xlu0 %10867, %v8609
        %v10869 = vpop.permute.xlu0 %10868
        %10870 = vset.pattern.permute.xlu0 0
        %10871 = vperm.xlu0 %10870, %v8610
        %v10872 = vpop.permute.xlu0 %10871
        %10873 = vset.pattern.permute.xlu0 0
        %10874 = vperm.xlu0 %10873, %v8611
        %v10875 = vpop.permute.xlu0 %10874
        %10876 = vset.pattern.permute.xlu0 0
        %10877 = vperm.xlu0 %10876, %v8612
        %v10878 = vpop.permute.xlu0 %10877
        %10879 = vset.pattern.permute.xlu0 0
        %10880 = vperm.xlu0 %10879, %v8613
        %v10881 = vpop.permute.xlu0 %10880
        %10882 = vset.pattern.permute.xlu0 0
        %10883 = vperm.xlu0 %10882, %v8614
        %v10884 = vpop.permute.xlu0 %10883
        %10885 = vset.pattern.permute.xlu0 0
        %10886 = vperm.xlu0 %10885, %v8615
        %v10887 = vpop.permute.xlu0 %10886
        %10888 = vset.pattern.permute.xlu0 0
        %10889 = vperm.xlu0 %10888, %v8616
        %v10890 = vpop.permute.xlu0 %10889
        %10891 = vset.pattern.permute.xlu0 0
        %10892 = vperm.xlu0 %10891, %v8617
        %v10893 = vpop.permute.xlu0 %10892
        %10894 = vset.pattern.permute.xlu0 0
        %10895 = vperm.xlu0 %10894, %v8618
        %v10896 = vpop.permute.xlu0 %10895
        %v10897 = vlaneseq
        %v10898 = vshrl.u32 %v10897, 7
        %v10899 = vsub.s32 %v9733, %v10898
        %v10900 = vrot.slane %v10851, %v10899
        %v10901 = vlaneseq
        %v10902 = vshrl.u32 %v10901, 7
        %v10903 = vsub.s32 %v9738, %v10902
        %v10904 = vrot.slane %v10854, %v10903
        %v10905 = vsel %vm9743, %v10904, %v10900
        %v10906 = vlaneseq
        %v10907 = vshrl.u32 %v10906, 7
        %v10908 = vsub.s32 %v9733, %v10907
        %v10909 = vrot.slane %v10857, %v10908
        %v10910 = vlaneseq
        %v10911 = vshrl.u32 %v10910, 7
        %v10912 = vsub.s32 %v9738, %v10911
        %v10913 = vrot.slane %v10860, %v10912
        %v10914 = vsel %vm9743, %v10913, %v10909
        %v10915 = vlaneseq
        %v10916 = vshrl.u32 %v10915, 7
        %v10917 = vsub.s32 %v9733, %v10916
        %v10918 = vrot.slane %v10863, %v10917
        %v10919 = vlaneseq
        %v10920 = vshrl.u32 %v10919, 7
        %v10921 = vsub.s32 %v9738, %v10920
        %v10922 = vrot.slane %v10866, %v10921
        %v10923 = vsel %vm9743, %v10922, %v10918
        %v10924 = vlaneseq
        %v10925 = vshrl.u32 %v10924, 7
        %v10926 = vsub.s32 %v9733, %v10925
        %v10927 = vrot.slane %v10869, %v10926
        %v10928 = vlaneseq
        %v10929 = vshrl.u32 %v10928, 7
        %v10930 = vsub.s32 %v9738, %v10929
        %v10931 = vrot.slane %v10872, %v10930
        %v10932 = vsel %vm9743, %v10931, %v10927
        %v10933 = vlaneseq
        %v10934 = vshrl.u32 %v10933, 7
        %v10935 = vsub.s32 %v9733, %v10934
        %v10936 = vrot.slane %v10875, %v10935
        %v10937 = vlaneseq
        %v10938 = vshrl.u32 %v10937, 7
        %v10939 = vsub.s32 %v9738, %v10938
        %v10940 = vrot.slane %v10878, %v10939
        %v10941 = vsel %vm9743, %v10940, %v10936
        %v10942 = vlaneseq
        %v10943 = vshrl.u32 %v10942, 7
        %v10944 = vsub.s32 %v9733, %v10943
        %v10945 = vrot.slane %v10881, %v10944
        %v10946 = vlaneseq
        %v10947 = vshrl.u32 %v10946, 7
        %v10948 = vsub.s32 %v9738, %v10947
        %v10949 = vrot.slane %v10884, %v10948
        %v10950 = vsel %vm9743, %v10949, %v10945
        %v10951 = vlaneseq
        %v10952 = vshrl.u32 %v10951, 7
        %v10953 = vsub.s32 %v9733, %v10952
        %v10954 = vrot.slane %v10887, %v10953
        %v10955 = vlaneseq
        %v10956 = vshrl.u32 %v10955, 7
        %v10957 = vsub.s32 %v9738, %v10956
        %v10958 = vrot.slane %v10890, %v10957
        %v10959 = vsel %vm9743, %v10958, %v10954
        %v10960 = vlaneseq
        %v10961 = vshrl.u32 %v10960, 7
        %v10962 = vsub.s32 %v9733, %v10961
        %v10963 = vrot.slane %v10893, %v10962
        %v10964 = vlaneseq
        %v10965 = vshrl.u32 %v10964, 7
        %v10966 = vsub.s32 %v9738, %v10965
        %v10967 = vrot.slane %v10896, %v10966
        %v10968 = vsel %vm9743, %v10967, %v10963
        %v10969 = vsel %vm8759, %v10914, %v10905
        %v10970 = vsel %vm8761, %v10923, %v10969
        %v10971 = vsel %vm8763, %v10932, %v10970
        %v10972 = vsel %vm8765, %v10941, %v10971
        %v10973 = vsel %vm8767, %v10950, %v10972
        %v10974 = vsel %vm8769, %v10959, %v10973
        %v10975 = vsel %vm8771, %v10968, %v10974
        %10977 = vst.msk [vmem:[%s350 + $0x8] sm:$0xff] %vm9816, %v10975
        %s10978 = sand.u32 %s207, 1
        %s10979 = scalar_lea.sflag [#allocation5], %s10978
        %s10980 = sand.u32 %s207, 1
        %s10981 = smul.addr %s10980, 16
        %s10982 = scalar_lea.vmem [#allocation9], %s10981
        // Predicated region
        $region65: #{tpu_custom_call.1} parent=51 // pred_check
          %p10983 = pneg %p217
        $region66: #{tpu_custom_call.1} parent=51 // pred_check_branch
          %10985 = sbr.rel (%p10983) target = $region68
        $region67: #{tpu_custom_call.1} parent=51 // pred_region
          %s10986 = smul.u32 2, %s26
          %s10988 = ssub.s32 256, 256
          %10989 = vsyncadd %s10979, %s10988
          %s10990 = smul.addr %s10986, 128
          %s10991 = scalar_lea.hbm %s8, %s10990
          %s10993 = sshll.u32 %s10982, 4
          %s10994 = int_to_ptr.vmem [resolvable:$true] %s10993
          %10996 = dma.vmem_to_hbm [thread:$0]  %s10994, 256, %s10991, %s10979
        $region68: #{tpu_custom_call.1} parent=51 // pred_fallthru
          _
      $region52: #{tpu_custom_call.1} parent=5 // pred_fallthru
        _
      %p10997 = scmp.le.s32.totalorder 2, %s21
      // Predicated region
      $region69: #{tpu_custom_call.1} parent=5 // pred_check
        %p10998 = pneg %p10997
      $region70: #{tpu_custom_call.1} parent=5 // pred_check_branch
        %11000 = sbr.rel (%p10998) target = $region72
      $region71: #{tpu_custom_call.1} parent=5 // pred_region
        %s11001 = ssub.s32 %s21, 2
        // Predicated region
        $region73: #{tpu_custom_call.1} parent=71 // pred_check
          %p11002 = pneg %p223
        $region74: #{tpu_custom_call.1} parent=71 // pred_check_branch
          %11004 = sbr.rel (%p11002) target = $region76
        $region75: #{tpu_custom_call.1} parent=71 // pred_region
          %s11005 = sand.u32 %s208, 1
          %s11006 = scalar_lea.sflag [#allocation5], %s11005
          %s11007 = sand.u32 %s208, 1
          %s11008 = smul.addr %s11007, 16
          %s11009 = scalar_lea.vmem [#allocation9], %s11008
          %11010 = dma.done %s11006, 256
        $region76: #{tpu_custom_call.1} parent=71 // pred_fallthru
          _
      $region72: #{tpu_custom_call.1} parent=5 // pred_fallthru
        _
    $region6: #{tpu_custom_call.1} parent=1 // loop_footer
      %s25 = sadd.s32 1, %s21
    $region7: #{tpu_custom_call.1} parent=1 // loop_footer_branch
      %20 = sbr.rel target = $region3
    $region8: #{tpu_custom_call.1} parent=1 // loop_exit
      _
    %11011 = vsyncpa [#allocation4], 1
    %s11012 = scalar_lea.sflag [#allocation4], 1
    %11013 = vsyncpa %s11012, 1
    %11014 = vsyncpa [#allocation7], 1
    %11015 = vsyncpa [#allocation5], 1
    %s11016 = scalar_lea.sflag [#allocation5], 1
    %11017 = vsyncpa %s11016, 1

</llo_original>
